<compile_context>
chip_gen: v6e
topology: v6e:2x2x1
jax: 0.10.0
libtpu: 0.0.40
codegen_flags: <defaults>
</compile_context>

<pallas_src>
import functools

import jax
import jax.numpy as jnp
from jax import lax
from jax.experimental import pallas as pl
from jax.experimental.pallas import tpu as pltpu

_POOL_KS = (5, 9, 17)
_R_PAD = max(_POOL_KS) // 2          # halo size for the padded pooling scratch
_BN_EPS = 1e-5


def _ms_kernel(x_ref, wb_ref, bb_ref, wf_ref, bf_ref, o_ref,
               wpad_ref, hpad_ref, acc_ref, *, H, W, C):
    """One batch element per grid step.

    x_ref   : (1, H, W, C)          input (bf16, channel-last)
    wb_ref  : (4, C, C4)            per-branch 1x1-conv weights, BN folded (bf16)
    bb_ref  : (4, 1, C4)            per-branch biases (f32)
    wf_ref  : (4, C4, C)            fuse 1x1-conv weight split per branch (bf16)
    bf_ref  : (1, C)                fuse bias (f32)
    o_ref   : (1, H, W, C)          output
    wpad_ref: (H, W+2R, C4)  f32    zero-padded scratch for the W-axis pool
    hpad_ref: (H+2R, W, C4)  f32    zero-padded scratch for the H-axis pool
    acc_ref : (H*W, C)       f32    lane-dense fuse accumulator
    """
    C4 = C // 4
    HW = H * W
    P = _R_PAD

    # Zero the pooling halos.  The data regions are fully rewritten by every
    # branch; the halos are never written, so this is the only init needed.
    wpad_ref[:, 0:P, :] = jnp.zeros((H, P, C4), jnp.float32)
    wpad_ref[:, P + W:P + W + P, :] = jnp.zeros((H, P, C4), jnp.float32)
    hpad_ref[0:P, :, :] = jnp.zeros((P, W, C4), jnp.float32)
    hpad_ref[P + H:P + H + P, :, :] = jnp.zeros((P, W, C4), jnp.float32)

    x2 = x_ref[0].reshape(HW, C)                                     # (HW, C) bf16

    # Identity branch (branch 3): conv+BN -> ReLU, then its slice of the fuse
    # conv accumulated into the lane-dense f32 accumulator (initializes it).
    z3 = jnp.dot(x2, wb_ref[3], preferred_element_type=jnp.float32)  # (HW, C4)
    y3 = jnp.maximum(z3 + bb_ref[3], 0.0)
    acc_ref[...] = jnp.dot(y3.astype(jnp.bfloat16), wf_ref[3],
                           preferred_element_type=jnp.float32)       # (HW, C)

    # Pooled branches.  The (linear) 1x1 conv is hoisted in front of the
    # (linear) average pool so only C/4 channels are pooled; the bias is added
    # AFTER pooling, which matches AvgPool2d(count_include_pad=True) with zero
    # padding exactly.
    for i, k in enumerate(_POOL_KS):
        r = k // 2
        zi = jnp.dot(x2, wb_ref[i], preferred_element_type=jnp.float32)

        # Separable pool, W axis: zero-padded f32 scratch + k shifted adds
        # (accumulated in registers; no intermediate stores).
        wpad_ref[:, P:P + W, :] = zi.reshape(H, W, C4)
        zw = wpad_ref[:, P - r:P - r + W, :]
        for d in range(1, k):
            zw = zw + wpad_ref[:, P - r + d:P - r + d + W, :]

        # Separable pool, H axis: same scheme along the cheap outer axis.
        hpad_ref[P:P + H, :, :] = zw
        zs = hpad_ref[P - r:P - r + H, :, :]
        for d in range(1, k):
            zs = zs + hpad_ref[P - r + d:P - r + d + H, :, :]

        y = jnp.maximum(zs.reshape(HW, C4) * (1.0 / float(k * k)) + bb_ref[i],
                        0.0)
        acc_ref[...] += jnp.dot(y.astype(jnp.bfloat16), wf_ref[i],
                                preferred_element_type=jnp.float32)

    # Fuse bias + ReLU once, lane-dense store.
    out = jnp.maximum(acc_ref[...] + bf_ref[...], 0.0)
    o_ref[0] = out.reshape(H, W, C).astype(o_ref.dtype)


def _vmem_capacity_bytes():
    try:
        cap = getattr(pltpu.get_tpu_info(), "vmem_capacity_bytes", None)
        if cap:
            return int(cap)
    except Exception:
        pass
    return 128 * 1024 * 1024


def multiscale_branch(x_nchw, kparams, *, out_dtype=jnp.float32):
    """x_nchw: (N, C, H, W) float32 (PyTorch layout). Returns (N, C, H, W)."""
    Wb_k, bb_k, Wf_k, bf_k = kparams
    N, C, H, W = x_nchw.shape
    assert C % 4 == 0
    C4 = C // 4
    HW = H * W
    out_isz = jnp.dtype(out_dtype).itemsize

    # Wrapper-side layout plumbing (plain JAX): NCHW -> NHWC, bf16 operands.
    x_nhwc = jnp.transpose(x_nchw, (0, 2, 3, 1)).astype(jnp.bfloat16)

    kernel = functools.partial(_ms_kernel, H=H, W=W, C=C)

    param_bytes = (Wb_k.size * 2 + Wf_k.size * 2 + bb_k.size * 4 + bf_k.size * 4)

    # Advisory cost estimate for XLA's scheduler.
    flops = N * (8 * HW * C * C4                    # 4 branch 1x1 convs
                 + 8 * HW * C4 * C                  # 4 per-branch fuse matmuls
                 + 2 * sum(_POOL_KS) * HW * C4      # separable window sums
                 + 4 * HW * C)                      # bias + ReLU
    bytes_accessed = N * HW * C * (2 + out_isz) + param_bytes

    # VMEM budget: double-buffered in/out blocks + params, plus scratch and the
    # f32 conv / pool / fuse intermediates (previously omitted).
    in_block = HW * C * 2
    out_block = HW * C * out_isz
    scratch_bytes = (H * (W + 2 * _R_PAD) * C4 * 4
                     + (H + 2 * _R_PAD) * W * C4 * 4
                     + HW * C * 4)
    temp_bytes = 4 * HW * C4 * 4 + 2 * HW * C * 4
    vmem_bytes = 2 * (in_block + out_block + param_bytes) + scratch_bytes + temp_bytes
    vmem_limit = int(min(max(int(vmem_bytes * 1.25), 8 * 1024 * 1024),
                         (_vmem_capacity_bytes() * 3) // 4))

    out_nhwc = pl.pallas_call(
        kernel,
        out_shape=jax.ShapeDtypeStruct((N, H, W, C), out_dtype),
        grid_spec=pltpu.PrefetchScalarGridSpec(
            num_scalar_prefetch=0,
            grid=(N,),
            in_specs=[
                pl.BlockSpec((1, H, W, C), lambda n: (n, 0, 0, 0)),
                pl.BlockSpec((4, C, C4), lambda n: (0, 0, 0)),
                pl.BlockSpec((4, 1, C4), lambda n: (0, 0, 0)),
                pl.BlockSpec((4, C4, C), lambda n: (0, 0, 0)),
                pl.BlockSpec((1, C), lambda n: (0, 0)),
            ],
            out_specs=pl.BlockSpec((1, H, W, C), lambda n: (n, 0, 0, 0)),
            scratch_shapes=[
                pltpu.VMEM((H, W + 2 * _R_PAD, C4), jnp.float32),    # W-pool pad
                pltpu.VMEM((H + 2 * _R_PAD, W, C4), jnp.float32),    # H-pool pad
                pltpu.VMEM((HW, C), jnp.float32),                    # fuse accumulator
            ],
        ),
        compiler_params=pltpu.CompilerParams(
            dimension_semantics=("parallel",),
            vmem_limit_bytes=vmem_limit,
        ),
        cost_estimate=pl.CostEstimate(
            flops=int(flops), transcendentals=0,
            bytes_accessed=int(bytes_accessed)),
    )(x_nhwc, Wb_k, bb_k, Wf_k, bf_k)

    return jnp.transpose(out_nhwc, (0, 3, 1, 2))


def init_params(C, key):
    """Deterministic synthetic parameters with conv + eval-mode BN folded."""
    C4 = C // 4
    keys = iter(jax.random.split(key, 64))

    def bn_params(c):
        gamma = 1.0 + 0.1 * jax.random.normal(next(keys), (c,), jnp.float32)
        beta = 0.1 * jax.random.normal(next(keys), (c,), jnp.float32)
        mean = 0.1 * jax.random.normal(next(keys), (c,), jnp.float32)
        var = jax.random.uniform(next(keys), (c,), jnp.float32,
                                 minval=0.5, maxval=1.5)
        return gamma, beta, mean, var

    def fold(w, b, gamma, beta, mean, var):
        # 1x1 conv followed by eval-mode BatchNorm -> single affine
        scale = gamma * lax.rsqrt(var + _BN_EPS)
        return w * scale[None, :], (b - mean) * scale + beta

    Wb_list, bb_list = [], []
    for _ in range(4):
        w = jax.random.normal(next(keys), (C, C4), jnp.float32) / jnp.sqrt(float(C))
        b = 0.1 * jax.random.normal(next(keys), (C4,), jnp.float32)
        wq, bq = fold(w, b, *bn_params(C4))
        Wb_list.append(wq)
        bb_list.append(bq)

    w = jax.random.normal(next(keys), (C, C), jnp.float32) / jnp.sqrt(float(C))
    b = 0.1 * jax.random.normal(next(keys), (C,), jnp.float32)
    Wf_full, bf_full = fold(w, b, *bn_params(C))

    # Kernel-format parameters: branch-major, bf16 matmul operands, f32 biases.
    Wb_k = jnp.stack(Wb_list, axis=0).astype(jnp.bfloat16)              # (4, C, C4)
    bb_k = jnp.stack(bb_list, axis=0).reshape(4, 1, C4).astype(jnp.float32)
    Wf_k = Wf_full.reshape(4, C4, C).astype(jnp.bfloat16)               # (4, C4, C)
    bf_k = bf_full.reshape(1, C).astype(jnp.float32)                    # (1, C)
    kparams = (Wb_k, bb_k, Wf_k, bf_k)

    # Reference-format parameters, rounded the same way the kernel sees them.
    Wb_ref = [wq.astype(jnp.bfloat16).astype(jnp.float32) for wq in Wb_list]
    Wf_ref = Wf_full.astype(jnp.bfloat16).astype(jnp.float32)
    folded = (Wb_ref, bb_list, Wf_ref, bf_full)
    return kparams, folded


def reference_forward(x_nchw, folded):
    """Pure-JAX (f32) reference using the same folded conv+BN parameters."""
    Wb_list, bb_list, Wf_full, bf_full = folded
    x = jnp.transpose(x_nchw, (0, 2, 3, 1))                             # NHWC

    def avgpool(v, k):
        r = k // 2
        s = lax.reduce_window(v, 0.0, lax.add, (1, k, k, 1), (1, 1, 1, 1),
                              ((0, 0), (r, r), (r, r), (0, 0)))
        return s / float(k * k)

    outs = []
    for i, k in enumerate(_POOL_KS):
        p = avgpool(x, k)
        outs.append(jnp.maximum(
            jnp.einsum('nhwc,co->nhwo', p, Wb_list[i]) + bb_list[i], 0.0))
    outs.append(jnp.maximum(
        jnp.einsum('nhwc,co->nhwo', x, Wb_list[3]) + bb_list[3], 0.0))
    cat = jnp.concatenate(outs, axis=-1)
    out = jnp.maximum(jnp.einsum('nhwc,co->nhwo', cat, Wf_full) + bf_full, 0.0)
    return jnp.transpose(out, (0, 3, 1, 2))


if __name__ == "__main__":
    N, C, H, W = 2, 128, 16, 16          # small synthetic shapes (NCHW)
    key = jax.random.PRNGKey(0)
    kx, kp = jax.random.split(key)
    x = jax.random.normal(kx, (N, C, H, W), jnp.float32)
    kparams, folded = init_params(C, kp)

    out = jax.block_until_ready(multiscale_branch(x, kparams))
    assert out.shape == (N, C, H, W)

    # Reference sees the same bf16-rounded inputs/weights; math stays in f32.
    x_q = x.astype(jnp.bfloat16).astype(jnp.float32)
    ref = reference_forward(x_q, folded)
    max_err = float(jnp.max(jnp.abs(out - ref)))
    assert max_err < 5e-2, f"max abs err {max_err}"
    print("KERNEL_OK")
</pallas_src>

<mosaic_0001>
module attributes {stable_mosaic.version = 11 : i64} {
  func.func @_ms_kernel(%arg0: i32, %arg1: memref<1x16x16x128xbf16, #tpu.memory_space<vmem>>, %arg2: memref<4x128x32xbf16, #tpu.memory_space<vmem>>, %arg3: memref<4x1x32xf32, #tpu.memory_space<vmem>>, %arg4: memref<4x32x128xbf16, #tpu.memory_space<vmem>>, %arg5: memref<1x128xf32, #tpu.memory_space<vmem>>, %arg6: memref<1x16x16x128xf32, #tpu.memory_space<vmem>>, %arg7: memref<16x32x32xf32, #tpu.memory_space<vmem>>, %arg8: memref<32x16x32xf32, #tpu.memory_space<vmem>>, %arg9: memref<256x128xf32, #tpu.memory_space<vmem>>) attributes {dimension_semantics = [#tpu.dimension_semantics<parallel>], iteration_bounds = array<i64: 2>, scalar_prefetch = 0 : i64, scratch_operands = 3 : i64, tpu.core_type = #tpu.core_type<tc>, window_params = [{transform_indices = @transform_0, window_bounds = array<i64: 1, 16, 16, 128>}, {pipeline_mode = #tpu.pipeline_mode<synchronous>, transform_indices = @transform_1, window_bounds = array<i64: 4, 128, 32>}, {pipeline_mode = #tpu.pipeline_mode<synchronous>, transform_indices = @transform_2, window_bounds = array<i64: 4, 1, 32>}, {pipeline_mode = #tpu.pipeline_mode<synchronous>, transform_indices = @transform_3, window_bounds = array<i64: 4, 32, 128>}, {pipeline_mode = #tpu.pipeline_mode<synchronous>, transform_indices = @transform_4, window_bounds = array<i64: 1, 128>}, {transform_indices = @transform_5, window_bounds = array<i64: 1, 16, 16, 128>}]} {
    %cst = arith.constant 0.000000e+00 : f32
    %0 = vector.broadcast %cst : f32 to vector<16x8x32xf32>
    %c0 = arith.constant 0 : index
    %c0_0 = arith.constant 0 : index
    %c0_1 = arith.constant 0 : index
    %1 = vector.load %arg7[%c0, %c0_0, %c0_1] : memref<16x32x32xf32, #tpu.memory_space<vmem>>, vector<16x8x32xf32>
    tpu.vector_store %arg7[%c0, %c0_0, %c0_1], %0 {strides = array<i32>} : memref<16x32x32xf32, #tpu.memory_space<vmem>>, vector<16x8x32xf32>,
    %cst_2 = arith.constant 0.000000e+00 : f32
    %2 = vector.broadcast %cst_2 : f32 to vector<16x8x32xf32>
    %c0_3 = arith.constant 0 : index
    %c24 = arith.constant 24 : index
    %c0_4 = arith.constant 0 : index
    %3 = vector.load %arg7[%c0_3, %c24, %c0_4] : memref<16x32x32xf32, #tpu.memory_space<vmem>>, vector<16x8x32xf32>
    tpu.vector_store %arg7[%c0_3, %c24, %c0_4], %2 {strides = array<i32>} : memref<16x32x32xf32, #tpu.memory_space<vmem>>, vector<16x8x32xf32>,
    %cst_5 = arith.constant 0.000000e+00 : f32
    %4 = vector.broadcast %cst_5 : f32 to vector<8x16x32xf32>
    %c0_6 = arith.constant 0 : index
    %c0_7 = arith.constant 0 : index
    %c0_8 = arith.constant 0 : index
    %5 = vector.load %arg8[%c0_6, %c0_7, %c0_8] : memref<32x16x32xf32, #tpu.memory_space<vmem>>, vector<8x16x32xf32>
    tpu.vector_store %arg8[%c0_6, %c0_7, %c0_8], %4 {strides = array<i32>} : memref<32x16x32xf32, #tpu.memory_space<vmem>>, vector<8x16x32xf32>,
    %cst_9 = arith.constant 0.000000e+00 : f32
    %6 = vector.broadcast %cst_9 : f32 to vector<8x16x32xf32>
    %c24_10 = arith.constant 24 : index
    %c0_11 = arith.constant 0 : index
    %c0_12 = arith.constant 0 : index
    %7 = vector.load %arg8[%c24_10, %c0_11, %c0_12] : memref<32x16x32xf32, #tpu.memory_space<vmem>>, vector<8x16x32xf32>
    tpu.vector_store %arg8[%c24_10, %c0_11, %c0_12], %6 {strides = array<i32>} : memref<32x16x32xf32, #tpu.memory_space<vmem>>, vector<8x16x32xf32>,
    %c0_13 = arith.constant 0 : index
    %c0_14 = arith.constant 0 : index
    %c0_15 = arith.constant 0 : index
    %c0_16 = arith.constant 0 : index
    %8 = vector.load %arg1[%c0_13, %c0_14, %c0_15, %c0_16] : memref<1x16x16x128xbf16, #tpu.memory_space<vmem>>, vector<1x16x16x128xbf16>
    %9 = vector.shape_cast %8 : vector<1x16x16x128xbf16> to vector<16x16x128xbf16>
    %10 = vector.shape_cast %9 : vector<16x16x128xbf16> to vector<256x128xbf16>
    %c3 = arith.constant 3 : index
    %c0_17 = arith.constant 0 : index
    %c0_18 = arith.constant 0 : index
    %11 = vector.load %arg2[%c3, %c0_17, %c0_18] : memref<4x128x32xbf16, #tpu.memory_space<vmem>>, vector<1x128x32xbf16>
    %12 = vector.shape_cast %11 : vector<1x128x32xbf16> to vector<128x32xbf16>
    %cst_19 = arith.constant dense<0.000000e+00> : vector<256x32xf32>
    %13 = tpu.matmul %10, %12, %cst_19 {dimension_numbers = #tpu.dot_dimension_numbers<[1], [0], [0], [1], [0, 0, 1, 1], [], []>} : vector<256x128xbf16>, vector<128x32xbf16>, vector<256x32xf32> -> vector<256x32xf32>
    %c3_20 = arith.constant 3 : index
    %c0_21 = arith.constant 0 : index
    %c0_22 = arith.constant 0 : index
    %14 = vector.load %arg3[%c3_20, %c0_21, %c0_22] : memref<4x1x32xf32, #tpu.memory_space<vmem>>, vector<1x1x32xf32>
    %15 = vector.shape_cast %14 : vector<1x1x32xf32> to vector<1x32xf32>
    %16 = vector.broadcast %15 : vector<1x32xf32> to vector<256x32xf32>
    %17 = arith.addf %13, %16 : vector<256x32xf32>
    %cst_23 = arith.constant 0.000000e+00 : f32
    %18 = vector.broadcast %cst_23 : f32 to vector<256x32xf32>
    %19 = arith.maximumf %17, %18 : vector<256x32xf32>
    %20 = arith.truncf %19 : vector<256x32xf32> to vector<256x32xbf16>
    %c3_24 = arith.constant 3 : index
    %c0_25 = arith.constant 0 : index
    %c0_26 = arith.constant 0 : index
    %21 = vector.load %arg4[%c3_24, %c0_25, %c0_26] : memref<4x32x128xbf16, #tpu.memory_space<vmem>>, vector<1x32x128xbf16>
    %22 = vector.shape_cast %21 : vector<1x32x128xbf16> to vector<32x128xbf16>
    %cst_27 = arith.constant dense<0.000000e+00> : vector<256x128xf32>
    %23 = tpu.matmul %20, %22, %cst_27 {dimension_numbers = #tpu.dot_dimension_numbers<[1], [0], [0], [1], [0, 0, 1, 1], [], []>} : vector<256x32xbf16>, vector<32x128xbf16>, vector<256x128xf32> -> vector<256x128xf32>
    %c0_28 = arith.constant 0 : index
    %c0_29 = arith.constant 0 : index
    %24 = vector.load %arg9[%c0_28, %c0_29] : memref<256x128xf32, #tpu.memory_space<vmem>>, vector<256x128xf32>
    tpu.vector_store %arg9[%c0_28, %c0_29], %23 {strides = array<i32>} : memref<256x128xf32, #tpu.memory_space<vmem>>, vector<256x128xf32>,
    %c0_30 = arith.constant 0 : index
    %c0_31 = arith.constant 0 : index
    %c0_32 = arith.constant 0 : index
    %25 = vector.load %arg2[%c0_30, %c0_31, %c0_32] : memref<4x128x32xbf16, #tpu.memory_space<vmem>>, vector<1x128x32xbf16>
    %26 = vector.shape_cast %25 : vector<1x128x32xbf16> to vector<128x32xbf16>
    %cst_33 = arith.constant dense<0.000000e+00> : vector<256x32xf32>
    %27 = tpu.matmul %10, %26, %cst_33 {dimension_numbers = #tpu.dot_dimension_numbers<[1], [0], [0], [1], [0, 0, 1, 1], [], []>} : vector<256x128xbf16>, vector<128x32xbf16>, vector<256x32xf32> -> vector<256x32xf32>
    %28 = vector.shape_cast %27 : vector<256x32xf32> to vector<16x16x32xf32>
    %c0_34 = arith.constant 0 : index
    %c8 = arith.constant 8 : index
    %c0_35 = arith.constant 0 : index
    %29 = vector.load %arg7[%c0_34, %c8, %c0_35] : memref<16x32x32xf32, #tpu.memory_space<vmem>>, vector<16x16x32xf32>
    tpu.vector_store %arg7[%c0_34, %c8, %c0_35], %28 {strides = array<i32>} : memref<16x32x32xf32, #tpu.memory_space<vmem>>, vector<16x16x32xf32>,
    %c0_36 = arith.constant 0 : index
    %c6 = arith.constant 6 : index
    %c0_37 = arith.constant 0 : index
    %30 = vector.load %arg7[%c0_36, %c6, %c0_37] : memref<16x32x32xf32, #tpu.memory_space<vmem>>, vector<16x16x32xf32>
    %c0_38 = arith.constant 0 : index
    %c7 = arith.constant 7 : index
    %c0_39 = arith.constant 0 : index
    %31 = vector.load %arg7[%c0_38, %c7, %c0_39] : memref<16x32x32xf32, #tpu.memory_space<vmem>>, vector<16x16x32xf32>
    %32 = arith.addf %30, %31 : vector<16x16x32xf32>
    %c0_40 = arith.constant 0 : index
    %c8_41 = arith.constant 8 : index
    %c0_42 = arith.constant 0 : index
    %33 = vector.load %arg7[%c0_40, %c8_41, %c0_42] : memref<16x32x32xf32, #tpu.memory_space<vmem>>, vector<16x16x32xf32>
    %34 = arith.addf %32, %33 : vector<16x16x32xf32>
    %c0_43 = arith.constant 0 : index
    %c9 = arith.constant 9 : index
    %c0_44 = arith.constant 0 : index
    %35 = vector.load %arg7[%c0_43, %c9, %c0_44] : memref<16x32x32xf32, #tpu.memory_space<vmem>>, vector<16x16x32xf32>
    %36 = arith.addf %34, %35 : vector<16x16x32xf32>
    %c0_45 = arith.constant 0 : index
    %c10 = arith.constant 10 : index
    %c0_46 = arith.constant 0 : index
    %37 = vector.load %arg7[%c0_45, %c10, %c0_46] : memref<16x32x32xf32, #tpu.memory_space<vmem>>, vector<16x16x32xf32>
    %38 = arith.addf %36, %37 : vector<16x16x32xf32>
    %c8_47 = arith.constant 8 : index
    %c0_48 = arith.constant 0 : index
    %c0_49 = arith.constant 0 : index
    %39 = vector.load %arg8[%c8_47, %c0_48, %c0_49] : memref<32x16x32xf32, #tpu.memory_space<vmem>>, vector<16x16x32xf32>
    tpu.vector_store %arg8[%c8_47, %c0_48, %c0_49], %38 {strides = array<i32>} : memref<32x16x32xf32, #tpu.memory_space<vmem>>, vector<16x16x32xf32>,
    %c6_50 = arith.constant 6 : index
    %c0_51 = arith.constant 0 : index
    %c0_52 = arith.constant 0 : index
    %40 = vector.load %arg8[%c6_50, %c0_51, %c0_52] : memref<32x16x32xf32, #tpu.memory_space<vmem>>, vector<16x16x32xf32>
    %c7_53 = arith.constant 7 : index
    %c0_54 = arith.constant 0 : index
    %c0_55 = arith.constant 0 : index
    %41 = vector.load %arg8[%c7_53, %c0_54, %c0_55] : memref<32x16x32xf32, #tpu.memory_space<vmem>>, vector<16x16x32xf32>
    %42 = arith.addf %40, %41 : vector<16x16x32xf32>
    %c8_56 = arith.constant 8 : index
    %c0_57 = arith.constant 0 : index
    %c0_58 = arith.constant 0 : index
    %43 = vector.load %arg8[%c8_56, %c0_57, %c0_58] : memref<32x16x32xf32, #tpu.memory_space<vmem>>, vector<16x16x32xf32>
    %44 = arith.addf %42, %43 : vector<16x16x32xf32>
    %c9_59 = arith.constant 9 : index
    %c0_60 = arith.constant 0 : index
    %c0_61 = arith.constant 0 : index
    %45 = vector.load %arg8[%c9_59, %c0_60, %c0_61] : memref<32x16x32xf32, #tpu.memory_space<vmem>>, vector<16x16x32xf32>
    %46 = arith.addf %44, %45 : vector<16x16x32xf32>
    %c10_62 = arith.constant 10 : index
    %c0_63 = arith.constant 0 : index
    %c0_64 = arith.constant 0 : index
    %47 = vector.load %arg8[%c10_62, %c0_63, %c0_64] : memref<32x16x32xf32, #tpu.memory_space<vmem>>, vector<16x16x32xf32>
    %48 = arith.addf %46, %47 : vector<16x16x32xf32>
    %49 = vector.shape_cast %48 : vector<16x16x32xf32> to vector<256x32xf32>
    %cst_65 = arith.constant 4.000000e-02 : f32
    %50 = vector.broadcast %cst_65 : f32 to vector<256x32xf32>
    %51 = arith.mulf %49, %50 : vector<256x32xf32>
    %c0_66 = arith.constant 0 : index
    %c0_67 = arith.constant 0 : index
    %c0_68 = arith.constant 0 : index
    %52 = vector.load %arg3[%c0_66, %c0_67, %c0_68] : memref<4x1x32xf32, #tpu.memory_space<vmem>>, vector<1x1x32xf32>
    %53 = vector.shape_cast %52 : vector<1x1x32xf32> to vector<1x32xf32>
    %54 = vector.broadcast %53 : vector<1x32xf32> to vector<256x32xf32>
    %55 = arith.addf %51, %54 : vector<256x32xf32>
    %cst_69 = arith.constant 0.000000e+00 : f32
    %56 = vector.broadcast %cst_69 : f32 to vector<256x32xf32>
    %57 = arith.maximumf %55, %56 : vector<256x32xf32>
    %c0_70 = arith.constant 0 : index
    %c0_71 = arith.constant 0 : index
    %58 = vector.load %arg9[%c0_70, %c0_71] : memref<256x128xf32, #tpu.memory_space<vmem>>, vector<256x128xf32>
    %59 = arith.truncf %57 : vector<256x32xf32> to vector<256x32xbf16>
    %c0_72 = arith.constant 0 : index
    %c0_73 = arith.constant 0 : index
    %c0_74 = arith.constant 0 : index
    %60 = vector.load %arg4[%c0_72, %c0_73, %c0_74] : memref<4x32x128xbf16, #tpu.memory_space<vmem>>, vector<1x32x128xbf16>
    %61 = vector.shape_cast %60 : vector<1x32x128xbf16> to vector<32x128xbf16>
    %cst_75 = arith.constant dense<0.000000e+00> : vector<256x128xf32>
    %62 = tpu.matmul %59, %61, %cst_75 {dimension_numbers = #tpu.dot_dimension_numbers<[1], [0], [0], [1], [0, 0, 1, 1], [], []>} : vector<256x32xbf16>, vector<32x128xbf16>, vector<256x128xf32> -> vector<256x128xf32>
    %63 = arith.addf %58, %62 : vector<256x128xf32>
    %c0_76 = arith.constant 0 : index
    %c0_77 = arith.constant 0 : index
    %64 = vector.load %arg9[%c0_76, %c0_77] : memref<256x128xf32, #tpu.memory_space<vmem>>, vector<256x128xf32>
    tpu.vector_store %arg9[%c0_76, %c0_77], %63 {strides = array<i32>} : memref<256x128xf32, #tpu.memory_space<vmem>>, vector<256x128xf32>,
    %c1 = arith.constant 1 : index
    %c0_78 = arith.constant 0 : index
    %c0_79 = arith.constant 0 : index
    %65 = vector.load %arg2[%c1, %c0_78, %c0_79] : memref<4x128x32xbf16, #tpu.memory_space<vmem>>, vector<1x128x32xbf16>
    %66 = vector.shape_cast %65 : vector<1x128x32xbf16> to vector<128x32xbf16>
    %cst_80 = arith.constant dense<0.000000e+00> : vector<256x32xf32>
    %67 = tpu.matmul %10, %66, %cst_80 {dimension_numbers = #tpu.dot_dimension_numbers<[1], [0], [0], [1], [0, 0, 1, 1], [], []>} : vector<256x128xbf16>, vector<128x32xbf16>, vector<256x32xf32> -> vector<256x32xf32>
    %68 = vector.shape_cast %67 : vector<256x32xf32> to vector<16x16x32xf32>
    %c0_81 = arith.constant 0 : index
    %c8_82 = arith.constant 8 : index
    %c0_83 = arith.constant 0 : index
    %69 = vector.load %arg7[%c0_81, %c8_82, %c0_83] : memref<16x32x32xf32, #tpu.memory_space<vmem>>, vector<16x16x32xf32>
    tpu.vector_store %arg7[%c0_81, %c8_82, %c0_83], %68 {strides = array<i32>} : memref<16x32x32xf32, #tpu.memory_space<vmem>>, vector<16x16x32xf32>,
    %c0_84 = arith.constant 0 : index
    %c4 = arith.constant 4 : index
    %c0_85 = arith.constant 0 : index
    %70 = vector.load %arg7[%c0_84, %c4, %c0_85] : memref<16x32x32xf32, #tpu.memory_space<vmem>>, vector<16x16x32xf32>
    %c0_86 = arith.constant 0 : index
    %c5 = arith.constant 5 : index
    %c0_87 = arith.constant 0 : index
    %71 = vector.load %arg7[%c0_86, %c5, %c0_87] : memref<16x32x32xf32, #tpu.memory_space<vmem>>, vector<16x16x32xf32>
    %72 = arith.addf %70, %71 : vector<16x16x32xf32>
    %c0_88 = arith.constant 0 : index
    %c6_89 = arith.constant 6 : index
    %c0_90 = arith.constant 0 : index
    %73 = vector.load %arg7[%c0_88, %c6_89, %c0_90] : memref<16x32x32xf32, #tpu.memory_space<vmem>>, vector<16x16x32xf32>
    %74 = arith.addf %72, %73 : vector<16x16x32xf32>
    %c0_91 = arith.constant 0 : index
    %c7_92 = arith.constant 7 : index
    %c0_93 = arith.constant 0 : index
    %75 = vector.load %arg7[%c0_91, %c7_92, %c0_93] : memref<16x32x32xf32, #tpu.memory_space<vmem>>, vector<16x16x32xf32>
    %76 = arith.addf %74, %75 : vector<16x16x32xf32>
    %c0_94 = arith.constant 0 : index
    %c8_95 = arith.constant 8 : index
    %c0_96 = arith.constant 0 : index
    %77 = vector.load %arg7[%c0_94, %c8_95, %c0_96] : memref<16x32x32xf32, #tpu.memory_space<vmem>>, vector<16x16x32xf32>
    %78 = arith.addf %76, %77 : vector<16x16x32xf32>
    %c0_97 = arith.constant 0 : index
    %c9_98 = arith.constant 9 : index
    %c0_99 = arith.constant 0 : index
    %79 = vector.load %arg7[%c0_97, %c9_98, %c0_99] : memref<16x32x32xf32, #tpu.memory_space<vmem>>, vector<16x16x32xf32>
    %80 = arith.addf %78, %79 : vector<16x16x32xf32>
    %c0_100 = arith.constant 0 : index
    %c10_101 = arith.constant 10 : index
    %c0_102 = arith.constant 0 : index
    %81 = vector.load %arg7[%c0_100, %c10_101, %c0_102] : memref<16x32x32xf32, #tpu.memory_space<vmem>>, vector<16x16x32xf32>
    %82 = arith.addf %80, %81 : vector<16x16x32xf32>
    %c0_103 = arith.constant 0 : index
    %c11 = arith.constant 11 : index
    %c0_104 = arith.constant 0 : index
    %83 = vector.load %arg7[%c0_103, %c11, %c0_104] : memref<16x32x32xf32, #tpu.memory_space<vmem>>, vector<16x16x32xf32>
    %84 = arith.addf %82, %83 : vector<16x16x32xf32>
    %c0_105 = arith.constant 0 : index
    %c12 = arith.constant 12 : index
    %c0_106 = arith.constant 0 : index
    %85 = vector.load %arg7[%c0_105, %c12, %c0_106] : memref<16x32x32xf32, #tpu.memory_space<vmem>>, vector<16x16x32xf32>
    %86 = arith.addf %84, %85 : vector<16x16x32xf32>
    %c8_107 = arith.constant 8 : index
    %c0_108 = arith.constant 0 : index
    %c0_109 = arith.constant 0 : index
    %87 = vector.load %arg8[%c8_107, %c0_108, %c0_109] : memref<32x16x32xf32, #tpu.memory_space<vmem>>, vector<16x16x32xf32>
    tpu.vector_store %arg8[%c8_107, %c0_108, %c0_109], %86 {strides = array<i32>} : memref<32x16x32xf32, #tpu.memory_space<vmem>>, vector<16x16x32xf32>,
    %c4_110 = arith.constant 4 : index
    %c0_111 = arith.constant 0 : index
    %c0_112 = arith.constant 0 : index
    %88 = vector.load %arg8[%c4_110, %c0_111, %c0_112] : memref<32x16x32xf32, #tpu.memory_space<vmem>>, vector<16x16x32xf32>
    %c5_113 = arith.constant 5 : index
    %c0_114 = arith.constant 0 : index
    %c0_115 = arith.constant 0 : index
    %89 = vector.load %arg8[%c5_113, %c0_114, %c0_115] : memref<32x16x32xf32, #tpu.memory_space<vmem>>, vector<16x16x32xf32>
    %90 = arith.addf %88, %89 : vector<16x16x32xf32>
    %c6_116 = arith.constant 6 : index
    %c0_117 = arith.constant 0 : index
    %c0_118 = arith.constant 0 : index
    %91 = vector.load %arg8[%c6_116, %c0_117, %c0_118] : memref<32x16x32xf32, #tpu.memory_space<vmem>>, vector<16x16x32xf32>
    %92 = arith.addf %90, %91 : vector<16x16x32xf32>
    %c7_119 = arith.constant 7 : index
    %c0_120 = arith.constant 0 : index
    %c0_121 = arith.constant 0 : index
    %93 = vector.load %arg8[%c7_119, %c0_120, %c0_121] : memref<32x16x32xf32, #tpu.memory_space<vmem>>, vector<16x16x32xf32>
    %94 = arith.addf %92, %93 : vector<16x16x32xf32>
    %c8_122 = arith.constant 8 : index
    %c0_123 = arith.constant 0 : index
    %c0_124 = arith.constant 0 : index
    %95 = vector.load %arg8[%c8_122, %c0_123, %c0_124] : memref<32x16x32xf32, #tpu.memory_space<vmem>>, vector<16x16x32xf32>
    %96 = arith.addf %94, %95 : vector<16x16x32xf32>
    %c9_125 = arith.constant 9 : index
    %c0_126 = arith.constant 0 : index
    %c0_127 = arith.constant 0 : index
    %97 = vector.load %arg8[%c9_125, %c0_126, %c0_127] : memref<32x16x32xf32, #tpu.memory_space<vmem>>, vector<16x16x32xf32>
    %98 = arith.addf %96, %97 : vector<16x16x32xf32>
    %c10_128 = arith.constant 10 : index
    %c0_129 = arith.constant 0 : index
    %c0_130 = arith.constant 0 : index
    %99 = vector.load %arg8[%c10_128, %c0_129, %c0_130] : memref<32x16x32xf32, #tpu.memory_space<vmem>>, vector<16x16x32xf32>
    %100 = arith.addf %98, %99 : vector<16x16x32xf32>
    %c11_131 = arith.constant 11 : index
    %c0_132 = arith.constant 0 : index
    %c0_133 = arith.constant 0 : index
    %101 = vector.load %arg8[%c11_131, %c0_132, %c0_133] : memref<32x16x32xf32, #tpu.memory_space<vmem>>, vector<16x16x32xf32>
    %102 = arith.addf %100, %101 : vector<16x16x32xf32>
    %c12_134 = arith.constant 12 : index
    %c0_135 = arith.constant 0 : index
    %c0_136 = arith.constant 0 : index
    %103 = vector.load %arg8[%c12_134, %c0_135, %c0_136] : memref<32x16x32xf32, #tpu.memory_space<vmem>>, vector<16x16x32xf32>
    %104 = arith.addf %102, %103 : vector<16x16x32xf32>
    %105 = vector.shape_cast %104 : vector<16x16x32xf32> to vector<256x32xf32>
    %cst_137 = arith.constant 0.0123456791 : f32
    %106 = vector.broadcast %cst_137 : f32 to vector<256x32xf32>
    %107 = arith.mulf %105, %106 : vector<256x32xf32>
    %c1_138 = arith.constant 1 : index
    %c0_139 = arith.constant 0 : index
    %c0_140 = arith.constant 0 : index
    %108 = vector.load %arg3[%c1_138, %c0_139, %c0_140] : memref<4x1x32xf32, #tpu.memory_space<vmem>>, vector<1x1x32xf32>
    %109 = vector.shape_cast %108 : vector<1x1x32xf32> to vector<1x32xf32>
    %110 = vector.broadcast %109 : vector<1x32xf32> to vector<256x32xf32>
    %111 = arith.addf %107, %110 : vector<256x32xf32>
    %cst_141 = arith.constant 0.000000e+00 : f32
    %112 = vector.broadcast %cst_141 : f32 to vector<256x32xf32>
    %113 = arith.maximumf %111, %112 : vector<256x32xf32>
    %c0_142 = arith.constant 0 : index
    %c0_143 = arith.constant 0 : index
    %114 = vector.load %arg9[%c0_142, %c0_143] : memref<256x128xf32, #tpu.memory_space<vmem>>, vector<256x128xf32>
    %115 = arith.truncf %113 : vector<256x32xf32> to vector<256x32xbf16>
    %c1_144 = arith.constant 1 : index
    %c0_145 = arith.constant 0 : index
    %c0_146 = arith.constant 0 : index
    %116 = vector.load %arg4[%c1_144, %c0_145, %c0_146] : memref<4x32x128xbf16, #tpu.memory_space<vmem>>, vector<1x32x128xbf16>
    %117 = vector.shape_cast %116 : vector<1x32x128xbf16> to vector<32x128xbf16>
    %cst_147 = arith.constant dense<0.000000e+00> : vector<256x128xf32>
    %118 = tpu.matmul %115, %117, %cst_147 {dimension_numbers = #tpu.dot_dimension_numbers<[1], [0], [0], [1], [0, 0, 1, 1], [], []>} : vector<256x32xbf16>, vector<32x128xbf16>, vector<256x128xf32> -> vector<256x128xf32>
    %119 = arith.addf %114, %118 : vector<256x128xf32>
    %c0_148 = arith.constant 0 : index
    %c0_149 = arith.constant 0 : index
    %120 = vector.load %arg9[%c0_148, %c0_149] : memref<256x128xf32, #tpu.memory_space<vmem>>, vector<256x128xf32>
    tpu.vector_store %arg9[%c0_148, %c0_149], %119 {strides = array<i32>} : memref<256x128xf32, #tpu.memory_space<vmem>>, vector<256x128xf32>,
    %c2 = arith.constant 2 : index
    %c0_150 = arith.constant 0 : index
    %c0_151 = arith.constant 0 : index
    %121 = vector.load %arg2[%c2, %c0_150, %c0_151] : memref<4x128x32xbf16, #tpu.memory_space<vmem>>, vector<1x128x32xbf16>
    %122 = vector.shape_cast %121 : vector<1x128x32xbf16> to vector<128x32xbf16>
    %cst_152 = arith.constant dense<0.000000e+00> : vector<256x32xf32>
    %123 = tpu.matmul %10, %122, %cst_152 {dimension_numbers = #tpu.dot_dimension_numbers<[1], [0], [0], [1], [0, 0, 1, 1], [], []>} : vector<256x128xbf16>, vector<128x32xbf16>, vector<256x32xf32> -> vector<256x32xf32>
    %124 = vector.shape_cast %123 : vector<256x32xf32> to vector<16x16x32xf32>
    %c0_153 = arith.constant 0 : index
    %c8_154 = arith.constant 8 : index
    %c0_155 = arith.constant 0 : index
    %125 = vector.load %arg7[%c0_153, %c8_154, %c0_155] : memref<16x32x32xf32, #tpu.memory_space<vmem>>, vector<16x16x32xf32>
    tpu.vector_store %arg7[%c0_153, %c8_154, %c0_155], %124 {strides = array<i32>} : memref<16x32x32xf32, #tpu.memory_space<vmem>>, vector<16x16x32xf32>,
    %c0_156 = arith.constant 0 : index
    %c0_157 = arith.constant 0 : index
    %c0_158 = arith.constant 0 : index
    %126 = vector.load %arg7[%c0_156, %c0_157, %c0_158] : memref<16x32x32xf32, #tpu.memory_space<vmem>>, vector<16x16x32xf32>
    %c0_159 = arith.constant 0 : index
    %c1_160 = arith.constant 1 : index
    %c0_161 = arith.constant 0 : index
    %127 = vector.load %arg7[%c0_159, %c1_160, %c0_161] : memref<16x32x32xf32, #tpu.memory_space<vmem>>, vector<16x16x32xf32>
    %128 = arith.addf %126, %127 : vector<16x16x32xf32>
    %c0_162 = arith.constant 0 : index
    %c2_163 = arith.constant 2 : index
    %c0_164 = arith.constant 0 : index
    %129 = vector.load %arg7[%c0_162, %c2_163, %c0_164] : memref<16x32x32xf32, #tpu.memory_space<vmem>>, vector<16x16x32xf32>
    %130 = arith.addf %128, %129 : vector<16x16x32xf32>
    %c0_165 = arith.constant 0 : index
    %c3_166 = arith.constant 3 : index
    %c0_167 = arith.constant 0 : index
    %131 = vector.load %arg7[%c0_165, %c3_166, %c0_167] : memref<16x32x32xf32, #tpu.memory_space<vmem>>, vector<16x16x32xf32>
    %132 = arith.addf %130, %131 : vector<16x16x32xf32>
    %c0_168 = arith.constant 0 : index
    %c4_169 = arith.constant 4 : index
    %c0_170 = arith.constant 0 : index
    %133 = vector.load %arg7[%c0_168, %c4_169, %c0_170] : memref<16x32x32xf32, #tpu.memory_space<vmem>>, vector<16x16x32xf32>
    %134 = arith.addf %132, %133 : vector<16x16x32xf32>
    %c0_171 = arith.constant 0 : index
    %c5_172 = arith.constant 5 : index
    %c0_173 = arith.constant 0 : index
    %135 = vector.load %arg7[%c0_171, %c5_172, %c0_173] : memref<16x32x32xf32, #tpu.memory_space<vmem>>, vector<16x16x32xf32>
    %136 = arith.addf %134, %135 : vector<16x16x32xf32>
    %c0_174 = arith.constant 0 : index
    %c6_175 = arith.constant 6 : index
    %c0_176 = arith.constant 0 : index
    %137 = vector.load %arg7[%c0_174, %c6_175, %c0_176] : memref<16x32x32xf32, #tpu.memory_space<vmem>>, vector<16x16x32xf32>
    %138 = arith.addf %136, %137 : vector<16x16x32xf32>
    %c0_177 = arith.constant 0 : index
    %c7_178 = arith.constant 7 : index
    %c0_179 = arith.constant 0 : index
    %139 = vector.load %arg7[%c0_177, %c7_178, %c0_179] : memref<16x32x32xf32, #tpu.memory_space<vmem>>, vector<16x16x32xf32>
    %140 = arith.addf %138, %139 : vector<16x16x32xf32>
    %c0_180 = arith.constant 0 : index
    %c8_181 = arith.constant 8 : index
    %c0_182 = arith.constant 0 : index
    %141 = vector.load %arg7[%c0_180, %c8_181, %c0_182] : memref<16x32x32xf32, #tpu.memory_space<vmem>>, vector<16x16x32xf32>
    %142 = arith.addf %140, %141 : vector<16x16x32xf32>
    %c0_183 = arith.constant 0 : index
    %c9_184 = arith.constant 9 : index
    %c0_185 = arith.constant 0 : index
    %143 = vector.load %arg7[%c0_183, %c9_184, %c0_185] : memref<16x32x32xf32, #tpu.memory_space<vmem>>, vector<16x16x32xf32>
    %144 = arith.addf %142, %143 : vector<16x16x32xf32>
    %c0_186 = arith.constant 0 : index
    %c10_187 = arith.constant 10 : index
    %c0_188 = arith.constant 0 : index
    %145 = vector.load %arg7[%c0_186, %c10_187, %c0_188] : memref<16x32x32xf32, #tpu.memory_space<vmem>>, vector<16x16x32xf32>
    %146 = arith.addf %144, %145 : vector<16x16x32xf32>
    %c0_189 = arith.constant 0 : index
    %c11_190 = arith.constant 11 : index
    %c0_191 = arith.constant 0 : index
    %147 = vector.load %arg7[%c0_189, %c11_190, %c0_191] : memref<16x32x32xf32, #tpu.memory_space<vmem>>, vector<16x16x32xf32>
    %148 = arith.addf %146, %147 : vector<16x16x32xf32>
    %c0_192 = arith.constant 0 : index
    %c12_193 = arith.constant 12 : index
    %c0_194 = arith.constant 0 : index
    %149 = vector.load %arg7[%c0_192, %c12_193, %c0_194] : memref<16x32x32xf32, #tpu.memory_space<vmem>>, vector<16x16x32xf32>
    %150 = arith.addf %148, %149 : vector<16x16x32xf32>
    %c0_195 = arith.constant 0 : index
    %c13 = arith.constant 13 : index
    %c0_196 = arith.constant 0 : index
    %151 = vector.load %arg7[%c0_195, %c13, %c0_196] : memref<16x32x32xf32, #tpu.memory_space<vmem>>, vector<16x16x32xf32>
    %152 = arith.addf %150, %151 : vector<16x16x32xf32>
    %c0_197 = arith.constant 0 : index
    %c14 = arith.constant 14 : index
    %c0_198 = arith.constant 0 : index
    %153 = vector.load %arg7[%c0_197, %c14, %c0_198] : memref<16x32x32xf32, #tpu.memory_space<vmem>>, vector<16x16x32xf32>
    %154 = arith.addf %152, %153 : vector<16x16x32xf32>
    %c0_199 = arith.constant 0 : index
    %c15 = arith.constant 15 : index
    %c0_200 = arith.constant 0 : index
    %155 = vector.load %arg7[%c0_199, %c15, %c0_200] : memref<16x32x32xf32, #tpu.memory_space<vmem>>, vector<16x16x32xf32>
    %156 = arith.addf %154, %155 : vector<16x16x32xf32>
    %c0_201 = arith.constant 0 : index
    %c16 = arith.constant 16 : index
    %c0_202 = arith.constant 0 : index
    %157 = vector.load %arg7[%c0_201, %c16, %c0_202] : memref<16x32x32xf32, #tpu.memory_space<vmem>>, vector<16x16x32xf32>
    %158 = arith.addf %156, %157 : vector<16x16x32xf32>
    %c8_203 = arith.constant 8 : index
    %c0_204 = arith.constant 0 : index
    %c0_205 = arith.constant 0 : index
    %159 = vector.load %arg8[%c8_203, %c0_204, %c0_205] : memref<32x16x32xf32, #tpu.memory_space<vmem>>, vector<16x16x32xf32>
    tpu.vector_store %arg8[%c8_203, %c0_204, %c0_205], %158 {strides = array<i32>} : memref<32x16x32xf32, #tpu.memory_space<vmem>>, vector<16x16x32xf32>,
    %c0_206 = arith.constant 0 : index
    %c0_207 = arith.constant 0 : index
    %c0_208 = arith.constant 0 : index
    %160 = vector.load %arg8[%c0_206, %c0_207, %c0_208] : memref<32x16x32xf32, #tpu.memory_space<vmem>>, vector<16x16x32xf32>
    %c1_209 = arith.constant 1 : index
    %c0_210 = arith.constant 0 : index
    %c0_211 = arith.constant 0 : index
    %161 = vector.load %arg8[%c1_209, %c0_210, %c0_211] : memref<32x16x32xf32, #tpu.memory_space<vmem>>, vector<16x16x32xf32>
    %162 = arith.addf %160, %161 : vector<16x16x32xf32>
    %c2_212 = arith.constant 2 : index
    %c0_213 = arith.constant 0 : index
    %c0_214 = arith.constant 0 : index
    %163 = vector.load %arg8[%c2_212, %c0_213, %c0_214] : memref<32x16x32xf32, #tpu.memory_space<vmem>>, vector<16x16x32xf32>
    %164 = arith.addf %162, %163 : vector<16x16x32xf32>
    %c3_215 = arith.constant 3 : index
    %c0_216 = arith.constant 0 : index
    %c0_217 = arith.constant 0 : index
    %165 = vector.load %arg8[%c3_215, %c0_216, %c0_217] : memref<32x16x32xf32, #tpu.memory_space<vmem>>, vector<16x16x32xf32>
    %166 = arith.addf %164, %165 : vector<16x16x32xf32>
    %c4_218 = arith.constant 4 : index
    %c0_219 = arith.constant 0 : index
    %c0_220 = arith.constant 0 : index
    %167 = vector.load %arg8[%c4_218, %c0_219, %c0_220] : memref<32x16x32xf32, #tpu.memory_space<vmem>>, vector<16x16x32xf32>
    %168 = arith.addf %166, %167 : vector<16x16x32xf32>
    %c5_221 = arith.constant 5 : index
    %c0_222 = arith.constant 0 : index
    %c0_223 = arith.constant 0 : index
    %169 = vector.load %arg8[%c5_221, %c0_222, %c0_223] : memref<32x16x32xf32, #tpu.memory_space<vmem>>, vector<16x16x32xf32>
    %170 = arith.addf %168, %169 : vector<16x16x32xf32>
    %c6_224 = arith.constant 6 : index
    %c0_225 = arith.constant 0 : index
    %c0_226 = arith.constant 0 : index
    %171 = vector.load %arg8[%c6_224, %c0_225, %c0_226] : memref<32x16x32xf32, #tpu.memory_space<vmem>>, vector<16x16x32xf32>
    %172 = arith.addf %170, %171 : vector<16x16x32xf32>
    %c7_227 = arith.constant 7 : index
    %c0_228 = arith.constant 0 : index
    %c0_229 = arith.constant 0 : index
    %173 = vector.load %arg8[%c7_227, %c0_228, %c0_229] : memref<32x16x32xf32, #tpu.memory_space<vmem>>, vector<16x16x32xf32>
    %174 = arith.addf %172, %173 : vector<16x16x32xf32>
    %c8_230 = arith.constant 8 : index
    %c0_231 = arith.constant 0 : index
    %c0_232 = arith.constant 0 : index
    %175 = vector.load %arg8[%c8_230, %c0_231, %c0_232] : memref<32x16x32xf32, #tpu.memory_space<vmem>>, vector<16x16x32xf32>
    %176 = arith.addf %174, %175 : vector<16x16x32xf32>
    %c9_233 = arith.constant 9 : index
    %c0_234 = arith.constant 0 : index
    %c0_235 = arith.constant 0 : index
    %177 = vector.load %arg8[%c9_233, %c0_234, %c0_235] : memref<32x16x32xf32, #tpu.memory_space<vmem>>, vector<16x16x32xf32>
    %178 = arith.addf %176, %177 : vector<16x16x32xf32>
    %c10_236 = arith.constant 10 : index
    %c0_237 = arith.constant 0 : index
    %c0_238 = arith.constant 0 : index
    %179 = vector.load %arg8[%c10_236, %c0_237, %c0_238] : memref<32x16x32xf32, #tpu.memory_space<vmem>>, vector<16x16x32xf32>
    %180 = arith.addf %178, %179 : vector<16x16x32xf32>
    %c11_239 = arith.constant 11 : index
    %c0_240 = arith.constant 0 : index
    %c0_241 = arith.constant 0 : index
    %181 = vector.load %arg8[%c11_239, %c0_240, %c0_241] : memref<32x16x32xf32, #tpu.memory_space<vmem>>, vector<16x16x32xf32>
    %182 = arith.addf %180, %181 : vector<16x16x32xf32>
    %c12_242 = arith.constant 12 : index
    %c0_243 = arith.constant 0 : index
    %c0_244 = arith.constant 0 : index
    %183 = vector.load %arg8[%c12_242, %c0_243, %c0_244] : memref<32x16x32xf32, #tpu.memory_space<vmem>>, vector<16x16x32xf32>
    %184 = arith.addf %182, %183 : vector<16x16x32xf32>
    %c13_245 = arith.constant 13 : index
    %c0_246 = arith.constant 0 : index
    %c0_247 = arith.constant 0 : index
    %185 = vector.load %arg8[%c13_245, %c0_246, %c0_247] : memref<32x16x32xf32, #tpu.memory_space<vmem>>, vector<16x16x32xf32>
    %186 = arith.addf %184, %185 : vector<16x16x32xf32>
    %c14_248 = arith.constant 14 : index
    %c0_249 = arith.constant 0 : index
    %c0_250 = arith.constant 0 : index
    %187 = vector.load %arg8[%c14_248, %c0_249, %c0_250] : memref<32x16x32xf32, #tpu.memory_space<vmem>>, vector<16x16x32xf32>
    %188 = arith.addf %186, %187 : vector<16x16x32xf32>
    %c15_251 = arith.constant 15 : index
    %c0_252 = arith.constant 0 : index
    %c0_253 = arith.constant 0 : index
    %189 = vector.load %arg8[%c15_251, %c0_252, %c0_253] : memref<32x16x32xf32, #tpu.memory_space<vmem>>, vector<16x16x32xf32>
    %190 = arith.addf %188, %189 : vector<16x16x32xf32>
    %c16_254 = arith.constant 16 : index
    %c0_255 = arith.constant 0 : index
    %c0_256 = arith.constant 0 : index
    %191 = vector.load %arg8[%c16_254, %c0_255, %c0_256] : memref<32x16x32xf32, #tpu.memory_space<vmem>>, vector<16x16x32xf32>
    %192 = arith.addf %190, %191 : vector<16x16x32xf32>
    %193 = vector.shape_cast %192 : vector<16x16x32xf32> to vector<256x32xf32>
    %cst_257 = arith.constant 0.00346020772 : f32
    %194 = vector.broadcast %cst_257 : f32 to vector<256x32xf32>
    %195 = arith.mulf %193, %194 : vector<256x32xf32>
    %c2_258 = arith.constant 2 : index
    %c0_259 = arith.constant 0 : index
    %c0_260 = arith.constant 0 : index
    %196 = vector.load %arg3[%c2_258, %c0_259, %c0_260] : memref<4x1x32xf32, #tpu.memory_space<vmem>>, vector<1x1x32xf32>
    %197 = vector.shape_cast %196 : vector<1x1x32xf32> to vector<1x32xf32>
    %198 = vector.broadcast %197 : vector<1x32xf32> to vector<256x32xf32>
    %199 = arith.addf %195, %198 : vector<256x32xf32>
    %cst_261 = arith.constant 0.000000e+00 : f32
    %200 = vector.broadcast %cst_261 : f32 to vector<256x32xf32>
    %201 = arith.maximumf %199, %200 : vector<256x32xf32>
    %c0_262 = arith.constant 0 : index
    %c0_263 = arith.constant 0 : index
    %202 = vector.load %arg9[%c0_262, %c0_263] : memref<256x128xf32, #tpu.memory_space<vmem>>, vector<256x128xf32>
    %203 = arith.truncf %201 : vector<256x32xf32> to vector<256x32xbf16>
    %c2_264 = arith.constant 2 : index
    %c0_265 = arith.constant 0 : index
    %c0_266 = arith.constant 0 : index
    %204 = vector.load %arg4[%c2_264, %c0_265, %c0_266] : memref<4x32x128xbf16, #tpu.memory_space<vmem>>, vector<1x32x128xbf16>
    %205 = vector.shape_cast %204 : vector<1x32x128xbf16> to vector<32x128xbf16>
    %cst_267 = arith.constant dense<0.000000e+00> : vector<256x128xf32>
    %206 = tpu.matmul %203, %205, %cst_267 {dimension_numbers = #tpu.dot_dimension_numbers<[1], [0], [0], [1], [0, 0, 1, 1], [], []>} : vector<256x32xbf16>, vector<32x128xbf16>, vector<256x128xf32> -> vector<256x128xf32>
    %207 = arith.addf %202, %206 : vector<256x128xf32>
    %c0_268 = arith.constant 0 : index
    %c0_269 = arith.constant 0 : index
    %208 = vector.load %arg9[%c0_268, %c0_269] : memref<256x128xf32, #tpu.memory_space<vmem>>, vector<256x128xf32>
    tpu.vector_store %arg9[%c0_268, %c0_269], %207 {strides = array<i32>} : memref<256x128xf32, #tpu.memory_space<vmem>>, vector<256x128xf32>,
    %c0_270 = arith.constant 0 : index
    %c0_271 = arith.constant 0 : index
    %209 = vector.load %arg9[%c0_270, %c0_271] : memref<256x128xf32, #tpu.memory_space<vmem>>, vector<256x128xf32>
    %c0_272 = arith.constant 0 : index
    %c0_273 = arith.constant 0 : index
    %210 = vector.load %arg5[%c0_272, %c0_273] : memref<1x128xf32, #tpu.memory_space<vmem>>, vector<1x128xf32>
    %211 = vector.broadcast %210 : vector<1x128xf32> to vector<256x128xf32>
    %212 = arith.addf %209, %211 : vector<256x128xf32>
    %cst_274 = arith.constant 0.000000e+00 : f32
    %213 = vector.broadcast %cst_274 : f32 to vector<256x128xf32>
    %214 = arith.maximumf %212, %213 : vector<256x128xf32>
    %215 = vector.shape_cast %214 : vector<256x128xf32> to vector<16x16x128xf32>
    %c0_275 = arith.constant 0 : index
    %c0_276 = arith.constant 0 : index
    %c0_277 = arith.constant 0 : index
    %c0_278 = arith.constant 0 : index
    %216 = vector.load %arg6[%c0_275, %c0_276, %c0_277, %c0_278] : memref<1x16x16x128xf32, #tpu.memory_space<vmem>>, vector<1x16x16x128xf32>
    %217 = vector.shape_cast %216 : vector<1x16x16x128xf32> to vector<16x16x128xf32>
    %218 = vector.shape_cast %215 : vector<16x16x128xf32> to vector<1x16x16x128xf32>
    tpu.vector_store %arg6[%c0_275, %c0_276, %c0_277, %c0_278], %218 {strides = array<i32>} : memref<1x16x16x128xf32, #tpu.memory_space<vmem>>, vector<1x16x16x128xf32>,
    return
  }
  func.func @transform_0(%arg0: i32) -> (i32, i32, i32, i32) {
    %c0_i32 = arith.constant 0 : i32
    %c0_i32_0 = arith.constant 0 : i32
    %c0_i32_1 = arith.constant 0 : i32
    %c0_i32_2 = arith.constant 0 : i32
    return %arg0, %c0_i32, %c0_i32_0, %c0_i32_1 : i32, i32, i32, i32
  }
  func.func @transform_1(%arg0: i32) -> (i32, i32, i32) {
    %c0_i32 = arith.constant 0 : i32
    %c0_i32_0 = arith.constant 0 : i32
    %c0_i32_1 = arith.constant 0 : i32
    %c0_i32_2 = arith.constant 0 : i32
    return %c0_i32, %c0_i32_0, %c0_i32_1 : i32, i32, i32
  }
  func.func @transform_2(%arg0: i32) -> (i32, i32, i32) {
    %c0_i32 = arith.constant 0 : i32
    %c0_i32_0 = arith.constant 0 : i32
    %c0_i32_1 = arith.constant 0 : i32
    %c0_i32_2 = arith.constant 0 : i32
    return %c0_i32, %c0_i32_0, %c0_i32_1 : i32, i32, i32
  }
  func.func @transform_3(%arg0: i32) -> (i32, i32, i32) {
    %c0_i32 = arith.constant 0 : i32
    %c0_i32_0 = arith.constant 0 : i32
    %c0_i32_1 = arith.constant 0 : i32
    %c0_i32_2 = arith.constant 0 : i32
    return %c0_i32, %c0_i32_0, %c0_i32_1 : i32, i32, i32
  }
  func.func @transform_4(%arg0: i32) -> (i32, i32) {
    %c0_i32 = arith.constant 0 : i32
    %c0_i32_0 = arith.constant 0 : i32
    %c0_i32_1 = arith.constant 0 : i32
    return %c0_i32, %c0_i32_0 : i32, i32
  }
  func.func @transform_5(%arg0: i32) -> (i32, i32, i32, i32) {
    %c0_i32 = arith.constant 0 : i32
    %c0_i32_0 = arith.constant 0 : i32
    %c0_i32_1 = arith.constant 0 : i32
    %c0_i32_2 = arith.constant 0 : i32
    return %arg0, %c0_i32, %c0_i32_0, %c0_i32_1 : i32, i32, i32, i32
  }
}

</mosaic_0001>

<llo_original>
// kernel: tpu_custom_call.1
$region0: #{tpu_custom_call.1}
  #allocation0 [shape = 'u32[]', space=smem, size = 0x4, offset = 0x4, fixed_abs, tag = 'smem constant byte address 0x4 - core index']
  #allocation1 [shape = 'u32[144,128]{1,0:T(1,128)}', space=vmem, size = 0x12000, scoped, tag = 'internal scratch']
  #allocation2 [shape = 'f32[16,32,32]{2,1,0:T(8,128)}', space=vmem, size = 0x40000, scoped, tag = 'scratch operand']
  #allocation3 [shape = 'f32[32,16,32]{2,1,0:T(8,128)}', space=vmem, size = 0x40000, scoped, tag = 'scratch operand']
  #allocation4 [shape = 'f32[256,128]{1,0:T(8,128)}', space=vmem, size = 0x20000, scoped, tag = 'scratch operand']
  %s0 = inlined_call_operand.vmem [shape: bf16[2,16,16,128], index: 0, kind: input, shape index: {}]
  %s1 = inlined_call_operand.vmem [shape: bf16[4,128,32], index: 1, kind: input, shape index: {}]
  %s2 = inlined_call_operand.hbm [shape: f32[4,1,32], index: 2, kind: input, shape index: {}]
  %s3 = inlined_call_operand.vmem [shape: bf16[4,32,128], index: 3, kind: input, shape index: {}]
  %s4 = inlined_call_operand.vmem [shape: f32[1,128], index: 4, kind: input, shape index: {}]
  %s5 = inlined_call_operand.hbm [shape: f32[2,16,16,128], index: 5, kind: output, shape index: {}]
  %s6 = sld [smem:[#allocation0]]
  $region57: #{tpu_custom_call.1} parent=0
    _
  %s8 = ssub.s32 1, %s6
  %s9 = scalar_select 0, %s8, %s6
  $region1: #{tpu_custom_call.1} parent=0
    #allocation5 [shape = 'u8[2048]{0}', space=vmem, size = 0x800, scoped, tag = 'input window, operand 2, single buffered']
    #allocation6 [shape = 's32[2]{0}', space=sflag, size = 0x8, scoped, tag = 'scoped memory for tpu_custom_call.1']
    #allocation7 [shape = 's32[2]{0}', space=sflag, size = 0x8, scoped, tag = 'scoped memory for tpu_custom_call.1']
    #allocation8 [shape = 'u8[262144]{0}', space=vmem, size = 0x40000, scoped, tag = 'output window, operand 0']
    %10 = vsyncpa [#allocation6], 0
    %11 = vsyncpa [#allocation7], 0
    %s12 = scalar_lea.sflag [#allocation7], 1
    %13 = vsyncpa %s12, 0
    loop: start=0, step=1, limit=4
    $region2: #{tpu_custom_call.1} parent=1 // loop_pre_header
      _
    $region3: #{tpu_custom_call.1} parent=1 // loop_header
      %s15 = sphi 0, %s19
      %p16 = scmp.ge.s32.totalorder %s15, 4
      %s25 = sphi 0, %s27
      %s28 = sphi 0, %s25
      %s29 = sphi 0, %s28
      %s45 = sphi 0, %s29
      %s49 = sphi 0, %s49
      %s51 = sphi 0, %s49
      %s52 = sphi 0, %s51
      %s66 = sphi 0, %s52
      %s70 = sphi 0, %s70
      %s72 = sphi 0, %s70
      %s73 = sphi 0, %s72
      %s87 = sphi 0, %s73
      %s91 = sphi 0, %s91
      %s93 = sphi 0, %s91
      %s94 = sphi 0, %s93
      %s108 = sphi 0, %s94
      %s112 = sphi 0, %s112
      %s114 = sphi 0, %s112
      %s115 = sphi 0, %s114
      %s129 = sphi 0, %s115
      %s135 = sphi 0, %s137
      %s138 = sphi 0, %s135
      %s139 = sphi 0, %s138
      %s155 = sphi 0, %s139
    $region4: #{tpu_custom_call.1} parent=1 // loop_header_branch
      %18 = sbr.rel (%p16) target = $region8
    $region5: #{tpu_custom_call.1} parent=1 // loop_body
      %s20 = ssub.s32 %s15, 1
      %s21 = ssub.s32 %s15, 2
      %s22 = sadd.s32 %s15, 1
      %s23 = ssub.s32 %s15, %s22
      %p24 = scmp.eq.s32.totalorder %s23, 0
      %s26 = sadd.s32 %s25, 1
      %s27 = scalar_select %p24, %s25, %s26
      %p30 = pneg %p24
      %p31 = scmp.eq.s32.totalorder %s15, 1
      %p32 = por %p30, %p31
      %p33 = scmp.ne.s32.totalorder %s25, %s28
      %p34 = scmp.eq.s32.totalorder %s15, 0
      %p35 = por %p33, %p34
      %p36 = scmp.ne.s32.totalorder %s25, %s28
      %p37 = scmp.eq.s32.totalorder %s20, 1
      %p38 = por %p36, %p37
      %p39 = scmp.ne.s32.totalorder %s28, %s29
      %p40 = scmp.eq.s32.totalorder %s20, 0
      %p41 = por %p39, %p40
      %p42 = scmp.ne.s32.totalorder %s28, %s29
      %p43 = scmp.eq.s32.totalorder %s21, 1
      %p44 = por %p42, %p43
      %p46 = scmp.ne.s32.totalorder %s29, %s45
      %p47 = scmp.eq.s32.totalorder %s21, 0
      %p48 = por %p46, %p47
      %s50 = sadd.s32 %s49, 1
      %p53 = scmp.eq.s32.totalorder %s15, 1
      %p54 = scmp.ne.s32.totalorder %s49, %s51
      %p55 = scmp.eq.s32.totalorder %s15, 0
      %p56 = por %p54, %p55
      %p57 = scmp.ne.s32.totalorder %s49, %s51
      %p58 = scmp.eq.s32.totalorder %s20, 1
      %p59 = por %p57, %p58
      %p60 = scmp.ne.s32.totalorder %s51, %s52
      %p61 = scmp.eq.s32.totalorder %s20, 0
      %p62 = por %p60, %p61
      %p63 = scmp.ne.s32.totalorder %s51, %s52
      %p64 = scmp.eq.s32.totalorder %s21, 1
      %p65 = por %p63, %p64
      %p67 = scmp.ne.s32.totalorder %s52, %s66
      %p68 = scmp.eq.s32.totalorder %s21, 0
      %p69 = por %p67, %p68
      %s71 = sadd.s32 %s70, 1
      %p74 = scmp.eq.s32.totalorder %s15, 1
      %p75 = scmp.ne.s32.totalorder %s70, %s72
      %p76 = scmp.eq.s32.totalorder %s15, 0
      %p77 = por %p75, %p76
      %p78 = scmp.ne.s32.totalorder %s70, %s72
      %p79 = scmp.eq.s32.totalorder %s20, 1
      %p80 = por %p78, %p79
      %p81 = scmp.ne.s32.totalorder %s72, %s73
      %p82 = scmp.eq.s32.totalorder %s20, 0
      %p83 = por %p81, %p82
      %p84 = scmp.ne.s32.totalorder %s72, %s73
      %p85 = scmp.eq.s32.totalorder %s21, 1
      %p86 = por %p84, %p85
      %p88 = scmp.ne.s32.totalorder %s73, %s87
      %p89 = scmp.eq.s32.totalorder %s21, 0
      %p90 = por %p88, %p89
      %s92 = sadd.s32 %s91, 1
      %p95 = scmp.eq.s32.totalorder %s15, 1
      %p96 = scmp.ne.s32.totalorder %s91, %s93
      %p97 = scmp.eq.s32.totalorder %s15, 0
      %p98 = por %p96, %p97
      %p99 = scmp.ne.s32.totalorder %s91, %s93
      %p100 = scmp.eq.s32.totalorder %s20, 1
      %p101 = por %p99, %p100
      %p102 = scmp.ne.s32.totalorder %s93, %s94
      %p103 = scmp.eq.s32.totalorder %s20, 0
      %p104 = por %p102, %p103
      %p105 = scmp.ne.s32.totalorder %s93, %s94
      %p106 = scmp.eq.s32.totalorder %s21, 1
      %p107 = por %p105, %p106
      %p109 = scmp.ne.s32.totalorder %s94, %s108
      %p110 = scmp.eq.s32.totalorder %s21, 0
      %p111 = por %p109, %p110
      %s113 = sadd.s32 %s112, 1
      %p116 = scmp.eq.s32.totalorder %s15, 1
      %p117 = scmp.ne.s32.totalorder %s112, %s114
      %p118 = scmp.eq.s32.totalorder %s15, 0
      %p119 = por %p117, %p118
      %p120 = scmp.ne.s32.totalorder %s112, %s114
      %p121 = scmp.eq.s32.totalorder %s20, 1
      %p122 = por %p120, %p121
      %p123 = scmp.ne.s32.totalorder %s114, %s115
      %p124 = scmp.eq.s32.totalorder %s20, 0
      %p125 = por %p123, %p124
      %p126 = scmp.ne.s32.totalorder %s114, %s115
      %p127 = scmp.eq.s32.totalorder %s21, 1
      %p128 = por %p126, %p127
      %p130 = scmp.ne.s32.totalorder %s115, %s129
      %p131 = scmp.eq.s32.totalorder %s21, 0
      %p132 = por %p130, %p131
      %s133 = ssub.s32 %s15, %s22
      %p134 = scmp.eq.s32.totalorder %s133, 0
      %s136 = sadd.s32 %s135, 1
      %s137 = scalar_select %p134, %s135, %s136
      %p140 = pneg %p134
      %p141 = scmp.eq.s32.totalorder %s15, 1
      %p142 = por %p140, %p141
      %p143 = scmp.ne.s32.totalorder %s135, %s138
      %p144 = scmp.eq.s32.totalorder %s15, 0
      %p145 = por %p143, %p144
      %p146 = scmp.ne.s32.totalorder %s135, %s138
      %p147 = scmp.eq.s32.totalorder %s20, 1
      %p148 = por %p146, %p147
      %p149 = scmp.ne.s32.totalorder %s138, %s139
      %p150 = scmp.eq.s32.totalorder %s20, 0
      %p151 = por %p149, %p150
      %p152 = scmp.ne.s32.totalorder %s138, %s139
      %p153 = scmp.eq.s32.totalorder %s21, 1
      %p154 = por %p152, %p153
      %p156 = scmp.ne.s32.totalorder %s139, %s155
      %p157 = scmp.eq.s32.totalorder %s21, 0
      %p158 = por %p156, %p157
      %p159 = scmp.le.s32.totalorder 1, %s15
      %p160 = scmp.lt.s32.totalorder %s15, 3
      %p161 = pnand %p159, %p160
      %p162 = pneg %p161
      // Predicated region
      $region9: #{tpu_custom_call.1} parent=5 // pred_check
        _
      $region10: #{tpu_custom_call.1} parent=5 // pred_check_branch
        %164 = sbr.rel (%p161) target = $region12
      $region11: #{tpu_custom_call.1} parent=5 // pred_region
        %s165 = ssub.s32 %s15, 1
        // Predicated region
        $region13: #{tpu_custom_call.1} parent=11 // pred_check
          %p166 = pneg %p62
        $region14: #{tpu_custom_call.1} parent=11 // pred_check_branch
          %168 = sbr.rel (%p166) target = $region16
        $region15: #{tpu_custom_call.1} parent=11 // pred_region
          _
        $region16: #{tpu_custom_call.1} parent=11 // pred_fallthru
          _
        // Predicated region
        $region17: #{tpu_custom_call.1} parent=11 // pred_check
          %p169 = pneg %p83
        $region18: #{tpu_custom_call.1} parent=11 // pred_check_branch
          %171 = sbr.rel (%p169) target = $region20
        $region19: #{tpu_custom_call.1} parent=11 // pred_region
          %s173 = ssub.s32 64, 64
          %174 = vsyncadd [#allocation6], %s173
          %s175 = sshll.u32 [#allocation5], 4
          %s176 = int_to_ptr.vmem [resolvable:$true] %s175
          %181 = dma.hbm_to_vmem [thread:$0]  %s2, 64, %s176, [#allocation6], 16, 16, 1
        $region20: #{tpu_custom_call.1} parent=11 // pred_fallthru
          _
        // Predicated region
        $region21: #{tpu_custom_call.1} parent=11 // pred_check
          %p182 = pneg %p104
        $region22: #{tpu_custom_call.1} parent=11 // pred_check_branch
          %184 = sbr.rel (%p182) target = $region24
        $region23: #{tpu_custom_call.1} parent=11 // pred_region
          _
        $region24: #{tpu_custom_call.1} parent=11 // pred_fallthru
          _
        // Predicated region
        $region25: #{tpu_custom_call.1} parent=11 // pred_check
          %p185 = pneg %p125
        $region26: #{tpu_custom_call.1} parent=11 // pred_check_branch
          %187 = sbr.rel (%p185) target = $region28
        $region27: #{tpu_custom_call.1} parent=11 // pred_region
          _
        $region28: #{tpu_custom_call.1} parent=11 // pred_fallthru
          _
      $region12: #{tpu_custom_call.1} parent=5 // pred_fallthru
        _
      %p188 = scmp.lt.s32.totalorder %s15, 2
      // Predicated region
      $region29: #{tpu_custom_call.1} parent=5 // pred_check
        %p189 = pneg %p188
      $region30: #{tpu_custom_call.1} parent=5 // pred_check_branch
        %191 = sbr.rel (%p189) target = $region32
      $region31: #{tpu_custom_call.1} parent=5 // pred_region
        // Predicated region
        $region33: #{tpu_custom_call.1} parent=31 // pred_check
          %p192 = pneg %p35
        $region34: #{tpu_custom_call.1} parent=31 // pred_check_branch
          %194 = sbr.rel (%p192) target = $region36
        $region35: #{tpu_custom_call.1} parent=31 // pred_region
          %p195 = scmp.lt.s32.totalorder %s15, 1
          %s196 = scalar_select %p195, %s15, 1
          %s197 = smul.addr %s196, 32
          %s198 = smul.addr %s197, 4
          %s199 = scalar_lea.vmem %s0, %s198
        $region36: #{tpu_custom_call.1} parent=31 // pred_fallthru
          _
      $region32: #{tpu_custom_call.1} parent=5 // pred_fallthru
        _
      %p200 = scmp.le.s32.totalorder 1, %s15
      %p201 = scmp.lt.s32.totalorder %s15, 3
      %p202 = pnand %p200, %p201
      %p203 = pneg %p202
      // Predicated region
      $region37: #{tpu_custom_call.1} parent=5 // pred_check
        _
      $region38: #{tpu_custom_call.1} parent=5 // pred_check_branch
        %205 = sbr.rel (%p202) target = $region40
      $region39: #{tpu_custom_call.1} parent=5 // pred_region
        %s206 = ssub.s32 %s15, 1
        // Predicated region
        $region41: #{tpu_custom_call.1} parent=39 // pred_check
          %p207 = pneg %p83
        $region42: #{tpu_custom_call.1} parent=39 // pred_check_branch
          %209 = sbr.rel (%p207) target = $region44
        $region43: #{tpu_custom_call.1} parent=39 // pred_region
          %210 = dma.done [#allocation6], 64
        $region44: #{tpu_custom_call.1} parent=39 // pred_fallthru
          _
        %p211 = scmp.lt.s32.totalorder %s20, 1
        %s212 = scalar_select %p211, %s20, 1
        %s213 = smul.addr %s212, 32
        %s214 = smul.addr %s213, 4
        %s215 = scalar_lea.vmem %s0, %s214
        %p216 = pneg %p41
        %p217 = pneg %p38
        %p218 = pneg %p62
        %p219 = pneg %p59
        %p220 = pneg %p83
        %p221 = pneg %p80
        %p222 = pneg %p104
        %p223 = pneg %p101
        %p224 = pneg %p125
        %p225 = pneg %p122
        %p226 = pneg %p151
        %p227 = pneg %p148
        %s228 = sand.u32 %s138, 1
        %s229 = scalar_lea.sflag [#allocation7], %s228
        %s230 = sand.u32 %s138, 1
        %s231 = smul.addr %s230, 256
        %s232 = scalar_lea.vmem [#allocation8], %s231
        %p233 = scmp.lt.s32.totalorder %s20, 1
        %s234 = scalar_select %p233, %s20, 1
        %s235 = smul.addr %s234, 32
        %s236 = smul.addr %s235, 4
        %s237 = scalar_lea.vmem %s0, %s236
        %vm239 = vcmask 261120
        %240 = vst.msk [vmem:[#allocation2] sm:$0xff] %vm239, 0.0
        %241 = vst.msk [vmem:[#allocation2 + $0x20] sm:$0xff] %vm239, 0.0
        %242 = vst.msk [vmem:[#allocation2 + $0x40] sm:$0xff] %vm239, 0.0
        %243 = vst.msk [vmem:[#allocation2 + $0x60] sm:$0xff] %vm239, 0.0
        %244 = vst.msk [vmem:[#allocation2 + $0x80] sm:$0xff] %vm239, 0.0
        %245 = vst.msk [vmem:[#allocation2 + $0xa0] sm:$0xff] %vm239, 0.0
        %246 = vst.msk [vmem:[#allocation2 + $0xc0] sm:$0xff] %vm239, 0.0
        %247 = vst.msk [vmem:[#allocation2 + $0xe0] sm:$0xff] %vm239, 0.0
        %248 = vst.msk [vmem:[#allocation2 + $0x100] sm:$0xff] %vm239, 0.0
        %249 = vst.msk [vmem:[#allocation2 + $0x120] sm:$0xff] %vm239, 0.0
        %250 = vst.msk [vmem:[#allocation2 + $0x140] sm:$0xff] %vm239, 0.0
        %251 = vst.msk [vmem:[#allocation2 + $0x160] sm:$0xff] %vm239, 0.0
        %252 = vst.msk [vmem:[#allocation2 + $0x180] sm:$0xff] %vm239, 0.0
        %253 = vst.msk [vmem:[#allocation2 + $0x1a0] sm:$0xff] %vm239, 0.0
        %254 = vst.msk [vmem:[#allocation2 + $0x1c0] sm:$0xff] %vm239, 0.0
        %255 = vst.msk [vmem:[#allocation2 + $0x1e0] sm:$0xff] %vm239, 0.0
        %256 = vst.msk [vmem:[#allocation2 + $0x18] sm:$0xff] %vm239, 0.0
        %257 = vst.msk [vmem:[#allocation2 + $0x38] sm:$0xff] %vm239, 0.0
        %258 = vst.msk [vmem:[#allocation2 + $0x58] sm:$0xff] %vm239, 0.0
        %259 = vst.msk [vmem:[#allocation2 + $0x78] sm:$0xff] %vm239, 0.0
        %260 = vst.msk [vmem:[#allocation2 + $0x98] sm:$0xff] %vm239, 0.0
        %261 = vst.msk [vmem:[#allocation2 + $0xb8] sm:$0xff] %vm239, 0.0
        %262 = vst.msk [vmem:[#allocation2 + $0xd8] sm:$0xff] %vm239, 0.0
        %263 = vst.msk [vmem:[#allocation2 + $0xf8] sm:$0xff] %vm239, 0.0
        %264 = vst.msk [vmem:[#allocation2 + $0x118] sm:$0xff] %vm239, 0.0
        %265 = vst.msk [vmem:[#allocation2 + $0x138] sm:$0xff] %vm239, 0.0
        %266 = vst.msk [vmem:[#allocation2 + $0x158] sm:$0xff] %vm239, 0.0
        %267 = vst.msk [vmem:[#allocation2 + $0x178] sm:$0xff] %vm239, 0.0
        %268 = vst.msk [vmem:[#allocation2 + $0x198] sm:$0xff] %vm239, 0.0
        %269 = vst.msk [vmem:[#allocation2 + $0x1b8] sm:$0xff] %vm239, 0.0
        %270 = vst.msk [vmem:[#allocation2 + $0x1d8] sm:$0xff] %vm239, 0.0
        %271 = vst.msk [vmem:[#allocation2 + $0x1f8] sm:$0xff] %vm239, 0.0
        %272 = vst.msk [vmem:[#allocation3] sm:$0xff] %vm239, 0.0
        %273 = vst.msk [vmem:[#allocation3 + $0x8] sm:$0xff] %vm239, 0.0
        %274 = vst.msk [vmem:[#allocation3 + $0x10] sm:$0xff] %vm239, 0.0
        %275 = vst.msk [vmem:[#allocation3 + $0x18] sm:$0xff] %vm239, 0.0
        %276 = vst.msk [vmem:[#allocation3 + $0x20] sm:$0xff] %vm239, 0.0
        %277 = vst.msk [vmem:[#allocation3 + $0x28] sm:$0xff] %vm239, 0.0
        %278 = vst.msk [vmem:[#allocation3 + $0x30] sm:$0xff] %vm239, 0.0
        %279 = vst.msk [vmem:[#allocation3 + $0x38] sm:$0xff] %vm239, 0.0
        %280 = vst.msk [vmem:[#allocation3 + $0x40] sm:$0xff] %vm239, 0.0
        %281 = vst.msk [vmem:[#allocation3 + $0x48] sm:$0xff] %vm239, 0.0
        %282 = vst.msk [vmem:[#allocation3 + $0x50] sm:$0xff] %vm239, 0.0
        %283 = vst.msk [vmem:[#allocation3 + $0x58] sm:$0xff] %vm239, 0.0
        %284 = vst.msk [vmem:[#allocation3 + $0x60] sm:$0xff] %vm239, 0.0
        %285 = vst.msk [vmem:[#allocation3 + $0x68] sm:$0xff] %vm239, 0.0
        %286 = vst.msk [vmem:[#allocation3 + $0x70] sm:$0xff] %vm239, 0.0
        %287 = vst.msk [vmem:[#allocation3 + $0x78] sm:$0xff] %vm239, 0.0
        %s288 = scalar_lea.vmem [#allocation3], 384
        %289 = vst.msk [vmem:[%s288] sm:$0xff] %vm239, 0.0
        %290 = vst.msk [vmem:[%s288 + $0x8] sm:$0xff] %vm239, 0.0
        %291 = vst.msk [vmem:[%s288 + $0x10] sm:$0xff] %vm239, 0.0
        %292 = vst.msk [vmem:[%s288 + $0x18] sm:$0xff] %vm239, 0.0
        %293 = vst.msk [vmem:[%s288 + $0x20] sm:$0xff] %vm239, 0.0
        %294 = vst.msk [vmem:[%s288 + $0x28] sm:$0xff] %vm239, 0.0
        %295 = vst.msk [vmem:[%s288 + $0x30] sm:$0xff] %vm239, 0.0
        %296 = vst.msk [vmem:[%s288 + $0x38] sm:$0xff] %vm239, 0.0
        %297 = vst.msk [vmem:[%s288 + $0x40] sm:$0xff] %vm239, 0.0
        %298 = vst.msk [vmem:[%s288 + $0x48] sm:$0xff] %vm239, 0.0
        %299 = vst.msk [vmem:[%s288 + $0x50] sm:$0xff] %vm239, 0.0
        %300 = vst.msk [vmem:[%s288 + $0x58] sm:$0xff] %vm239, 0.0
        %301 = vst.msk [vmem:[%s288 + $0x60] sm:$0xff] %vm239, 0.0
        %302 = vst.msk [vmem:[%s288 + $0x68] sm:$0xff] %vm239, 0.0
        %303 = vst.msk [vmem:[%s288 + $0x70] sm:$0xff] %vm239, 0.0
        %304 = vst.msk [vmem:[%s288 + $0x78] sm:$0xff] %vm239, 0.0
        %v305 = vld [vmem:[%s237] sm:$0xf]
        %v306 = vld [vmem:[%s237 + $0x4] sm:$0xf]
        %v307 = vld [vmem:[%s237 + $0x8] sm:$0xf]
        %v308 = vld [vmem:[%s237 + $0xc] sm:$0xf]
        %v309 = vld [vmem:[%s237 + $0x10] sm:$0xf]
        %v310 = vld [vmem:[%s237 + $0x14] sm:$0xf]
        %v311 = vld [vmem:[%s237 + $0x18] sm:$0xf]
        %v312 = vld [vmem:[%s237 + $0x1c] sm:$0xf]
        %v313 = vld [vmem:[%s237 + $0x20] sm:$0xf]
        %v314 = vld [vmem:[%s237 + $0x24] sm:$0xf]
        %v315 = vld [vmem:[%s237 + $0x28] sm:$0xf]
        %v316 = vld [vmem:[%s237 + $0x2c] sm:$0xf]
        %v317 = vld [vmem:[%s237 + $0x30] sm:$0xf]
        %v318 = vld [vmem:[%s237 + $0x34] sm:$0xf]
        %v319 = vld [vmem:[%s237 + $0x38] sm:$0xf]
        %v320 = vld [vmem:[%s237 + $0x3c] sm:$0xf]
        %v321 = vld [vmem:[%s237 + $0x40] sm:$0xf]
        %v322 = vld [vmem:[%s237 + $0x44] sm:$0xf]
        %v323 = vld [vmem:[%s237 + $0x48] sm:$0xf]
        %v324 = vld [vmem:[%s237 + $0x4c] sm:$0xf]
        %v325 = vld [vmem:[%s237 + $0x50] sm:$0xf]
        %v326 = vld [vmem:[%s237 + $0x54] sm:$0xf]
        %v327 = vld [vmem:[%s237 + $0x58] sm:$0xf]
        %v328 = vld [vmem:[%s237 + $0x5c] sm:$0xf]
        %v329 = vld [vmem:[%s237 + $0x60] sm:$0xf]
        %v330 = vld [vmem:[%s237 + $0x64] sm:$0xf]
        %v331 = vld [vmem:[%s237 + $0x68] sm:$0xf]
        %v332 = vld [vmem:[%s237 + $0x6c] sm:$0xf]
        %v333 = vld [vmem:[%s237 + $0x70] sm:$0xf]
        %v334 = vld [vmem:[%s237 + $0x74] sm:$0xf]
        %v335 = vld [vmem:[%s237 + $0x78] sm:$0xf]
        %v336 = vld [vmem:[%s237 + $0x7c] sm:$0xf]
        %s337 = scalar_lea.vmem %s1, 192
        %v338 = vld [vmem:[%s337] sm:$0xf]
        %v339 = vld [vmem:[%s337 + $0x4] sm:$0xf]
        %v340 = vld [vmem:[%s337 + $0x8] sm:$0xf]
        %v341 = vld [vmem:[%s337 + $0xc] sm:$0xf]
        %v342 = vld [vmem:[%s337 + $0x10] sm:$0xf]
        %v343 = vld [vmem:[%s337 + $0x14] sm:$0xf]
        %v344 = vld [vmem:[%s337 + $0x18] sm:$0xf]
        %v345 = vld [vmem:[%s337 + $0x1c] sm:$0xf]
        %v346 = vld [vmem:[%s337 + $0x20] sm:$0xf]
        %v347 = vld [vmem:[%s337 + $0x24] sm:$0xf]
        %v348 = vld [vmem:[%s337 + $0x28] sm:$0xf]
        %v349 = vld [vmem:[%s337 + $0x2c] sm:$0xf]
        %v350 = vld [vmem:[%s337 + $0x30] sm:$0xf]
        %v351 = vld [vmem:[%s337 + $0x34] sm:$0xf]
        %v352 = vld [vmem:[%s337 + $0x38] sm:$0xf]
        %v353 = vld [vmem:[%s337 + $0x3c] sm:$0xf]
        %s354 = scalar_lea.vmem [#allocation5], 3
        %v355 = vld [vmem:[%s354] sm:$0x1]
        %v357 = vlaneseq
        %v358 = vshrl.u32 %v357, 7
        %v359 = vsub.s32 0, %v358
        %v360 = vrot.slane %v355, %v359
        %v394 = vunpack.c.l.b16 %v305
        %v395 = vunpack.c.l.b16 %v306
        %v396 = vunpack.c.l.b16 %v307
        %v397 = vunpack.c.l.b16 %v308
        %v398 = vunpack.c.l.b16 %v309
        %v399 = vunpack.c.l.b16 %v310
        %v400 = vunpack.c.l.b16 %v311
        %v401 = vunpack.c.l.b16 %v312
        %v402 = vunpack.c.l.b16 %v313
        %v403 = vunpack.c.l.b16 %v314
        %v404 = vunpack.c.l.b16 %v315
        %v405 = vunpack.c.l.b16 %v316
        %v406 = vunpack.c.l.b16 %v317
        %v407 = vunpack.c.l.b16 %v318
        %v408 = vunpack.c.l.b16 %v319
        %v409 = vunpack.c.l.b16 %v320
        %v410 = vunpack.c.l.b16 %v321
        %v411 = vunpack.c.l.b16 %v322
        %v412 = vunpack.c.l.b16 %v323
        %v413 = vunpack.c.l.b16 %v324
        %v414 = vunpack.c.l.b16 %v325
        %v415 = vunpack.c.l.b16 %v326
        %v416 = vunpack.c.l.b16 %v327
        %v417 = vunpack.c.l.b16 %v328
        %v418 = vunpack.c.l.b16 %v329
        %v419 = vunpack.c.l.b16 %v330
        %v420 = vunpack.c.l.b16 %v331
        %v421 = vunpack.c.l.b16 %v332
        %v422 = vunpack.c.l.b16 %v333
        %v423 = vunpack.c.l.b16 %v334
        %v424 = vunpack.c.l.b16 %v335
        %v425 = vunpack.c.l.b16 %v336
        %v426 = vpack.c.b16 %v395, %v394
        %v427 = vpack.c.b16 %v397, %v396
        %v428 = vpack.c.b16 %v399, %v398
        %v429 = vpack.c.b16 %v401, %v400
        %v430 = vpack.c.b16 %v403, %v402
        %v431 = vpack.c.b16 %v405, %v404
        %v432 = vpack.c.b16 %v407, %v406
        %v433 = vpack.c.b16 %v409, %v408
        %v434 = vpack.c.b16 %v411, %v410
        %v435 = vpack.c.b16 %v413, %v412
        %v436 = vpack.c.b16 %v415, %v414
        %v437 = vpack.c.b16 %v417, %v416
        %v438 = vpack.c.b16 %v419, %v418
        %v439 = vpack.c.b16 %v421, %v420
        %v440 = vpack.c.b16 %v423, %v422
        %v441 = vpack.c.b16 %v425, %v424
        %v474 = vunpack.c.l.b16 %v338
        %v475 = vunpack.c.l.b16 %v339
        %v476 = vunpack.c.l.b16 %v340
        %v477 = vunpack.c.l.b16 %v341
        %v478 = vunpack.c.l.b16 %v342
        %v479 = vunpack.c.l.b16 %v343
        %v480 = vunpack.c.l.b16 %v344
        %v481 = vunpack.c.l.b16 %v345
        %v482 = vunpack.c.l.b16 %v346
        %v483 = vunpack.c.l.b16 %v347
        %v484 = vunpack.c.l.b16 %v348
        %v485 = vunpack.c.l.b16 %v349
        %v486 = vunpack.c.l.b16 %v350
        %v487 = vunpack.c.l.b16 %v351
        %v488 = vunpack.c.l.b16 %v352
        %v489 = vunpack.c.l.b16 %v353
        %v490 = vpack.c.b16 %v475, %v474
        %v491 = vpack.c.b16 %v477, %v476
        %v492 = vpack.c.b16 %v479, %v478
        %v493 = vpack.c.b16 %v481, %v480
        %v494 = vpack.c.b16 %v483, %v482
        %v495 = vpack.c.b16 %v485, %v484
        %v496 = vpack.c.b16 %v487, %v486
        %v497 = vpack.c.b16 %v489, %v488
        %506 = vmatprep.subr.bf16.mxu0 0
        %507 = vmatpush1.bf16.msra.mxu0 %v497
        %508 = vmatprep.subr.bf16.mxu0 0
        %509 = vmatpush1.bf16.msra.mxu0 %v496
        %510 = vmatprep.subr.bf16.mxu0 0
        %511 = vmatpush1.bf16.msra.mxu0 %v495
        %512 = vmatprep.subr.bf16.mxu0 0
        %513 = vmatpush1.bf16.msra.mxu0 %v494
        %514 = vmatprep.subr.bf16.mxu0 0
        %515 = vmatpush1.bf16.msra.mxu0 %v493
        %516 = vmatprep.subr.bf16.mxu0 0
        %517 = vmatpush1.bf16.msra.mxu0 %v492
        %518 = vmatprep.subr.bf16.mxu0 0
        %519 = vmatpush1.bf16.msra.mxu0 %v491
        %520 = vmatprep.subr.bf16.mxu0 0
        %521 = vmatpush1.bf16.msra.mxu0 %v490
        %522 = vmatprep.subr.bf16.mxu0 0
        %523 = vmatpush2.bf16.msra.mxu0 0
        %524 = vmatprep.subr.bf16.mxu0 0
        %525 = vmatpush2.bf16.msra.mxu0 0
        %526 = vmatprep.subr.bf16.mxu0 0
        %527 = vmatpush2.bf16.msra.mxu0 0
        %528 = vmatprep.subr.bf16.mxu0 0
        %529 = vmatpush2.bf16.msra.mxu0 0
        %530 = vmatprep.subr.bf16.mxu0 0
        %531 = vmatpush2.bf16.msra.mxu0 0
        %532 = vmatprep.subr.bf16.mxu0 0
        %533 = vmatpush2.bf16.msra.mxu0 0
        %534 = vmatprep.subr.bf16.mxu0 0
        %535 = vmatpush2.bf16.msra.mxu0 0
        %536 = vmatprep.subr.bf16.mxu0 0
        %537 = vmatpush2.bf16.msra.mxu0 0
        %538 = vmatprep.mubr.bf16.mxu0 0
        %539 = vmatmul.mubr.bf16.gmra.mxu0 %v426
        %v540 = vpop.f32.mrf.mxu0
        %v541 = vadd.f32 %v360, %v540
        %v542 = vpop.f32.mrf.mxu0
        %v543 = vpop.f32.mrf.mxu0
        %v544 = vadd.f32 %v360, %v543
        %v545 = vpop.f32.mrf.mxu0
        %546 = vmatprep.mubr.bf16.mxu0 0
        %547 = vmatmul.mubr.bf16.gmra.mxu0 %v427
        %v548 = vpop.f32.mrf.mxu0
        %v549 = vadd.f32 %v360, %v548
        %v550 = vpop.f32.mrf.mxu0
        %v551 = vpop.f32.mrf.mxu0
        %v552 = vadd.f32 %v360, %v551
        %v553 = vpop.f32.mrf.mxu0
        %554 = vmatprep.mubr.bf16.mxu0 0
        %555 = vmatmul.mubr.bf16.gmra.mxu0 %v428
        %v556 = vpop.f32.mrf.mxu0
        %v557 = vadd.f32 %v360, %v556
        %v558 = vpop.f32.mrf.mxu0
        %v559 = vpop.f32.mrf.mxu0
        %v560 = vadd.f32 %v360, %v559
        %v561 = vpop.f32.mrf.mxu0
        %562 = vmatprep.mubr.bf16.mxu0 0
        %563 = vmatmul.mubr.bf16.gmra.mxu0 %v429
        %v564 = vpop.f32.mrf.mxu0
        %v565 = vadd.f32 %v360, %v564
        %v566 = vpop.f32.mrf.mxu0
        %v567 = vpop.f32.mrf.mxu0
        %v568 = vadd.f32 %v360, %v567
        %v569 = vpop.f32.mrf.mxu0
        %570 = vmatprep.mubr.bf16.mxu0 0
        %571 = vmatmul.mubr.bf16.gmra.mxu0 %v430
        %v572 = vpop.f32.mrf.mxu0
        %v573 = vadd.f32 %v360, %v572
        %v574 = vpop.f32.mrf.mxu0
        %v575 = vpop.f32.mrf.mxu0
        %v576 = vadd.f32 %v360, %v575
        %v577 = vpop.f32.mrf.mxu0
        %578 = vmatprep.mubr.bf16.mxu0 0
        %579 = vmatmul.mubr.bf16.gmra.mxu0 %v431
        %v580 = vpop.f32.mrf.mxu0
        %v581 = vadd.f32 %v360, %v580
        %v582 = vpop.f32.mrf.mxu0
        %v583 = vpop.f32.mrf.mxu0
        %v584 = vadd.f32 %v360, %v583
        %v585 = vpop.f32.mrf.mxu0
        %586 = vmatprep.mubr.bf16.mxu0 0
        %587 = vmatmul.mubr.bf16.gmra.mxu0 %v432
        %v588 = vpop.f32.mrf.mxu0
        %v589 = vadd.f32 %v360, %v588
        %v590 = vpop.f32.mrf.mxu0
        %v591 = vpop.f32.mrf.mxu0
        %v592 = vadd.f32 %v360, %v591
        %v593 = vpop.f32.mrf.mxu0
        %594 = vmatprep.mubr.bf16.mxu0 0
        %595 = vmatmul.mubr.bf16.gmra.mxu0 %v433
        %v596 = vpop.f32.mrf.mxu0
        %v597 = vadd.f32 %v360, %v596
        %v598 = vpop.f32.mrf.mxu0
        %v599 = vpop.f32.mrf.mxu0
        %v600 = vadd.f32 %v360, %v599
        %v601 = vpop.f32.mrf.mxu0
        %602 = vmatprep.mubr.bf16.mxu0 0
        %603 = vmatmul.mubr.bf16.gmra.mxu0 %v434
        %v604 = vpop.f32.mrf.mxu0
        %v605 = vadd.f32 %v360, %v604
        %v606 = vpop.f32.mrf.mxu0
        %v607 = vpop.f32.mrf.mxu0
        %v608 = vadd.f32 %v360, %v607
        %v609 = vpop.f32.mrf.mxu0
        %610 = vmatprep.mubr.bf16.mxu0 0
        %611 = vmatmul.mubr.bf16.gmra.mxu0 %v435
        %v612 = vpop.f32.mrf.mxu0
        %v613 = vadd.f32 %v360, %v612
        %v614 = vpop.f32.mrf.mxu0
        %v615 = vpop.f32.mrf.mxu0
        %v616 = vadd.f32 %v360, %v615
        %v617 = vpop.f32.mrf.mxu0
        %618 = vmatprep.mubr.bf16.mxu0 0
        %619 = vmatmul.mubr.bf16.gmra.mxu0 %v436
        %v620 = vpop.f32.mrf.mxu0
        %v621 = vadd.f32 %v360, %v620
        %v622 = vpop.f32.mrf.mxu0
        %v623 = vpop.f32.mrf.mxu0
        %v624 = vadd.f32 %v360, %v623
        %v625 = vpop.f32.mrf.mxu0
        %626 = vmatprep.mubr.bf16.mxu0 0
        %627 = vmatmul.mubr.bf16.gmra.mxu0 %v437
        %v628 = vpop.f32.mrf.mxu0
        %v629 = vadd.f32 %v360, %v628
        %v630 = vpop.f32.mrf.mxu0
        %v631 = vpop.f32.mrf.mxu0
        %v632 = vadd.f32 %v360, %v631
        %v633 = vpop.f32.mrf.mxu0
        %634 = vmatprep.mubr.bf16.mxu0 0
        %635 = vmatmul.mubr.bf16.gmra.mxu0 %v438
        %v636 = vpop.f32.mrf.mxu0
        %v637 = vadd.f32 %v360, %v636
        %v638 = vpop.f32.mrf.mxu0
        %v639 = vpop.f32.mrf.mxu0
        %v640 = vadd.f32 %v360, %v639
        %v641 = vpop.f32.mrf.mxu0
        %642 = vmatprep.mubr.bf16.mxu0 0
        %643 = vmatmul.mubr.bf16.gmra.mxu0 %v439
        %v644 = vpop.f32.mrf.mxu0
        %v645 = vadd.f32 %v360, %v644
        %v646 = vpop.f32.mrf.mxu0
        %v647 = vpop.f32.mrf.mxu0
        %v648 = vadd.f32 %v360, %v647
        %v649 = vpop.f32.mrf.mxu0
        %650 = vmatprep.mubr.bf16.mxu0 0
        %651 = vmatmul.mubr.bf16.gmra.mxu0 %v440
        %v652 = vpop.f32.mrf.mxu0
        %v653 = vadd.f32 %v360, %v652
        %v654 = vpop.f32.mrf.mxu0
        %v655 = vpop.f32.mrf.mxu0
        %v656 = vadd.f32 %v360, %v655
        %v657 = vpop.f32.mrf.mxu0
        %658 = vmatprep.mubr.bf16.mxu0 0
        %659 = vmatmul.mubr.bf16.gmra.mxu0 %v441
        %v660 = vpop.f32.mrf.mxu0
        %v661 = vadd.f32 %v360, %v660
        %v662 = vpop.f32.mrf.mxu0
        %v663 = vpop.f32.mrf.mxu0
        %v664 = vadd.f32 %v360, %v663
        %v665 = vpop.f32.mrf.mxu0
        %666 = vdwg.mxu0
        %v667 = vmax.f32 %v541, 0.0
        %v668 = vmax.f32 %v544, 0.0
        %v669 = vmax.f32 %v549, 0.0
        %v670 = vmax.f32 %v552, 0.0
        %v671 = vmax.f32 %v557, 0.0
        %v672 = vmax.f32 %v560, 0.0
        %v673 = vmax.f32 %v565, 0.0
        %v674 = vmax.f32 %v568, 0.0
        %v675 = vmax.f32 %v573, 0.0
        %v676 = vmax.f32 %v576, 0.0
        %v677 = vmax.f32 %v581, 0.0
        %v678 = vmax.f32 %v584, 0.0
        %v679 = vmax.f32 %v589, 0.0
        %v680 = vmax.f32 %v592, 0.0
        %v681 = vmax.f32 %v597, 0.0
        %v682 = vmax.f32 %v600, 0.0
        %v683 = vmax.f32 %v605, 0.0
        %v684 = vmax.f32 %v608, 0.0
        %v685 = vmax.f32 %v613, 0.0
        %v686 = vmax.f32 %v616, 0.0
        %v687 = vmax.f32 %v621, 0.0
        %v688 = vmax.f32 %v624, 0.0
        %v689 = vmax.f32 %v629, 0.0
        %v690 = vmax.f32 %v632, 0.0
        %v691 = vmax.f32 %v637, 0.0
        %v692 = vmax.f32 %v640, 0.0
        %v693 = vmax.f32 %v645, 0.0
        %v694 = vmax.f32 %v648, 0.0
        %v695 = vmax.f32 %v653, 0.0
        %v696 = vmax.f32 %v656, 0.0
        %v697 = vmax.f32 %v661, 0.0
        %v698 = vmax.f32 %v664, 0.0
        %v699 = vpack.c.bf16 %v668, %v667
        %v700 = vpack.c.bf16 %v670, %v669
        %v701 = vpack.c.bf16 %v672, %v671
        %v702 = vpack.c.bf16 %v674, %v673
        %v703 = vpack.c.bf16 %v676, %v675
        %v704 = vpack.c.bf16 %v678, %v677
        %v705 = vpack.c.bf16 %v680, %v679
        %v706 = vpack.c.bf16 %v682, %v681
        %v707 = vpack.c.bf16 %v684, %v683
        %v708 = vpack.c.bf16 %v686, %v685
        %v709 = vpack.c.bf16 %v688, %v687
        %v710 = vpack.c.bf16 %v690, %v689
        %v711 = vpack.c.bf16 %v692, %v691
        %v712 = vpack.c.bf16 %v694, %v693
        %v713 = vpack.c.bf16 %v696, %v695
        %v714 = vpack.c.bf16 %v698, %v697
        %s715 = scalar_lea.vmem %s3, 48
        %v716 = vld [vmem:[%s715] sm:$0xf]
        %v717 = vld [vmem:[%s715 + $0x4] sm:$0xf]
        %v718 = vld [vmem:[%s715 + $0x8] sm:$0xf]
        %v719 = vld [vmem:[%s715 + $0xc] sm:$0xf]
        %v724 = vunpack.c.l.b16 %v716
        %v725 = vunpack.c.l.b16 %v717
        %v726 = vunpack.c.l.b16 %v718
        %v727 = vunpack.c.l.b16 %v719
        %v728 = vpack.c.b16 %v725, %v724
        %v729 = vpack.c.b16 %v727, %v726
        %v733 = vsel %vm239, %v699, 0
        %v736 = vsel %vm239, %v700, 0
        %v739 = vsel %vm239, %v701, 0
        %v742 = vsel %vm239, %v702, 0
        %v745 = vsel %vm239, %v703, 0
        %v748 = vsel %vm239, %v704, 0
        %v751 = vsel %vm239, %v705, 0
        %v754 = vsel %vm239, %v706, 0
        %v757 = vsel %vm239, %v707, 0
        %v760 = vsel %vm239, %v708, 0
        %v763 = vsel %vm239, %v709, 0
        %v766 = vsel %vm239, %v710, 0
        %v769 = vsel %vm239, %v711, 0
        %v772 = vsel %vm239, %v712, 0
        %v775 = vsel %vm239, %v713, 0
        %v778 = vsel %vm239, %v714, 0
        %780 = vmatprep.subr.bf16.mxu0 0
        %781 = vmatpush1.bf16.msra.mxu0 0
        %782 = vmatprep.subr.bf16.mxu0 0
        %783 = vmatpush1.bf16.msra.mxu0 0
        %784 = vmatprep.subr.bf16.mxu0 0
        %785 = vmatpush1.bf16.msra.mxu0 0
        %786 = vmatprep.subr.bf16.mxu0 0
        %787 = vmatpush1.bf16.msra.mxu0 0
        %788 = vmatprep.subr.bf16.mxu0 0
        %789 = vmatpush1.bf16.msra.mxu0 0
        %790 = vmatprep.subr.bf16.mxu0 0
        %791 = vmatpush1.bf16.msra.mxu0 0
        %792 = vmatprep.subr.bf16.mxu0 0
        %793 = vmatpush1.bf16.msra.mxu0 %v729
        %794 = vmatprep.subr.bf16.mxu0 0
        %795 = vmatpush1.bf16.msra.mxu0 %v728
        %796 = vmatprep.subr.bf16.mxu0 0
        %797 = vmatpush2.bf16.msra.mxu0 0
        %798 = vmatprep.subr.bf16.mxu0 0
        %799 = vmatpush2.bf16.msra.mxu0 0
        %800 = vmatprep.subr.bf16.mxu0 0
        %801 = vmatpush2.bf16.msra.mxu0 0
        %802 = vmatprep.subr.bf16.mxu0 0
        %803 = vmatpush2.bf16.msra.mxu0 0
        %804 = vmatprep.subr.bf16.mxu0 0
        %805 = vmatpush2.bf16.msra.mxu0 0
        %806 = vmatprep.subr.bf16.mxu0 0
        %807 = vmatpush2.bf16.msra.mxu0 0
        %808 = vmatprep.subr.bf16.mxu0 0
        %809 = vmatpush2.bf16.msra.mxu0 0
        %810 = vmatprep.subr.bf16.mxu0 0
        %811 = vmatpush2.bf16.msra.mxu0 0
        %812 = vmatprep.mubr.bf16.mxu0 0
        %813 = vmatmul.mubr.bf16.gmra.mxu0 %v733
        %v814 = vpop.f32.mrf.mxu0
        %v815 = vadd.f32 0.0, %v814
        %v816 = vpop.f32.mrf.mxu0
        %v817 = vpop.f32.mrf.mxu0
        %v818 = vadd.f32 0.0, %v817
        %v819 = vpop.f32.mrf.mxu0
        %820 = vmatprep.mubr.bf16.mxu0 0
        %821 = vmatmul.mubr.bf16.gmra.mxu0 %v736
        %v822 = vpop.f32.mrf.mxu0
        %v823 = vadd.f32 0.0, %v822
        %v824 = vpop.f32.mrf.mxu0
        %v825 = vpop.f32.mrf.mxu0
        %v826 = vadd.f32 0.0, %v825
        %v827 = vpop.f32.mrf.mxu0
        %828 = vmatprep.mubr.bf16.mxu0 0
        %829 = vmatmul.mubr.bf16.gmra.mxu0 %v739
        %v830 = vpop.f32.mrf.mxu0
        %v831 = vadd.f32 0.0, %v830
        %v832 = vpop.f32.mrf.mxu0
        %v833 = vpop.f32.mrf.mxu0
        %v834 = vadd.f32 0.0, %v833
        %v835 = vpop.f32.mrf.mxu0
        %836 = vmatprep.mubr.bf16.mxu0 0
        %837 = vmatmul.mubr.bf16.gmra.mxu0 %v742
        %v838 = vpop.f32.mrf.mxu0
        %v839 = vadd.f32 0.0, %v838
        %v840 = vpop.f32.mrf.mxu0
        %v841 = vpop.f32.mrf.mxu0
        %v842 = vadd.f32 0.0, %v841
        %v843 = vpop.f32.mrf.mxu0
        %844 = vmatprep.mubr.bf16.mxu0 0
        %845 = vmatmul.mubr.bf16.gmra.mxu0 %v745
        %v846 = vpop.f32.mrf.mxu0
        %v847 = vadd.f32 0.0, %v846
        %v848 = vpop.f32.mrf.mxu0
        %v849 = vpop.f32.mrf.mxu0
        %v850 = vadd.f32 0.0, %v849
        %v851 = vpop.f32.mrf.mxu0
        %852 = vmatprep.mubr.bf16.mxu0 0
        %853 = vmatmul.mubr.bf16.gmra.mxu0 %v748
        %v854 = vpop.f32.mrf.mxu0
        %v855 = vadd.f32 0.0, %v854
        %v856 = vpop.f32.mrf.mxu0
        %v857 = vpop.f32.mrf.mxu0
        %v858 = vadd.f32 0.0, %v857
        %v859 = vpop.f32.mrf.mxu0
        %860 = vmatprep.mubr.bf16.mxu0 0
        %861 = vmatmul.mubr.bf16.gmra.mxu0 %v751
        %v862 = vpop.f32.mrf.mxu0
        %v863 = vadd.f32 0.0, %v862
        %v864 = vpop.f32.mrf.mxu0
        %v865 = vpop.f32.mrf.mxu0
        %v866 = vadd.f32 0.0, %v865
        %v867 = vpop.f32.mrf.mxu0
        %868 = vmatprep.mubr.bf16.mxu0 0
        %869 = vmatmul.mubr.bf16.gmra.mxu0 %v754
        %v870 = vpop.f32.mrf.mxu0
        %v871 = vadd.f32 0.0, %v870
        %v872 = vpop.f32.mrf.mxu0
        %v873 = vpop.f32.mrf.mxu0
        %v874 = vadd.f32 0.0, %v873
        %v875 = vpop.f32.mrf.mxu0
        %876 = vmatprep.mubr.bf16.mxu0 0
        %877 = vmatmul.mubr.bf16.gmra.mxu0 %v757
        %v878 = vpop.f32.mrf.mxu0
        %v879 = vadd.f32 0.0, %v878
        %v880 = vpop.f32.mrf.mxu0
        %v881 = vpop.f32.mrf.mxu0
        %v882 = vadd.f32 0.0, %v881
        %v883 = vpop.f32.mrf.mxu0
        %884 = vmatprep.mubr.bf16.mxu0 0
        %885 = vmatmul.mubr.bf16.gmra.mxu0 %v760
        %v886 = vpop.f32.mrf.mxu0
        %v887 = vadd.f32 0.0, %v886
        %v888 = vpop.f32.mrf.mxu0
        %v889 = vpop.f32.mrf.mxu0
        %v890 = vadd.f32 0.0, %v889
        %v891 = vpop.f32.mrf.mxu0
        %892 = vmatprep.mubr.bf16.mxu0 0
        %893 = vmatmul.mubr.bf16.gmra.mxu0 %v763
        %v894 = vpop.f32.mrf.mxu0
        %v895 = vadd.f32 0.0, %v894
        %v896 = vpop.f32.mrf.mxu0
        %v897 = vpop.f32.mrf.mxu0
        %v898 = vadd.f32 0.0, %v897
        %v899 = vpop.f32.mrf.mxu0
        %900 = vmatprep.mubr.bf16.mxu0 0
        %901 = vmatmul.mubr.bf16.gmra.mxu0 %v766
        %v902 = vpop.f32.mrf.mxu0
        %v903 = vadd.f32 0.0, %v902
        %v904 = vpop.f32.mrf.mxu0
        %v905 = vpop.f32.mrf.mxu0
        %v906 = vadd.f32 0.0, %v905
        %v907 = vpop.f32.mrf.mxu0
        %908 = vmatprep.mubr.bf16.mxu0 0
        %909 = vmatmul.mubr.bf16.gmra.mxu0 %v769
        %v910 = vpop.f32.mrf.mxu0
        %v911 = vadd.f32 0.0, %v910
        %v912 = vpop.f32.mrf.mxu0
        %v913 = vpop.f32.mrf.mxu0
        %v914 = vadd.f32 0.0, %v913
        %v915 = vpop.f32.mrf.mxu0
        %916 = vmatprep.mubr.bf16.mxu0 0
        %917 = vmatmul.mubr.bf16.gmra.mxu0 %v772
        %v918 = vpop.f32.mrf.mxu0
        %v919 = vadd.f32 0.0, %v918
        %v920 = vpop.f32.mrf.mxu0
        %v921 = vpop.f32.mrf.mxu0
        %v922 = vadd.f32 0.0, %v921
        %v923 = vpop.f32.mrf.mxu0
        %924 = vmatprep.mubr.bf16.mxu0 0
        %925 = vmatmul.mubr.bf16.gmra.mxu0 %v775
        %v926 = vpop.f32.mrf.mxu0
        %v927 = vadd.f32 0.0, %v926
        %v928 = vpop.f32.mrf.mxu0
        %v929 = vpop.f32.mrf.mxu0
        %v930 = vadd.f32 0.0, %v929
        %v931 = vpop.f32.mrf.mxu0
        %932 = vmatprep.mubr.bf16.mxu0 0
        %933 = vmatmul.mubr.bf16.gmra.mxu0 %v778
        %v934 = vpop.f32.mrf.mxu0
        %v935 = vadd.f32 0.0, %v934
        %v936 = vpop.f32.mrf.mxu0
        %v937 = vpop.f32.mrf.mxu0
        %v938 = vadd.f32 0.0, %v937
        %v939 = vpop.f32.mrf.mxu0
        %940 = vdwg.mxu0
        %941 = vst [vmem:[#allocation4] sm:$0xff] %v815
        %942 = vst [vmem:[#allocation4 + $0x8] sm:$0xff] %v818
        %943 = vst [vmem:[#allocation4 + $0x10] sm:$0xff] %v823
        %944 = vst [vmem:[#allocation4 + $0x18] sm:$0xff] %v826
        %945 = vst [vmem:[#allocation4 + $0x20] sm:$0xff] %v831
        %946 = vst [vmem:[#allocation4 + $0x28] sm:$0xff] %v834
        %947 = vst [vmem:[#allocation4 + $0x30] sm:$0xff] %v839
        %948 = vst [vmem:[#allocation4 + $0x38] sm:$0xff] %v842
        %949 = vst [vmem:[#allocation4 + $0x40] sm:$0xff] %v847
        %950 = vst [vmem:[#allocation4 + $0x48] sm:$0xff] %v850
        %951 = vst [vmem:[#allocation4 + $0x50] sm:$0xff] %v855
        %952 = vst [vmem:[#allocation4 + $0x58] sm:$0xff] %v858
        %953 = vst [vmem:[#allocation4 + $0x60] sm:$0xff] %v863
        %954 = vst [vmem:[#allocation4 + $0x68] sm:$0xff] %v866
        %955 = vst [vmem:[#allocation4 + $0x70] sm:$0xff] %v871
        %956 = vst [vmem:[#allocation4 + $0x78] sm:$0xff] %v874
        %957 = vst [vmem:[#allocation4 + $0x80] sm:$0xff] %v879
        %958 = vst [vmem:[#allocation4 + $0x88] sm:$0xff] %v882
        %959 = vst [vmem:[#allocation4 + $0x90] sm:$0xff] %v887
        %960 = vst [vmem:[#allocation4 + $0x98] sm:$0xff] %v890
        %961 = vst [vmem:[#allocation4 + $0xa0] sm:$0xff] %v895
        %962 = vst [vmem:[#allocation4 + $0xa8] sm:$0xff] %v898
        %963 = vst [vmem:[#allocation4 + $0xb0] sm:$0xff] %v903
        %964 = vst [vmem:[#allocation4 + $0xb8] sm:$0xff] %v906
        %965 = vst [vmem:[#allocation4 + $0xc0] sm:$0xff] %v911
        %966 = vst [vmem:[#allocation4 + $0xc8] sm:$0xff] %v914
        %967 = vst [vmem:[#allocation4 + $0xd0] sm:$0xff] %v919
        %968 = vst [vmem:[#allocation4 + $0xd8] sm:$0xff] %v922
        %969 = vst [vmem:[#allocation4 + $0xe0] sm:$0xff] %v927
        %970 = vst [vmem:[#allocation4 + $0xe8] sm:$0xff] %v930
        %971 = vst [vmem:[#allocation4 + $0xf0] sm:$0xff] %v935
        %972 = vst [vmem:[#allocation4 + $0xf8] sm:$0xff] %v938
        %v973 = vld [vmem:[%s1] sm:$0xf]
        %v974 = vld [vmem:[%s1 + $0x4] sm:$0xf]
        %v975 = vld [vmem:[%s1 + $0x8] sm:$0xf]
        %v976 = vld [vmem:[%s1 + $0xc] sm:$0xf]
        %v977 = vld [vmem:[%s1 + $0x10] sm:$0xf]
        %v978 = vld [vmem:[%s1 + $0x14] sm:$0xf]
        %v979 = vld [vmem:[%s1 + $0x18] sm:$0xf]
        %v980 = vld [vmem:[%s1 + $0x1c] sm:$0xf]
        %v981 = vld [vmem:[%s1 + $0x20] sm:$0xf]
        %v982 = vld [vmem:[%s1 + $0x24] sm:$0xf]
        %v983 = vld [vmem:[%s1 + $0x28] sm:$0xf]
        %v984 = vld [vmem:[%s1 + $0x2c] sm:$0xf]
        %v985 = vld [vmem:[%s1 + $0x30] sm:$0xf]
        %v986 = vld [vmem:[%s1 + $0x34] sm:$0xf]
        %v987 = vld [vmem:[%s1 + $0x38] sm:$0xf]
        %v988 = vld [vmem:[%s1 + $0x3c] sm:$0xf]
        %v1005 = vunpack.c.l.b16 %v973
        %v1006 = vunpack.c.l.b16 %v974
        %v1007 = vunpack.c.l.b16 %v975
        %v1008 = vunpack.c.l.b16 %v976
        %v1009 = vunpack.c.l.b16 %v977
        %v1010 = vunpack.c.l.b16 %v978
        %v1011 = vunpack.c.l.b16 %v979
        %v1012 = vunpack.c.l.b16 %v980
        %v1013 = vunpack.c.l.b16 %v981
        %v1014 = vunpack.c.l.b16 %v982
        %v1015 = vunpack.c.l.b16 %v983
        %v1016 = vunpack.c.l.b16 %v984
        %v1017 = vunpack.c.l.b16 %v985
        %v1018 = vunpack.c.l.b16 %v986
        %v1019 = vunpack.c.l.b16 %v987
        %v1020 = vunpack.c.l.b16 %v988
        %v1021 = vpack.c.b16 %v1006, %v1005
        %v1022 = vpack.c.b16 %v1008, %v1007
        %v1023 = vpack.c.b16 %v1010, %v1009
        %v1024 = vpack.c.b16 %v1012, %v1011
        %v1025 = vpack.c.b16 %v1014, %v1013
        %v1026 = vpack.c.b16 %v1016, %v1015
        %v1027 = vpack.c.b16 %v1018, %v1017
        %v1028 = vpack.c.b16 %v1020, %v1019
        %1037 = vmatprep.subr.bf16.mxu0 0
        %1038 = vmatpush1.bf16.msra.mxu0 %v1028
        %1039 = vmatprep.subr.bf16.mxu0 0
        %1040 = vmatpush1.bf16.msra.mxu0 %v1027
        %1041 = vmatprep.subr.bf16.mxu0 0
        %1042 = vmatpush1.bf16.msra.mxu0 %v1026
        %1043 = vmatprep.subr.bf16.mxu0 0
        %1044 = vmatpush1.bf16.msra.mxu0 %v1025
        %1045 = vmatprep.subr.bf16.mxu0 0
        %1046 = vmatpush1.bf16.msra.mxu0 %v1024
        %1047 = vmatprep.subr.bf16.mxu0 0
        %1048 = vmatpush1.bf16.msra.mxu0 %v1023
        %1049 = vmatprep.subr.bf16.mxu0 0
        %1050 = vmatpush1.bf16.msra.mxu0 %v1022
        %1051 = vmatprep.subr.bf16.mxu0 0
        %1052 = vmatpush1.bf16.msra.mxu0 %v1021
        %1053 = vmatprep.subr.bf16.mxu0 0
        %1054 = vmatpush2.bf16.msra.mxu0 0
        %1055 = vmatprep.subr.bf16.mxu0 0
        %1056 = vmatpush2.bf16.msra.mxu0 0
        %1057 = vmatprep.subr.bf16.mxu0 0
        %1058 = vmatpush2.bf16.msra.mxu0 0
        %1059 = vmatprep.subr.bf16.mxu0 0
        %1060 = vmatpush2.bf16.msra.mxu0 0
        %1061 = vmatprep.subr.bf16.mxu0 0
        %1062 = vmatpush2.bf16.msra.mxu0 0
        %1063 = vmatprep.subr.bf16.mxu0 0
        %1064 = vmatpush2.bf16.msra.mxu0 0
        %1065 = vmatprep.subr.bf16.mxu0 0
        %1066 = vmatpush2.bf16.msra.mxu0 0
        %1067 = vmatprep.subr.bf16.mxu0 0
        %1068 = vmatpush2.bf16.msra.mxu0 0
        %1069 = vmatprep.mubr.bf16.mxu0 0
        %1070 = vmatmul.mubr.bf16.gmra.mxu0 %v426
        %v1071 = vpop.f32.mrf.mxu0
        %v1072 = vadd.f32 0.0, %v1071
        %v1073 = vpop.f32.mrf.mxu0
        %v1074 = vpop.f32.mrf.mxu0
        %v1075 = vadd.f32 0.0, %v1074
        %v1076 = vpop.f32.mrf.mxu0
        %1077 = vmatprep.mubr.bf16.mxu0 0
        %1078 = vmatmul.mubr.bf16.gmra.mxu0 %v427
        %v1079 = vpop.f32.mrf.mxu0
        %v1080 = vadd.f32 0.0, %v1079
        %v1081 = vpop.f32.mrf.mxu0
        %v1082 = vpop.f32.mrf.mxu0
        %v1083 = vadd.f32 0.0, %v1082
        %v1084 = vpop.f32.mrf.mxu0
        %1085 = vmatprep.mubr.bf16.mxu0 0
        %1086 = vmatmul.mubr.bf16.gmra.mxu0 %v428
        %v1087 = vpop.f32.mrf.mxu0
        %v1088 = vadd.f32 0.0, %v1087
        %v1089 = vpop.f32.mrf.mxu0
        %v1090 = vpop.f32.mrf.mxu0
        %v1091 = vadd.f32 0.0, %v1090
        %v1092 = vpop.f32.mrf.mxu0
        %1093 = vmatprep.mubr.bf16.mxu0 0
        %1094 = vmatmul.mubr.bf16.gmra.mxu0 %v429
        %v1095 = vpop.f32.mrf.mxu0
        %v1096 = vadd.f32 0.0, %v1095
        %v1097 = vpop.f32.mrf.mxu0
        %v1098 = vpop.f32.mrf.mxu0
        %v1099 = vadd.f32 0.0, %v1098
        %v1100 = vpop.f32.mrf.mxu0
        %1101 = vmatprep.mubr.bf16.mxu0 0
        %1102 = vmatmul.mubr.bf16.gmra.mxu0 %v430
        %v1103 = vpop.f32.mrf.mxu0
        %v1104 = vadd.f32 0.0, %v1103
        %v1105 = vpop.f32.mrf.mxu0
        %v1106 = vpop.f32.mrf.mxu0
        %v1107 = vadd.f32 0.0, %v1106
        %v1108 = vpop.f32.mrf.mxu0
        %1109 = vmatprep.mubr.bf16.mxu0 0
        %1110 = vmatmul.mubr.bf16.gmra.mxu0 %v431
        %v1111 = vpop.f32.mrf.mxu0
        %v1112 = vadd.f32 0.0, %v1111
        %v1113 = vpop.f32.mrf.mxu0
        %v1114 = vpop.f32.mrf.mxu0
        %v1115 = vadd.f32 0.0, %v1114
        %v1116 = vpop.f32.mrf.mxu0
        %1117 = vmatprep.mubr.bf16.mxu0 0
        %1118 = vmatmul.mubr.bf16.gmra.mxu0 %v432
        %v1119 = vpop.f32.mrf.mxu0
        %v1120 = vadd.f32 0.0, %v1119
        %v1121 = vpop.f32.mrf.mxu0
        %v1122 = vpop.f32.mrf.mxu0
        %v1123 = vadd.f32 0.0, %v1122
        %v1124 = vpop.f32.mrf.mxu0
        %1125 = vmatprep.mubr.bf16.mxu0 0
        %1126 = vmatmul.mubr.bf16.gmra.mxu0 %v433
        %v1127 = vpop.f32.mrf.mxu0
        %v1128 = vadd.f32 0.0, %v1127
        %v1129 = vpop.f32.mrf.mxu0
        %v1130 = vpop.f32.mrf.mxu0
        %v1131 = vadd.f32 0.0, %v1130
        %v1132 = vpop.f32.mrf.mxu0
        %1133 = vmatprep.mubr.bf16.mxu0 0
        %1134 = vmatmul.mubr.bf16.gmra.mxu0 %v434
        %v1135 = vpop.f32.mrf.mxu0
        %v1136 = vadd.f32 0.0, %v1135
        %v1137 = vpop.f32.mrf.mxu0
        %v1138 = vpop.f32.mrf.mxu0
        %v1139 = vadd.f32 0.0, %v1138
        %v1140 = vpop.f32.mrf.mxu0
        %1141 = vmatprep.mubr.bf16.mxu0 0
        %1142 = vmatmul.mubr.bf16.gmra.mxu0 %v435
        %v1143 = vpop.f32.mrf.mxu0
        %v1144 = vadd.f32 0.0, %v1143
        %v1145 = vpop.f32.mrf.mxu0
        %v1146 = vpop.f32.mrf.mxu0
        %v1147 = vadd.f32 0.0, %v1146
        %v1148 = vpop.f32.mrf.mxu0
        %1149 = vmatprep.mubr.bf16.mxu0 0
        %1150 = vmatmul.mubr.bf16.gmra.mxu0 %v436
        %v1151 = vpop.f32.mrf.mxu0
        %v1152 = vadd.f32 0.0, %v1151
        %v1153 = vpop.f32.mrf.mxu0
        %v1154 = vpop.f32.mrf.mxu0
        %v1155 = vadd.f32 0.0, %v1154
        %v1156 = vpop.f32.mrf.mxu0
        %1157 = vmatprep.mubr.bf16.mxu0 0
        %1158 = vmatmul.mubr.bf16.gmra.mxu0 %v437
        %v1159 = vpop.f32.mrf.mxu0
        %v1160 = vadd.f32 0.0, %v1159
        %v1161 = vpop.f32.mrf.mxu0
        %v1162 = vpop.f32.mrf.mxu0
        %v1163 = vadd.f32 0.0, %v1162
        %v1164 = vpop.f32.mrf.mxu0
        %1165 = vmatprep.mubr.bf16.mxu0 0
        %1166 = vmatmul.mubr.bf16.gmra.mxu0 %v438
        %v1167 = vpop.f32.mrf.mxu0
        %v1168 = vadd.f32 0.0, %v1167
        %v1169 = vpop.f32.mrf.mxu0
        %v1170 = vpop.f32.mrf.mxu0
        %v1171 = vadd.f32 0.0, %v1170
        %v1172 = vpop.f32.mrf.mxu0
        %1173 = vmatprep.mubr.bf16.mxu0 0
        %1174 = vmatmul.mubr.bf16.gmra.mxu0 %v439
        %v1175 = vpop.f32.mrf.mxu0
        %v1176 = vadd.f32 0.0, %v1175
        %v1177 = vpop.f32.mrf.mxu0
        %v1178 = vpop.f32.mrf.mxu0
        %v1179 = vadd.f32 0.0, %v1178
        %v1180 = vpop.f32.mrf.mxu0
        %1181 = vmatprep.mubr.bf16.mxu0 0
        %1182 = vmatmul.mubr.bf16.gmra.mxu0 %v440
        %v1183 = vpop.f32.mrf.mxu0
        %v1184 = vadd.f32 0.0, %v1183
        %v1185 = vpop.f32.mrf.mxu0
        %v1186 = vpop.f32.mrf.mxu0
        %v1187 = vadd.f32 0.0, %v1186
        %v1188 = vpop.f32.mrf.mxu0
        %1189 = vmatprep.mubr.bf16.mxu0 0
        %1190 = vmatmul.mubr.bf16.gmra.mxu0 %v441
        %v1191 = vpop.f32.mrf.mxu0
        %v1192 = vadd.f32 0.0, %v1191
        %v1193 = vpop.f32.mrf.mxu0
        %v1194 = vpop.f32.mrf.mxu0
        %v1195 = vadd.f32 0.0, %v1194
        %v1196 = vpop.f32.mrf.mxu0
        %1197 = vdwg.mxu0
        %1198 = vst.msk [vmem:[#allocation2 + $0x8] sm:$0xff] %vm239, %v1072
        %1199 = vst.msk [vmem:[#allocation2 + $0x10] sm:$0xff] %vm239, %v1075
        %1200 = vst.msk [vmem:[#allocation2 + $0x28] sm:$0xff] %vm239, %v1080
        %1201 = vst.msk [vmem:[#allocation2 + $0x30] sm:$0xff] %vm239, %v1083
        %1202 = vst.msk [vmem:[#allocation2 + $0x48] sm:$0xff] %vm239, %v1088
        %1203 = vst.msk [vmem:[#allocation2 + $0x50] sm:$0xff] %vm239, %v1091
        %1204 = vst.msk [vmem:[#allocation2 + $0x68] sm:$0xff] %vm239, %v1096
        %1205 = vst.msk [vmem:[#allocation2 + $0x70] sm:$0xff] %vm239, %v1099
        %1206 = vst.msk [vmem:[#allocation2 + $0x88] sm:$0xff] %vm239, %v1104
        %1207 = vst.msk [vmem:[#allocation2 + $0x90] sm:$0xff] %vm239, %v1107
        %1208 = vst.msk [vmem:[#allocation2 + $0xa8] sm:$0xff] %vm239, %v1112
        %1209 = vst.msk [vmem:[#allocation2 + $0xb0] sm:$0xff] %vm239, %v1115
        %1210 = vst.msk [vmem:[#allocation2 + $0xc8] sm:$0xff] %vm239, %v1120
        %1211 = vst.msk [vmem:[#allocation2 + $0xd0] sm:$0xff] %vm239, %v1123
        %1212 = vst.msk [vmem:[#allocation2 + $0xe8] sm:$0xff] %vm239, %v1128
        %1213 = vst.msk [vmem:[#allocation2 + $0xf0] sm:$0xff] %vm239, %v1131
        %1214 = vst.msk [vmem:[#allocation2 + $0x108] sm:$0xff] %vm239, %v1136
        %1215 = vst.msk [vmem:[#allocation2 + $0x110] sm:$0xff] %vm239, %v1139
        %1216 = vst.msk [vmem:[#allocation2 + $0x128] sm:$0xff] %vm239, %v1144
        %1217 = vst.msk [vmem:[#allocation2 + $0x130] sm:$0xff] %vm239, %v1147
        %1218 = vst.msk [vmem:[#allocation2 + $0x148] sm:$0xff] %vm239, %v1152
        %1219 = vst.msk [vmem:[#allocation2 + $0x150] sm:$0xff] %vm239, %v1155
        %1220 = vst.msk [vmem:[#allocation2 + $0x168] sm:$0xff] %vm239, %v1160
        %1221 = vst.msk [vmem:[#allocation2 + $0x170] sm:$0xff] %vm239, %v1163
        %1222 = vst.msk [vmem:[#allocation2 + $0x188] sm:$0xff] %vm239, %v1168
        %1223 = vst.msk [vmem:[#allocation2 + $0x190] sm:$0xff] %vm239, %v1171
        %1224 = vst.msk [vmem:[#allocation2 + $0x1a8] sm:$0xff] %vm239, %v1176
        %1225 = vst.msk [vmem:[#allocation2 + $0x1b0] sm:$0xff] %vm239, %v1179
        %1226 = vst.msk [vmem:[#allocation2 + $0x1c8] sm:$0xff] %vm239, %v1184
        %1227 = vst.msk [vmem:[#allocation2 + $0x1d0] sm:$0xff] %vm239, %v1187
        %1228 = vst.msk [vmem:[#allocation2 + $0x1e8] sm:$0xff] %vm239, %v1192
        %1229 = vst.msk [vmem:[#allocation2 + $0x1f0] sm:$0xff] %vm239, %v1195
        %v1230 = vld [vmem:[#allocation2 + $0x6] sm:$0xff]
        %v1231 = vld [vmem:[#allocation2 + $0xe] sm:$0xff]
        %v1232 = vld [vmem:[#allocation2 + $0x26] sm:$0xff]
        %v1233 = vld [vmem:[#allocation2 + $0x2e] sm:$0xff]
        %v1234 = vld [vmem:[#allocation2 + $0x46] sm:$0xff]
        %v1235 = vld [vmem:[#allocation2 + $0x4e] sm:$0xff]
        %v1236 = vld [vmem:[#allocation2 + $0x66] sm:$0xff]
        %v1237 = vld [vmem:[#allocation2 + $0x6e] sm:$0xff]
        %v1238 = vld [vmem:[#allocation2 + $0x86] sm:$0xff]
        %v1239 = vld [vmem:[#allocation2 + $0x8e] sm:$0xff]
        %v1240 = vld [vmem:[#allocation2 + $0xa6] sm:$0xff]
        %v1241 = vld [vmem:[#allocation2 + $0xae] sm:$0xff]
        %v1242 = vld [vmem:[#allocation2 + $0xc6] sm:$0xff]
        %v1243 = vld [vmem:[#allocation2 + $0xce] sm:$0xff]
        %v1244 = vld [vmem:[#allocation2 + $0xe6] sm:$0xff]
        %v1245 = vld [vmem:[#allocation2 + $0xee] sm:$0xff]
        %v1246 = vld [vmem:[#allocation2 + $0x106] sm:$0xff]
        %v1247 = vld [vmem:[#allocation2 + $0x10e] sm:$0xff]
        %v1248 = vld [vmem:[#allocation2 + $0x126] sm:$0xff]
        %v1249 = vld [vmem:[#allocation2 + $0x12e] sm:$0xff]
        %v1250 = vld [vmem:[#allocation2 + $0x146] sm:$0xff]
        %v1251 = vld [vmem:[#allocation2 + $0x14e] sm:$0xff]
        %v1252 = vld [vmem:[#allocation2 + $0x166] sm:$0xff]
        %v1253 = vld [vmem:[#allocation2 + $0x16e] sm:$0xff]
        %v1254 = vld [vmem:[#allocation2 + $0x186] sm:$0xff]
        %v1255 = vld [vmem:[#allocation2 + $0x18e] sm:$0xff]
        %v1256 = vld [vmem:[#allocation2 + $0x1a6] sm:$0xff]
        %v1257 = vld [vmem:[#allocation2 + $0x1ae] sm:$0xff]
        %v1258 = vld [vmem:[#allocation2 + $0x1c6] sm:$0xff]
        %v1259 = vld [vmem:[#allocation2 + $0x1ce] sm:$0xff]
        %v1260 = vld [vmem:[#allocation2 + $0x1e6] sm:$0xff]
        %v1261 = vld [vmem:[#allocation2 + $0x1ee] sm:$0xff]
        %v1262 = vld [vmem:[#allocation2 + $0x7] sm:$0xff]
        %v1263 = vld [vmem:[#allocation2 + $0xf] sm:$0xff]
        %v1264 = vld [vmem:[#allocation2 + $0x27] sm:$0xff]
        %v1265 = vld [vmem:[#allocation2 + $0x2f] sm:$0xff]
        %v1266 = vld [vmem:[#allocation2 + $0x47] sm:$0xff]
        %v1267 = vld [vmem:[#allocation2 + $0x4f] sm:$0xff]
        %v1268 = vld [vmem:[#allocation2 + $0x67] sm:$0xff]
        %v1269 = vld [vmem:[#allocation2 + $0x6f] sm:$0xff]
        %v1270 = vld [vmem:[#allocation2 + $0x87] sm:$0xff]
        %v1271 = vld [vmem:[#allocation2 + $0x8f] sm:$0xff]
        %v1272 = vld [vmem:[#allocation2 + $0xa7] sm:$0xff]
        %v1273 = vld [vmem:[#allocation2 + $0xaf] sm:$0xff]
        %v1274 = vld [vmem:[#allocation2 + $0xc7] sm:$0xff]
        %v1275 = vld [vmem:[#allocation2 + $0xcf] sm:$0xff]
        %v1276 = vld [vmem:[#allocation2 + $0xe7] sm:$0xff]
        %v1277 = vld [vmem:[#allocation2 + $0xef] sm:$0xff]
        %v1278 = vld [vmem:[#allocation2 + $0x107] sm:$0xff]
        %v1279 = vld [vmem:[#allocation2 + $0x10f] sm:$0xff]
        %v1280 = vld [vmem:[#allocation2 + $0x127] sm:$0xff]
        %v1281 = vld [vmem:[#allocation2 + $0x12f] sm:$0xff]
        %v1282 = vld [vmem:[#allocation2 + $0x147] sm:$0xff]
        %v1283 = vld [vmem:[#allocation2 + $0x14f] sm:$0xff]
        %v1284 = vld [vmem:[#allocation2 + $0x167] sm:$0xff]
        %v1285 = vld [vmem:[#allocation2 + $0x16f] sm:$0xff]
        %v1286 = vld [vmem:[#allocation2 + $0x187] sm:$0xff]
        %v1287 = vld [vmem:[#allocation2 + $0x18f] sm:$0xff]
        %v1288 = vld [vmem:[#allocation2 + $0x1a7] sm:$0xff]
        %v1289 = vld [vmem:[#allocation2 + $0x1af] sm:$0xff]
        %v1290 = vld [vmem:[#allocation2 + $0x1c7] sm:$0xff]
        %v1291 = vld [vmem:[#allocation2 + $0x1cf] sm:$0xff]
        %v1292 = vld [vmem:[#allocation2 + $0x1e7] sm:$0xff]
        %v1293 = vld [vmem:[#allocation2 + $0x1ef] sm:$0xff]
        %v1294 = vadd.f32 %v1230, %v1262
        %v1295 = vadd.f32 %v1231, %v1263
        %v1296 = vadd.f32 %v1232, %v1264
        %v1297 = vadd.f32 %v1233, %v1265
        %v1298 = vadd.f32 %v1234, %v1266
        %v1299 = vadd.f32 %v1235, %v1267
        %v1300 = vadd.f32 %v1236, %v1268
        %v1301 = vadd.f32 %v1237, %v1269
        %v1302 = vadd.f32 %v1238, %v1270
        %v1303 = vadd.f32 %v1239, %v1271
        %v1304 = vadd.f32 %v1240, %v1272
        %v1305 = vadd.f32 %v1241, %v1273
        %v1306 = vadd.f32 %v1242, %v1274
        %v1307 = vadd.f32 %v1243, %v1275
        %v1308 = vadd.f32 %v1244, %v1276
        %v1309 = vadd.f32 %v1245, %v1277
        %v1310 = vadd.f32 %v1246, %v1278
        %v1311 = vadd.f32 %v1247, %v1279
        %v1312 = vadd.f32 %v1248, %v1280
        %v1313 = vadd.f32 %v1249, %v1281
        %v1314 = vadd.f32 %v1250, %v1282
        %v1315 = vadd.f32 %v1251, %v1283
        %v1316 = vadd.f32 %v1252, %v1284
        %v1317 = vadd.f32 %v1253, %v1285
        %v1318 = vadd.f32 %v1254, %v1286
        %v1319 = vadd.f32 %v1255, %v1287
        %v1320 = vadd.f32 %v1256, %v1288
        %v1321 = vadd.f32 %v1257, %v1289
        %v1322 = vadd.f32 %v1258, %v1290
        %v1323 = vadd.f32 %v1259, %v1291
        %v1324 = vadd.f32 %v1260, %v1292
        %v1325 = vadd.f32 %v1261, %v1293
        %v1326 = vld [vmem:[#allocation2 + $0x8] sm:$0xff]
        %v1327 = vld [vmem:[#allocation2 + $0x10] sm:$0xff]
        %v1328 = vld [vmem:[#allocation2 + $0x28] sm:$0xff]
        %v1329 = vld [vmem:[#allocation2 + $0x30] sm:$0xff]
        %v1330 = vld [vmem:[#allocation2 + $0x48] sm:$0xff]
        %v1331 = vld [vmem:[#allocation2 + $0x50] sm:$0xff]
        %v1332 = vld [vmem:[#allocation2 + $0x68] sm:$0xff]
        %v1333 = vld [vmem:[#allocation2 + $0x70] sm:$0xff]
        %v1334 = vld [vmem:[#allocation2 + $0x88] sm:$0xff]
        %v1335 = vld [vmem:[#allocation2 + $0x90] sm:$0xff]
        %v1336 = vld [vmem:[#allocation2 + $0xa8] sm:$0xff]
        %v1337 = vld [vmem:[#allocation2 + $0xb0] sm:$0xff]
        %v1338 = vld [vmem:[#allocation2 + $0xc8] sm:$0xff]
        %v1339 = vld [vmem:[#allocation2 + $0xd0] sm:$0xff]
        %v1340 = vld [vmem:[#allocation2 + $0xe8] sm:$0xff]
        %v1341 = vld [vmem:[#allocation2 + $0xf0] sm:$0xff]
        %v1342 = vld [vmem:[#allocation2 + $0x108] sm:$0xff]
        %v1343 = vld [vmem:[#allocation2 + $0x110] sm:$0xff]
        %v1344 = vld [vmem:[#allocation2 + $0x128] sm:$0xff]
        %v1345 = vld [vmem:[#allocation2 + $0x130] sm:$0xff]
        %v1346 = vld [vmem:[#allocation2 + $0x148] sm:$0xff]
        %v1347 = vld [vmem:[#allocation2 + $0x150] sm:$0xff]
        %v1348 = vld [vmem:[#allocation2 + $0x168] sm:$0xff]
        %v1349 = vld [vmem:[#allocation2 + $0x170] sm:$0xff]
        %v1350 = vld [vmem:[#allocation2 + $0x188] sm:$0xff]
        %v1351 = vld [vmem:[#allocation2 + $0x190] sm:$0xff]
        %v1352 = vld [vmem:[#allocation2 + $0x1a8] sm:$0xff]
        %v1353 = vld [vmem:[#allocation2 + $0x1b0] sm:$0xff]
        %v1354 = vld [vmem:[#allocation2 + $0x1c8] sm:$0xff]
        %v1355 = vld [vmem:[#allocation2 + $0x1d0] sm:$0xff]
        %v1356 = vld [vmem:[#allocation2 + $0x1e8] sm:$0xff]
        %v1357 = vld [vmem:[#allocation2 + $0x1f0] sm:$0xff]
        %v1358 = vadd.f32 %v1294, %v1326
        %v1359 = vadd.f32 %v1295, %v1327
        %v1360 = vadd.f32 %v1296, %v1328
        %v1361 = vadd.f32 %v1297, %v1329
        %v1362 = vadd.f32 %v1298, %v1330
        %v1363 = vadd.f32 %v1299, %v1331
        %v1364 = vadd.f32 %v1300, %v1332
        %v1365 = vadd.f32 %v1301, %v1333
        %v1366 = vadd.f32 %v1302, %v1334
        %v1367 = vadd.f32 %v1303, %v1335
        %v1368 = vadd.f32 %v1304, %v1336
        %v1369 = vadd.f32 %v1305, %v1337
        %v1370 = vadd.f32 %v1306, %v1338
        %v1371 = vadd.f32 %v1307, %v1339
        %v1372 = vadd.f32 %v1308, %v1340
        %v1373 = vadd.f32 %v1309, %v1341
        %v1374 = vadd.f32 %v1310, %v1342
        %v1375 = vadd.f32 %v1311, %v1343
        %v1376 = vadd.f32 %v1312, %v1344
        %v1377 = vadd.f32 %v1313, %v1345
        %v1378 = vadd.f32 %v1314, %v1346
        %v1379 = vadd.f32 %v1315, %v1347
        %v1380 = vadd.f32 %v1316, %v1348
        %v1381 = vadd.f32 %v1317, %v1349
        %v1382 = vadd.f32 %v1318, %v1350
        %v1383 = vadd.f32 %v1319, %v1351
        %v1384 = vadd.f32 %v1320, %v1352
        %v1385 = vadd.f32 %v1321, %v1353
        %v1386 = vadd.f32 %v1322, %v1354
        %v1387 = vadd.f32 %v1323, %v1355
        %v1388 = vadd.f32 %v1324, %v1356
        %v1389 = vadd.f32 %v1325, %v1357
        %v1390 = vld [vmem:[#allocation2 + $0x9] sm:$0xff]
        %v1391 = vld [vmem:[#allocation2 + $0x11] sm:$0xff]
        %v1392 = vld [vmem:[#allocation2 + $0x29] sm:$0xff]
        %v1393 = vld [vmem:[#allocation2 + $0x31] sm:$0xff]
        %v1394 = vld [vmem:[#allocation2 + $0x49] sm:$0xff]
        %v1395 = vld [vmem:[#allocation2 + $0x51] sm:$0xff]
        %v1396 = vld [vmem:[#allocation2 + $0x69] sm:$0xff]
        %v1397 = vld [vmem:[#allocation2 + $0x71] sm:$0xff]
        %v1398 = vld [vmem:[#allocation2 + $0x89] sm:$0xff]
        %v1399 = vld [vmem:[#allocation2 + $0x91] sm:$0xff]
        %v1400 = vld [vmem:[#allocation2 + $0xa9] sm:$0xff]
        %v1401 = vld [vmem:[#allocation2 + $0xb1] sm:$0xff]
        %v1402 = vld [vmem:[#allocation2 + $0xc9] sm:$0xff]
        %v1403 = vld [vmem:[#allocation2 + $0xd1] sm:$0xff]
        %v1404 = vld [vmem:[#allocation2 + $0xe9] sm:$0xff]
        %v1405 = vld [vmem:[#allocation2 + $0xf1] sm:$0xff]
        %v1406 = vld [vmem:[#allocation2 + $0x109] sm:$0xff]
        %v1407 = vld [vmem:[#allocation2 + $0x111] sm:$0xff]
        %v1408 = vld [vmem:[#allocation2 + $0x129] sm:$0xff]
        %v1409 = vld [vmem:[#allocation2 + $0x131] sm:$0xff]
        %v1410 = vld [vmem:[#allocation2 + $0x149] sm:$0xff]
        %v1411 = vld [vmem:[#allocation2 + $0x151] sm:$0xff]
        %v1412 = vld [vmem:[#allocation2 + $0x169] sm:$0xff]
        %v1413 = vld [vmem:[#allocation2 + $0x171] sm:$0xff]
        %v1414 = vld [vmem:[#allocation2 + $0x189] sm:$0xff]
        %v1415 = vld [vmem:[#allocation2 + $0x191] sm:$0xff]
        %v1416 = vld [vmem:[#allocation2 + $0x1a9] sm:$0xff]
        %v1417 = vld [vmem:[#allocation2 + $0x1b1] sm:$0xff]
        %v1418 = vld [vmem:[#allocation2 + $0x1c9] sm:$0xff]
        %v1419 = vld [vmem:[#allocation2 + $0x1d1] sm:$0xff]
        %v1420 = vld [vmem:[#allocation2 + $0x1e9] sm:$0xff]
        %v1421 = vld [vmem:[#allocation2 + $0x1f1] sm:$0xff]
        %v1422 = vadd.f32 %v1358, %v1390
        %v1423 = vadd.f32 %v1359, %v1391
        %v1424 = vadd.f32 %v1360, %v1392
        %v1425 = vadd.f32 %v1361, %v1393
        %v1426 = vadd.f32 %v1362, %v1394
        %v1427 = vadd.f32 %v1363, %v1395
        %v1428 = vadd.f32 %v1364, %v1396
        %v1429 = vadd.f32 %v1365, %v1397
        %v1430 = vadd.f32 %v1366, %v1398
        %v1431 = vadd.f32 %v1367, %v1399
        %v1432 = vadd.f32 %v1368, %v1400
        %v1433 = vadd.f32 %v1369, %v1401
        %v1434 = vadd.f32 %v1370, %v1402
        %v1435 = vadd.f32 %v1371, %v1403
        %v1436 = vadd.f32 %v1372, %v1404
        %v1437 = vadd.f32 %v1373, %v1405
        %v1438 = vadd.f32 %v1374, %v1406
        %v1439 = vadd.f32 %v1375, %v1407
        %v1440 = vadd.f32 %v1376, %v1408
        %v1441 = vadd.f32 %v1377, %v1409
        %v1442 = vadd.f32 %v1378, %v1410
        %v1443 = vadd.f32 %v1379, %v1411
        %v1444 = vadd.f32 %v1380, %v1412
        %v1445 = vadd.f32 %v1381, %v1413
        %v1446 = vadd.f32 %v1382, %v1414
        %v1447 = vadd.f32 %v1383, %v1415
        %v1448 = vadd.f32 %v1384, %v1416
        %v1449 = vadd.f32 %v1385, %v1417
        %v1450 = vadd.f32 %v1386, %v1418
        %v1451 = vadd.f32 %v1387, %v1419
        %v1452 = vadd.f32 %v1388, %v1420
        %v1453 = vadd.f32 %v1389, %v1421
        %v1454 = vld [vmem:[#allocation2 + $0xa] sm:$0xff]
        %v1455 = vld [vmem:[#allocation2 + $0x12] sm:$0xff]
        %v1456 = vld [vmem:[#allocation2 + $0x2a] sm:$0xff]
        %v1457 = vld [vmem:[#allocation2 + $0x32] sm:$0xff]
        %v1458 = vld [vmem:[#allocation2 + $0x4a] sm:$0xff]
        %v1459 = vld [vmem:[#allocation2 + $0x52] sm:$0xff]
        %v1460 = vld [vmem:[#allocation2 + $0x6a] sm:$0xff]
        %v1461 = vld [vmem:[#allocation2 + $0x72] sm:$0xff]
        %v1462 = vld [vmem:[#allocation2 + $0x8a] sm:$0xff]
        %v1463 = vld [vmem:[#allocation2 + $0x92] sm:$0xff]
        %v1464 = vld [vmem:[#allocation2 + $0xaa] sm:$0xff]
        %v1465 = vld [vmem:[#allocation2 + $0xb2] sm:$0xff]
        %v1466 = vld [vmem:[#allocation2 + $0xca] sm:$0xff]
        %v1467 = vld [vmem:[#allocation2 + $0xd2] sm:$0xff]
        %v1468 = vld [vmem:[#allocation2 + $0xea] sm:$0xff]
        %v1469 = vld [vmem:[#allocation2 + $0xf2] sm:$0xff]
        %v1470 = vld [vmem:[#allocation2 + $0x10a] sm:$0xff]
        %v1471 = vld [vmem:[#allocation2 + $0x112] sm:$0xff]
        %v1472 = vld [vmem:[#allocation2 + $0x12a] sm:$0xff]
        %v1473 = vld [vmem:[#allocation2 + $0x132] sm:$0xff]
        %v1474 = vld [vmem:[#allocation2 + $0x14a] sm:$0xff]
        %v1475 = vld [vmem:[#allocation2 + $0x152] sm:$0xff]
        %v1476 = vld [vmem:[#allocation2 + $0x16a] sm:$0xff]
        %v1477 = vld [vmem:[#allocation2 + $0x172] sm:$0xff]
        %v1478 = vld [vmem:[#allocation2 + $0x18a] sm:$0xff]
        %v1479 = vld [vmem:[#allocation2 + $0x192] sm:$0xff]
        %v1480 = vld [vmem:[#allocation2 + $0x1aa] sm:$0xff]
        %v1481 = vld [vmem:[#allocation2 + $0x1b2] sm:$0xff]
        %v1482 = vld [vmem:[#allocation2 + $0x1ca] sm:$0xff]
        %v1483 = vld [vmem:[#allocation2 + $0x1d2] sm:$0xff]
        %v1484 = vld [vmem:[#allocation2 + $0x1ea] sm:$0xff]
        %v1485 = vld [vmem:[#allocation2 + $0x1f2] sm:$0xff]
        %v1486 = vadd.f32 %v1422, %v1454
        %v1487 = vadd.f32 %v1423, %v1455
        %v1488 = vadd.f32 %v1424, %v1456
        %v1489 = vadd.f32 %v1425, %v1457
        %v1490 = vadd.f32 %v1426, %v1458
        %v1491 = vadd.f32 %v1427, %v1459
        %v1492 = vadd.f32 %v1428, %v1460
        %v1493 = vadd.f32 %v1429, %v1461
        %v1494 = vadd.f32 %v1430, %v1462
        %v1495 = vadd.f32 %v1431, %v1463
        %v1496 = vadd.f32 %v1432, %v1464
        %v1497 = vadd.f32 %v1433, %v1465
        %v1498 = vadd.f32 %v1434, %v1466
        %v1499 = vadd.f32 %v1435, %v1467
        %v1500 = vadd.f32 %v1436, %v1468
        %v1501 = vadd.f32 %v1437, %v1469
        %v1502 = vadd.f32 %v1438, %v1470
        %v1503 = vadd.f32 %v1439, %v1471
        %v1504 = vadd.f32 %v1440, %v1472
        %v1505 = vadd.f32 %v1441, %v1473
        %v1506 = vadd.f32 %v1442, %v1474
        %v1507 = vadd.f32 %v1443, %v1475
        %v1508 = vadd.f32 %v1444, %v1476
        %v1509 = vadd.f32 %v1445, %v1477
        %v1510 = vadd.f32 %v1446, %v1478
        %v1511 = vadd.f32 %v1447, %v1479
        %v1512 = vadd.f32 %v1448, %v1480
        %v1513 = vadd.f32 %v1449, %v1481
        %v1514 = vadd.f32 %v1450, %v1482
        %v1515 = vadd.f32 %v1451, %v1483
        %v1516 = vadd.f32 %v1452, %v1484
        %v1517 = vadd.f32 %v1453, %v1485
        %s1518 = scalar_lea.vmem [#allocation3], 128
        %1519 = vst.msk [vmem:[%s1518] sm:$0xff] %vm239, %v1486
        %1520 = vst.msk [vmem:[%s1518 + $0x8] sm:$0xff] %vm239, %v1487
        %1521 = vst.msk [vmem:[%s1518 + $0x10] sm:$0xff] %vm239, %v1488
        %1522 = vst.msk [vmem:[%s1518 + $0x18] sm:$0xff] %vm239, %v1489
        %1523 = vst.msk [vmem:[%s1518 + $0x20] sm:$0xff] %vm239, %v1490
        %1524 = vst.msk [vmem:[%s1518 + $0x28] sm:$0xff] %vm239, %v1491
        %1525 = vst.msk [vmem:[%s1518 + $0x30] sm:$0xff] %vm239, %v1492
        %1526 = vst.msk [vmem:[%s1518 + $0x38] sm:$0xff] %vm239, %v1493
        %1527 = vst.msk [vmem:[%s1518 + $0x40] sm:$0xff] %vm239, %v1494
        %1528 = vst.msk [vmem:[%s1518 + $0x48] sm:$0xff] %vm239, %v1495
        %1529 = vst.msk [vmem:[%s1518 + $0x50] sm:$0xff] %vm239, %v1496
        %1530 = vst.msk [vmem:[%s1518 + $0x58] sm:$0xff] %vm239, %v1497
        %1531 = vst.msk [vmem:[%s1518 + $0x60] sm:$0xff] %vm239, %v1498
        %1532 = vst.msk [vmem:[%s1518 + $0x68] sm:$0xff] %vm239, %v1499
        %1533 = vst.msk [vmem:[%s1518 + $0x70] sm:$0xff] %vm239, %v1500
        %1534 = vst.msk [vmem:[%s1518 + $0x78] sm:$0xff] %vm239, %v1501
        %1535 = vst.msk [vmem:[%s1518 + $0x80] sm:$0xff] %vm239, %v1502
        %1536 = vst.msk [vmem:[%s1518 + $0x88] sm:$0xff] %vm239, %v1503
        %1537 = vst.msk [vmem:[%s1518 + $0x90] sm:$0xff] %vm239, %v1504
        %1538 = vst.msk [vmem:[%s1518 + $0x98] sm:$0xff] %vm239, %v1505
        %1539 = vst.msk [vmem:[%s1518 + $0xa0] sm:$0xff] %vm239, %v1506
        %1540 = vst.msk [vmem:[%s1518 + $0xa8] sm:$0xff] %vm239, %v1507
        %1541 = vst.msk [vmem:[%s1518 + $0xb0] sm:$0xff] %vm239, %v1508
        %1542 = vst.msk [vmem:[%s1518 + $0xb8] sm:$0xff] %vm239, %v1509
        %1543 = vst.msk [vmem:[%s1518 + $0xc0] sm:$0xff] %vm239, %v1510
        %1544 = vst.msk [vmem:[%s1518 + $0xc8] sm:$0xff] %vm239, %v1511
        %1545 = vst.msk [vmem:[%s1518 + $0xd0] sm:$0xff] %vm239, %v1512
        %1546 = vst.msk [vmem:[%s1518 + $0xd8] sm:$0xff] %vm239, %v1513
        %1547 = vst.msk [vmem:[%s1518 + $0xe0] sm:$0xff] %vm239, %v1514
        %1548 = vst.msk [vmem:[%s1518 + $0xe8] sm:$0xff] %vm239, %v1515
        %1549 = vst.msk [vmem:[%s1518 + $0xf0] sm:$0xff] %vm239, %v1516
        %1550 = vst.msk [vmem:[%s1518 + $0xf8] sm:$0xff] %vm239, %v1517
        %s1551 = scalar_lea.vmem [#allocation3], 96
        %v1552 = vld [vmem:[%s1551] sm:$0xff]
        %v1553 = vld [vmem:[%s1551 + $0x8] sm:$0xff]
        %v1554 = vld [vmem:[%s1551 + $0x10] sm:$0xff]
        %v1555 = vld [vmem:[%s1551 + $0x18] sm:$0xff]
        %v1556 = vld [vmem:[%s1551 + $0x20] sm:$0xff]
        %v1557 = vld [vmem:[%s1551 + $0x28] sm:$0xff]
        %v1558 = vld [vmem:[%s1551 + $0x30] sm:$0xff]
        %v1559 = vld [vmem:[%s1551 + $0x38] sm:$0xff]
        %v1560 = vld [vmem:[%s1551 + $0x40] sm:$0xff]
        %v1561 = vld [vmem:[%s1551 + $0x48] sm:$0xff]
        %v1562 = vld [vmem:[%s1551 + $0x50] sm:$0xff]
        %v1563 = vld [vmem:[%s1551 + $0x58] sm:$0xff]
        %v1564 = vld [vmem:[%s1551 + $0x60] sm:$0xff]
        %v1565 = vld [vmem:[%s1551 + $0x68] sm:$0xff]
        %v1566 = vld [vmem:[%s1551 + $0x70] sm:$0xff]
        %v1567 = vld [vmem:[%s1551 + $0x78] sm:$0xff]
        %v1568 = vld [vmem:[%s1551 + $0x80] sm:$0xff]
        %v1569 = vld [vmem:[%s1551 + $0x88] sm:$0xff]
        %v1570 = vld [vmem:[%s1551 + $0x90] sm:$0xff]
        %v1571 = vld [vmem:[%s1551 + $0x98] sm:$0xff]
        %v1572 = vld [vmem:[%s1551 + $0xa0] sm:$0xff]
        %v1573 = vld [vmem:[%s1551 + $0xa8] sm:$0xff]
        %v1574 = vld [vmem:[%s1551 + $0xb0] sm:$0xff]
        %v1575 = vld [vmem:[%s1551 + $0xb8] sm:$0xff]
        %v1576 = vld [vmem:[%s1551 + $0xc0] sm:$0xff]
        %v1577 = vld [vmem:[%s1551 + $0xc8] sm:$0xff]
        %v1578 = vld [vmem:[%s1551 + $0xd0] sm:$0xff]
        %v1579 = vld [vmem:[%s1551 + $0xd8] sm:$0xff]
        %v1580 = vld [vmem:[%s1551 + $0xe0] sm:$0xff]
        %v1581 = vld [vmem:[%s1551 + $0xe8] sm:$0xff]
        %v1582 = vld [vmem:[%s1551 + $0xf0] sm:$0xff]
        %v1583 = vld [vmem:[%s1551 + $0xf8] sm:$0xff]
        %s1584 = scalar_lea.vmem [#allocation3], 112
        %v1585 = vld [vmem:[%s1584] sm:$0xff]
        %v1586 = vld [vmem:[%s1584 + $0x8] sm:$0xff]
        %v1587 = vld [vmem:[%s1584 + $0x10] sm:$0xff]
        %v1588 = vld [vmem:[%s1584 + $0x18] sm:$0xff]
        %v1589 = vld [vmem:[%s1584 + $0x20] sm:$0xff]
        %v1590 = vld [vmem:[%s1584 + $0x28] sm:$0xff]
        %v1591 = vld [vmem:[%s1584 + $0x30] sm:$0xff]
        %v1592 = vld [vmem:[%s1584 + $0x38] sm:$0xff]
        %v1593 = vld [vmem:[%s1584 + $0x40] sm:$0xff]
        %v1594 = vld [vmem:[%s1584 + $0x48] sm:$0xff]
        %v1595 = vld [vmem:[%s1584 + $0x50] sm:$0xff]
        %v1596 = vld [vmem:[%s1584 + $0x58] sm:$0xff]
        %v1597 = vld [vmem:[%s1584 + $0x60] sm:$0xff]
        %v1598 = vld [vmem:[%s1584 + $0x68] sm:$0xff]
        %v1599 = vld [vmem:[%s1584 + $0x70] sm:$0xff]
        %v1600 = vld [vmem:[%s1584 + $0x78] sm:$0xff]
        %v1601 = vld [vmem:[%s1584 + $0x80] sm:$0xff]
        %v1602 = vld [vmem:[%s1584 + $0x88] sm:$0xff]
        %v1603 = vld [vmem:[%s1584 + $0x90] sm:$0xff]
        %v1604 = vld [vmem:[%s1584 + $0x98] sm:$0xff]
        %v1605 = vld [vmem:[%s1584 + $0xa0] sm:$0xff]
        %v1606 = vld [vmem:[%s1584 + $0xa8] sm:$0xff]
        %v1607 = vld [vmem:[%s1584 + $0xb0] sm:$0xff]
        %v1608 = vld [vmem:[%s1584 + $0xb8] sm:$0xff]
        %v1609 = vld [vmem:[%s1584 + $0xc0] sm:$0xff]
        %v1610 = vld [vmem:[%s1584 + $0xc8] sm:$0xff]
        %v1611 = vld [vmem:[%s1584 + $0xd0] sm:$0xff]
        %v1612 = vld [vmem:[%s1584 + $0xd8] sm:$0xff]
        %v1613 = vld [vmem:[%s1584 + $0xe0] sm:$0xff]
        %v1614 = vld [vmem:[%s1584 + $0xe8] sm:$0xff]
        %v1615 = vld [vmem:[%s1584 + $0xf0] sm:$0xff]
        %v1616 = vld [vmem:[%s1584 + $0xf8] sm:$0xff]
        %v1617 = vadd.f32 %v1552, %v1585
        %v1618 = vadd.f32 %v1553, %v1586
        %v1619 = vadd.f32 %v1554, %v1587
        %v1620 = vadd.f32 %v1555, %v1588
        %v1621 = vadd.f32 %v1556, %v1589
        %v1622 = vadd.f32 %v1557, %v1590
        %v1623 = vadd.f32 %v1558, %v1591
        %v1624 = vadd.f32 %v1559, %v1592
        %v1625 = vadd.f32 %v1560, %v1593
        %v1626 = vadd.f32 %v1561, %v1594
        %v1627 = vadd.f32 %v1562, %v1595
        %v1628 = vadd.f32 %v1563, %v1596
        %v1629 = vadd.f32 %v1564, %v1597
        %v1630 = vadd.f32 %v1565, %v1598
        %v1631 = vadd.f32 %v1566, %v1599
        %v1632 = vadd.f32 %v1567, %v1600
        %v1633 = vadd.f32 %v1568, %v1601
        %v1634 = vadd.f32 %v1569, %v1602
        %v1635 = vadd.f32 %v1570, %v1603
        %v1636 = vadd.f32 %v1571, %v1604
        %v1637 = vadd.f32 %v1572, %v1605
        %v1638 = vadd.f32 %v1573, %v1606
        %v1639 = vadd.f32 %v1574, %v1607
        %v1640 = vadd.f32 %v1575, %v1608
        %v1641 = vadd.f32 %v1576, %v1609
        %v1642 = vadd.f32 %v1577, %v1610
        %v1643 = vadd.f32 %v1578, %v1611
        %v1644 = vadd.f32 %v1579, %v1612
        %v1645 = vadd.f32 %v1580, %v1613
        %v1646 = vadd.f32 %v1581, %v1614
        %v1647 = vadd.f32 %v1582, %v1615
        %v1648 = vadd.f32 %v1583, %v1616
        %v1649 = vld [vmem:[%s1518] sm:$0xff]
        %v1650 = vld [vmem:[%s1518 + $0x8] sm:$0xff]
        %v1651 = vld [vmem:[%s1518 + $0x10] sm:$0xff]
        %v1652 = vld [vmem:[%s1518 + $0x18] sm:$0xff]
        %v1653 = vld [vmem:[%s1518 + $0x20] sm:$0xff]
        %v1654 = vld [vmem:[%s1518 + $0x28] sm:$0xff]
        %v1655 = vld [vmem:[%s1518 + $0x30] sm:$0xff]
        %v1656 = vld [vmem:[%s1518 + $0x38] sm:$0xff]
        %v1657 = vld [vmem:[%s1518 + $0x40] sm:$0xff]
        %v1658 = vld [vmem:[%s1518 + $0x48] sm:$0xff]
        %v1659 = vld [vmem:[%s1518 + $0x50] sm:$0xff]
        %v1660 = vld [vmem:[%s1518 + $0x58] sm:$0xff]
        %v1661 = vld [vmem:[%s1518 + $0x60] sm:$0xff]
        %v1662 = vld [vmem:[%s1518 + $0x68] sm:$0xff]
        %v1663 = vld [vmem:[%s1518 + $0x70] sm:$0xff]
        %v1664 = vld [vmem:[%s1518 + $0x78] sm:$0xff]
        %v1665 = vld [vmem:[%s1518 + $0x80] sm:$0xff]
        %v1666 = vld [vmem:[%s1518 + $0x88] sm:$0xff]
        %v1667 = vld [vmem:[%s1518 + $0x90] sm:$0xff]
        %v1668 = vld [vmem:[%s1518 + $0x98] sm:$0xff]
        %v1669 = vld [vmem:[%s1518 + $0xa0] sm:$0xff]
        %v1670 = vld [vmem:[%s1518 + $0xa8] sm:$0xff]
        %v1671 = vld [vmem:[%s1518 + $0xb0] sm:$0xff]
        %v1672 = vld [vmem:[%s1518 + $0xb8] sm:$0xff]
        %v1673 = vld [vmem:[%s1518 + $0xc0] sm:$0xff]
        %v1674 = vld [vmem:[%s1518 + $0xc8] sm:$0xff]
        %v1675 = vld [vmem:[%s1518 + $0xd0] sm:$0xff]
        %v1676 = vld [vmem:[%s1518 + $0xd8] sm:$0xff]
        %v1677 = vld [vmem:[%s1518 + $0xe0] sm:$0xff]
        %v1678 = vld [vmem:[%s1518 + $0xe8] sm:$0xff]
        %v1679 = vld [vmem:[%s1518 + $0xf0] sm:$0xff]
        %v1680 = vld [vmem:[%s1518 + $0xf8] sm:$0xff]
        %v1681 = vadd.f32 %v1617, %v1649
        %v1682 = vadd.f32 %v1618, %v1650
        %v1683 = vadd.f32 %v1619, %v1651
        %v1684 = vadd.f32 %v1620, %v1652
        %v1685 = vadd.f32 %v1621, %v1653
        %v1686 = vadd.f32 %v1622, %v1654
        %v1687 = vadd.f32 %v1623, %v1655
        %v1688 = vadd.f32 %v1624, %v1656
        %v1689 = vadd.f32 %v1625, %v1657
        %v1690 = vadd.f32 %v1626, %v1658
        %v1691 = vadd.f32 %v1627, %v1659
        %v1692 = vadd.f32 %v1628, %v1660
        %v1693 = vadd.f32 %v1629, %v1661
        %v1694 = vadd.f32 %v1630, %v1662
        %v1695 = vadd.f32 %v1631, %v1663
        %v1696 = vadd.f32 %v1632, %v1664
        %v1697 = vadd.f32 %v1633, %v1665
        %v1698 = vadd.f32 %v1634, %v1666
        %v1699 = vadd.f32 %v1635, %v1667
        %v1700 = vadd.f32 %v1636, %v1668
        %v1701 = vadd.f32 %v1637, %v1669
        %v1702 = vadd.f32 %v1638, %v1670
        %v1703 = vadd.f32 %v1639, %v1671
        %v1704 = vadd.f32 %v1640, %v1672
        %v1705 = vadd.f32 %v1641, %v1673
        %v1706 = vadd.f32 %v1642, %v1674
        %v1707 = vadd.f32 %v1643, %v1675
        %v1708 = vadd.f32 %v1644, %v1676
        %v1709 = vadd.f32 %v1645, %v1677
        %v1710 = vadd.f32 %v1646, %v1678
        %v1711 = vadd.f32 %v1647, %v1679
        %v1712 = vadd.f32 %v1648, %v1680
        %s1713 = scalar_lea.vmem [#allocation3], 144
        %v1714 = vld [vmem:[%s1713] sm:$0xff]
        %v1715 = vld [vmem:[%s1713 + $0x8] sm:$0xff]
        %v1716 = vld [vmem:[%s1713 + $0x10] sm:$0xff]
        %v1717 = vld [vmem:[%s1713 + $0x18] sm:$0xff]
        %v1718 = vld [vmem:[%s1713 + $0x20] sm:$0xff]
        %v1719 = vld [vmem:[%s1713 + $0x28] sm:$0xff]
        %v1720 = vld [vmem:[%s1713 + $0x30] sm:$0xff]
        %v1721 = vld [vmem:[%s1713 + $0x38] sm:$0xff]
        %v1722 = vld [vmem:[%s1713 + $0x40] sm:$0xff]
        %v1723 = vld [vmem:[%s1713 + $0x48] sm:$0xff]
        %v1724 = vld [vmem:[%s1713 + $0x50] sm:$0xff]
        %v1725 = vld [vmem:[%s1713 + $0x58] sm:$0xff]
        %v1726 = vld [vmem:[%s1713 + $0x60] sm:$0xff]
        %v1727 = vld [vmem:[%s1713 + $0x68] sm:$0xff]
        %v1728 = vld [vmem:[%s1713 + $0x70] sm:$0xff]
        %v1729 = vld [vmem:[%s1713 + $0x78] sm:$0xff]
        %v1730 = vld [vmem:[%s1713 + $0x80] sm:$0xff]
        %v1731 = vld [vmem:[%s1713 + $0x88] sm:$0xff]
        %v1732 = vld [vmem:[%s1713 + $0x90] sm:$0xff]
        %v1733 = vld [vmem:[%s1713 + $0x98] sm:$0xff]
        %v1734 = vld [vmem:[%s1713 + $0xa0] sm:$0xff]
        %v1735 = vld [vmem:[%s1713 + $0xa8] sm:$0xff]
        %v1736 = vld [vmem:[%s1713 + $0xb0] sm:$0xff]
        %v1737 = vld [vmem:[%s1713 + $0xb8] sm:$0xff]
        %v1738 = vld [vmem:[%s1713 + $0xc0] sm:$0xff]
        %v1739 = vld [vmem:[%s1713 + $0xc8] sm:$0xff]
        %v1740 = vld [vmem:[%s1713 + $0xd0] sm:$0xff]
        %v1741 = vld [vmem:[%s1713 + $0xd8] sm:$0xff]
        %v1742 = vld [vmem:[%s1713 + $0xe0] sm:$0xff]
        %v1743 = vld [vmem:[%s1713 + $0xe8] sm:$0xff]
        %v1744 = vld [vmem:[%s1713 + $0xf0] sm:$0xff]
        %v1745 = vld [vmem:[%s1713 + $0xf8] sm:$0xff]
        %v1746 = vadd.f32 %v1681, %v1714
        %v1747 = vadd.f32 %v1682, %v1715
        %v1748 = vadd.f32 %v1683, %v1716
        %v1749 = vadd.f32 %v1684, %v1717
        %v1750 = vadd.f32 %v1685, %v1718
        %v1751 = vadd.f32 %v1686, %v1719
        %v1752 = vadd.f32 %v1687, %v1720
        %v1753 = vadd.f32 %v1688, %v1721
        %v1754 = vadd.f32 %v1689, %v1722
        %v1755 = vadd.f32 %v1690, %v1723
        %v1756 = vadd.f32 %v1691, %v1724
        %v1757 = vadd.f32 %v1692, %v1725
        %v1758 = vadd.f32 %v1693, %v1726
        %v1759 = vadd.f32 %v1694, %v1727
        %v1760 = vadd.f32 %v1695, %v1728
        %v1761 = vadd.f32 %v1696, %v1729
        %v1762 = vadd.f32 %v1697, %v1730
        %v1763 = vadd.f32 %v1698, %v1731
        %v1764 = vadd.f32 %v1699, %v1732
        %v1765 = vadd.f32 %v1700, %v1733
        %v1766 = vadd.f32 %v1701, %v1734
        %v1767 = vadd.f32 %v1702, %v1735
        %v1768 = vadd.f32 %v1703, %v1736
        %v1769 = vadd.f32 %v1704, %v1737
        %v1770 = vadd.f32 %v1705, %v1738
        %v1771 = vadd.f32 %v1706, %v1739
        %v1772 = vadd.f32 %v1707, %v1740
        %v1773 = vadd.f32 %v1708, %v1741
        %v1774 = vadd.f32 %v1709, %v1742
        %v1775 = vadd.f32 %v1710, %v1743
        %v1776 = vadd.f32 %v1711, %v1744
        %v1777 = vadd.f32 %v1712, %v1745
        %s1778 = scalar_lea.vmem [#allocation3], 160
        %v1779 = vld [vmem:[%s1778] sm:$0xff]
        %v1780 = vld [vmem:[%s1778 + $0x8] sm:$0xff]
        %v1781 = vld [vmem:[%s1778 + $0x10] sm:$0xff]
        %v1782 = vld [vmem:[%s1778 + $0x18] sm:$0xff]
        %v1783 = vld [vmem:[%s1778 + $0x20] sm:$0xff]
        %v1784 = vld [vmem:[%s1778 + $0x28] sm:$0xff]
        %v1785 = vld [vmem:[%s1778 + $0x30] sm:$0xff]
        %v1786 = vld [vmem:[%s1778 + $0x38] sm:$0xff]
        %v1787 = vld [vmem:[%s1778 + $0x40] sm:$0xff]
        %v1788 = vld [vmem:[%s1778 + $0x48] sm:$0xff]
        %v1789 = vld [vmem:[%s1778 + $0x50] sm:$0xff]
        %v1790 = vld [vmem:[%s1778 + $0x58] sm:$0xff]
        %v1791 = vld [vmem:[%s1778 + $0x60] sm:$0xff]
        %v1792 = vld [vmem:[%s1778 + $0x68] sm:$0xff]
        %v1793 = vld [vmem:[%s1778 + $0x70] sm:$0xff]
        %v1794 = vld [vmem:[%s1778 + $0x78] sm:$0xff]
        %v1795 = vld [vmem:[%s1778 + $0x80] sm:$0xff]
        %v1796 = vld [vmem:[%s1778 + $0x88] sm:$0xff]
        %v1797 = vld [vmem:[%s1778 + $0x90] sm:$0xff]
        %v1798 = vld [vmem:[%s1778 + $0x98] sm:$0xff]
        %v1799 = vld [vmem:[%s1778 + $0xa0] sm:$0xff]
        %v1800 = vld [vmem:[%s1778 + $0xa8] sm:$0xff]
        %v1801 = vld [vmem:[%s1778 + $0xb0] sm:$0xff]
        %v1802 = vld [vmem:[%s1778 + $0xb8] sm:$0xff]
        %v1803 = vld [vmem:[%s1778 + $0xc0] sm:$0xff]
        %v1804 = vld [vmem:[%s1778 + $0xc8] sm:$0xff]
        %v1805 = vld [vmem:[%s1778 + $0xd0] sm:$0xff]
        %v1806 = vld [vmem:[%s1778 + $0xd8] sm:$0xff]
        %v1807 = vld [vmem:[%s1778 + $0xe0] sm:$0xff]
        %v1808 = vld [vmem:[%s1778 + $0xe8] sm:$0xff]
        %v1809 = vld [vmem:[%s1778 + $0xf0] sm:$0xff]
        %v1810 = vld [vmem:[%s1778 + $0xf8] sm:$0xff]
        %v1811 = vadd.f32 %v1746, %v1779
        %v1812 = vadd.f32 %v1747, %v1780
        %v1813 = vadd.f32 %v1748, %v1781
        %v1814 = vadd.f32 %v1749, %v1782
        %v1815 = vadd.f32 %v1750, %v1783
        %v1816 = vadd.f32 %v1751, %v1784
        %v1817 = vadd.f32 %v1752, %v1785
        %v1818 = vadd.f32 %v1753, %v1786
        %v1819 = vadd.f32 %v1754, %v1787
        %v1820 = vadd.f32 %v1755, %v1788
        %v1821 = vadd.f32 %v1756, %v1789
        %v1822 = vadd.f32 %v1757, %v1790
        %v1823 = vadd.f32 %v1758, %v1791
        %v1824 = vadd.f32 %v1759, %v1792
        %v1825 = vadd.f32 %v1760, %v1793
        %v1826 = vadd.f32 %v1761, %v1794
        %v1827 = vadd.f32 %v1762, %v1795
        %v1828 = vadd.f32 %v1763, %v1796
        %v1829 = vadd.f32 %v1764, %v1797
        %v1830 = vadd.f32 %v1765, %v1798
        %v1831 = vadd.f32 %v1766, %v1799
        %v1832 = vadd.f32 %v1767, %v1800
        %v1833 = vadd.f32 %v1768, %v1801
        %v1834 = vadd.f32 %v1769, %v1802
        %v1835 = vadd.f32 %v1770, %v1803
        %v1836 = vadd.f32 %v1771, %v1804
        %v1837 = vadd.f32 %v1772, %v1805
        %v1838 = vadd.f32 %v1773, %v1806
        %v1839 = vadd.f32 %v1774, %v1807
        %v1840 = vadd.f32 %v1775, %v1808
        %v1841 = vadd.f32 %v1776, %v1809
        %v1842 = vadd.f32 %v1777, %v1810
        %v1843 = vmul.f32 %v1811, 0.04
        %v1844 = vmul.f32 %v1812, 0.04
        %v1845 = vmul.f32 %v1813, 0.04
        %v1846 = vmul.f32 %v1814, 0.04
        %v1847 = vmul.f32 %v1815, 0.04
        %v1848 = vmul.f32 %v1816, 0.04
        %v1849 = vmul.f32 %v1817, 0.04
        %v1850 = vmul.f32 %v1818, 0.04
        %v1851 = vmul.f32 %v1819, 0.04
        %v1852 = vmul.f32 %v1820, 0.04
        %v1853 = vmul.f32 %v1821, 0.04
        %v1854 = vmul.f32 %v1822, 0.04
        %v1855 = vmul.f32 %v1823, 0.04
        %v1856 = vmul.f32 %v1824, 0.04
        %v1857 = vmul.f32 %v1825, 0.04
        %v1858 = vmul.f32 %v1826, 0.04
        %v1859 = vmul.f32 %v1827, 0.04
        %v1860 = vmul.f32 %v1828, 0.04
        %v1861 = vmul.f32 %v1829, 0.04
        %v1862 = vmul.f32 %v1830, 0.04
        %v1863 = vmul.f32 %v1831, 0.04
        %v1864 = vmul.f32 %v1832, 0.04
        %v1865 = vmul.f32 %v1833, 0.04
        %v1866 = vmul.f32 %v1834, 0.04
        %v1867 = vmul.f32 %v1835, 0.04
        %v1868 = vmul.f32 %v1836, 0.04
        %v1869 = vmul.f32 %v1837, 0.04
        %v1870 = vmul.f32 %v1838, 0.04
        %v1871 = vmul.f32 %v1839, 0.04
        %v1872 = vmul.f32 %v1840, 0.04
        %v1873 = vmul.f32 %v1841, 0.04
        %v1874 = vmul.f32 %v1842, 0.04
        %v1875 = vld [vmem:[#allocation5] sm:$0x1]
        %v1877 = vlaneseq
        %v1878 = vshrl.u32 %v1877, 7
        %v1879 = vsub.s32 0, %v1878
        %v1880 = vrot.slane %v1875, %v1879
        %v1882 = vadd.f32 %v1843, %v1880
        %v1883 = vadd.f32 %v1844, %v1880
        %v1884 = vadd.f32 %v1845, %v1880
        %v1885 = vadd.f32 %v1846, %v1880
        %v1886 = vadd.f32 %v1847, %v1880
        %v1887 = vadd.f32 %v1848, %v1880
        %v1888 = vadd.f32 %v1849, %v1880
        %v1889 = vadd.f32 %v1850, %v1880
        %v1890 = vadd.f32 %v1851, %v1880
        %v1891 = vadd.f32 %v1852, %v1880
        %v1892 = vadd.f32 %v1853, %v1880
        %v1893 = vadd.f32 %v1854, %v1880
        %v1894 = vadd.f32 %v1855, %v1880
        %v1895 = vadd.f32 %v1856, %v1880
        %v1896 = vadd.f32 %v1857, %v1880
        %v1897 = vadd.f32 %v1858, %v1880
        %v1898 = vadd.f32 %v1859, %v1880
        %v1899 = vadd.f32 %v1860, %v1880
        %v1900 = vadd.f32 %v1861, %v1880
        %v1901 = vadd.f32 %v1862, %v1880
        %v1902 = vadd.f32 %v1863, %v1880
        %v1903 = vadd.f32 %v1864, %v1880
        %v1904 = vadd.f32 %v1865, %v1880
        %v1905 = vadd.f32 %v1866, %v1880
        %v1906 = vadd.f32 %v1867, %v1880
        %v1907 = vadd.f32 %v1868, %v1880
        %v1908 = vadd.f32 %v1869, %v1880
        %v1909 = vadd.f32 %v1870, %v1880
        %v1910 = vadd.f32 %v1871, %v1880
        %v1911 = vadd.f32 %v1872, %v1880
        %v1912 = vadd.f32 %v1873, %v1880
        %v1913 = vadd.f32 %v1874, %v1880
        %v1914 = vmax.f32 %v1882, 0.0
        %v1915 = vmax.f32 %v1883, 0.0
        %v1916 = vmax.f32 %v1884, 0.0
        %v1917 = vmax.f32 %v1885, 0.0
        %v1918 = vmax.f32 %v1886, 0.0
        %v1919 = vmax.f32 %v1887, 0.0
        %v1920 = vmax.f32 %v1888, 0.0
        %v1921 = vmax.f32 %v1889, 0.0
        %v1922 = vmax.f32 %v1890, 0.0
        %v1923 = vmax.f32 %v1891, 0.0
        %v1924 = vmax.f32 %v1892, 0.0
        %v1925 = vmax.f32 %v1893, 0.0
        %v1926 = vmax.f32 %v1894, 0.0
        %v1927 = vmax.f32 %v1895, 0.0
        %v1928 = vmax.f32 %v1896, 0.0
        %v1929 = vmax.f32 %v1897, 0.0
        %v1930 = vmax.f32 %v1898, 0.0
        %v1931 = vmax.f32 %v1899, 0.0
        %v1932 = vmax.f32 %v1900, 0.0
        %v1933 = vmax.f32 %v1901, 0.0
        %v1934 = vmax.f32 %v1902, 0.0
        %v1935 = vmax.f32 %v1903, 0.0
        %v1936 = vmax.f32 %v1904, 0.0
        %v1937 = vmax.f32 %v1905, 0.0
        %v1938 = vmax.f32 %v1906, 0.0
        %v1939 = vmax.f32 %v1907, 0.0
        %v1940 = vmax.f32 %v1908, 0.0
        %v1941 = vmax.f32 %v1909, 0.0
        %v1942 = vmax.f32 %v1910, 0.0
        %v1943 = vmax.f32 %v1911, 0.0
        %v1944 = vmax.f32 %v1912, 0.0
        %v1945 = vmax.f32 %v1913, 0.0
        %v1946 = vld [vmem:[#allocation4] sm:$0xff]
        %v1947 = vld [vmem:[#allocation4 + $0x8] sm:$0xff]
        %v1948 = vld [vmem:[#allocation4 + $0x10] sm:$0xff]
        %v1949 = vld [vmem:[#allocation4 + $0x18] sm:$0xff]
        %v1950 = vld [vmem:[#allocation4 + $0x20] sm:$0xff]
        %v1951 = vld [vmem:[#allocation4 + $0x28] sm:$0xff]
        %v1952 = vld [vmem:[#allocation4 + $0x30] sm:$0xff]
        %v1953 = vld [vmem:[#allocation4 + $0x38] sm:$0xff]
        %v1954 = vld [vmem:[#allocation4 + $0x40] sm:$0xff]
        %v1955 = vld [vmem:[#allocation4 + $0x48] sm:$0xff]
        %v1956 = vld [vmem:[#allocation4 + $0x50] sm:$0xff]
        %v1957 = vld [vmem:[#allocation4 + $0x58] sm:$0xff]
        %v1958 = vld [vmem:[#allocation4 + $0x60] sm:$0xff]
        %v1959 = vld [vmem:[#allocation4 + $0x68] sm:$0xff]
        %v1960 = vld [vmem:[#allocation4 + $0x70] sm:$0xff]
        %v1961 = vld [vmem:[#allocation4 + $0x78] sm:$0xff]
        %v1962 = vld [vmem:[#allocation4 + $0x80] sm:$0xff]
        %v1963 = vld [vmem:[#allocation4 + $0x88] sm:$0xff]
        %v1964 = vld [vmem:[#allocation4 + $0x90] sm:$0xff]
        %v1965 = vld [vmem:[#allocation4 + $0x98] sm:$0xff]
        %v1966 = vld [vmem:[#allocation4 + $0xa0] sm:$0xff]
        %v1967 = vld [vmem:[#allocation4 + $0xa8] sm:$0xff]
        %v1968 = vld [vmem:[#allocation4 + $0xb0] sm:$0xff]
        %v1969 = vld [vmem:[#allocation4 + $0xb8] sm:$0xff]
        %v1970 = vld [vmem:[#allocation4 + $0xc0] sm:$0xff]
        %v1971 = vld [vmem:[#allocation4 + $0xc8] sm:$0xff]
        %v1972 = vld [vmem:[#allocation4 + $0xd0] sm:$0xff]
        %v1973 = vld [vmem:[#allocation4 + $0xd8] sm:$0xff]
        %v1974 = vld [vmem:[#allocation4 + $0xe0] sm:$0xff]
        %v1975 = vld [vmem:[#allocation4 + $0xe8] sm:$0xff]
        %v1976 = vld [vmem:[#allocation4 + $0xf0] sm:$0xff]
        %v1977 = vld [vmem:[#allocation4 + $0xf8] sm:$0xff]
        %v1978 = vpack.c.bf16 %v1915, %v1914
        %v1979 = vpack.c.bf16 %v1917, %v1916
        %v1980 = vpack.c.bf16 %v1919, %v1918
        %v1981 = vpack.c.bf16 %v1921, %v1920
        %v1982 = vpack.c.bf16 %v1923, %v1922
        %v1983 = vpack.c.bf16 %v1925, %v1924
        %v1984 = vpack.c.bf16 %v1927, %v1926
        %v1985 = vpack.c.bf16 %v1929, %v1928
        %v1986 = vpack.c.bf16 %v1931, %v1930
        %v1987 = vpack.c.bf16 %v1933, %v1932
        %v1988 = vpack.c.bf16 %v1935, %v1934
        %v1989 = vpack.c.bf16 %v1937, %v1936
        %v1990 = vpack.c.bf16 %v1939, %v1938
        %v1991 = vpack.c.bf16 %v1941, %v1940
        %v1992 = vpack.c.bf16 %v1943, %v1942
        %v1993 = vpack.c.bf16 %v1945, %v1944
        %v1994 = vld [vmem:[%s3] sm:$0xf]
        %v1995 = vld [vmem:[%s3 + $0x4] sm:$0xf]
        %v1996 = vld [vmem:[%s3 + $0x8] sm:$0xf]
        %v1997 = vld [vmem:[%s3 + $0xc] sm:$0xf]
        %v2002 = vunpack.c.l.b16 %v1994
        %v2003 = vunpack.c.l.b16 %v1995
        %v2004 = vunpack.c.l.b16 %v1996
        %v2005 = vunpack.c.l.b16 %v1997
        %v2006 = vpack.c.b16 %v2003, %v2002
        %v2007 = vpack.c.b16 %v2005, %v2004
        %v2011 = vsel %vm239, %v1978, 0
        %v2014 = vsel %vm239, %v1979, 0
        %v2017 = vsel %vm239, %v1980, 0
        %v2020 = vsel %vm239, %v1981, 0
        %v2023 = vsel %vm239, %v1982, 0
        %v2026 = vsel %vm239, %v1983, 0
        %v2029 = vsel %vm239, %v1984, 0
        %v2032 = vsel %vm239, %v1985, 0
        %v2035 = vsel %vm239, %v1986, 0
        %v2038 = vsel %vm239, %v1987, 0
        %v2041 = vsel %vm239, %v1988, 0
        %v2044 = vsel %vm239, %v1989, 0
        %v2047 = vsel %vm239, %v1990, 0
        %v2050 = vsel %vm239, %v1991, 0
        %v2053 = vsel %vm239, %v1992, 0
        %v2056 = vsel %vm239, %v1993, 0
        %2058 = vmatprep.subr.bf16.mxu0 0
        %2059 = vmatpush1.bf16.msra.mxu0 0
        %2060 = vmatprep.subr.bf16.mxu0 0
        %2061 = vmatpush1.bf16.msra.mxu0 0
        %2062 = vmatprep.subr.bf16.mxu0 0
        %2063 = vmatpush1.bf16.msra.mxu0 0
        %2064 = vmatprep.subr.bf16.mxu0 0
        %2065 = vmatpush1.bf16.msra.mxu0 0
        %2066 = vmatprep.subr.bf16.mxu0 0
        %2067 = vmatpush1.bf16.msra.mxu0 0
        %2068 = vmatprep.subr.bf16.mxu0 0
        %2069 = vmatpush1.bf16.msra.mxu0 0
        %2070 = vmatprep.subr.bf16.mxu0 0
        %2071 = vmatpush1.bf16.msra.mxu0 %v2007
        %2072 = vmatprep.subr.bf16.mxu0 0
        %2073 = vmatpush1.bf16.msra.mxu0 %v2006
        %2074 = vmatprep.subr.bf16.mxu0 0
        %2075 = vmatpush2.bf16.msra.mxu0 0
        %2076 = vmatprep.subr.bf16.mxu0 0
        %2077 = vmatpush2.bf16.msra.mxu0 0
        %2078 = vmatprep.subr.bf16.mxu0 0
        %2079 = vmatpush2.bf16.msra.mxu0 0
        %2080 = vmatprep.subr.bf16.mxu0 0
        %2081 = vmatpush2.bf16.msra.mxu0 0
        %2082 = vmatprep.subr.bf16.mxu0 0
        %2083 = vmatpush2.bf16.msra.mxu0 0
        %2084 = vmatprep.subr.bf16.mxu0 0
        %2085 = vmatpush2.bf16.msra.mxu0 0
        %2086 = vmatprep.subr.bf16.mxu0 0
        %2087 = vmatpush2.bf16.msra.mxu0 0
        %2088 = vmatprep.subr.bf16.mxu0 0
        %2089 = vmatpush2.bf16.msra.mxu0 0
        %2090 = vmatprep.mubr.bf16.mxu0 0
        %2091 = vmatmul.mubr.bf16.gmra.mxu0 %v2011
        %v2092 = vpop.f32.mrf.mxu0
        %v2093 = vadd.f32 0.0, %v2092
        %v2094 = vpop.f32.mrf.mxu0
        %v2095 = vpop.f32.mrf.mxu0
        %v2096 = vadd.f32 0.0, %v2095
        %v2097 = vpop.f32.mrf.mxu0
        %2098 = vmatprep.mubr.bf16.mxu0 0
        %2099 = vmatmul.mubr.bf16.gmra.mxu0 %v2014
        %v2100 = vpop.f32.mrf.mxu0
        %v2101 = vadd.f32 0.0, %v2100
        %v2102 = vpop.f32.mrf.mxu0
        %v2103 = vpop.f32.mrf.mxu0
        %v2104 = vadd.f32 0.0, %v2103
        %v2105 = vpop.f32.mrf.mxu0
        %2106 = vmatprep.mubr.bf16.mxu0 0
        %2107 = vmatmul.mubr.bf16.gmra.mxu0 %v2017
        %v2108 = vpop.f32.mrf.mxu0
        %v2109 = vadd.f32 0.0, %v2108
        %v2110 = vpop.f32.mrf.mxu0
        %v2111 = vpop.f32.mrf.mxu0
        %v2112 = vadd.f32 0.0, %v2111
        %v2113 = vpop.f32.mrf.mxu0
        %2114 = vmatprep.mubr.bf16.mxu0 0
        %2115 = vmatmul.mubr.bf16.gmra.mxu0 %v2020
        %v2116 = vpop.f32.mrf.mxu0
        %v2117 = vadd.f32 0.0, %v2116
        %v2118 = vpop.f32.mrf.mxu0
        %v2119 = vpop.f32.mrf.mxu0
        %v2120 = vadd.f32 0.0, %v2119
        %v2121 = vpop.f32.mrf.mxu0
        %2122 = vmatprep.mubr.bf16.mxu0 0
        %2123 = vmatmul.mubr.bf16.gmra.mxu0 %v2023
        %v2124 = vpop.f32.mrf.mxu0
        %v2125 = vadd.f32 0.0, %v2124
        %v2126 = vpop.f32.mrf.mxu0
        %v2127 = vpop.f32.mrf.mxu0
        %v2128 = vadd.f32 0.0, %v2127
        %v2129 = vpop.f32.mrf.mxu0
        %2130 = vmatprep.mubr.bf16.mxu0 0
        %2131 = vmatmul.mubr.bf16.gmra.mxu0 %v2026
        %v2132 = vpop.f32.mrf.mxu0
        %v2133 = vadd.f32 0.0, %v2132
        %v2134 = vpop.f32.mrf.mxu0
        %v2135 = vpop.f32.mrf.mxu0
        %v2136 = vadd.f32 0.0, %v2135
        %v2137 = vpop.f32.mrf.mxu0
        %2138 = vmatprep.mubr.bf16.mxu0 0
        %2139 = vmatmul.mubr.bf16.gmra.mxu0 %v2029
        %v2140 = vpop.f32.mrf.mxu0
        %v2141 = vadd.f32 0.0, %v2140
        %v2142 = vpop.f32.mrf.mxu0
        %v2143 = vpop.f32.mrf.mxu0
        %v2144 = vadd.f32 0.0, %v2143
        %v2145 = vpop.f32.mrf.mxu0
        %2146 = vmatprep.mubr.bf16.mxu0 0
        %2147 = vmatmul.mubr.bf16.gmra.mxu0 %v2032
        %v2148 = vpop.f32.mrf.mxu0
        %v2149 = vadd.f32 0.0, %v2148
        %v2150 = vpop.f32.mrf.mxu0
        %v2151 = vpop.f32.mrf.mxu0
        %v2152 = vadd.f32 0.0, %v2151
        %v2153 = vpop.f32.mrf.mxu0
        %2154 = vmatprep.mubr.bf16.mxu0 0
        %2155 = vmatmul.mubr.bf16.gmra.mxu0 %v2035
        %v2156 = vpop.f32.mrf.mxu0
        %v2157 = vadd.f32 0.0, %v2156
        %v2158 = vpop.f32.mrf.mxu0
        %v2159 = vpop.f32.mrf.mxu0
        %v2160 = vadd.f32 0.0, %v2159
        %v2161 = vpop.f32.mrf.mxu0
        %2162 = vmatprep.mubr.bf16.mxu0 0
        %2163 = vmatmul.mubr.bf16.gmra.mxu0 %v2038
        %v2164 = vpop.f32.mrf.mxu0
        %v2165 = vadd.f32 0.0, %v2164
        %v2166 = vpop.f32.mrf.mxu0
        %v2167 = vpop.f32.mrf.mxu0
        %v2168 = vadd.f32 0.0, %v2167
        %v2169 = vpop.f32.mrf.mxu0
        %2170 = vmatprep.mubr.bf16.mxu0 0
        %2171 = vmatmul.mubr.bf16.gmra.mxu0 %v2041
        %v2172 = vpop.f32.mrf.mxu0
        %v2173 = vadd.f32 0.0, %v2172
        %v2174 = vpop.f32.mrf.mxu0
        %v2175 = vpop.f32.mrf.mxu0
        %v2176 = vadd.f32 0.0, %v2175
        %v2177 = vpop.f32.mrf.mxu0
        %2178 = vmatprep.mubr.bf16.mxu0 0
        %2179 = vmatmul.mubr.bf16.gmra.mxu0 %v2044
        %v2180 = vpop.f32.mrf.mxu0
        %v2181 = vadd.f32 0.0, %v2180
        %v2182 = vpop.f32.mrf.mxu0
        %v2183 = vpop.f32.mrf.mxu0
        %v2184 = vadd.f32 0.0, %v2183
        %v2185 = vpop.f32.mrf.mxu0
        %2186 = vmatprep.mubr.bf16.mxu0 0
        %2187 = vmatmul.mubr.bf16.gmra.mxu0 %v2047
        %v2188 = vpop.f32.mrf.mxu0
        %v2189 = vadd.f32 0.0, %v2188
        %v2190 = vpop.f32.mrf.mxu0
        %v2191 = vpop.f32.mrf.mxu0
        %v2192 = vadd.f32 0.0, %v2191
        %v2193 = vpop.f32.mrf.mxu0
        %2194 = vmatprep.mubr.bf16.mxu0 0
        %2195 = vmatmul.mubr.bf16.gmra.mxu0 %v2050
        %v2196 = vpop.f32.mrf.mxu0
        %v2197 = vadd.f32 0.0, %v2196
        %v2198 = vpop.f32.mrf.mxu0
        %v2199 = vpop.f32.mrf.mxu0
        %v2200 = vadd.f32 0.0, %v2199
        %v2201 = vpop.f32.mrf.mxu0
        %2202 = vmatprep.mubr.bf16.mxu0 0
        %2203 = vmatmul.mubr.bf16.gmra.mxu0 %v2053
        %v2204 = vpop.f32.mrf.mxu0
        %v2205 = vadd.f32 0.0, %v2204
        %v2206 = vpop.f32.mrf.mxu0
        %v2207 = vpop.f32.mrf.mxu0
        %v2208 = vadd.f32 0.0, %v2207
        %v2209 = vpop.f32.mrf.mxu0
        %2210 = vmatprep.mubr.bf16.mxu0 0
        %2211 = vmatmul.mubr.bf16.gmra.mxu0 %v2056
        %v2212 = vpop.f32.mrf.mxu0
        %v2213 = vadd.f32 0.0, %v2212
        %v2214 = vpop.f32.mrf.mxu0
        %v2215 = vpop.f32.mrf.mxu0
        %v2216 = vadd.f32 0.0, %v2215
        %v2217 = vpop.f32.mrf.mxu0
        %2218 = vdwg.mxu0
        %v2219 = vadd.f32 %v1946, %v2093
        %v2220 = vadd.f32 %v1947, %v2096
        %v2221 = vadd.f32 %v1948, %v2101
        %v2222 = vadd.f32 %v1949, %v2104
        %v2223 = vadd.f32 %v1950, %v2109
        %v2224 = vadd.f32 %v1951, %v2112
        %v2225 = vadd.f32 %v1952, %v2117
        %v2226 = vadd.f32 %v1953, %v2120
        %v2227 = vadd.f32 %v1954, %v2125
        %v2228 = vadd.f32 %v1955, %v2128
        %v2229 = vadd.f32 %v1956, %v2133
        %v2230 = vadd.f32 %v1957, %v2136
        %v2231 = vadd.f32 %v1958, %v2141
        %v2232 = vadd.f32 %v1959, %v2144
        %v2233 = vadd.f32 %v1960, %v2149
        %v2234 = vadd.f32 %v1961, %v2152
        %v2235 = vadd.f32 %v1962, %v2157
        %v2236 = vadd.f32 %v1963, %v2160
        %v2237 = vadd.f32 %v1964, %v2165
        %v2238 = vadd.f32 %v1965, %v2168
        %v2239 = vadd.f32 %v1966, %v2173
        %v2240 = vadd.f32 %v1967, %v2176
        %v2241 = vadd.f32 %v1968, %v2181
        %v2242 = vadd.f32 %v1969, %v2184
        %v2243 = vadd.f32 %v1970, %v2189
        %v2244 = vadd.f32 %v1971, %v2192
        %v2245 = vadd.f32 %v1972, %v2197
        %v2246 = vadd.f32 %v1973, %v2200
        %v2247 = vadd.f32 %v1974, %v2205
        %v2248 = vadd.f32 %v1975, %v2208
        %v2249 = vadd.f32 %v1976, %v2213
        %v2250 = vadd.f32 %v1977, %v2216
        %2251 = vst [vmem:[#allocation4] sm:$0xff] %v2219
        %2252 = vst [vmem:[#allocation4 + $0x8] sm:$0xff] %v2220
        %2253 = vst [vmem:[#allocation4 + $0x10] sm:$0xff] %v2221
        %2254 = vst [vmem:[#allocation4 + $0x18] sm:$0xff] %v2222
        %2255 = vst [vmem:[#allocation4 + $0x20] sm:$0xff] %v2223
        %2256 = vst [vmem:[#allocation4 + $0x28] sm:$0xff] %v2224
        %2257 = vst [vmem:[#allocation4 + $0x30] sm:$0xff] %v2225
        %2258 = vst [vmem:[#allocation4 + $0x38] sm:$0xff] %v2226
        %2259 = vst [vmem:[#allocation4 + $0x40] sm:$0xff] %v2227
        %2260 = vst [vmem:[#allocation4 + $0x48] sm:$0xff] %v2228
        %2261 = vst [vmem:[#allocation4 + $0x50] sm:$0xff] %v2229
        %2262 = vst [vmem:[#allocation4 + $0x58] sm:$0xff] %v2230
        %2263 = vst [vmem:[#allocation4 + $0x60] sm:$0xff] %v2231
        %2264 = vst [vmem:[#allocation4 + $0x68] sm:$0xff] %v2232
        %2265 = vst [vmem:[#allocation4 + $0x70] sm:$0xff] %v2233
        %2266 = vst [vmem:[#allocation4 + $0x78] sm:$0xff] %v2234
        %2267 = vst [vmem:[#allocation4 + $0x80] sm:$0xff] %v2235
        %2268 = vst [vmem:[#allocation4 + $0x88] sm:$0xff] %v2236
        %2269 = vst [vmem:[#allocation4 + $0x90] sm:$0xff] %v2237
        %2270 = vst [vmem:[#allocation4 + $0x98] sm:$0xff] %v2238
        %2271 = vst [vmem:[#allocation4 + $0xa0] sm:$0xff] %v2239
        %2272 = vst [vmem:[#allocation4 + $0xa8] sm:$0xff] %v2240
        %2273 = vst [vmem:[#allocation4 + $0xb0] sm:$0xff] %v2241
        %2274 = vst [vmem:[#allocation4 + $0xb8] sm:$0xff] %v2242
        %2275 = vst [vmem:[#allocation4 + $0xc0] sm:$0xff] %v2243
        %2276 = vst [vmem:[#allocation4 + $0xc8] sm:$0xff] %v2244
        %2277 = vst [vmem:[#allocation4 + $0xd0] sm:$0xff] %v2245
        %2278 = vst [vmem:[#allocation4 + $0xd8] sm:$0xff] %v2246
        %2279 = vst [vmem:[#allocation4 + $0xe0] sm:$0xff] %v2247
        %2280 = vst [vmem:[#allocation4 + $0xe8] sm:$0xff] %v2248
        %2281 = vst [vmem:[#allocation4 + $0xf0] sm:$0xff] %v2249
        %2282 = vst [vmem:[#allocation4 + $0xf8] sm:$0xff] %v2250
        %s2283 = scalar_lea.vmem %s1, 64
        %v2284 = vld [vmem:[%s2283] sm:$0xf]
        %v2285 = vld [vmem:[%s2283 + $0x4] sm:$0xf]
        %v2286 = vld [vmem:[%s2283 + $0x8] sm:$0xf]
        %v2287 = vld [vmem:[%s2283 + $0xc] sm:$0xf]
        %v2288 = vld [vmem:[%s2283 + $0x10] sm:$0xf]
        %v2289 = vld [vmem:[%s2283 + $0x14] sm:$0xf]
        %v2290 = vld [vmem:[%s2283 + $0x18] sm:$0xf]
        %v2291 = vld [vmem:[%s2283 + $0x1c] sm:$0xf]
        %v2292 = vld [vmem:[%s2283 + $0x20] sm:$0xf]
        %v2293 = vld [vmem:[%s2283 + $0x24] sm:$0xf]
        %v2294 = vld [vmem:[%s2283 + $0x28] sm:$0xf]
        %v2295 = vld [vmem:[%s2283 + $0x2c] sm:$0xf]
        %v2296 = vld [vmem:[%s2283 + $0x30] sm:$0xf]
        %v2297 = vld [vmem:[%s2283 + $0x34] sm:$0xf]
        %v2298 = vld [vmem:[%s2283 + $0x38] sm:$0xf]
        %v2299 = vld [vmem:[%s2283 + $0x3c] sm:$0xf]
        %v2316 = vunpack.c.l.b16 %v2284
        %v2317 = vunpack.c.l.b16 %v2285
        %v2318 = vunpack.c.l.b16 %v2286
        %v2319 = vunpack.c.l.b16 %v2287
        %v2320 = vunpack.c.l.b16 %v2288
        %v2321 = vunpack.c.l.b16 %v2289
        %v2322 = vunpack.c.l.b16 %v2290
        %v2323 = vunpack.c.l.b16 %v2291
        %v2324 = vunpack.c.l.b16 %v2292
        %v2325 = vunpack.c.l.b16 %v2293
        %v2326 = vunpack.c.l.b16 %v2294
        %v2327 = vunpack.c.l.b16 %v2295
        %v2328 = vunpack.c.l.b16 %v2296
        %v2329 = vunpack.c.l.b16 %v2297
        %v2330 = vunpack.c.l.b16 %v2298
        %v2331 = vunpack.c.l.b16 %v2299
        %v2332 = vpack.c.b16 %v2317, %v2316
        %v2333 = vpack.c.b16 %v2319, %v2318
        %v2334 = vpack.c.b16 %v2321, %v2320
        %v2335 = vpack.c.b16 %v2323, %v2322
        %v2336 = vpack.c.b16 %v2325, %v2324
        %v2337 = vpack.c.b16 %v2327, %v2326
        %v2338 = vpack.c.b16 %v2329, %v2328
        %v2339 = vpack.c.b16 %v2331, %v2330
        %2348 = vmatprep.subr.bf16.mxu0 0
        %2349 = vmatpush1.bf16.msra.mxu0 %v2339
        %2350 = vmatprep.subr.bf16.mxu0 0
        %2351 = vmatpush1.bf16.msra.mxu0 %v2338
        %2352 = vmatprep.subr.bf16.mxu0 0
        %2353 = vmatpush1.bf16.msra.mxu0 %v2337
        %2354 = vmatprep.subr.bf16.mxu0 0
        %2355 = vmatpush1.bf16.msra.mxu0 %v2336
        %2356 = vmatprep.subr.bf16.mxu0 0
        %2357 = vmatpush1.bf16.msra.mxu0 %v2335
        %2358 = vmatprep.subr.bf16.mxu0 0
        %2359 = vmatpush1.bf16.msra.mxu0 %v2334
        %2360 = vmatprep.subr.bf16.mxu0 0
        %2361 = vmatpush1.bf16.msra.mxu0 %v2333
        %2362 = vmatprep.subr.bf16.mxu0 0
        %2363 = vmatpush1.bf16.msra.mxu0 %v2332
        %2364 = vmatprep.subr.bf16.mxu0 0
        %2365 = vmatpush2.bf16.msra.mxu0 0
        %2366 = vmatprep.subr.bf16.mxu0 0
        %2367 = vmatpush2.bf16.msra.mxu0 0
        %2368 = vmatprep.subr.bf16.mxu0 0
        %2369 = vmatpush2.bf16.msra.mxu0 0
        %2370 = vmatprep.subr.bf16.mxu0 0
        %2371 = vmatpush2.bf16.msra.mxu0 0
        %2372 = vmatprep.subr.bf16.mxu0 0
        %2373 = vmatpush2.bf16.msra.mxu0 0
        %2374 = vmatprep.subr.bf16.mxu0 0
        %2375 = vmatpush2.bf16.msra.mxu0 0
        %2376 = vmatprep.subr.bf16.mxu0 0
        %2377 = vmatpush2.bf16.msra.mxu0 0
        %2378 = vmatprep.subr.bf16.mxu0 0
        %2379 = vmatpush2.bf16.msra.mxu0 0
        %2380 = vmatprep.mubr.bf16.mxu0 0
        %2381 = vmatmul.mubr.bf16.gmra.mxu0 %v426
        %v2382 = vpop.f32.mrf.mxu0
        %v2383 = vadd.f32 0.0, %v2382
        %v2384 = vpop.f32.mrf.mxu0
        %v2385 = vpop.f32.mrf.mxu0
        %v2386 = vadd.f32 0.0, %v2385
        %v2387 = vpop.f32.mrf.mxu0
        %2388 = vmatprep.mubr.bf16.mxu0 0
        %2389 = vmatmul.mubr.bf16.gmra.mxu0 %v427
        %v2390 = vpop.f32.mrf.mxu0
        %v2391 = vadd.f32 0.0, %v2390
        %v2392 = vpop.f32.mrf.mxu0
        %v2393 = vpop.f32.mrf.mxu0
        %v2394 = vadd.f32 0.0, %v2393
        %v2395 = vpop.f32.mrf.mxu0
        %2396 = vmatprep.mubr.bf16.mxu0 0
        %2397 = vmatmul.mubr.bf16.gmra.mxu0 %v428
        %v2398 = vpop.f32.mrf.mxu0
        %v2399 = vadd.f32 0.0, %v2398
        %v2400 = vpop.f32.mrf.mxu0
        %v2401 = vpop.f32.mrf.mxu0
        %v2402 = vadd.f32 0.0, %v2401
        %v2403 = vpop.f32.mrf.mxu0
        %2404 = vmatprep.mubr.bf16.mxu0 0
        %2405 = vmatmul.mubr.bf16.gmra.mxu0 %v429
        %v2406 = vpop.f32.mrf.mxu0
        %v2407 = vadd.f32 0.0, %v2406
        %v2408 = vpop.f32.mrf.mxu0
        %v2409 = vpop.f32.mrf.mxu0
        %v2410 = vadd.f32 0.0, %v2409
        %v2411 = vpop.f32.mrf.mxu0
        %2412 = vmatprep.mubr.bf16.mxu0 0
        %2413 = vmatmul.mubr.bf16.gmra.mxu0 %v430
        %v2414 = vpop.f32.mrf.mxu0
        %v2415 = vadd.f32 0.0, %v2414
        %v2416 = vpop.f32.mrf.mxu0
        %v2417 = vpop.f32.mrf.mxu0
        %v2418 = vadd.f32 0.0, %v2417
        %v2419 = vpop.f32.mrf.mxu0
        %2420 = vmatprep.mubr.bf16.mxu0 0
        %2421 = vmatmul.mubr.bf16.gmra.mxu0 %v431
        %v2422 = vpop.f32.mrf.mxu0
        %v2423 = vadd.f32 0.0, %v2422
        %v2424 = vpop.f32.mrf.mxu0
        %v2425 = vpop.f32.mrf.mxu0
        %v2426 = vadd.f32 0.0, %v2425
        %v2427 = vpop.f32.mrf.mxu0
        %2428 = vmatprep.mubr.bf16.mxu0 0
        %2429 = vmatmul.mubr.bf16.gmra.mxu0 %v432
        %v2430 = vpop.f32.mrf.mxu0
        %v2431 = vadd.f32 0.0, %v2430
        %v2432 = vpop.f32.mrf.mxu0
        %v2433 = vpop.f32.mrf.mxu0
        %v2434 = vadd.f32 0.0, %v2433
        %v2435 = vpop.f32.mrf.mxu0
        %2436 = vmatprep.mubr.bf16.mxu0 0
        %2437 = vmatmul.mubr.bf16.gmra.mxu0 %v433
        %v2438 = vpop.f32.mrf.mxu0
        %v2439 = vadd.f32 0.0, %v2438
        %v2440 = vpop.f32.mrf.mxu0
        %v2441 = vpop.f32.mrf.mxu0
        %v2442 = vadd.f32 0.0, %v2441
        %v2443 = vpop.f32.mrf.mxu0
        %2444 = vmatprep.mubr.bf16.mxu0 0
        %2445 = vmatmul.mubr.bf16.gmra.mxu0 %v434
        %v2446 = vpop.f32.mrf.mxu0
        %v2447 = vadd.f32 0.0, %v2446
        %v2448 = vpop.f32.mrf.mxu0
        %v2449 = vpop.f32.mrf.mxu0
        %v2450 = vadd.f32 0.0, %v2449
        %v2451 = vpop.f32.mrf.mxu0
        %2452 = vmatprep.mubr.bf16.mxu0 0
        %2453 = vmatmul.mubr.bf16.gmra.mxu0 %v435
        %v2454 = vpop.f32.mrf.mxu0
        %v2455 = vadd.f32 0.0, %v2454
        %v2456 = vpop.f32.mrf.mxu0
        %v2457 = vpop.f32.mrf.mxu0
        %v2458 = vadd.f32 0.0, %v2457
        %v2459 = vpop.f32.mrf.mxu0
        %2460 = vmatprep.mubr.bf16.mxu0 0
        %2461 = vmatmul.mubr.bf16.gmra.mxu0 %v436
        %v2462 = vpop.f32.mrf.mxu0
        %v2463 = vadd.f32 0.0, %v2462
        %v2464 = vpop.f32.mrf.mxu0
        %v2465 = vpop.f32.mrf.mxu0
        %v2466 = vadd.f32 0.0, %v2465
        %v2467 = vpop.f32.mrf.mxu0
        %2468 = vmatprep.mubr.bf16.mxu0 0
        %2469 = vmatmul.mubr.bf16.gmra.mxu0 %v437
        %v2470 = vpop.f32.mrf.mxu0
        %v2471 = vadd.f32 0.0, %v2470
        %v2472 = vpop.f32.mrf.mxu0
        %v2473 = vpop.f32.mrf.mxu0
        %v2474 = vadd.f32 0.0, %v2473
        %v2475 = vpop.f32.mrf.mxu0
        %2476 = vmatprep.mubr.bf16.mxu0 0
        %2477 = vmatmul.mubr.bf16.gmra.mxu0 %v438
        %v2478 = vpop.f32.mrf.mxu0
        %v2479 = vadd.f32 0.0, %v2478
        %v2480 = vpop.f32.mrf.mxu0
        %v2481 = vpop.f32.mrf.mxu0
        %v2482 = vadd.f32 0.0, %v2481
        %v2483 = vpop.f32.mrf.mxu0
        %2484 = vmatprep.mubr.bf16.mxu0 0
        %2485 = vmatmul.mubr.bf16.gmra.mxu0 %v439
        %v2486 = vpop.f32.mrf.mxu0
        %v2487 = vadd.f32 0.0, %v2486
        %v2488 = vpop.f32.mrf.mxu0
        %v2489 = vpop.f32.mrf.mxu0
        %v2490 = vadd.f32 0.0, %v2489
        %v2491 = vpop.f32.mrf.mxu0
        %2492 = vmatprep.mubr.bf16.mxu0 0
        %2493 = vmatmul.mubr.bf16.gmra.mxu0 %v440
        %v2494 = vpop.f32.mrf.mxu0
        %v2495 = vadd.f32 0.0, %v2494
        %v2496 = vpop.f32.mrf.mxu0
        %v2497 = vpop.f32.mrf.mxu0
        %v2498 = vadd.f32 0.0, %v2497
        %v2499 = vpop.f32.mrf.mxu0
        %2500 = vmatprep.mubr.bf16.mxu0 0
        %2501 = vmatmul.mubr.bf16.gmra.mxu0 %v441
        %v2502 = vpop.f32.mrf.mxu0
        %v2503 = vadd.f32 0.0, %v2502
        %v2504 = vpop.f32.mrf.mxu0
        %v2505 = vpop.f32.mrf.mxu0
        %v2506 = vadd.f32 0.0, %v2505
        %v2507 = vpop.f32.mrf.mxu0
        %2508 = vdwg.mxu0
        %2509 = vst.msk [vmem:[#allocation2 + $0x8] sm:$0xff] %vm239, %v2383
        %2510 = vst.msk [vmem:[#allocation2 + $0x10] sm:$0xff] %vm239, %v2386
        %2511 = vst.msk [vmem:[#allocation2 + $0x28] sm:$0xff] %vm239, %v2391
        %2512 = vst.msk [vmem:[#allocation2 + $0x30] sm:$0xff] %vm239, %v2394
        %2513 = vst.msk [vmem:[#allocation2 + $0x48] sm:$0xff] %vm239, %v2399
        %2514 = vst.msk [vmem:[#allocation2 + $0x50] sm:$0xff] %vm239, %v2402
        %2515 = vst.msk [vmem:[#allocation2 + $0x68] sm:$0xff] %vm239, %v2407
        %2516 = vst.msk [vmem:[#allocation2 + $0x70] sm:$0xff] %vm239, %v2410
        %2517 = vst.msk [vmem:[#allocation2 + $0x88] sm:$0xff] %vm239, %v2415
        %2518 = vst.msk [vmem:[#allocation2 + $0x90] sm:$0xff] %vm239, %v2418
        %2519 = vst.msk [vmem:[#allocation2 + $0xa8] sm:$0xff] %vm239, %v2423
        %2520 = vst.msk [vmem:[#allocation2 + $0xb0] sm:$0xff] %vm239, %v2426
        %2521 = vst.msk [vmem:[#allocation2 + $0xc8] sm:$0xff] %vm239, %v2431
        %2522 = vst.msk [vmem:[#allocation2 + $0xd0] sm:$0xff] %vm239, %v2434
        %2523 = vst.msk [vmem:[#allocation2 + $0xe8] sm:$0xff] %vm239, %v2439
        %2524 = vst.msk [vmem:[#allocation2 + $0xf0] sm:$0xff] %vm239, %v2442
        %2525 = vst.msk [vmem:[#allocation2 + $0x108] sm:$0xff] %vm239, %v2447
        %2526 = vst.msk [vmem:[#allocation2 + $0x110] sm:$0xff] %vm239, %v2450
        %2527 = vst.msk [vmem:[#allocation2 + $0x128] sm:$0xff] %vm239, %v2455
        %2528 = vst.msk [vmem:[#allocation2 + $0x130] sm:$0xff] %vm239, %v2458
        %2529 = vst.msk [vmem:[#allocation2 + $0x148] sm:$0xff] %vm239, %v2463
        %2530 = vst.msk [vmem:[#allocation2 + $0x150] sm:$0xff] %vm239, %v2466
        %2531 = vst.msk [vmem:[#allocation2 + $0x168] sm:$0xff] %vm239, %v2471
        %2532 = vst.msk [vmem:[#allocation2 + $0x170] sm:$0xff] %vm239, %v2474
        %2533 = vst.msk [vmem:[#allocation2 + $0x188] sm:$0xff] %vm239, %v2479
        %2534 = vst.msk [vmem:[#allocation2 + $0x190] sm:$0xff] %vm239, %v2482
        %2535 = vst.msk [vmem:[#allocation2 + $0x1a8] sm:$0xff] %vm239, %v2487
        %2536 = vst.msk [vmem:[#allocation2 + $0x1b0] sm:$0xff] %vm239, %v2490
        %2537 = vst.msk [vmem:[#allocation2 + $0x1c8] sm:$0xff] %vm239, %v2495
        %2538 = vst.msk [vmem:[#allocation2 + $0x1d0] sm:$0xff] %vm239, %v2498
        %2539 = vst.msk [vmem:[#allocation2 + $0x1e8] sm:$0xff] %vm239, %v2503
        %2540 = vst.msk [vmem:[#allocation2 + $0x1f0] sm:$0xff] %vm239, %v2506
        %v2541 = vld [vmem:[#allocation2 + $0x4] sm:$0xff]
        %v2542 = vld [vmem:[#allocation2 + $0xc] sm:$0xff]
        %v2543 = vld [vmem:[#allocation2 + $0x24] sm:$0xff]
        %v2544 = vld [vmem:[#allocation2 + $0x2c] sm:$0xff]
        %v2545 = vld [vmem:[#allocation2 + $0x44] sm:$0xff]
        %v2546 = vld [vmem:[#allocation2 + $0x4c] sm:$0xff]
        %v2547 = vld [vmem:[#allocation2 + $0x64] sm:$0xff]
        %v2548 = vld [vmem:[#allocation2 + $0x6c] sm:$0xff]
        %v2549 = vld [vmem:[#allocation2 + $0x84] sm:$0xff]
        %v2550 = vld [vmem:[#allocation2 + $0x8c] sm:$0xff]
        %v2551 = vld [vmem:[#allocation2 + $0xa4] sm:$0xff]
        %v2552 = vld [vmem:[#allocation2 + $0xac] sm:$0xff]
        %v2553 = vld [vmem:[#allocation2 + $0xc4] sm:$0xff]
        %v2554 = vld [vmem:[#allocation2 + $0xcc] sm:$0xff]
        %v2555 = vld [vmem:[#allocation2 + $0xe4] sm:$0xff]
        %v2556 = vld [vmem:[#allocation2 + $0xec] sm:$0xff]
        %v2557 = vld [vmem:[#allocation2 + $0x104] sm:$0xff]
        %v2558 = vld [vmem:[#allocation2 + $0x10c] sm:$0xff]
        %v2559 = vld [vmem:[#allocation2 + $0x124] sm:$0xff]
        %v2560 = vld [vmem:[#allocation2 + $0x12c] sm:$0xff]
        %v2561 = vld [vmem:[#allocation2 + $0x144] sm:$0xff]
        %v2562 = vld [vmem:[#allocation2 + $0x14c] sm:$0xff]
        %v2563 = vld [vmem:[#allocation2 + $0x164] sm:$0xff]
        %v2564 = vld [vmem:[#allocation2 + $0x16c] sm:$0xff]
        %v2565 = vld [vmem:[#allocation2 + $0x184] sm:$0xff]
        %v2566 = vld [vmem:[#allocation2 + $0x18c] sm:$0xff]
        %v2567 = vld [vmem:[#allocation2 + $0x1a4] sm:$0xff]
        %v2568 = vld [vmem:[#allocation2 + $0x1ac] sm:$0xff]
        %v2569 = vld [vmem:[#allocation2 + $0x1c4] sm:$0xff]
        %v2570 = vld [vmem:[#allocation2 + $0x1cc] sm:$0xff]
        %v2571 = vld [vmem:[#allocation2 + $0x1e4] sm:$0xff]
        %v2572 = vld [vmem:[#allocation2 + $0x1ec] sm:$0xff]
        %v2573 = vld [vmem:[#allocation2 + $0x5] sm:$0xff]
        %v2574 = vld [vmem:[#allocation2 + $0xd] sm:$0xff]
        %v2575 = vld [vmem:[#allocation2 + $0x25] sm:$0xff]
        %v2576 = vld [vmem:[#allocation2 + $0x2d] sm:$0xff]
        %v2577 = vld [vmem:[#allocation2 + $0x45] sm:$0xff]
        %v2578 = vld [vmem:[#allocation2 + $0x4d] sm:$0xff]
        %v2579 = vld [vmem:[#allocation2 + $0x65] sm:$0xff]
        %v2580 = vld [vmem:[#allocation2 + $0x6d] sm:$0xff]
        %v2581 = vld [vmem:[#allocation2 + $0x85] sm:$0xff]
        %v2582 = vld [vmem:[#allocation2 + $0x8d] sm:$0xff]
        %v2583 = vld [vmem:[#allocation2 + $0xa5] sm:$0xff]
        %v2584 = vld [vmem:[#allocation2 + $0xad] sm:$0xff]
        %v2585 = vld [vmem:[#allocation2 + $0xc5] sm:$0xff]
        %v2586 = vld [vmem:[#allocation2 + $0xcd] sm:$0xff]
        %v2587 = vld [vmem:[#allocation2 + $0xe5] sm:$0xff]
        %v2588 = vld [vmem:[#allocation2 + $0xed] sm:$0xff]
        %v2589 = vld [vmem:[#allocation2 + $0x105] sm:$0xff]
        %v2590 = vld [vmem:[#allocation2 + $0x10d] sm:$0xff]
        %v2591 = vld [vmem:[#allocation2 + $0x125] sm:$0xff]
        %v2592 = vld [vmem:[#allocation2 + $0x12d] sm:$0xff]
        %v2593 = vld [vmem:[#allocation2 + $0x145] sm:$0xff]
        %v2594 = vld [vmem:[#allocation2 + $0x14d] sm:$0xff]
        %v2595 = vld [vmem:[#allocation2 + $0x165] sm:$0xff]
        %v2596 = vld [vmem:[#allocation2 + $0x16d] sm:$0xff]
        %v2597 = vld [vmem:[#allocation2 + $0x185] sm:$0xff]
        %v2598 = vld [vmem:[#allocation2 + $0x18d] sm:$0xff]
        %v2599 = vld [vmem:[#allocation2 + $0x1a5] sm:$0xff]
        %v2600 = vld [vmem:[#allocation2 + $0x1ad] sm:$0xff]
        %v2601 = vld [vmem:[#allocation2 + $0x1c5] sm:$0xff]
        %v2602 = vld [vmem:[#allocation2 + $0x1cd] sm:$0xff]
        %v2603 = vld [vmem:[#allocation2 + $0x1e5] sm:$0xff]
        %v2604 = vld [vmem:[#allocation2 + $0x1ed] sm:$0xff]
        %v2605 = vadd.f32 %v2541, %v2573
        %v2606 = vadd.f32 %v2542, %v2574
        %v2607 = vadd.f32 %v2543, %v2575
        %v2608 = vadd.f32 %v2544, %v2576
        %v2609 = vadd.f32 %v2545, %v2577
        %v2610 = vadd.f32 %v2546, %v2578
        %v2611 = vadd.f32 %v2547, %v2579
        %v2612 = vadd.f32 %v2548, %v2580
        %v2613 = vadd.f32 %v2549, %v2581
        %v2614 = vadd.f32 %v2550, %v2582
        %v2615 = vadd.f32 %v2551, %v2583
        %v2616 = vadd.f32 %v2552, %v2584
        %v2617 = vadd.f32 %v2553, %v2585
        %v2618 = vadd.f32 %v2554, %v2586
        %v2619 = vadd.f32 %v2555, %v2587
        %v2620 = vadd.f32 %v2556, %v2588
        %v2621 = vadd.f32 %v2557, %v2589
        %v2622 = vadd.f32 %v2558, %v2590
        %v2623 = vadd.f32 %v2559, %v2591
        %v2624 = vadd.f32 %v2560, %v2592
        %v2625 = vadd.f32 %v2561, %v2593
        %v2626 = vadd.f32 %v2562, %v2594
        %v2627 = vadd.f32 %v2563, %v2595
        %v2628 = vadd.f32 %v2564, %v2596
        %v2629 = vadd.f32 %v2565, %v2597
        %v2630 = vadd.f32 %v2566, %v2598
        %v2631 = vadd.f32 %v2567, %v2599
        %v2632 = vadd.f32 %v2568, %v2600
        %v2633 = vadd.f32 %v2569, %v2601
        %v2634 = vadd.f32 %v2570, %v2602
        %v2635 = vadd.f32 %v2571, %v2603
        %v2636 = vadd.f32 %v2572, %v2604
        %v2637 = vld [vmem:[#allocation2 + $0x6] sm:$0xff]
        %v2638 = vld [vmem:[#allocation2 + $0xe] sm:$0xff]
        %v2639 = vld [vmem:[#allocation2 + $0x26] sm:$0xff]
        %v2640 = vld [vmem:[#allocation2 + $0x2e] sm:$0xff]
        %v2641 = vld [vmem:[#allocation2 + $0x46] sm:$0xff]
        %v2642 = vld [vmem:[#allocation2 + $0x4e] sm:$0xff]
        %v2643 = vld [vmem:[#allocation2 + $0x66] sm:$0xff]
        %v2644 = vld [vmem:[#allocation2 + $0x6e] sm:$0xff]
        %v2645 = vld [vmem:[#allocation2 + $0x86] sm:$0xff]
        %v2646 = vld [vmem:[#allocation2 + $0x8e] sm:$0xff]
        %v2647 = vld [vmem:[#allocation2 + $0xa6] sm:$0xff]
        %v2648 = vld [vmem:[#allocation2 + $0xae] sm:$0xff]
        %v2649 = vld [vmem:[#allocation2 + $0xc6] sm:$0xff]
        %v2650 = vld [vmem:[#allocation2 + $0xce] sm:$0xff]
        %v2651 = vld [vmem:[#allocation2 + $0xe6] sm:$0xff]
        %v2652 = vld [vmem:[#allocation2 + $0xee] sm:$0xff]
        %v2653 = vld [vmem:[#allocation2 + $0x106] sm:$0xff]
        %v2654 = vld [vmem:[#allocation2 + $0x10e] sm:$0xff]
        %v2655 = vld [vmem:[#allocation2 + $0x126] sm:$0xff]
        %v2656 = vld [vmem:[#allocation2 + $0x12e] sm:$0xff]
        %v2657 = vld [vmem:[#allocation2 + $0x146] sm:$0xff]
        %v2658 = vld [vmem:[#allocation2 + $0x14e] sm:$0xff]
        %v2659 = vld [vmem:[#allocation2 + $0x166] sm:$0xff]
        %v2660 = vld [vmem:[#allocation2 + $0x16e] sm:$0xff]
        %v2661 = vld [vmem:[#allocation2 + $0x186] sm:$0xff]
        %v2662 = vld [vmem:[#allocation2 + $0x18e] sm:$0xff]
        %v2663 = vld [vmem:[#allocation2 + $0x1a6] sm:$0xff]
        %v2664 = vld [vmem:[#allocation2 + $0x1ae] sm:$0xff]
        %v2665 = vld [vmem:[#allocation2 + $0x1c6] sm:$0xff]
        %v2666 = vld [vmem:[#allocation2 + $0x1ce] sm:$0xff]
        %v2667 = vld [vmem:[#allocation2 + $0x1e6] sm:$0xff]
        %v2668 = vld [vmem:[#allocation2 + $0x1ee] sm:$0xff]
        %v2669 = vadd.f32 %v2605, %v2637
        %v2670 = vadd.f32 %v2606, %v2638
        %v2671 = vadd.f32 %v2607, %v2639
        %v2672 = vadd.f32 %v2608, %v2640
        %v2673 = vadd.f32 %v2609, %v2641
        %v2674 = vadd.f32 %v2610, %v2642
        %v2675 = vadd.f32 %v2611, %v2643
        %v2676 = vadd.f32 %v2612, %v2644
        %v2677 = vadd.f32 %v2613, %v2645
        %v2678 = vadd.f32 %v2614, %v2646
        %v2679 = vadd.f32 %v2615, %v2647
        %v2680 = vadd.f32 %v2616, %v2648
        %v2681 = vadd.f32 %v2617, %v2649
        %v2682 = vadd.f32 %v2618, %v2650
        %v2683 = vadd.f32 %v2619, %v2651
        %v2684 = vadd.f32 %v2620, %v2652
        %v2685 = vadd.f32 %v2621, %v2653
        %v2686 = vadd.f32 %v2622, %v2654
        %v2687 = vadd.f32 %v2623, %v2655
        %v2688 = vadd.f32 %v2624, %v2656
        %v2689 = vadd.f32 %v2625, %v2657
        %v2690 = vadd.f32 %v2626, %v2658
        %v2691 = vadd.f32 %v2627, %v2659
        %v2692 = vadd.f32 %v2628, %v2660
        %v2693 = vadd.f32 %v2629, %v2661
        %v2694 = vadd.f32 %v2630, %v2662
        %v2695 = vadd.f32 %v2631, %v2663
        %v2696 = vadd.f32 %v2632, %v2664
        %v2697 = vadd.f32 %v2633, %v2665
        %v2698 = vadd.f32 %v2634, %v2666
        %v2699 = vadd.f32 %v2635, %v2667
        %v2700 = vadd.f32 %v2636, %v2668
        %v2701 = vld [vmem:[#allocation2 + $0x7] sm:$0xff]
        %v2702 = vld [vmem:[#allocation2 + $0xf] sm:$0xff]
        %v2703 = vld [vmem:[#allocation2 + $0x27] sm:$0xff]
        %v2704 = vld [vmem:[#allocation2 + $0x2f] sm:$0xff]
        %v2705 = vld [vmem:[#allocation2 + $0x47] sm:$0xff]
        %v2706 = vld [vmem:[#allocation2 + $0x4f] sm:$0xff]
        %v2707 = vld [vmem:[#allocation2 + $0x67] sm:$0xff]
        %v2708 = vld [vmem:[#allocation2 + $0x6f] sm:$0xff]
        %v2709 = vld [vmem:[#allocation2 + $0x87] sm:$0xff]
        %v2710 = vld [vmem:[#allocation2 + $0x8f] sm:$0xff]
        %v2711 = vld [vmem:[#allocation2 + $0xa7] sm:$0xff]
        %v2712 = vld [vmem:[#allocation2 + $0xaf] sm:$0xff]
        %v2713 = vld [vmem:[#allocation2 + $0xc7] sm:$0xff]
        %v2714 = vld [vmem:[#allocation2 + $0xcf] sm:$0xff]
        %v2715 = vld [vmem:[#allocation2 + $0xe7] sm:$0xff]
        %v2716 = vld [vmem:[#allocation2 + $0xef] sm:$0xff]
        %v2717 = vld [vmem:[#allocation2 + $0x107] sm:$0xff]
        %v2718 = vld [vmem:[#allocation2 + $0x10f] sm:$0xff]
        %v2719 = vld [vmem:[#allocation2 + $0x127] sm:$0xff]
        %v2720 = vld [vmem:[#allocation2 + $0x12f] sm:$0xff]
        %v2721 = vld [vmem:[#allocation2 + $0x147] sm:$0xff]
        %v2722 = vld [vmem:[#allocation2 + $0x14f] sm:$0xff]
        %v2723 = vld [vmem:[#allocation2 + $0x167] sm:$0xff]
        %v2724 = vld [vmem:[#allocation2 + $0x16f] sm:$0xff]
        %v2725 = vld [vmem:[#allocation2 + $0x187] sm:$0xff]
        %v2726 = vld [vmem:[#allocation2 + $0x18f] sm:$0xff]
        %v2727 = vld [vmem:[#allocation2 + $0x1a7] sm:$0xff]
        %v2728 = vld [vmem:[#allocation2 + $0x1af] sm:$0xff]
        %v2729 = vld [vmem:[#allocation2 + $0x1c7] sm:$0xff]
        %v2730 = vld [vmem:[#allocation2 + $0x1cf] sm:$0xff]
        %v2731 = vld [vmem:[#allocation2 + $0x1e7] sm:$0xff]
        %v2732 = vld [vmem:[#allocation2 + $0x1ef] sm:$0xff]
        %v2733 = vadd.f32 %v2669, %v2701
        %v2734 = vadd.f32 %v2670, %v2702
        %v2735 = vadd.f32 %v2671, %v2703
        %v2736 = vadd.f32 %v2672, %v2704
        %v2737 = vadd.f32 %v2673, %v2705
        %v2738 = vadd.f32 %v2674, %v2706
        %v2739 = vadd.f32 %v2675, %v2707
        %v2740 = vadd.f32 %v2676, %v2708
        %v2741 = vadd.f32 %v2677, %v2709
        %v2742 = vadd.f32 %v2678, %v2710
        %v2743 = vadd.f32 %v2679, %v2711
        %v2744 = vadd.f32 %v2680, %v2712
        %v2745 = vadd.f32 %v2681, %v2713
        %v2746 = vadd.f32 %v2682, %v2714
        %v2747 = vadd.f32 %v2683, %v2715
        %v2748 = vadd.f32 %v2684, %v2716
        %v2749 = vadd.f32 %v2685, %v2717
        %v2750 = vadd.f32 %v2686, %v2718
        %v2751 = vadd.f32 %v2687, %v2719
        %v2752 = vadd.f32 %v2688, %v2720
        %v2753 = vadd.f32 %v2689, %v2721
        %v2754 = vadd.f32 %v2690, %v2722
        %v2755 = vadd.f32 %v2691, %v2723
        %v2756 = vadd.f32 %v2692, %v2724
        %v2757 = vadd.f32 %v2693, %v2725
        %v2758 = vadd.f32 %v2694, %v2726
        %v2759 = vadd.f32 %v2695, %v2727
        %v2760 = vadd.f32 %v2696, %v2728
        %v2761 = vadd.f32 %v2697, %v2729
        %v2762 = vadd.f32 %v2698, %v2730
        %v2763 = vadd.f32 %v2699, %v2731
        %v2764 = vadd.f32 %v2700, %v2732
        %v2765 = vld [vmem:[#allocation2 + $0x8] sm:$0xff]
        %v2766 = vld [vmem:[#allocation2 + $0x10] sm:$0xff]
        %v2767 = vld [vmem:[#allocation2 + $0x28] sm:$0xff]
        %v2768 = vld [vmem:[#allocation2 + $0x30] sm:$0xff]
        %v2769 = vld [vmem:[#allocation2 + $0x48] sm:$0xff]
        %v2770 = vld [vmem:[#allocation2 + $0x50] sm:$0xff]
        %v2771 = vld [vmem:[#allocation2 + $0x68] sm:$0xff]
        %v2772 = vld [vmem:[#allocation2 + $0x70] sm:$0xff]
        %v2773 = vld [vmem:[#allocation2 + $0x88] sm:$0xff]
        %v2774 = vld [vmem:[#allocation2 + $0x90] sm:$0xff]
        %v2775 = vld [vmem:[#allocation2 + $0xa8] sm:$0xff]
        %v2776 = vld [vmem:[#allocation2 + $0xb0] sm:$0xff]
        %v2777 = vld [vmem:[#allocation2 + $0xc8] sm:$0xff]
        %v2778 = vld [vmem:[#allocation2 + $0xd0] sm:$0xff]
        %v2779 = vld [vmem:[#allocation2 + $0xe8] sm:$0xff]
        %v2780 = vld [vmem:[#allocation2 + $0xf0] sm:$0xff]
        %v2781 = vld [vmem:[#allocation2 + $0x108] sm:$0xff]
        %v2782 = vld [vmem:[#allocation2 + $0x110] sm:$0xff]
        %v2783 = vld [vmem:[#allocation2 + $0x128] sm:$0xff]
        %v2784 = vld [vmem:[#allocation2 + $0x130] sm:$0xff]
        %v2785 = vld [vmem:[#allocation2 + $0x148] sm:$0xff]
        %v2786 = vld [vmem:[#allocation2 + $0x150] sm:$0xff]
        %v2787 = vld [vmem:[#allocation2 + $0x168] sm:$0xff]
        %v2788 = vld [vmem:[#allocation2 + $0x170] sm:$0xff]
        %v2789 = vld [vmem:[#allocation2 + $0x188] sm:$0xff]
        %v2790 = vld [vmem:[#allocation2 + $0x190] sm:$0xff]
        %v2791 = vld [vmem:[#allocation2 + $0x1a8] sm:$0xff]
        %v2792 = vld [vmem:[#allocation2 + $0x1b0] sm:$0xff]
        %v2793 = vld [vmem:[#allocation2 + $0x1c8] sm:$0xff]
        %v2794 = vld [vmem:[#allocation2 + $0x1d0] sm:$0xff]
        %v2795 = vld [vmem:[#allocation2 + $0x1e8] sm:$0xff]
        %v2796 = vld [vmem:[#allocation2 + $0x1f0] sm:$0xff]
        %v2797 = vadd.f32 %v2733, %v2765
        %v2798 = vadd.f32 %v2734, %v2766
        %v2799 = vadd.f32 %v2735, %v2767
        %v2800 = vadd.f32 %v2736, %v2768
        %v2801 = vadd.f32 %v2737, %v2769
        %v2802 = vadd.f32 %v2738, %v2770
        %v2803 = vadd.f32 %v2739, %v2771
        %v2804 = vadd.f32 %v2740, %v2772
        %v2805 = vadd.f32 %v2741, %v2773
        %v2806 = vadd.f32 %v2742, %v2774
        %v2807 = vadd.f32 %v2743, %v2775
        %v2808 = vadd.f32 %v2744, %v2776
        %v2809 = vadd.f32 %v2745, %v2777
        %v2810 = vadd.f32 %v2746, %v2778
        %v2811 = vadd.f32 %v2747, %v2779
        %v2812 = vadd.f32 %v2748, %v2780
        %v2813 = vadd.f32 %v2749, %v2781
        %v2814 = vadd.f32 %v2750, %v2782
        %v2815 = vadd.f32 %v2751, %v2783
        %v2816 = vadd.f32 %v2752, %v2784
        %v2817 = vadd.f32 %v2753, %v2785
        %v2818 = vadd.f32 %v2754, %v2786
        %v2819 = vadd.f32 %v2755, %v2787
        %v2820 = vadd.f32 %v2756, %v2788
        %v2821 = vadd.f32 %v2757, %v2789
        %v2822 = vadd.f32 %v2758, %v2790
        %v2823 = vadd.f32 %v2759, %v2791
        %v2824 = vadd.f32 %v2760, %v2792
        %v2825 = vadd.f32 %v2761, %v2793
        %v2826 = vadd.f32 %v2762, %v2794
        %v2827 = vadd.f32 %v2763, %v2795
        %v2828 = vadd.f32 %v2764, %v2796
        %v2829 = vld [vmem:[#allocation2 + $0x9] sm:$0xff]
        %v2830 = vld [vmem:[#allocation2 + $0x11] sm:$0xff]
        %v2831 = vld [vmem:[#allocation2 + $0x29] sm:$0xff]
        %v2832 = vld [vmem:[#allocation2 + $0x31] sm:$0xff]
        %v2833 = vld [vmem:[#allocation2 + $0x49] sm:$0xff]
        %v2834 = vld [vmem:[#allocation2 + $0x51] sm:$0xff]
        %v2835 = vld [vmem:[#allocation2 + $0x69] sm:$0xff]
        %v2836 = vld [vmem:[#allocation2 + $0x71] sm:$0xff]
        %v2837 = vld [vmem:[#allocation2 + $0x89] sm:$0xff]
        %v2838 = vld [vmem:[#allocation2 + $0x91] sm:$0xff]
        %v2839 = vld [vmem:[#allocation2 + $0xa9] sm:$0xff]
        %v2840 = vld [vmem:[#allocation2 + $0xb1] sm:$0xff]
        %v2841 = vld [vmem:[#allocation2 + $0xc9] sm:$0xff]
        %v2842 = vld [vmem:[#allocation2 + $0xd1] sm:$0xff]
        %v2843 = vld [vmem:[#allocation2 + $0xe9] sm:$0xff]
        %v2844 = vld [vmem:[#allocation2 + $0xf1] sm:$0xff]
        %v2845 = vld [vmem:[#allocation2 + $0x109] sm:$0xff]
        %v2846 = vld [vmem:[#allocation2 + $0x111] sm:$0xff]
        %v2847 = vld [vmem:[#allocation2 + $0x129] sm:$0xff]
        %v2848 = vld [vmem:[#allocation2 + $0x131] sm:$0xff]
        %v2849 = vld [vmem:[#allocation2 + $0x149] sm:$0xff]
        %v2850 = vld [vmem:[#allocation2 + $0x151] sm:$0xff]
        %v2851 = vld [vmem:[#allocation2 + $0x169] sm:$0xff]
        %v2852 = vld [vmem:[#allocation2 + $0x171] sm:$0xff]
        %v2853 = vld [vmem:[#allocation2 + $0x189] sm:$0xff]
        %v2854 = vld [vmem:[#allocation2 + $0x191] sm:$0xff]
        %v2855 = vld [vmem:[#allocation2 + $0x1a9] sm:$0xff]
        %v2856 = vld [vmem:[#allocation2 + $0x1b1] sm:$0xff]
        %v2857 = vld [vmem:[#allocation2 + $0x1c9] sm:$0xff]
        %v2858 = vld [vmem:[#allocation2 + $0x1d1] sm:$0xff]
        %v2859 = vld [vmem:[#allocation2 + $0x1e9] sm:$0xff]
        %v2860 = vld [vmem:[#allocation2 + $0x1f1] sm:$0xff]
        %v2861 = vadd.f32 %v2797, %v2829
        %v2862 = vadd.f32 %v2798, %v2830
        %v2863 = vadd.f32 %v2799, %v2831
        %v2864 = vadd.f32 %v2800, %v2832
        %v2865 = vadd.f32 %v2801, %v2833
        %v2866 = vadd.f32 %v2802, %v2834
        %v2867 = vadd.f32 %v2803, %v2835
        %v2868 = vadd.f32 %v2804, %v2836
        %v2869 = vadd.f32 %v2805, %v2837
        %v2870 = vadd.f32 %v2806, %v2838
        %v2871 = vadd.f32 %v2807, %v2839
        %v2872 = vadd.f32 %v2808, %v2840
        %v2873 = vadd.f32 %v2809, %v2841
        %v2874 = vadd.f32 %v2810, %v2842
        %v2875 = vadd.f32 %v2811, %v2843
        %v2876 = vadd.f32 %v2812, %v2844
        %v2877 = vadd.f32 %v2813, %v2845
        %v2878 = vadd.f32 %v2814, %v2846
        %v2879 = vadd.f32 %v2815, %v2847
        %v2880 = vadd.f32 %v2816, %v2848
        %v2881 = vadd.f32 %v2817, %v2849
        %v2882 = vadd.f32 %v2818, %v2850
        %v2883 = vadd.f32 %v2819, %v2851
        %v2884 = vadd.f32 %v2820, %v2852
        %v2885 = vadd.f32 %v2821, %v2853
        %v2886 = vadd.f32 %v2822, %v2854
        %v2887 = vadd.f32 %v2823, %v2855
        %v2888 = vadd.f32 %v2824, %v2856
        %v2889 = vadd.f32 %v2825, %v2857
        %v2890 = vadd.f32 %v2826, %v2858
        %v2891 = vadd.f32 %v2827, %v2859
        %v2892 = vadd.f32 %v2828, %v2860
        %v2893 = vld [vmem:[#allocation2 + $0xa] sm:$0xff]
        %v2894 = vld [vmem:[#allocation2 + $0x12] sm:$0xff]
        %v2895 = vld [vmem:[#allocation2 + $0x2a] sm:$0xff]
        %v2896 = vld [vmem:[#allocation2 + $0x32] sm:$0xff]
        %v2897 = vld [vmem:[#allocation2 + $0x4a] sm:$0xff]
        %v2898 = vld [vmem:[#allocation2 + $0x52] sm:$0xff]
        %v2899 = vld [vmem:[#allocation2 + $0x6a] sm:$0xff]
        %v2900 = vld [vmem:[#allocation2 + $0x72] sm:$0xff]
        %v2901 = vld [vmem:[#allocation2 + $0x8a] sm:$0xff]
        %v2902 = vld [vmem:[#allocation2 + $0x92] sm:$0xff]
        %v2903 = vld [vmem:[#allocation2 + $0xaa] sm:$0xff]
        %v2904 = vld [vmem:[#allocation2 + $0xb2] sm:$0xff]
        %v2905 = vld [vmem:[#allocation2 + $0xca] sm:$0xff]
        %v2906 = vld [vmem:[#allocation2 + $0xd2] sm:$0xff]
        %v2907 = vld [vmem:[#allocation2 + $0xea] sm:$0xff]
        %v2908 = vld [vmem:[#allocation2 + $0xf2] sm:$0xff]
        %v2909 = vld [vmem:[#allocation2 + $0x10a] sm:$0xff]
        %v2910 = vld [vmem:[#allocation2 + $0x112] sm:$0xff]
        %v2911 = vld [vmem:[#allocation2 + $0x12a] sm:$0xff]
        %v2912 = vld [vmem:[#allocation2 + $0x132] sm:$0xff]
        %v2913 = vld [vmem:[#allocation2 + $0x14a] sm:$0xff]
        %v2914 = vld [vmem:[#allocation2 + $0x152] sm:$0xff]
        %v2915 = vld [vmem:[#allocation2 + $0x16a] sm:$0xff]
        %v2916 = vld [vmem:[#allocation2 + $0x172] sm:$0xff]
        %v2917 = vld [vmem:[#allocation2 + $0x18a] sm:$0xff]
        %v2918 = vld [vmem:[#allocation2 + $0x192] sm:$0xff]
        %v2919 = vld [vmem:[#allocation2 + $0x1aa] sm:$0xff]
        %v2920 = vld [vmem:[#allocation2 + $0x1b2] sm:$0xff]
        %v2921 = vld [vmem:[#allocation2 + $0x1ca] sm:$0xff]
        %v2922 = vld [vmem:[#allocation2 + $0x1d2] sm:$0xff]
        %v2923 = vld [vmem:[#allocation2 + $0x1ea] sm:$0xff]
        %v2924 = vld [vmem:[#allocation2 + $0x1f2] sm:$0xff]
        %v2925 = vadd.f32 %v2861, %v2893
        %v2926 = vadd.f32 %v2862, %v2894
        %v2927 = vadd.f32 %v2863, %v2895
        %v2928 = vadd.f32 %v2864, %v2896
        %v2929 = vadd.f32 %v2865, %v2897
        %v2930 = vadd.f32 %v2866, %v2898
        %v2931 = vadd.f32 %v2867, %v2899
        %v2932 = vadd.f32 %v2868, %v2900
        %v2933 = vadd.f32 %v2869, %v2901
        %v2934 = vadd.f32 %v2870, %v2902
        %v2935 = vadd.f32 %v2871, %v2903
        %v2936 = vadd.f32 %v2872, %v2904
        %v2937 = vadd.f32 %v2873, %v2905
        %v2938 = vadd.f32 %v2874, %v2906
        %v2939 = vadd.f32 %v2875, %v2907
        %v2940 = vadd.f32 %v2876, %v2908
        %v2941 = vadd.f32 %v2877, %v2909
        %v2942 = vadd.f32 %v2878, %v2910
        %v2943 = vadd.f32 %v2879, %v2911
        %v2944 = vadd.f32 %v2880, %v2912
        %v2945 = vadd.f32 %v2881, %v2913
        %v2946 = vadd.f32 %v2882, %v2914
        %v2947 = vadd.f32 %v2883, %v2915
        %v2948 = vadd.f32 %v2884, %v2916
        %v2949 = vadd.f32 %v2885, %v2917
        %v2950 = vadd.f32 %v2886, %v2918
        %v2951 = vadd.f32 %v2887, %v2919
        %v2952 = vadd.f32 %v2888, %v2920
        %v2953 = vadd.f32 %v2889, %v2921
        %v2954 = vadd.f32 %v2890, %v2922
        %v2955 = vadd.f32 %v2891, %v2923
        %v2956 = vadd.f32 %v2892, %v2924
        %v2957 = vld [vmem:[#allocation2 + $0xb] sm:$0xff]
        %v2958 = vld [vmem:[#allocation2 + $0x13] sm:$0xff]
        %v2959 = vld [vmem:[#allocation2 + $0x2b] sm:$0xff]
        %v2960 = vld [vmem:[#allocation2 + $0x33] sm:$0xff]
        %v2961 = vld [vmem:[#allocation2 + $0x4b] sm:$0xff]
        %v2962 = vld [vmem:[#allocation2 + $0x53] sm:$0xff]
        %v2963 = vld [vmem:[#allocation2 + $0x6b] sm:$0xff]
        %v2964 = vld [vmem:[#allocation2 + $0x73] sm:$0xff]
        %v2965 = vld [vmem:[#allocation2 + $0x8b] sm:$0xff]
        %v2966 = vld [vmem:[#allocation2 + $0x93] sm:$0xff]
        %v2967 = vld [vmem:[#allocation2 + $0xab] sm:$0xff]
        %v2968 = vld [vmem:[#allocation2 + $0xb3] sm:$0xff]
        %v2969 = vld [vmem:[#allocation2 + $0xcb] sm:$0xff]
        %v2970 = vld [vmem:[#allocation2 + $0xd3] sm:$0xff]
        %v2971 = vld [vmem:[#allocation2 + $0xeb] sm:$0xff]
        %v2972 = vld [vmem:[#allocation2 + $0xf3] sm:$0xff]
        %v2973 = vld [vmem:[#allocation2 + $0x10b] sm:$0xff]
        %v2974 = vld [vmem:[#allocation2 + $0x113] sm:$0xff]
        %v2975 = vld [vmem:[#allocation2 + $0x12b] sm:$0xff]
        %v2976 = vld [vmem:[#allocation2 + $0x133] sm:$0xff]
        %v2977 = vld [vmem:[#allocation2 + $0x14b] sm:$0xff]
        %v2978 = vld [vmem:[#allocation2 + $0x153] sm:$0xff]
        %v2979 = vld [vmem:[#allocation2 + $0x16b] sm:$0xff]
        %v2980 = vld [vmem:[#allocation2 + $0x173] sm:$0xff]
        %v2981 = vld [vmem:[#allocation2 + $0x18b] sm:$0xff]
        %v2982 = vld [vmem:[#allocation2 + $0x193] sm:$0xff]
        %v2983 = vld [vmem:[#allocation2 + $0x1ab] sm:$0xff]
        %v2984 = vld [vmem:[#allocation2 + $0x1b3] sm:$0xff]
        %v2985 = vld [vmem:[#allocation2 + $0x1cb] sm:$0xff]
        %v2986 = vld [vmem:[#allocation2 + $0x1d3] sm:$0xff]
        %v2987 = vld [vmem:[#allocation2 + $0x1eb] sm:$0xff]
        %v2988 = vld [vmem:[#allocation2 + $0x1f3] sm:$0xff]
        %v2989 = vadd.f32 %v2925, %v2957
        %v2990 = vadd.f32 %v2926, %v2958
        %v2991 = vadd.f32 %v2927, %v2959
        %v2992 = vadd.f32 %v2928, %v2960
        %v2993 = vadd.f32 %v2929, %v2961
        %v2994 = vadd.f32 %v2930, %v2962
        %v2995 = vadd.f32 %v2931, %v2963
        %v2996 = vadd.f32 %v2932, %v2964
        %v2997 = vadd.f32 %v2933, %v2965
        %v2998 = vadd.f32 %v2934, %v2966
        %v2999 = vadd.f32 %v2935, %v2967
        %v3000 = vadd.f32 %v2936, %v2968
        %v3001 = vadd.f32 %v2937, %v2969
        %v3002 = vadd.f32 %v2938, %v2970
        %v3003 = vadd.f32 %v2939, %v2971
        %v3004 = vadd.f32 %v2940, %v2972
        %v3005 = vadd.f32 %v2941, %v2973
        %v3006 = vadd.f32 %v2942, %v2974
        %v3007 = vadd.f32 %v2943, %v2975
        %v3008 = vadd.f32 %v2944, %v2976
        %v3009 = vadd.f32 %v2945, %v2977
        %v3010 = vadd.f32 %v2946, %v2978
        %v3011 = vadd.f32 %v2947, %v2979
        %v3012 = vadd.f32 %v2948, %v2980
        %v3013 = vadd.f32 %v2949, %v2981
        %v3014 = vadd.f32 %v2950, %v2982
        %v3015 = vadd.f32 %v2951, %v2983
        %v3016 = vadd.f32 %v2952, %v2984
        %v3017 = vadd.f32 %v2953, %v2985
        %v3018 = vadd.f32 %v2954, %v2986
        %v3019 = vadd.f32 %v2955, %v2987
        %v3020 = vadd.f32 %v2956, %v2988
        %v3021 = vld [vmem:[#allocation2 + $0x14] sm:$0xff]
        %v3022 = vld [vmem:[#allocation2 + $0x34] sm:$0xff]
        %v3023 = vld [vmem:[#allocation2 + $0x54] sm:$0xff]
        %v3024 = vld [vmem:[#allocation2 + $0x74] sm:$0xff]
        %v3025 = vld [vmem:[#allocation2 + $0x94] sm:$0xff]
        %v3026 = vld [vmem:[#allocation2 + $0xb4] sm:$0xff]
        %v3027 = vld [vmem:[#allocation2 + $0xd4] sm:$0xff]
        %v3028 = vld [vmem:[#allocation2 + $0xf4] sm:$0xff]
        %v3029 = vld [vmem:[#allocation2 + $0x114] sm:$0xff]
        %v3030 = vld [vmem:[#allocation2 + $0x134] sm:$0xff]
        %v3031 = vld [vmem:[#allocation2 + $0x154] sm:$0xff]
        %v3032 = vld [vmem:[#allocation2 + $0x174] sm:$0xff]
        %v3033 = vld [vmem:[#allocation2 + $0x194] sm:$0xff]
        %v3034 = vld [vmem:[#allocation2 + $0x1b4] sm:$0xff]
        %v3035 = vld [vmem:[#allocation2 + $0x1d4] sm:$0xff]
        %v3036 = vld [vmem:[#allocation2 + $0x1f4] sm:$0xff]
        %v3037 = vadd.f32 %v2989, %v2542
        %v3038 = vadd.f32 %v2990, %v3021
        %v3039 = vadd.f32 %v2991, %v2544
        %v3040 = vadd.f32 %v2992, %v3022
        %v3041 = vadd.f32 %v2993, %v2546
        %v3042 = vadd.f32 %v2994, %v3023
        %v3043 = vadd.f32 %v2995, %v2548
        %v3044 = vadd.f32 %v2996, %v3024
        %v3045 = vadd.f32 %v2997, %v2550
        %v3046 = vadd.f32 %v2998, %v3025
        %v3047 = vadd.f32 %v2999, %v2552
        %v3048 = vadd.f32 %v3000, %v3026
        %v3049 = vadd.f32 %v3001, %v2554
        %v3050 = vadd.f32 %v3002, %v3027
        %v3051 = vadd.f32 %v3003, %v2556
        %v3052 = vadd.f32 %v3004, %v3028
        %v3053 = vadd.f32 %v3005, %v2558
        %v3054 = vadd.f32 %v3006, %v3029
        %v3055 = vadd.f32 %v3007, %v2560
        %v3056 = vadd.f32 %v3008, %v3030
        %v3057 = vadd.f32 %v3009, %v2562
        %v3058 = vadd.f32 %v3010, %v3031
        %v3059 = vadd.f32 %v3011, %v2564
        %v3060 = vadd.f32 %v3012, %v3032
        %v3061 = vadd.f32 %v3013, %v2566
        %v3062 = vadd.f32 %v3014, %v3033
        %v3063 = vadd.f32 %v3015, %v2568
        %v3064 = vadd.f32 %v3016, %v3034
        %v3065 = vadd.f32 %v3017, %v2570
        %v3066 = vadd.f32 %v3018, %v3035
        %v3067 = vadd.f32 %v3019, %v2572
        %v3068 = vadd.f32 %v3020, %v3036
        %3069 = vst.msk [vmem:[%s1518] sm:$0xff] %vm239, %v3037
        %3070 = vst.msk [vmem:[%s1518 + $0x8] sm:$0xff] %vm239, %v3038
        %3071 = vst.msk [vmem:[%s1518 + $0x10] sm:$0xff] %vm239, %v3039
        %3072 = vst.msk [vmem:[%s1518 + $0x18] sm:$0xff] %vm239, %v3040
        %3073 = vst.msk [vmem:[%s1518 + $0x20] sm:$0xff] %vm239, %v3041
        %3074 = vst.msk [vmem:[%s1518 + $0x28] sm:$0xff] %vm239, %v3042
        %3075 = vst.msk [vmem:[%s1518 + $0x30] sm:$0xff] %vm239, %v3043
        %3076 = vst.msk [vmem:[%s1518 + $0x38] sm:$0xff] %vm239, %v3044
        %3077 = vst.msk [vmem:[%s1518 + $0x40] sm:$0xff] %vm239, %v3045
        %3078 = vst.msk [vmem:[%s1518 + $0x48] sm:$0xff] %vm239, %v3046
        %3079 = vst.msk [vmem:[%s1518 + $0x50] sm:$0xff] %vm239, %v3047
        %3080 = vst.msk [vmem:[%s1518 + $0x58] sm:$0xff] %vm239, %v3048
        %3081 = vst.msk [vmem:[%s1518 + $0x60] sm:$0xff] %vm239, %v3049
        %3082 = vst.msk [vmem:[%s1518 + $0x68] sm:$0xff] %vm239, %v3050
        %3083 = vst.msk [vmem:[%s1518 + $0x70] sm:$0xff] %vm239, %v3051
        %3084 = vst.msk [vmem:[%s1518 + $0x78] sm:$0xff] %vm239, %v3052
        %3085 = vst.msk [vmem:[%s1518 + $0x80] sm:$0xff] %vm239, %v3053
        %3086 = vst.msk [vmem:[%s1518 + $0x88] sm:$0xff] %vm239, %v3054
        %3087 = vst.msk [vmem:[%s1518 + $0x90] sm:$0xff] %vm239, %v3055
        %3088 = vst.msk [vmem:[%s1518 + $0x98] sm:$0xff] %vm239, %v3056
        %3089 = vst.msk [vmem:[%s1518 + $0xa0] sm:$0xff] %vm239, %v3057
        %3090 = vst.msk [vmem:[%s1518 + $0xa8] sm:$0xff] %vm239, %v3058
        %3091 = vst.msk [vmem:[%s1518 + $0xb0] sm:$0xff] %vm239, %v3059
        %3092 = vst.msk [vmem:[%s1518 + $0xb8] sm:$0xff] %vm239, %v3060
        %3093 = vst.msk [vmem:[%s1518 + $0xc0] sm:$0xff] %vm239, %v3061
        %3094 = vst.msk [vmem:[%s1518 + $0xc8] sm:$0xff] %vm239, %v3062
        %3095 = vst.msk [vmem:[%s1518 + $0xd0] sm:$0xff] %vm239, %v3063
        %3096 = vst.msk [vmem:[%s1518 + $0xd8] sm:$0xff] %vm239, %v3064
        %3097 = vst.msk [vmem:[%s1518 + $0xe0] sm:$0xff] %vm239, %v3065
        %3098 = vst.msk [vmem:[%s1518 + $0xe8] sm:$0xff] %vm239, %v3066
        %3099 = vst.msk [vmem:[%s1518 + $0xf0] sm:$0xff] %vm239, %v3067
        %3100 = vst.msk [vmem:[%s1518 + $0xf8] sm:$0xff] %vm239, %v3068
        %s3101 = scalar_lea.vmem [#allocation3], 64
        %v3102 = vld [vmem:[%s3101] sm:$0xff]
        %v3103 = vld [vmem:[%s3101 + $0x8] sm:$0xff]
        %v3104 = vld [vmem:[%s3101 + $0x10] sm:$0xff]
        %v3105 = vld [vmem:[%s3101 + $0x18] sm:$0xff]
        %v3106 = vld [vmem:[%s3101 + $0x20] sm:$0xff]
        %v3107 = vld [vmem:[%s3101 + $0x28] sm:$0xff]
        %v3108 = vld [vmem:[%s3101 + $0x30] sm:$0xff]
        %v3109 = vld [vmem:[%s3101 + $0x38] sm:$0xff]
        %v3110 = vld [vmem:[%s3101 + $0x40] sm:$0xff]
        %v3111 = vld [vmem:[%s3101 + $0x48] sm:$0xff]
        %v3112 = vld [vmem:[%s3101 + $0x50] sm:$0xff]
        %v3113 = vld [vmem:[%s3101 + $0x58] sm:$0xff]
        %v3114 = vld [vmem:[%s3101 + $0x60] sm:$0xff]
        %v3115 = vld [vmem:[%s3101 + $0x68] sm:$0xff]
        %v3116 = vld [vmem:[%s3101 + $0x70] sm:$0xff]
        %v3117 = vld [vmem:[%s3101 + $0x78] sm:$0xff]
        %v3118 = vld [vmem:[%s3101 + $0x80] sm:$0xff]
        %v3119 = vld [vmem:[%s3101 + $0x88] sm:$0xff]
        %v3120 = vld [vmem:[%s3101 + $0x90] sm:$0xff]
        %v3121 = vld [vmem:[%s3101 + $0x98] sm:$0xff]
        %v3122 = vld [vmem:[%s3101 + $0xa0] sm:$0xff]
        %v3123 = vld [vmem:[%s3101 + $0xa8] sm:$0xff]
        %v3124 = vld [vmem:[%s3101 + $0xb0] sm:$0xff]
        %v3125 = vld [vmem:[%s3101 + $0xb8] sm:$0xff]
        %v3126 = vld [vmem:[%s3101 + $0xc0] sm:$0xff]
        %v3127 = vld [vmem:[%s3101 + $0xc8] sm:$0xff]
        %v3128 = vld [vmem:[%s3101 + $0xd0] sm:$0xff]
        %v3129 = vld [vmem:[%s3101 + $0xd8] sm:$0xff]
        %v3130 = vld [vmem:[%s3101 + $0xe0] sm:$0xff]
        %v3131 = vld [vmem:[%s3101 + $0xe8] sm:$0xff]
        %v3132 = vld [vmem:[%s3101 + $0xf0] sm:$0xff]
        %v3133 = vld [vmem:[%s3101 + $0xf8] sm:$0xff]
        %s3134 = scalar_lea.vmem [#allocation3], 80
        %v3135 = vld [vmem:[%s3134] sm:$0xff]
        %v3136 = vld [vmem:[%s3134 + $0x8] sm:$0xff]
        %v3137 = vld [vmem:[%s3134 + $0x10] sm:$0xff]
        %v3138 = vld [vmem:[%s3134 + $0x18] sm:$0xff]
        %v3139 = vld [vmem:[%s3134 + $0x20] sm:$0xff]
        %v3140 = vld [vmem:[%s3134 + $0x28] sm:$0xff]
        %v3141 = vld [vmem:[%s3134 + $0x30] sm:$0xff]
        %v3142 = vld [vmem:[%s3134 + $0x38] sm:$0xff]
        %v3143 = vld [vmem:[%s3134 + $0x40] sm:$0xff]
        %v3144 = vld [vmem:[%s3134 + $0x48] sm:$0xff]
        %v3145 = vld [vmem:[%s3134 + $0x50] sm:$0xff]
        %v3146 = vld [vmem:[%s3134 + $0x58] sm:$0xff]
        %v3147 = vld [vmem:[%s3134 + $0x60] sm:$0xff]
        %v3148 = vld [vmem:[%s3134 + $0x68] sm:$0xff]
        %v3149 = vld [vmem:[%s3134 + $0x70] sm:$0xff]
        %v3150 = vld [vmem:[%s3134 + $0x78] sm:$0xff]
        %v3151 = vld [vmem:[%s3134 + $0x80] sm:$0xff]
        %v3152 = vld [vmem:[%s3134 + $0x88] sm:$0xff]
        %v3153 = vld [vmem:[%s3134 + $0x90] sm:$0xff]
        %v3154 = vld [vmem:[%s3134 + $0x98] sm:$0xff]
        %v3155 = vld [vmem:[%s3134 + $0xa0] sm:$0xff]
        %v3156 = vld [vmem:[%s3134 + $0xa8] sm:$0xff]
        %v3157 = vld [vmem:[%s3134 + $0xb0] sm:$0xff]
        %v3158 = vld [vmem:[%s3134 + $0xb8] sm:$0xff]
        %v3159 = vld [vmem:[%s3134 + $0xc0] sm:$0xff]
        %v3160 = vld [vmem:[%s3134 + $0xc8] sm:$0xff]
        %v3161 = vld [vmem:[%s3134 + $0xd0] sm:$0xff]
        %v3162 = vld [vmem:[%s3134 + $0xd8] sm:$0xff]
        %v3163 = vld [vmem:[%s3134 + $0xe0] sm:$0xff]
        %v3164 = vld [vmem:[%s3134 + $0xe8] sm:$0xff]
        %v3165 = vld [vmem:[%s3134 + $0xf0] sm:$0xff]
        %v3166 = vld [vmem:[%s3134 + $0xf8] sm:$0xff]
        %v3167 = vadd.f32 %v3102, %v3135
        %v3168 = vadd.f32 %v3103, %v3136
        %v3169 = vadd.f32 %v3104, %v3137
        %v3170 = vadd.f32 %v3105, %v3138
        %v3171 = vadd.f32 %v3106, %v3139
        %v3172 = vadd.f32 %v3107, %v3140
        %v3173 = vadd.f32 %v3108, %v3141
        %v3174 = vadd.f32 %v3109, %v3142
        %v3175 = vadd.f32 %v3110, %v3143
        %v3176 = vadd.f32 %v3111, %v3144
        %v3177 = vadd.f32 %v3112, %v3145
        %v3178 = vadd.f32 %v3113, %v3146
        %v3179 = vadd.f32 %v3114, %v3147
        %v3180 = vadd.f32 %v3115, %v3148
        %v3181 = vadd.f32 %v3116, %v3149
        %v3182 = vadd.f32 %v3117, %v3150
        %v3183 = vadd.f32 %v3118, %v3151
        %v3184 = vadd.f32 %v3119, %v3152
        %v3185 = vadd.f32 %v3120, %v3153
        %v3186 = vadd.f32 %v3121, %v3154
        %v3187 = vadd.f32 %v3122, %v3155
        %v3188 = vadd.f32 %v3123, %v3156
        %v3189 = vadd.f32 %v3124, %v3157
        %v3190 = vadd.f32 %v3125, %v3158
        %v3191 = vadd.f32 %v3126, %v3159
        %v3192 = vadd.f32 %v3127, %v3160
        %v3193 = vadd.f32 %v3128, %v3161
        %v3194 = vadd.f32 %v3129, %v3162
        %v3195 = vadd.f32 %v3130, %v3163
        %v3196 = vadd.f32 %v3131, %v3164
        %v3197 = vadd.f32 %v3132, %v3165
        %v3198 = vadd.f32 %v3133, %v3166
        %v3199 = vld [vmem:[%s1551] sm:$0xff]
        %v3200 = vld [vmem:[%s1551 + $0x8] sm:$0xff]
        %v3201 = vld [vmem:[%s1551 + $0x10] sm:$0xff]
        %v3202 = vld [vmem:[%s1551 + $0x18] sm:$0xff]
        %v3203 = vld [vmem:[%s1551 + $0x20] sm:$0xff]
        %v3204 = vld [vmem:[%s1551 + $0x28] sm:$0xff]
        %v3205 = vld [vmem:[%s1551 + $0x30] sm:$0xff]
        %v3206 = vld [vmem:[%s1551 + $0x38] sm:$0xff]
        %v3207 = vld [vmem:[%s1551 + $0x40] sm:$0xff]
        %v3208 = vld [vmem:[%s1551 + $0x48] sm:$0xff]
        %v3209 = vld [vmem:[%s1551 + $0x50] sm:$0xff]
        %v3210 = vld [vmem:[%s1551 + $0x58] sm:$0xff]
        %v3211 = vld [vmem:[%s1551 + $0x60] sm:$0xff]
        %v3212 = vld [vmem:[%s1551 + $0x68] sm:$0xff]
        %v3213 = vld [vmem:[%s1551 + $0x70] sm:$0xff]
        %v3214 = vld [vmem:[%s1551 + $0x78] sm:$0xff]
        %v3215 = vld [vmem:[%s1551 + $0x80] sm:$0xff]
        %v3216 = vld [vmem:[%s1551 + $0x88] sm:$0xff]
        %v3217 = vld [vmem:[%s1551 + $0x90] sm:$0xff]
        %v3218 = vld [vmem:[%s1551 + $0x98] sm:$0xff]
        %v3219 = vld [vmem:[%s1551 + $0xa0] sm:$0xff]
        %v3220 = vld [vmem:[%s1551 + $0xa8] sm:$0xff]
        %v3221 = vld [vmem:[%s1551 + $0xb0] sm:$0xff]
        %v3222 = vld [vmem:[%s1551 + $0xb8] sm:$0xff]
        %v3223 = vld [vmem:[%s1551 + $0xc0] sm:$0xff]
        %v3224 = vld [vmem:[%s1551 + $0xc8] sm:$0xff]
        %v3225 = vld [vmem:[%s1551 + $0xd0] sm:$0xff]
        %v3226 = vld [vmem:[%s1551 + $0xd8] sm:$0xff]
        %v3227 = vld [vmem:[%s1551 + $0xe0] sm:$0xff]
        %v3228 = vld [vmem:[%s1551 + $0xe8] sm:$0xff]
        %v3229 = vld [vmem:[%s1551 + $0xf0] sm:$0xff]
        %v3230 = vld [vmem:[%s1551 + $0xf8] sm:$0xff]
        %v3231 = vadd.f32 %v3167, %v3199
        %v3232 = vadd.f32 %v3168, %v3200
        %v3233 = vadd.f32 %v3169, %v3201
        %v3234 = vadd.f32 %v3170, %v3202
        %v3235 = vadd.f32 %v3171, %v3203
        %v3236 = vadd.f32 %v3172, %v3204
        %v3237 = vadd.f32 %v3173, %v3205
        %v3238 = vadd.f32 %v3174, %v3206
        %v3239 = vadd.f32 %v3175, %v3207
        %v3240 = vadd.f32 %v3176, %v3208
        %v3241 = vadd.f32 %v3177, %v3209
        %v3242 = vadd.f32 %v3178, %v3210
        %v3243 = vadd.f32 %v3179, %v3211
        %v3244 = vadd.f32 %v3180, %v3212
        %v3245 = vadd.f32 %v3181, %v3213
        %v3246 = vadd.f32 %v3182, %v3214
        %v3247 = vadd.f32 %v3183, %v3215
        %v3248 = vadd.f32 %v3184, %v3216
        %v3249 = vadd.f32 %v3185, %v3217
        %v3250 = vadd.f32 %v3186, %v3218
        %v3251 = vadd.f32 %v3187, %v3219
        %v3252 = vadd.f32 %v3188, %v3220
        %v3253 = vadd.f32 %v3189, %v3221
        %v3254 = vadd.f32 %v3190, %v3222
        %v3255 = vadd.f32 %v3191, %v3223
        %v3256 = vadd.f32 %v3192, %v3224
        %v3257 = vadd.f32 %v3193, %v3225
        %v3258 = vadd.f32 %v3194, %v3226
        %v3259 = vadd.f32 %v3195, %v3227
        %v3260 = vadd.f32 %v3196, %v3228
        %v3261 = vadd.f32 %v3197, %v3229
        %v3262 = vadd.f32 %v3198, %v3230
        %v3263 = vld [vmem:[%s1584] sm:$0xff]
        %v3264 = vld [vmem:[%s1584 + $0x8] sm:$0xff]
        %v3265 = vld [vmem:[%s1584 + $0x10] sm:$0xff]
        %v3266 = vld [vmem:[%s1584 + $0x18] sm:$0xff]
        %v3267 = vld [vmem:[%s1584 + $0x20] sm:$0xff]
        %v3268 = vld [vmem:[%s1584 + $0x28] sm:$0xff]
        %v3269 = vld [vmem:[%s1584 + $0x30] sm:$0xff]
        %v3270 = vld [vmem:[%s1584 + $0x38] sm:$0xff]
        %v3271 = vld [vmem:[%s1584 + $0x40] sm:$0xff]
        %v3272 = vld [vmem:[%s1584 + $0x48] sm:$0xff]
        %v3273 = vld [vmem:[%s1584 + $0x50] sm:$0xff]
        %v3274 = vld [vmem:[%s1584 + $0x58] sm:$0xff]
        %v3275 = vld [vmem:[%s1584 + $0x60] sm:$0xff]
        %v3276 = vld [vmem:[%s1584 + $0x68] sm:$0xff]
        %v3277 = vld [vmem:[%s1584 + $0x70] sm:$0xff]
        %v3278 = vld [vmem:[%s1584 + $0x78] sm:$0xff]
        %v3279 = vld [vmem:[%s1584 + $0x80] sm:$0xff]
        %v3280 = vld [vmem:[%s1584 + $0x88] sm:$0xff]
        %v3281 = vld [vmem:[%s1584 + $0x90] sm:$0xff]
        %v3282 = vld [vmem:[%s1584 + $0x98] sm:$0xff]
        %v3283 = vld [vmem:[%s1584 + $0xa0] sm:$0xff]
        %v3284 = vld [vmem:[%s1584 + $0xa8] sm:$0xff]
        %v3285 = vld [vmem:[%s1584 + $0xb0] sm:$0xff]
        %v3286 = vld [vmem:[%s1584 + $0xb8] sm:$0xff]
        %v3287 = vld [vmem:[%s1584 + $0xc0] sm:$0xff]
        %v3288 = vld [vmem:[%s1584 + $0xc8] sm:$0xff]
        %v3289 = vld [vmem:[%s1584 + $0xd0] sm:$0xff]
        %v3290 = vld [vmem:[%s1584 + $0xd8] sm:$0xff]
        %v3291 = vld [vmem:[%s1584 + $0xe0] sm:$0xff]
        %v3292 = vld [vmem:[%s1584 + $0xe8] sm:$0xff]
        %v3293 = vld [vmem:[%s1584 + $0xf0] sm:$0xff]
        %v3294 = vld [vmem:[%s1584 + $0xf8] sm:$0xff]
        %v3295 = vadd.f32 %v3231, %v3263
        %v3296 = vadd.f32 %v3232, %v3264
        %v3297 = vadd.f32 %v3233, %v3265
        %v3298 = vadd.f32 %v3234, %v3266
        %v3299 = vadd.f32 %v3235, %v3267
        %v3300 = vadd.f32 %v3236, %v3268
        %v3301 = vadd.f32 %v3237, %v3269
        %v3302 = vadd.f32 %v3238, %v3270
        %v3303 = vadd.f32 %v3239, %v3271
        %v3304 = vadd.f32 %v3240, %v3272
        %v3305 = vadd.f32 %v3241, %v3273
        %v3306 = vadd.f32 %v3242, %v3274
        %v3307 = vadd.f32 %v3243, %v3275
        %v3308 = vadd.f32 %v3244, %v3276
        %v3309 = vadd.f32 %v3245, %v3277
        %v3310 = vadd.f32 %v3246, %v3278
        %v3311 = vadd.f32 %v3247, %v3279
        %v3312 = vadd.f32 %v3248, %v3280
        %v3313 = vadd.f32 %v3249, %v3281
        %v3314 = vadd.f32 %v3250, %v3282
        %v3315 = vadd.f32 %v3251, %v3283
        %v3316 = vadd.f32 %v3252, %v3284
        %v3317 = vadd.f32 %v3253, %v3285
        %v3318 = vadd.f32 %v3254, %v3286
        %v3319 = vadd.f32 %v3255, %v3287
        %v3320 = vadd.f32 %v3256, %v3288
        %v3321 = vadd.f32 %v3257, %v3289
        %v3322 = vadd.f32 %v3258, %v3290
        %v3323 = vadd.f32 %v3259, %v3291
        %v3324 = vadd.f32 %v3260, %v3292
        %v3325 = vadd.f32 %v3261, %v3293
        %v3326 = vadd.f32 %v3262, %v3294
        %v3327 = vld [vmem:[%s1518] sm:$0xff]
        %v3328 = vld [vmem:[%s1518 + $0x8] sm:$0xff]
        %v3329 = vld [vmem:[%s1518 + $0x10] sm:$0xff]
        %v3330 = vld [vmem:[%s1518 + $0x18] sm:$0xff]
        %v3331 = vld [vmem:[%s1518 + $0x20] sm:$0xff]
        %v3332 = vld [vmem:[%s1518 + $0x28] sm:$0xff]
        %v3333 = vld [vmem:[%s1518 + $0x30] sm:$0xff]
        %v3334 = vld [vmem:[%s1518 + $0x38] sm:$0xff]
        %v3335 = vld [vmem:[%s1518 + $0x40] sm:$0xff]
        %v3336 = vld [vmem:[%s1518 + $0x48] sm:$0xff]
        %v3337 = vld [vmem:[%s1518 + $0x50] sm:$0xff]
        %v3338 = vld [vmem:[%s1518 + $0x58] sm:$0xff]
        %v3339 = vld [vmem:[%s1518 + $0x60] sm:$0xff]
        %v3340 = vld [vmem:[%s1518 + $0x68] sm:$0xff]
        %v3341 = vld [vmem:[%s1518 + $0x70] sm:$0xff]
        %v3342 = vld [vmem:[%s1518 + $0x78] sm:$0xff]
        %v3343 = vld [vmem:[%s1518 + $0x80] sm:$0xff]
        %v3344 = vld [vmem:[%s1518 + $0x88] sm:$0xff]
        %v3345 = vld [vmem:[%s1518 + $0x90] sm:$0xff]
        %v3346 = vld [vmem:[%s1518 + $0x98] sm:$0xff]
        %v3347 = vld [vmem:[%s1518 + $0xa0] sm:$0xff]
        %v3348 = vld [vmem:[%s1518 + $0xa8] sm:$0xff]
        %v3349 = vld [vmem:[%s1518 + $0xb0] sm:$0xff]
        %v3350 = vld [vmem:[%s1518 + $0xb8] sm:$0xff]
        %v3351 = vld [vmem:[%s1518 + $0xc0] sm:$0xff]
        %v3352 = vld [vmem:[%s1518 + $0xc8] sm:$0xff]
        %v3353 = vld [vmem:[%s1518 + $0xd0] sm:$0xff]
        %v3354 = vld [vmem:[%s1518 + $0xd8] sm:$0xff]
        %v3355 = vld [vmem:[%s1518 + $0xe0] sm:$0xff]
        %v3356 = vld [vmem:[%s1518 + $0xe8] sm:$0xff]
        %v3357 = vld [vmem:[%s1518 + $0xf0] sm:$0xff]
        %v3358 = vld [vmem:[%s1518 + $0xf8] sm:$0xff]
        %v3359 = vadd.f32 %v3295, %v3327
        %v3360 = vadd.f32 %v3296, %v3328
        %v3361 = vadd.f32 %v3297, %v3329
        %v3362 = vadd.f32 %v3298, %v3330
        %v3363 = vadd.f32 %v3299, %v3331
        %v3364 = vadd.f32 %v3300, %v3332
        %v3365 = vadd.f32 %v3301, %v3333
        %v3366 = vadd.f32 %v3302, %v3334
        %v3367 = vadd.f32 %v3303, %v3335
        %v3368 = vadd.f32 %v3304, %v3336
        %v3369 = vadd.f32 %v3305, %v3337
        %v3370 = vadd.f32 %v3306, %v3338
        %v3371 = vadd.f32 %v3307, %v3339
        %v3372 = vadd.f32 %v3308, %v3340
        %v3373 = vadd.f32 %v3309, %v3341
        %v3374 = vadd.f32 %v3310, %v3342
        %v3375 = vadd.f32 %v3311, %v3343
        %v3376 = vadd.f32 %v3312, %v3344
        %v3377 = vadd.f32 %v3313, %v3345
        %v3378 = vadd.f32 %v3314, %v3346
        %v3379 = vadd.f32 %v3315, %v3347
        %v3380 = vadd.f32 %v3316, %v3348
        %v3381 = vadd.f32 %v3317, %v3349
        %v3382 = vadd.f32 %v3318, %v3350
        %v3383 = vadd.f32 %v3319, %v3351
        %v3384 = vadd.f32 %v3320, %v3352
        %v3385 = vadd.f32 %v3321, %v3353
        %v3386 = vadd.f32 %v3322, %v3354
        %v3387 = vadd.f32 %v3323, %v3355
        %v3388 = vadd.f32 %v3324, %v3356
        %v3389 = vadd.f32 %v3325, %v3357
        %v3390 = vadd.f32 %v3326, %v3358
        %v3391 = vld [vmem:[%s1713] sm:$0xff]
        %v3392 = vld [vmem:[%s1713 + $0x8] sm:$0xff]
        %v3393 = vld [vmem:[%s1713 + $0x10] sm:$0xff]
        %v3394 = vld [vmem:[%s1713 + $0x18] sm:$0xff]
        %v3395 = vld [vmem:[%s1713 + $0x20] sm:$0xff]
        %v3396 = vld [vmem:[%s1713 + $0x28] sm:$0xff]
        %v3397 = vld [vmem:[%s1713 + $0x30] sm:$0xff]
        %v3398 = vld [vmem:[%s1713 + $0x38] sm:$0xff]
        %v3399 = vld [vmem:[%s1713 + $0x40] sm:$0xff]
        %v3400 = vld [vmem:[%s1713 + $0x48] sm:$0xff]
        %v3401 = vld [vmem:[%s1713 + $0x50] sm:$0xff]
        %v3402 = vld [vmem:[%s1713 + $0x58] sm:$0xff]
        %v3403 = vld [vmem:[%s1713 + $0x60] sm:$0xff]
        %v3404 = vld [vmem:[%s1713 + $0x68] sm:$0xff]
        %v3405 = vld [vmem:[%s1713 + $0x70] sm:$0xff]
        %v3406 = vld [vmem:[%s1713 + $0x78] sm:$0xff]
        %v3407 = vld [vmem:[%s1713 + $0x80] sm:$0xff]
        %v3408 = vld [vmem:[%s1713 + $0x88] sm:$0xff]
        %v3409 = vld [vmem:[%s1713 + $0x90] sm:$0xff]
        %v3410 = vld [vmem:[%s1713 + $0x98] sm:$0xff]
        %v3411 = vld [vmem:[%s1713 + $0xa0] sm:$0xff]
        %v3412 = vld [vmem:[%s1713 + $0xa8] sm:$0xff]
        %v3413 = vld [vmem:[%s1713 + $0xb0] sm:$0xff]
        %v3414 = vld [vmem:[%s1713 + $0xb8] sm:$0xff]
        %v3415 = vld [vmem:[%s1713 + $0xc0] sm:$0xff]
        %v3416 = vld [vmem:[%s1713 + $0xc8] sm:$0xff]
        %v3417 = vld [vmem:[%s1713 + $0xd0] sm:$0xff]
        %v3418 = vld [vmem:[%s1713 + $0xd8] sm:$0xff]
        %v3419 = vld [vmem:[%s1713 + $0xe0] sm:$0xff]
        %v3420 = vld [vmem:[%s1713 + $0xe8] sm:$0xff]
        %v3421 = vld [vmem:[%s1713 + $0xf0] sm:$0xff]
        %v3422 = vld [vmem:[%s1713 + $0xf8] sm:$0xff]
        %v3423 = vadd.f32 %v3359, %v3391
        %v3424 = vadd.f32 %v3360, %v3392
        %v3425 = vadd.f32 %v3361, %v3393
        %v3426 = vadd.f32 %v3362, %v3394
        %v3427 = vadd.f32 %v3363, %v3395
        %v3428 = vadd.f32 %v3364, %v3396
        %v3429 = vadd.f32 %v3365, %v3397
        %v3430 = vadd.f32 %v3366, %v3398
        %v3431 = vadd.f32 %v3367, %v3399
        %v3432 = vadd.f32 %v3368, %v3400
        %v3433 = vadd.f32 %v3369, %v3401
        %v3434 = vadd.f32 %v3370, %v3402
        %v3435 = vadd.f32 %v3371, %v3403
        %v3436 = vadd.f32 %v3372, %v3404
        %v3437 = vadd.f32 %v3373, %v3405
        %v3438 = vadd.f32 %v3374, %v3406
        %v3439 = vadd.f32 %v3375, %v3407
        %v3440 = vadd.f32 %v3376, %v3408
        %v3441 = vadd.f32 %v3377, %v3409
        %v3442 = vadd.f32 %v3378, %v3410
        %v3443 = vadd.f32 %v3379, %v3411
        %v3444 = vadd.f32 %v3380, %v3412
        %v3445 = vadd.f32 %v3381, %v3413
        %v3446 = vadd.f32 %v3382, %v3414
        %v3447 = vadd.f32 %v3383, %v3415
        %v3448 = vadd.f32 %v3384, %v3416
        %v3449 = vadd.f32 %v3385, %v3417
        %v3450 = vadd.f32 %v3386, %v3418
        %v3451 = vadd.f32 %v3387, %v3419
        %v3452 = vadd.f32 %v3388, %v3420
        %v3453 = vadd.f32 %v3389, %v3421
        %v3454 = vadd.f32 %v3390, %v3422
        %v3455 = vld [vmem:[%s1778] sm:$0xff]
        %v3456 = vld [vmem:[%s1778 + $0x8] sm:$0xff]
        %v3457 = vld [vmem:[%s1778 + $0x10] sm:$0xff]
        %v3458 = vld [vmem:[%s1778 + $0x18] sm:$0xff]
        %v3459 = vld [vmem:[%s1778 + $0x20] sm:$0xff]
        %v3460 = vld [vmem:[%s1778 + $0x28] sm:$0xff]
        %v3461 = vld [vmem:[%s1778 + $0x30] sm:$0xff]
        %v3462 = vld [vmem:[%s1778 + $0x38] sm:$0xff]
        %v3463 = vld [vmem:[%s1778 + $0x40] sm:$0xff]
        %v3464 = vld [vmem:[%s1778 + $0x48] sm:$0xff]
        %v3465 = vld [vmem:[%s1778 + $0x50] sm:$0xff]
        %v3466 = vld [vmem:[%s1778 + $0x58] sm:$0xff]
        %v3467 = vld [vmem:[%s1778 + $0x60] sm:$0xff]
        %v3468 = vld [vmem:[%s1778 + $0x68] sm:$0xff]
        %v3469 = vld [vmem:[%s1778 + $0x70] sm:$0xff]
        %v3470 = vld [vmem:[%s1778 + $0x78] sm:$0xff]
        %v3471 = vld [vmem:[%s1778 + $0x80] sm:$0xff]
        %v3472 = vld [vmem:[%s1778 + $0x88] sm:$0xff]
        %v3473 = vld [vmem:[%s1778 + $0x90] sm:$0xff]
        %v3474 = vld [vmem:[%s1778 + $0x98] sm:$0xff]
        %v3475 = vld [vmem:[%s1778 + $0xa0] sm:$0xff]
        %v3476 = vld [vmem:[%s1778 + $0xa8] sm:$0xff]
        %v3477 = vld [vmem:[%s1778 + $0xb0] sm:$0xff]
        %v3478 = vld [vmem:[%s1778 + $0xb8] sm:$0xff]
        %v3479 = vld [vmem:[%s1778 + $0xc0] sm:$0xff]
        %v3480 = vld [vmem:[%s1778 + $0xc8] sm:$0xff]
        %v3481 = vld [vmem:[%s1778 + $0xd0] sm:$0xff]
        %v3482 = vld [vmem:[%s1778 + $0xd8] sm:$0xff]
        %v3483 = vld [vmem:[%s1778 + $0xe0] sm:$0xff]
        %v3484 = vld [vmem:[%s1778 + $0xe8] sm:$0xff]
        %v3485 = vld [vmem:[%s1778 + $0xf0] sm:$0xff]
        %v3486 = vld [vmem:[%s1778 + $0xf8] sm:$0xff]
        %v3487 = vadd.f32 %v3423, %v3455
        %v3488 = vadd.f32 %v3424, %v3456
        %v3489 = vadd.f32 %v3425, %v3457
        %v3490 = vadd.f32 %v3426, %v3458
        %v3491 = vadd.f32 %v3427, %v3459
        %v3492 = vadd.f32 %v3428, %v3460
        %v3493 = vadd.f32 %v3429, %v3461
        %v3494 = vadd.f32 %v3430, %v3462
        %v3495 = vadd.f32 %v3431, %v3463
        %v3496 = vadd.f32 %v3432, %v3464
        %v3497 = vadd.f32 %v3433, %v3465
        %v3498 = vadd.f32 %v3434, %v3466
        %v3499 = vadd.f32 %v3435, %v3467
        %v3500 = vadd.f32 %v3436, %v3468
        %v3501 = vadd.f32 %v3437, %v3469
        %v3502 = vadd.f32 %v3438, %v3470
        %v3503 = vadd.f32 %v3439, %v3471
        %v3504 = vadd.f32 %v3440, %v3472
        %v3505 = vadd.f32 %v3441, %v3473
        %v3506 = vadd.f32 %v3442, %v3474
        %v3507 = vadd.f32 %v3443, %v3475
        %v3508 = vadd.f32 %v3444, %v3476
        %v3509 = vadd.f32 %v3445, %v3477
        %v3510 = vadd.f32 %v3446, %v3478
        %v3511 = vadd.f32 %v3447, %v3479
        %v3512 = vadd.f32 %v3448, %v3480
        %v3513 = vadd.f32 %v3449, %v3481
        %v3514 = vadd.f32 %v3450, %v3482
        %v3515 = vadd.f32 %v3451, %v3483
        %v3516 = vadd.f32 %v3452, %v3484
        %v3517 = vadd.f32 %v3453, %v3485
        %v3518 = vadd.f32 %v3454, %v3486
        %s3519 = scalar_lea.vmem [#allocation3], 176
        %v3520 = vld [vmem:[%s3519] sm:$0xff]
        %v3521 = vld [vmem:[%s3519 + $0x8] sm:$0xff]
        %v3522 = vld [vmem:[%s3519 + $0x10] sm:$0xff]
        %v3523 = vld [vmem:[%s3519 + $0x18] sm:$0xff]
        %v3524 = vld [vmem:[%s3519 + $0x20] sm:$0xff]
        %v3525 = vld [vmem:[%s3519 + $0x28] sm:$0xff]
        %v3526 = vld [vmem:[%s3519 + $0x30] sm:$0xff]
        %v3527 = vld [vmem:[%s3519 + $0x38] sm:$0xff]
        %v3528 = vld [vmem:[%s3519 + $0x40] sm:$0xff]
        %v3529 = vld [vmem:[%s3519 + $0x48] sm:$0xff]
        %v3530 = vld [vmem:[%s3519 + $0x50] sm:$0xff]
        %v3531 = vld [vmem:[%s3519 + $0x58] sm:$0xff]
        %v3532 = vld [vmem:[%s3519 + $0x60] sm:$0xff]
        %v3533 = vld [vmem:[%s3519 + $0x68] sm:$0xff]
        %v3534 = vld [vmem:[%s3519 + $0x70] sm:$0xff]
        %v3535 = vld [vmem:[%s3519 + $0x78] sm:$0xff]
        %v3536 = vld [vmem:[%s3519 + $0x80] sm:$0xff]
        %v3537 = vld [vmem:[%s3519 + $0x88] sm:$0xff]
        %v3538 = vld [vmem:[%s3519 + $0x90] sm:$0xff]
        %v3539 = vld [vmem:[%s3519 + $0x98] sm:$0xff]
        %v3540 = vld [vmem:[%s3519 + $0xa0] sm:$0xff]
        %v3541 = vld [vmem:[%s3519 + $0xa8] sm:$0xff]
        %v3542 = vld [vmem:[%s3519 + $0xb0] sm:$0xff]
        %v3543 = vld [vmem:[%s3519 + $0xb8] sm:$0xff]
        %v3544 = vld [vmem:[%s3519 + $0xc0] sm:$0xff]
        %v3545 = vld [vmem:[%s3519 + $0xc8] sm:$0xff]
        %v3546 = vld [vmem:[%s3519 + $0xd0] sm:$0xff]
        %v3547 = vld [vmem:[%s3519 + $0xd8] sm:$0xff]
        %v3548 = vld [vmem:[%s3519 + $0xe0] sm:$0xff]
        %v3549 = vld [vmem:[%s3519 + $0xe8] sm:$0xff]
        %v3550 = vld [vmem:[%s3519 + $0xf0] sm:$0xff]
        %v3551 = vld [vmem:[%s3519 + $0xf8] sm:$0xff]
        %v3552 = vadd.f32 %v3487, %v3520
        %v3553 = vadd.f32 %v3488, %v3521
        %v3554 = vadd.f32 %v3489, %v3522
        %v3555 = vadd.f32 %v3490, %v3523
        %v3556 = vadd.f32 %v3491, %v3524
        %v3557 = vadd.f32 %v3492, %v3525
        %v3558 = vadd.f32 %v3493, %v3526
        %v3559 = vadd.f32 %v3494, %v3527
        %v3560 = vadd.f32 %v3495, %v3528
        %v3561 = vadd.f32 %v3496, %v3529
        %v3562 = vadd.f32 %v3497, %v3530
        %v3563 = vadd.f32 %v3498, %v3531
        %v3564 = vadd.f32 %v3499, %v3532
        %v3565 = vadd.f32 %v3500, %v3533
        %v3566 = vadd.f32 %v3501, %v3534
        %v3567 = vadd.f32 %v3502, %v3535
        %v3568 = vadd.f32 %v3503, %v3536
        %v3569 = vadd.f32 %v3504, %v3537
        %v3570 = vadd.f32 %v3505, %v3538
        %v3571 = vadd.f32 %v3506, %v3539
        %v3572 = vadd.f32 %v3507, %v3540
        %v3573 = vadd.f32 %v3508, %v3541
        %v3574 = vadd.f32 %v3509, %v3542
        %v3575 = vadd.f32 %v3510, %v3543
        %v3576 = vadd.f32 %v3511, %v3544
        %v3577 = vadd.f32 %v3512, %v3545
        %v3578 = vadd.f32 %v3513, %v3546
        %v3579 = vadd.f32 %v3514, %v3547
        %v3580 = vadd.f32 %v3515, %v3548
        %v3581 = vadd.f32 %v3516, %v3549
        %v3582 = vadd.f32 %v3517, %v3550
        %v3583 = vadd.f32 %v3518, %v3551
        %s3584 = scalar_lea.vmem [#allocation3], 192
        %v3585 = vld [vmem:[%s3584] sm:$0xff]
        %v3586 = vld [vmem:[%s3584 + $0x8] sm:$0xff]
        %v3587 = vld [vmem:[%s3584 + $0x10] sm:$0xff]
        %v3588 = vld [vmem:[%s3584 + $0x18] sm:$0xff]
        %v3589 = vld [vmem:[%s3584 + $0x20] sm:$0xff]
        %v3590 = vld [vmem:[%s3584 + $0x28] sm:$0xff]
        %v3591 = vld [vmem:[%s3584 + $0x30] sm:$0xff]
        %v3592 = vld [vmem:[%s3584 + $0x38] sm:$0xff]
        %v3593 = vld [vmem:[%s3584 + $0x40] sm:$0xff]
        %v3594 = vld [vmem:[%s3584 + $0x48] sm:$0xff]
        %v3595 = vld [vmem:[%s3584 + $0x50] sm:$0xff]
        %v3596 = vld [vmem:[%s3584 + $0x58] sm:$0xff]
        %v3597 = vld [vmem:[%s3584 + $0x60] sm:$0xff]
        %v3598 = vld [vmem:[%s3584 + $0x68] sm:$0xff]
        %v3599 = vld [vmem:[%s3584 + $0x70] sm:$0xff]
        %v3600 = vld [vmem:[%s3584 + $0x78] sm:$0xff]
        %v3601 = vld [vmem:[%s3584 + $0x80] sm:$0xff]
        %v3602 = vld [vmem:[%s3584 + $0x88] sm:$0xff]
        %v3603 = vld [vmem:[%s3584 + $0x90] sm:$0xff]
        %v3604 = vld [vmem:[%s3584 + $0x98] sm:$0xff]
        %v3605 = vld [vmem:[%s3584 + $0xa0] sm:$0xff]
        %v3606 = vld [vmem:[%s3584 + $0xa8] sm:$0xff]
        %v3607 = vld [vmem:[%s3584 + $0xb0] sm:$0xff]
        %v3608 = vld [vmem:[%s3584 + $0xb8] sm:$0xff]
        %v3609 = vld [vmem:[%s3584 + $0xc0] sm:$0xff]
        %v3610 = vld [vmem:[%s3584 + $0xc8] sm:$0xff]
        %v3611 = vld [vmem:[%s3584 + $0xd0] sm:$0xff]
        %v3612 = vld [vmem:[%s3584 + $0xd8] sm:$0xff]
        %v3613 = vld [vmem:[%s3584 + $0xe0] sm:$0xff]
        %v3614 = vld [vmem:[%s3584 + $0xe8] sm:$0xff]
        %v3615 = vld [vmem:[%s3584 + $0xf0] sm:$0xff]
        %v3616 = vld [vmem:[%s3584 + $0xf8] sm:$0xff]
        %v3617 = vadd.f32 %v3552, %v3585
        %v3618 = vadd.f32 %v3553, %v3586
        %v3619 = vadd.f32 %v3554, %v3587
        %v3620 = vadd.f32 %v3555, %v3588
        %v3621 = vadd.f32 %v3556, %v3589
        %v3622 = vadd.f32 %v3557, %v3590
        %v3623 = vadd.f32 %v3558, %v3591
        %v3624 = vadd.f32 %v3559, %v3592
        %v3625 = vadd.f32 %v3560, %v3593
        %v3626 = vadd.f32 %v3561, %v3594
        %v3627 = vadd.f32 %v3562, %v3595
        %v3628 = vadd.f32 %v3563, %v3596
        %v3629 = vadd.f32 %v3564, %v3597
        %v3630 = vadd.f32 %v3565, %v3598
        %v3631 = vadd.f32 %v3566, %v3599
        %v3632 = vadd.f32 %v3567, %v3600
        %v3633 = vadd.f32 %v3568, %v3601
        %v3634 = vadd.f32 %v3569, %v3602
        %v3635 = vadd.f32 %v3570, %v3603
        %v3636 = vadd.f32 %v3571, %v3604
        %v3637 = vadd.f32 %v3572, %v3605
        %v3638 = vadd.f32 %v3573, %v3606
        %v3639 = vadd.f32 %v3574, %v3607
        %v3640 = vadd.f32 %v3575, %v3608
        %v3641 = vadd.f32 %v3576, %v3609
        %v3642 = vadd.f32 %v3577, %v3610
        %v3643 = vadd.f32 %v3578, %v3611
        %v3644 = vadd.f32 %v3579, %v3612
        %v3645 = vadd.f32 %v3580, %v3613
        %v3646 = vadd.f32 %v3581, %v3614
        %v3647 = vadd.f32 %v3582, %v3615
        %v3648 = vadd.f32 %v3583, %v3616
        %v3649 = vmul.f32 %v3617, 0.012345679
        %v3650 = vmul.f32 %v3618, 0.012345679
        %v3651 = vmul.f32 %v3619, 0.012345679
        %v3652 = vmul.f32 %v3620, 0.012345679
        %v3653 = vmul.f32 %v3621, 0.012345679
        %v3654 = vmul.f32 %v3622, 0.012345679
        %v3655 = vmul.f32 %v3623, 0.012345679
        %v3656 = vmul.f32 %v3624, 0.012345679
        %v3657 = vmul.f32 %v3625, 0.012345679
        %v3658 = vmul.f32 %v3626, 0.012345679
        %v3659 = vmul.f32 %v3627, 0.012345679
        %v3660 = vmul.f32 %v3628, 0.012345679
        %v3661 = vmul.f32 %v3629, 0.012345679
        %v3662 = vmul.f32 %v3630, 0.012345679
        %v3663 = vmul.f32 %v3631, 0.012345679
        %v3664 = vmul.f32 %v3632, 0.012345679
        %v3665 = vmul.f32 %v3633, 0.012345679
        %v3666 = vmul.f32 %v3634, 0.012345679
        %v3667 = vmul.f32 %v3635, 0.012345679
        %v3668 = vmul.f32 %v3636, 0.012345679
        %v3669 = vmul.f32 %v3637, 0.012345679
        %v3670 = vmul.f32 %v3638, 0.012345679
        %v3671 = vmul.f32 %v3639, 0.012345679
        %v3672 = vmul.f32 %v3640, 0.012345679
        %v3673 = vmul.f32 %v3641, 0.012345679
        %v3674 = vmul.f32 %v3642, 0.012345679
        %v3675 = vmul.f32 %v3643, 0.012345679
        %v3676 = vmul.f32 %v3644, 0.012345679
        %v3677 = vmul.f32 %v3645, 0.012345679
        %v3678 = vmul.f32 %v3646, 0.012345679
        %v3679 = vmul.f32 %v3647, 0.012345679
        %v3680 = vmul.f32 %v3648, 0.012345679
        %s3681 = scalar_lea.vmem [#allocation5], 1
        %v3682 = vld [vmem:[%s3681] sm:$0x1]
        %v3684 = vlaneseq
        %v3685 = vshrl.u32 %v3684, 7
        %v3686 = vsub.s32 0, %v3685
        %v3687 = vrot.slane %v3682, %v3686
        %v3689 = vadd.f32 %v3649, %v3687
        %v3690 = vadd.f32 %v3650, %v3687
        %v3691 = vadd.f32 %v3651, %v3687
        %v3692 = vadd.f32 %v3652, %v3687
        %v3693 = vadd.f32 %v3653, %v3687
        %v3694 = vadd.f32 %v3654, %v3687
        %v3695 = vadd.f32 %v3655, %v3687
        %v3696 = vadd.f32 %v3656, %v3687
        %v3697 = vadd.f32 %v3657, %v3687
        %v3698 = vadd.f32 %v3658, %v3687
        %v3699 = vadd.f32 %v3659, %v3687
        %v3700 = vadd.f32 %v3660, %v3687
        %v3701 = vadd.f32 %v3661, %v3687
        %v3702 = vadd.f32 %v3662, %v3687
        %v3703 = vadd.f32 %v3663, %v3687
        %v3704 = vadd.f32 %v3664, %v3687
        %v3705 = vadd.f32 %v3665, %v3687
        %v3706 = vadd.f32 %v3666, %v3687
        %v3707 = vadd.f32 %v3667, %v3687
        %v3708 = vadd.f32 %v3668, %v3687
        %v3709 = vadd.f32 %v3669, %v3687
        %v3710 = vadd.f32 %v3670, %v3687
        %v3711 = vadd.f32 %v3671, %v3687
        %v3712 = vadd.f32 %v3672, %v3687
        %v3713 = vadd.f32 %v3673, %v3687
        %v3714 = vadd.f32 %v3674, %v3687
        %v3715 = vadd.f32 %v3675, %v3687
        %v3716 = vadd.f32 %v3676, %v3687
        %v3717 = vadd.f32 %v3677, %v3687
        %v3718 = vadd.f32 %v3678, %v3687
        %v3719 = vadd.f32 %v3679, %v3687
        %v3720 = vadd.f32 %v3680, %v3687
        %v3721 = vmax.f32 %v3689, 0.0
        %v3722 = vmax.f32 %v3690, 0.0
        %v3723 = vmax.f32 %v3691, 0.0
        %v3724 = vmax.f32 %v3692, 0.0
        %v3725 = vmax.f32 %v3693, 0.0
        %v3726 = vmax.f32 %v3694, 0.0
        %v3727 = vmax.f32 %v3695, 0.0
        %v3728 = vmax.f32 %v3696, 0.0
        %v3729 = vmax.f32 %v3697, 0.0
        %v3730 = vmax.f32 %v3698, 0.0
        %v3731 = vmax.f32 %v3699, 0.0
        %v3732 = vmax.f32 %v3700, 0.0
        %v3733 = vmax.f32 %v3701, 0.0
        %v3734 = vmax.f32 %v3702, 0.0
        %v3735 = vmax.f32 %v3703, 0.0
        %v3736 = vmax.f32 %v3704, 0.0
        %v3737 = vmax.f32 %v3705, 0.0
        %v3738 = vmax.f32 %v3706, 0.0
        %v3739 = vmax.f32 %v3707, 0.0
        %v3740 = vmax.f32 %v3708, 0.0
        %v3741 = vmax.f32 %v3709, 0.0
        %v3742 = vmax.f32 %v3710, 0.0
        %v3743 = vmax.f32 %v3711, 0.0
        %v3744 = vmax.f32 %v3712, 0.0
        %v3745 = vmax.f32 %v3713, 0.0
        %v3746 = vmax.f32 %v3714, 0.0
        %v3747 = vmax.f32 %v3715, 0.0
        %v3748 = vmax.f32 %v3716, 0.0
        %v3749 = vmax.f32 %v3717, 0.0
        %v3750 = vmax.f32 %v3718, 0.0
        %v3751 = vmax.f32 %v3719, 0.0
        %v3752 = vmax.f32 %v3720, 0.0
        %v3753 = vld [vmem:[#allocation4] sm:$0xff]
        %v3754 = vld [vmem:[#allocation4 + $0x8] sm:$0xff]
        %v3755 = vld [vmem:[#allocation4 + $0x10] sm:$0xff]
        %v3756 = vld [vmem:[#allocation4 + $0x18] sm:$0xff]
        %v3757 = vld [vmem:[#allocation4 + $0x20] sm:$0xff]
        %v3758 = vld [vmem:[#allocation4 + $0x28] sm:$0xff]
        %v3759 = vld [vmem:[#allocation4 + $0x30] sm:$0xff]
        %v3760 = vld [vmem:[#allocation4 + $0x38] sm:$0xff]
        %v3761 = vld [vmem:[#allocation4 + $0x40] sm:$0xff]
        %v3762 = vld [vmem:[#allocation4 + $0x48] sm:$0xff]
        %v3763 = vld [vmem:[#allocation4 + $0x50] sm:$0xff]
        %v3764 = vld [vmem:[#allocation4 + $0x58] sm:$0xff]
        %v3765 = vld [vmem:[#allocation4 + $0x60] sm:$0xff]
        %v3766 = vld [vmem:[#allocation4 + $0x68] sm:$0xff]
        %v3767 = vld [vmem:[#allocation4 + $0x70] sm:$0xff]
        %v3768 = vld [vmem:[#allocation4 + $0x78] sm:$0xff]
        %v3769 = vld [vmem:[#allocation4 + $0x80] sm:$0xff]
        %v3770 = vld [vmem:[#allocation4 + $0x88] sm:$0xff]
        %v3771 = vld [vmem:[#allocation4 + $0x90] sm:$0xff]
        %v3772 = vld [vmem:[#allocation4 + $0x98] sm:$0xff]
        %v3773 = vld [vmem:[#allocation4 + $0xa0] sm:$0xff]
        %v3774 = vld [vmem:[#allocation4 + $0xa8] sm:$0xff]
        %v3775 = vld [vmem:[#allocation4 + $0xb0] sm:$0xff]
        %v3776 = vld [vmem:[#allocation4 + $0xb8] sm:$0xff]
        %v3777 = vld [vmem:[#allocation4 + $0xc0] sm:$0xff]
        %v3778 = vld [vmem:[#allocation4 + $0xc8] sm:$0xff]
        %v3779 = vld [vmem:[#allocation4 + $0xd0] sm:$0xff]
        %v3780 = vld [vmem:[#allocation4 + $0xd8] sm:$0xff]
        %v3781 = vld [vmem:[#allocation4 + $0xe0] sm:$0xff]
        %v3782 = vld [vmem:[#allocation4 + $0xe8] sm:$0xff]
        %v3783 = vld [vmem:[#allocation4 + $0xf0] sm:$0xff]
        %v3784 = vld [vmem:[#allocation4 + $0xf8] sm:$0xff]
        %v3785 = vpack.c.bf16 %v3722, %v3721
        %v3786 = vpack.c.bf16 %v3724, %v3723
        %v3787 = vpack.c.bf16 %v3726, %v3725
        %v3788 = vpack.c.bf16 %v3728, %v3727
        %v3789 = vpack.c.bf16 %v3730, %v3729
        %v3790 = vpack.c.bf16 %v3732, %v3731
        %v3791 = vpack.c.bf16 %v3734, %v3733
        %v3792 = vpack.c.bf16 %v3736, %v3735
        %v3793 = vpack.c.bf16 %v3738, %v3737
        %v3794 = vpack.c.bf16 %v3740, %v3739
        %v3795 = vpack.c.bf16 %v3742, %v3741
        %v3796 = vpack.c.bf16 %v3744, %v3743
        %v3797 = vpack.c.bf16 %v3746, %v3745
        %v3798 = vpack.c.bf16 %v3748, %v3747
        %v3799 = vpack.c.bf16 %v3750, %v3749
        %v3800 = vpack.c.bf16 %v3752, %v3751
        %s3801 = scalar_lea.vmem %s3, 16
        %v3802 = vld [vmem:[%s3801] sm:$0xf]
        %v3803 = vld [vmem:[%s3801 + $0x4] sm:$0xf]
        %v3804 = vld [vmem:[%s3801 + $0x8] sm:$0xf]
        %v3805 = vld [vmem:[%s3801 + $0xc] sm:$0xf]
        %v3810 = vunpack.c.l.b16 %v3802
        %v3811 = vunpack.c.l.b16 %v3803
        %v3812 = vunpack.c.l.b16 %v3804
        %v3813 = vunpack.c.l.b16 %v3805
        %v3814 = vpack.c.b16 %v3811, %v3810
        %v3815 = vpack.c.b16 %v3813, %v3812
        %v3819 = vsel %vm239, %v3785, 0
        %v3822 = vsel %vm239, %v3786, 0
        %v3825 = vsel %vm239, %v3787, 0
        %v3828 = vsel %vm239, %v3788, 0
        %v3831 = vsel %vm239, %v3789, 0
        %v3834 = vsel %vm239, %v3790, 0
        %v3837 = vsel %vm239, %v3791, 0
        %v3840 = vsel %vm239, %v3792, 0
        %v3843 = vsel %vm239, %v3793, 0
        %v3846 = vsel %vm239, %v3794, 0
        %v3849 = vsel %vm239, %v3795, 0
        %v3852 = vsel %vm239, %v3796, 0
        %v3855 = vsel %vm239, %v3797, 0
        %v3858 = vsel %vm239, %v3798, 0
        %v3861 = vsel %vm239, %v3799, 0
        %v3864 = vsel %vm239, %v3800, 0
        %3866 = vmatprep.subr.bf16.mxu0 0
        %3867 = vmatpush1.bf16.msra.mxu0 0
        %3868 = vmatprep.subr.bf16.mxu0 0
        %3869 = vmatpush1.bf16.msra.mxu0 0
        %3870 = vmatprep.subr.bf16.mxu0 0
        %3871 = vmatpush1.bf16.msra.mxu0 0
        %3872 = vmatprep.subr.bf16.mxu0 0
        %3873 = vmatpush1.bf16.msra.mxu0 0
        %3874 = vmatprep.subr.bf16.mxu0 0
        %3875 = vmatpush1.bf16.msra.mxu0 0
        %3876 = vmatprep.subr.bf16.mxu0 0
        %3877 = vmatpush1.bf16.msra.mxu0 0
        %3878 = vmatprep.subr.bf16.mxu0 0
        %3879 = vmatpush1.bf16.msra.mxu0 %v3815
        %3880 = vmatprep.subr.bf16.mxu0 0
        %3881 = vmatpush1.bf16.msra.mxu0 %v3814
        %3882 = vmatprep.subr.bf16.mxu0 0
        %3883 = vmatpush2.bf16.msra.mxu0 0
        %3884 = vmatprep.subr.bf16.mxu0 0
        %3885 = vmatpush2.bf16.msra.mxu0 0
        %3886 = vmatprep.subr.bf16.mxu0 0
        %3887 = vmatpush2.bf16.msra.mxu0 0
        %3888 = vmatprep.subr.bf16.mxu0 0
        %3889 = vmatpush2.bf16.msra.mxu0 0
        %3890 = vmatprep.subr.bf16.mxu0 0
        %3891 = vmatpush2.bf16.msra.mxu0 0
        %3892 = vmatprep.subr.bf16.mxu0 0
        %3893 = vmatpush2.bf16.msra.mxu0 0
        %3894 = vmatprep.subr.bf16.mxu0 0
        %3895 = vmatpush2.bf16.msra.mxu0 0
        %3896 = vmatprep.subr.bf16.mxu0 0
        %3897 = vmatpush2.bf16.msra.mxu0 0
        %3898 = vmatprep.mubr.bf16.mxu0 0
        %3899 = vmatmul.mubr.bf16.gmra.mxu0 %v3819
        %v3900 = vpop.f32.mrf.mxu0
        %v3901 = vadd.f32 0.0, %v3900
        %v3902 = vpop.f32.mrf.mxu0
        %v3903 = vpop.f32.mrf.mxu0
        %v3904 = vadd.f32 0.0, %v3903
        %v3905 = vpop.f32.mrf.mxu0
        %3906 = vmatprep.mubr.bf16.mxu0 0
        %3907 = vmatmul.mubr.bf16.gmra.mxu0 %v3822
        %v3908 = vpop.f32.mrf.mxu0
        %v3909 = vadd.f32 0.0, %v3908
        %v3910 = vpop.f32.mrf.mxu0
        %v3911 = vpop.f32.mrf.mxu0
        %v3912 = vadd.f32 0.0, %v3911
        %v3913 = vpop.f32.mrf.mxu0
        %3914 = vmatprep.mubr.bf16.mxu0 0
        %3915 = vmatmul.mubr.bf16.gmra.mxu0 %v3825
        %v3916 = vpop.f32.mrf.mxu0
        %v3917 = vadd.f32 0.0, %v3916
        %v3918 = vpop.f32.mrf.mxu0
        %v3919 = vpop.f32.mrf.mxu0
        %v3920 = vadd.f32 0.0, %v3919
        %v3921 = vpop.f32.mrf.mxu0
        %3922 = vmatprep.mubr.bf16.mxu0 0
        %3923 = vmatmul.mubr.bf16.gmra.mxu0 %v3828
        %v3924 = vpop.f32.mrf.mxu0
        %v3925 = vadd.f32 0.0, %v3924
        %v3926 = vpop.f32.mrf.mxu0
        %v3927 = vpop.f32.mrf.mxu0
        %v3928 = vadd.f32 0.0, %v3927
        %v3929 = vpop.f32.mrf.mxu0
        %3930 = vmatprep.mubr.bf16.mxu0 0
        %3931 = vmatmul.mubr.bf16.gmra.mxu0 %v3831
        %v3932 = vpop.f32.mrf.mxu0
        %v3933 = vadd.f32 0.0, %v3932
        %v3934 = vpop.f32.mrf.mxu0
        %v3935 = vpop.f32.mrf.mxu0
        %v3936 = vadd.f32 0.0, %v3935
        %v3937 = vpop.f32.mrf.mxu0
        %3938 = vmatprep.mubr.bf16.mxu0 0
        %3939 = vmatmul.mubr.bf16.gmra.mxu0 %v3834
        %v3940 = vpop.f32.mrf.mxu0
        %v3941 = vadd.f32 0.0, %v3940
        %v3942 = vpop.f32.mrf.mxu0
        %v3943 = vpop.f32.mrf.mxu0
        %v3944 = vadd.f32 0.0, %v3943
        %v3945 = vpop.f32.mrf.mxu0
        %3946 = vmatprep.mubr.bf16.mxu0 0
        %3947 = vmatmul.mubr.bf16.gmra.mxu0 %v3837
        %v3948 = vpop.f32.mrf.mxu0
        %v3949 = vadd.f32 0.0, %v3948
        %v3950 = vpop.f32.mrf.mxu0
        %v3951 = vpop.f32.mrf.mxu0
        %v3952 = vadd.f32 0.0, %v3951
        %v3953 = vpop.f32.mrf.mxu0
        %3954 = vmatprep.mubr.bf16.mxu0 0
        %3955 = vmatmul.mubr.bf16.gmra.mxu0 %v3840
        %v3956 = vpop.f32.mrf.mxu0
        %v3957 = vadd.f32 0.0, %v3956
        %v3958 = vpop.f32.mrf.mxu0
        %v3959 = vpop.f32.mrf.mxu0
        %v3960 = vadd.f32 0.0, %v3959
        %v3961 = vpop.f32.mrf.mxu0
        %3962 = vmatprep.mubr.bf16.mxu0 0
        %3963 = vmatmul.mubr.bf16.gmra.mxu0 %v3843
        %v3964 = vpop.f32.mrf.mxu0
        %v3965 = vadd.f32 0.0, %v3964
        %v3966 = vpop.f32.mrf.mxu0
        %v3967 = vpop.f32.mrf.mxu0
        %v3968 = vadd.f32 0.0, %v3967
        %v3969 = vpop.f32.mrf.mxu0
        %3970 = vmatprep.mubr.bf16.mxu0 0
        %3971 = vmatmul.mubr.bf16.gmra.mxu0 %v3846
        %v3972 = vpop.f32.mrf.mxu0
        %v3973 = vadd.f32 0.0, %v3972
        %v3974 = vpop.f32.mrf.mxu0
        %v3975 = vpop.f32.mrf.mxu0
        %v3976 = vadd.f32 0.0, %v3975
        %v3977 = vpop.f32.mrf.mxu0
        %3978 = vmatprep.mubr.bf16.mxu0 0
        %3979 = vmatmul.mubr.bf16.gmra.mxu0 %v3849
        %v3980 = vpop.f32.mrf.mxu0
        %v3981 = vadd.f32 0.0, %v3980
        %v3982 = vpop.f32.mrf.mxu0
        %v3983 = vpop.f32.mrf.mxu0
        %v3984 = vadd.f32 0.0, %v3983
        %v3985 = vpop.f32.mrf.mxu0
        %3986 = vmatprep.mubr.bf16.mxu0 0
        %3987 = vmatmul.mubr.bf16.gmra.mxu0 %v3852
        %v3988 = vpop.f32.mrf.mxu0
        %v3989 = vadd.f32 0.0, %v3988
        %v3990 = vpop.f32.mrf.mxu0
        %v3991 = vpop.f32.mrf.mxu0
        %v3992 = vadd.f32 0.0, %v3991
        %v3993 = vpop.f32.mrf.mxu0
        %3994 = vmatprep.mubr.bf16.mxu0 0
        %3995 = vmatmul.mubr.bf16.gmra.mxu0 %v3855
        %v3996 = vpop.f32.mrf.mxu0
        %v3997 = vadd.f32 0.0, %v3996
        %v3998 = vpop.f32.mrf.mxu0
        %v3999 = vpop.f32.mrf.mxu0
        %v4000 = vadd.f32 0.0, %v3999
        %v4001 = vpop.f32.mrf.mxu0
        %4002 = vmatprep.mubr.bf16.mxu0 0
        %4003 = vmatmul.mubr.bf16.gmra.mxu0 %v3858
        %v4004 = vpop.f32.mrf.mxu0
        %v4005 = vadd.f32 0.0, %v4004
        %v4006 = vpop.f32.mrf.mxu0
        %v4007 = vpop.f32.mrf.mxu0
        %v4008 = vadd.f32 0.0, %v4007
        %v4009 = vpop.f32.mrf.mxu0
        %4010 = vmatprep.mubr.bf16.mxu0 0
        %4011 = vmatmul.mubr.bf16.gmra.mxu0 %v3861
        %v4012 = vpop.f32.mrf.mxu0
        %v4013 = vadd.f32 0.0, %v4012
        %v4014 = vpop.f32.mrf.mxu0
        %v4015 = vpop.f32.mrf.mxu0
        %v4016 = vadd.f32 0.0, %v4015
        %v4017 = vpop.f32.mrf.mxu0
        %4018 = vmatprep.mubr.bf16.mxu0 0
        %4019 = vmatmul.mubr.bf16.gmra.mxu0 %v3864
        %v4020 = vpop.f32.mrf.mxu0
        %v4021 = vadd.f32 0.0, %v4020
        %v4022 = vpop.f32.mrf.mxu0
        %v4023 = vpop.f32.mrf.mxu0
        %v4024 = vadd.f32 0.0, %v4023
        %v4025 = vpop.f32.mrf.mxu0
        %4026 = vdwg.mxu0
        %v4027 = vadd.f32 %v3753, %v3901
        %v4028 = vadd.f32 %v3754, %v3904
        %v4029 = vadd.f32 %v3755, %v3909
        %v4030 = vadd.f32 %v3756, %v3912
        %v4031 = vadd.f32 %v3757, %v3917
        %v4032 = vadd.f32 %v3758, %v3920
        %v4033 = vadd.f32 %v3759, %v3925
        %v4034 = vadd.f32 %v3760, %v3928
        %v4035 = vadd.f32 %v3761, %v3933
        %v4036 = vadd.f32 %v3762, %v3936
        %v4037 = vadd.f32 %v3763, %v3941
        %v4038 = vadd.f32 %v3764, %v3944
        %v4039 = vadd.f32 %v3765, %v3949
        %v4040 = vadd.f32 %v3766, %v3952
        %v4041 = vadd.f32 %v3767, %v3957
        %v4042 = vadd.f32 %v3768, %v3960
        %v4043 = vadd.f32 %v3769, %v3965
        %v4044 = vadd.f32 %v3770, %v3968
        %v4045 = vadd.f32 %v3771, %v3973
        %v4046 = vadd.f32 %v3772, %v3976
        %v4047 = vadd.f32 %v3773, %v3981
        %v4048 = vadd.f32 %v3774, %v3984
        %v4049 = vadd.f32 %v3775, %v3989
        %v4050 = vadd.f32 %v3776, %v3992
        %v4051 = vadd.f32 %v3777, %v3997
        %v4052 = vadd.f32 %v3778, %v4000
        %v4053 = vadd.f32 %v3779, %v4005
        %v4054 = vadd.f32 %v3780, %v4008
        %v4055 = vadd.f32 %v3781, %v4013
        %v4056 = vadd.f32 %v3782, %v4016
        %v4057 = vadd.f32 %v3783, %v4021
        %v4058 = vadd.f32 %v3784, %v4024
        %4059 = vst [vmem:[#allocation4] sm:$0xff] %v4027
        %4060 = vst [vmem:[#allocation4 + $0x8] sm:$0xff] %v4028
        %4061 = vst [vmem:[#allocation4 + $0x10] sm:$0xff] %v4029
        %4062 = vst [vmem:[#allocation4 + $0x18] sm:$0xff] %v4030
        %4063 = vst [vmem:[#allocation4 + $0x20] sm:$0xff] %v4031
        %4064 = vst [vmem:[#allocation4 + $0x28] sm:$0xff] %v4032
        %4065 = vst [vmem:[#allocation4 + $0x30] sm:$0xff] %v4033
        %4066 = vst [vmem:[#allocation4 + $0x38] sm:$0xff] %v4034
        %4067 = vst [vmem:[#allocation4 + $0x40] sm:$0xff] %v4035
        %4068 = vst [vmem:[#allocation4 + $0x48] sm:$0xff] %v4036
        %4069 = vst [vmem:[#allocation4 + $0x50] sm:$0xff] %v4037
        %4070 = vst [vmem:[#allocation4 + $0x58] sm:$0xff] %v4038
        %4071 = vst [vmem:[#allocation4 + $0x60] sm:$0xff] %v4039
        %4072 = vst [vmem:[#allocation4 + $0x68] sm:$0xff] %v4040
        %4073 = vst [vmem:[#allocation4 + $0x70] sm:$0xff] %v4041
        %4074 = vst [vmem:[#allocation4 + $0x78] sm:$0xff] %v4042
        %4075 = vst [vmem:[#allocation4 + $0x80] sm:$0xff] %v4043
        %4076 = vst [vmem:[#allocation4 + $0x88] sm:$0xff] %v4044
        %4077 = vst [vmem:[#allocation4 + $0x90] sm:$0xff] %v4045
        %4078 = vst [vmem:[#allocation4 + $0x98] sm:$0xff] %v4046
        %4079 = vst [vmem:[#allocation4 + $0xa0] sm:$0xff] %v4047
        %4080 = vst [vmem:[#allocation4 + $0xa8] sm:$0xff] %v4048
        %4081 = vst [vmem:[#allocation4 + $0xb0] sm:$0xff] %v4049
        %4082 = vst [vmem:[#allocation4 + $0xb8] sm:$0xff] %v4050
        %4083 = vst [vmem:[#allocation4 + $0xc0] sm:$0xff] %v4051
        %4084 = vst [vmem:[#allocation4 + $0xc8] sm:$0xff] %v4052
        %4085 = vst [vmem:[#allocation4 + $0xd0] sm:$0xff] %v4053
        %4086 = vst [vmem:[#allocation4 + $0xd8] sm:$0xff] %v4054
        %4087 = vst [vmem:[#allocation4 + $0xe0] sm:$0xff] %v4055
        %4088 = vst [vmem:[#allocation4 + $0xe8] sm:$0xff] %v4056
        %4089 = vst [vmem:[#allocation4 + $0xf0] sm:$0xff] %v4057
        %4090 = vst [vmem:[#allocation4 + $0xf8] sm:$0xff] %v4058
        %s4091 = scalar_lea.vmem %s1, 128
        %v4092 = vld [vmem:[%s4091] sm:$0xf]
        %v4093 = vld [vmem:[%s4091 + $0x4] sm:$0xf]
        %v4094 = vld [vmem:[%s4091 + $0x8] sm:$0xf]
        %v4095 = vld [vmem:[%s4091 + $0xc] sm:$0xf]
        %v4096 = vld [vmem:[%s4091 + $0x10] sm:$0xf]
        %v4097 = vld [vmem:[%s4091 + $0x14] sm:$0xf]
        %v4098 = vld [vmem:[%s4091 + $0x18] sm:$0xf]
        %v4099 = vld [vmem:[%s4091 + $0x1c] sm:$0xf]
        %v4100 = vld [vmem:[%s4091 + $0x20] sm:$0xf]
        %v4101 = vld [vmem:[%s4091 + $0x24] sm:$0xf]
        %v4102 = vld [vmem:[%s4091 + $0x28] sm:$0xf]
        %v4103 = vld [vmem:[%s4091 + $0x2c] sm:$0xf]
        %v4104 = vld [vmem:[%s4091 + $0x30] sm:$0xf]
        %v4105 = vld [vmem:[%s4091 + $0x34] sm:$0xf]
        %v4106 = vld [vmem:[%s4091 + $0x38] sm:$0xf]
        %v4107 = vld [vmem:[%s4091 + $0x3c] sm:$0xf]
        %v4124 = vunpack.c.l.b16 %v4092
        %v4125 = vunpack.c.l.b16 %v4093
        %v4126 = vunpack.c.l.b16 %v4094
        %v4127 = vunpack.c.l.b16 %v4095
        %v4128 = vunpack.c.l.b16 %v4096
        %v4129 = vunpack.c.l.b16 %v4097
        %v4130 = vunpack.c.l.b16 %v4098
        %v4131 = vunpack.c.l.b16 %v4099
        %v4132 = vunpack.c.l.b16 %v4100
        %v4133 = vunpack.c.l.b16 %v4101
        %v4134 = vunpack.c.l.b16 %v4102
        %v4135 = vunpack.c.l.b16 %v4103
        %v4136 = vunpack.c.l.b16 %v4104
        %v4137 = vunpack.c.l.b16 %v4105
        %v4138 = vunpack.c.l.b16 %v4106
        %v4139 = vunpack.c.l.b16 %v4107
        %v4140 = vpack.c.b16 %v4125, %v4124
        %v4141 = vpack.c.b16 %v4127, %v4126
        %v4142 = vpack.c.b16 %v4129, %v4128
        %v4143 = vpack.c.b16 %v4131, %v4130
        %v4144 = vpack.c.b16 %v4133, %v4132
        %v4145 = vpack.c.b16 %v4135, %v4134
        %v4146 = vpack.c.b16 %v4137, %v4136
        %v4147 = vpack.c.b16 %v4139, %v4138
        %4156 = vmatprep.subr.bf16.mxu0 0
        %4157 = vmatpush1.bf16.msra.mxu0 %v4147
        %4158 = vmatprep.subr.bf16.mxu0 0
        %4159 = vmatpush1.bf16.msra.mxu0 %v4146
        %4160 = vmatprep.subr.bf16.mxu0 0
        %4161 = vmatpush1.bf16.msra.mxu0 %v4145
        %4162 = vmatprep.subr.bf16.mxu0 0
        %4163 = vmatpush1.bf16.msra.mxu0 %v4144
        %4164 = vmatprep.subr.bf16.mxu0 0
        %4165 = vmatpush1.bf16.msra.mxu0 %v4143
        %4166 = vmatprep.subr.bf16.mxu0 0
        %4167 = vmatpush1.bf16.msra.mxu0 %v4142
        %4168 = vmatprep.subr.bf16.mxu0 0
        %4169 = vmatpush1.bf16.msra.mxu0 %v4141
        %4170 = vmatprep.subr.bf16.mxu0 0
        %4171 = vmatpush1.bf16.msra.mxu0 %v4140
        %4172 = vmatprep.subr.bf16.mxu0 0
        %4173 = vmatpush2.bf16.msra.mxu0 0
        %4174 = vmatprep.subr.bf16.mxu0 0
        %4175 = vmatpush2.bf16.msra.mxu0 0
        %4176 = vmatprep.subr.bf16.mxu0 0
        %4177 = vmatpush2.bf16.msra.mxu0 0
        %4178 = vmatprep.subr.bf16.mxu0 0
        %4179 = vmatpush2.bf16.msra.mxu0 0
        %4180 = vmatprep.subr.bf16.mxu0 0
        %4181 = vmatpush2.bf16.msra.mxu0 0
        %4182 = vmatprep.subr.bf16.mxu0 0
        %4183 = vmatpush2.bf16.msra.mxu0 0
        %4184 = vmatprep.subr.bf16.mxu0 0
        %4185 = vmatpush2.bf16.msra.mxu0 0
        %4186 = vmatprep.subr.bf16.mxu0 0
        %4187 = vmatpush2.bf16.msra.mxu0 0
        %4188 = vmatprep.mubr.bf16.mxu0 0
        %4189 = vmatmul.mubr.bf16.gmra.mxu0 %v426
        %v4190 = vpop.f32.mrf.mxu0
        %v4191 = vadd.f32 0.0, %v4190
        %v4192 = vpop.f32.mrf.mxu0
        %v4193 = vpop.f32.mrf.mxu0
        %v4194 = vadd.f32 0.0, %v4193
        %v4195 = vpop.f32.mrf.mxu0
        %4196 = vmatprep.mubr.bf16.mxu0 0
        %4197 = vmatmul.mubr.bf16.gmra.mxu0 %v427
        %v4198 = vpop.f32.mrf.mxu0
        %v4199 = vadd.f32 0.0, %v4198
        %v4200 = vpop.f32.mrf.mxu0
        %v4201 = vpop.f32.mrf.mxu0
        %v4202 = vadd.f32 0.0, %v4201
        %v4203 = vpop.f32.mrf.mxu0
        %4204 = vmatprep.mubr.bf16.mxu0 0
        %4205 = vmatmul.mubr.bf16.gmra.mxu0 %v428
        %v4206 = vpop.f32.mrf.mxu0
        %v4207 = vadd.f32 0.0, %v4206
        %v4208 = vpop.f32.mrf.mxu0
        %v4209 = vpop.f32.mrf.mxu0
        %v4210 = vadd.f32 0.0, %v4209
        %v4211 = vpop.f32.mrf.mxu0
        %4212 = vmatprep.mubr.bf16.mxu0 0
        %4213 = vmatmul.mubr.bf16.gmra.mxu0 %v429
        %v4214 = vpop.f32.mrf.mxu0
        %v4215 = vadd.f32 0.0, %v4214
        %v4216 = vpop.f32.mrf.mxu0
        %v4217 = vpop.f32.mrf.mxu0
        %v4218 = vadd.f32 0.0, %v4217
        %v4219 = vpop.f32.mrf.mxu0
        %4220 = vmatprep.mubr.bf16.mxu0 0
        %4221 = vmatmul.mubr.bf16.gmra.mxu0 %v430
        %v4222 = vpop.f32.mrf.mxu0
        %v4223 = vadd.f32 0.0, %v4222
        %v4224 = vpop.f32.mrf.mxu0
        %v4225 = vpop.f32.mrf.mxu0
        %v4226 = vadd.f32 0.0, %v4225
        %v4227 = vpop.f32.mrf.mxu0
        %4228 = vmatprep.mubr.bf16.mxu0 0
        %4229 = vmatmul.mubr.bf16.gmra.mxu0 %v431
        %v4230 = vpop.f32.mrf.mxu0
        %v4231 = vadd.f32 0.0, %v4230
        %v4232 = vpop.f32.mrf.mxu0
        %v4233 = vpop.f32.mrf.mxu0
        %v4234 = vadd.f32 0.0, %v4233
        %v4235 = vpop.f32.mrf.mxu0
        %4236 = vmatprep.mubr.bf16.mxu0 0
        %4237 = vmatmul.mubr.bf16.gmra.mxu0 %v432
        %v4238 = vpop.f32.mrf.mxu0
        %v4239 = vadd.f32 0.0, %v4238
        %v4240 = vpop.f32.mrf.mxu0
        %v4241 = vpop.f32.mrf.mxu0
        %v4242 = vadd.f32 0.0, %v4241
        %v4243 = vpop.f32.mrf.mxu0
        %4244 = vmatprep.mubr.bf16.mxu0 0
        %4245 = vmatmul.mubr.bf16.gmra.mxu0 %v433
        %v4246 = vpop.f32.mrf.mxu0
        %v4247 = vadd.f32 0.0, %v4246
        %v4248 = vpop.f32.mrf.mxu0
        %v4249 = vpop.f32.mrf.mxu0
        %v4250 = vadd.f32 0.0, %v4249
        %v4251 = vpop.f32.mrf.mxu0
        %4252 = vmatprep.mubr.bf16.mxu0 0
        %4253 = vmatmul.mubr.bf16.gmra.mxu0 %v434
        %v4254 = vpop.f32.mrf.mxu0
        %v4255 = vadd.f32 0.0, %v4254
        %v4256 = vpop.f32.mrf.mxu0
        %v4257 = vpop.f32.mrf.mxu0
        %v4258 = vadd.f32 0.0, %v4257
        %v4259 = vpop.f32.mrf.mxu0
        %4260 = vmatprep.mubr.bf16.mxu0 0
        %4261 = vmatmul.mubr.bf16.gmra.mxu0 %v435
        %v4262 = vpop.f32.mrf.mxu0
        %v4263 = vadd.f32 0.0, %v4262
        %v4264 = vpop.f32.mrf.mxu0
        %v4265 = vpop.f32.mrf.mxu0
        %v4266 = vadd.f32 0.0, %v4265
        %v4267 = vpop.f32.mrf.mxu0
        %4268 = vmatprep.mubr.bf16.mxu0 0
        %4269 = vmatmul.mubr.bf16.gmra.mxu0 %v436
        %v4270 = vpop.f32.mrf.mxu0
        %v4271 = vadd.f32 0.0, %v4270
        %v4272 = vpop.f32.mrf.mxu0
        %v4273 = vpop.f32.mrf.mxu0
        %v4274 = vadd.f32 0.0, %v4273
        %v4275 = vpop.f32.mrf.mxu0
        %4276 = vmatprep.mubr.bf16.mxu0 0
        %4277 = vmatmul.mubr.bf16.gmra.mxu0 %v437
        %v4278 = vpop.f32.mrf.mxu0
        %v4279 = vadd.f32 0.0, %v4278
        %v4280 = vpop.f32.mrf.mxu0
        %v4281 = vpop.f32.mrf.mxu0
        %v4282 = vadd.f32 0.0, %v4281
        %v4283 = vpop.f32.mrf.mxu0
        %4284 = vmatprep.mubr.bf16.mxu0 0
        %4285 = vmatmul.mubr.bf16.gmra.mxu0 %v438
        %v4286 = vpop.f32.mrf.mxu0
        %v4287 = vadd.f32 0.0, %v4286
        %v4288 = vpop.f32.mrf.mxu0
        %v4289 = vpop.f32.mrf.mxu0
        %v4290 = vadd.f32 0.0, %v4289
        %v4291 = vpop.f32.mrf.mxu0
        %4292 = vmatprep.mubr.bf16.mxu0 0
        %4293 = vmatmul.mubr.bf16.gmra.mxu0 %v439
        %v4294 = vpop.f32.mrf.mxu0
        %v4295 = vadd.f32 0.0, %v4294
        %v4296 = vpop.f32.mrf.mxu0
        %v4297 = vpop.f32.mrf.mxu0
        %v4298 = vadd.f32 0.0, %v4297
        %v4299 = vpop.f32.mrf.mxu0
        %4300 = vmatprep.mubr.bf16.mxu0 0
        %4301 = vmatmul.mubr.bf16.gmra.mxu0 %v440
        %v4302 = vpop.f32.mrf.mxu0
        %v4303 = vadd.f32 0.0, %v4302
        %v4304 = vpop.f32.mrf.mxu0
        %v4305 = vpop.f32.mrf.mxu0
        %v4306 = vadd.f32 0.0, %v4305
        %v4307 = vpop.f32.mrf.mxu0
        %4308 = vmatprep.mubr.bf16.mxu0 0
        %4309 = vmatmul.mubr.bf16.gmra.mxu0 %v441
        %v4310 = vpop.f32.mrf.mxu0
        %v4311 = vadd.f32 0.0, %v4310
        %v4312 = vpop.f32.mrf.mxu0
        %v4313 = vpop.f32.mrf.mxu0
        %v4314 = vadd.f32 0.0, %v4313
        %v4315 = vpop.f32.mrf.mxu0
        %4316 = vdwg.mxu0
        %4317 = vst.msk [vmem:[#allocation2 + $0x8] sm:$0xff] %vm239, %v4191
        %4318 = vst.msk [vmem:[#allocation2 + $0x10] sm:$0xff] %vm239, %v4194
        %4319 = vst.msk [vmem:[#allocation2 + $0x28] sm:$0xff] %vm239, %v4199
        %4320 = vst.msk [vmem:[#allocation2 + $0x30] sm:$0xff] %vm239, %v4202
        %4321 = vst.msk [vmem:[#allocation2 + $0x48] sm:$0xff] %vm239, %v4207
        %4322 = vst.msk [vmem:[#allocation2 + $0x50] sm:$0xff] %vm239, %v4210
        %4323 = vst.msk [vmem:[#allocation2 + $0x68] sm:$0xff] %vm239, %v4215
        %4324 = vst.msk [vmem:[#allocation2 + $0x70] sm:$0xff] %vm239, %v4218
        %4325 = vst.msk [vmem:[#allocation2 + $0x88] sm:$0xff] %vm239, %v4223
        %4326 = vst.msk [vmem:[#allocation2 + $0x90] sm:$0xff] %vm239, %v4226
        %4327 = vst.msk [vmem:[#allocation2 + $0xa8] sm:$0xff] %vm239, %v4231
        %4328 = vst.msk [vmem:[#allocation2 + $0xb0] sm:$0xff] %vm239, %v4234
        %4329 = vst.msk [vmem:[#allocation2 + $0xc8] sm:$0xff] %vm239, %v4239
        %4330 = vst.msk [vmem:[#allocation2 + $0xd0] sm:$0xff] %vm239, %v4242
        %4331 = vst.msk [vmem:[#allocation2 + $0xe8] sm:$0xff] %vm239, %v4247
        %4332 = vst.msk [vmem:[#allocation2 + $0xf0] sm:$0xff] %vm239, %v4250
        %4333 = vst.msk [vmem:[#allocation2 + $0x108] sm:$0xff] %vm239, %v4255
        %4334 = vst.msk [vmem:[#allocation2 + $0x110] sm:$0xff] %vm239, %v4258
        %4335 = vst.msk [vmem:[#allocation2 + $0x128] sm:$0xff] %vm239, %v4263
        %4336 = vst.msk [vmem:[#allocation2 + $0x130] sm:$0xff] %vm239, %v4266
        %4337 = vst.msk [vmem:[#allocation2 + $0x148] sm:$0xff] %vm239, %v4271
        %4338 = vst.msk [vmem:[#allocation2 + $0x150] sm:$0xff] %vm239, %v4274
        %4339 = vst.msk [vmem:[#allocation2 + $0x168] sm:$0xff] %vm239, %v4279
        %4340 = vst.msk [vmem:[#allocation2 + $0x170] sm:$0xff] %vm239, %v4282
        %4341 = vst.msk [vmem:[#allocation2 + $0x188] sm:$0xff] %vm239, %v4287
        %4342 = vst.msk [vmem:[#allocation2 + $0x190] sm:$0xff] %vm239, %v4290
        %4343 = vst.msk [vmem:[#allocation2 + $0x1a8] sm:$0xff] %vm239, %v4295
        %4344 = vst.msk [vmem:[#allocation2 + $0x1b0] sm:$0xff] %vm239, %v4298
        %4345 = vst.msk [vmem:[#allocation2 + $0x1c8] sm:$0xff] %vm239, %v4303
        %4346 = vst.msk [vmem:[#allocation2 + $0x1d0] sm:$0xff] %vm239, %v4306
        %4347 = vst.msk [vmem:[#allocation2 + $0x1e8] sm:$0xff] %vm239, %v4311
        %4348 = vst.msk [vmem:[#allocation2 + $0x1f0] sm:$0xff] %vm239, %v4314
        %v4349 = vld [vmem:[#allocation2] sm:$0xff]
        %v4350 = vld [vmem:[#allocation2 + $0x8] sm:$0xff]
        %v4351 = vld [vmem:[#allocation2 + $0x20] sm:$0xff]
        %v4352 = vld [vmem:[#allocation2 + $0x28] sm:$0xff]
        %v4353 = vld [vmem:[#allocation2 + $0x40] sm:$0xff]
        %v4354 = vld [vmem:[#allocation2 + $0x48] sm:$0xff]
        %v4355 = vld [vmem:[#allocation2 + $0x60] sm:$0xff]
        %v4356 = vld [vmem:[#allocation2 + $0x68] sm:$0xff]
        %v4357 = vld [vmem:[#allocation2 + $0x80] sm:$0xff]
        %v4358 = vld [vmem:[#allocation2 + $0x88] sm:$0xff]
        %v4359 = vld [vmem:[#allocation2 + $0xa0] sm:$0xff]
        %v4360 = vld [vmem:[#allocation2 + $0xa8] sm:$0xff]
        %v4361 = vld [vmem:[#allocation2 + $0xc0] sm:$0xff]
        %v4362 = vld [vmem:[#allocation2 + $0xc8] sm:$0xff]
        %v4363 = vld [vmem:[#allocation2 + $0xe0] sm:$0xff]
        %v4364 = vld [vmem:[#allocation2 + $0xe8] sm:$0xff]
        %v4365 = vld [vmem:[#allocation2 + $0x100] sm:$0xff]
        %v4366 = vld [vmem:[#allocation2 + $0x108] sm:$0xff]
        %v4367 = vld [vmem:[#allocation2 + $0x120] sm:$0xff]
        %v4368 = vld [vmem:[#allocation2 + $0x128] sm:$0xff]
        %v4369 = vld [vmem:[#allocation2 + $0x140] sm:$0xff]
        %v4370 = vld [vmem:[#allocation2 + $0x148] sm:$0xff]
        %v4371 = vld [vmem:[#allocation2 + $0x160] sm:$0xff]
        %v4372 = vld [vmem:[#allocation2 + $0x168] sm:$0xff]
        %v4373 = vld [vmem:[#allocation2 + $0x180] sm:$0xff]
        %v4374 = vld [vmem:[#allocation2 + $0x188] sm:$0xff]
        %v4375 = vld [vmem:[#allocation2 + $0x1a0] sm:$0xff]
        %v4376 = vld [vmem:[#allocation2 + $0x1a8] sm:$0xff]
        %v4377 = vld [vmem:[#allocation2 + $0x1c0] sm:$0xff]
        %v4378 = vld [vmem:[#allocation2 + $0x1c8] sm:$0xff]
        %v4379 = vld [vmem:[#allocation2 + $0x1e0] sm:$0xff]
        %v4380 = vld [vmem:[#allocation2 + $0x1e8] sm:$0xff]
        %v4381 = vld [vmem:[#allocation2 + $0x1] sm:$0xff]
        %v4382 = vld [vmem:[#allocation2 + $0x9] sm:$0xff]
        %v4383 = vld [vmem:[#allocation2 + $0x21] sm:$0xff]
        %v4384 = vld [vmem:[#allocation2 + $0x29] sm:$0xff]
        %v4385 = vld [vmem:[#allocation2 + $0x41] sm:$0xff]
        %v4386 = vld [vmem:[#allocation2 + $0x49] sm:$0xff]
        %v4387 = vld [vmem:[#allocation2 + $0x61] sm:$0xff]
        %v4388 = vld [vmem:[#allocation2 + $0x69] sm:$0xff]
        %v4389 = vld [vmem:[#allocation2 + $0x81] sm:$0xff]
        %v4390 = vld [vmem:[#allocation2 + $0x89] sm:$0xff]
        %v4391 = vld [vmem:[#allocation2 + $0xa1] sm:$0xff]
        %v4392 = vld [vmem:[#allocation2 + $0xa9] sm:$0xff]
        %v4393 = vld [vmem:[#allocation2 + $0xc1] sm:$0xff]
        %v4394 = vld [vmem:[#allocation2 + $0xc9] sm:$0xff]
        %v4395 = vld [vmem:[#allocation2 + $0xe1] sm:$0xff]
        %v4396 = vld [vmem:[#allocation2 + $0xe9] sm:$0xff]
        %v4397 = vld [vmem:[#allocation2 + $0x101] sm:$0xff]
        %v4398 = vld [vmem:[#allocation2 + $0x109] sm:$0xff]
        %v4399 = vld [vmem:[#allocation2 + $0x121] sm:$0xff]
        %v4400 = vld [vmem:[#allocation2 + $0x129] sm:$0xff]
        %v4401 = vld [vmem:[#allocation2 + $0x141] sm:$0xff]
        %v4402 = vld [vmem:[#allocation2 + $0x149] sm:$0xff]
        %v4403 = vld [vmem:[#allocation2 + $0x161] sm:$0xff]
        %v4404 = vld [vmem:[#allocation2 + $0x169] sm:$0xff]
        %v4405 = vld [vmem:[#allocation2 + $0x181] sm:$0xff]
        %v4406 = vld [vmem:[#allocation2 + $0x189] sm:$0xff]
        %v4407 = vld [vmem:[#allocation2 + $0x1a1] sm:$0xff]
        %v4408 = vld [vmem:[#allocation2 + $0x1a9] sm:$0xff]
        %v4409 = vld [vmem:[#allocation2 + $0x1c1] sm:$0xff]
        %v4410 = vld [vmem:[#allocation2 + $0x1c9] sm:$0xff]
        %v4411 = vld [vmem:[#allocation2 + $0x1e1] sm:$0xff]
        %v4412 = vld [vmem:[#allocation2 + $0x1e9] sm:$0xff]
        %v4413 = vadd.f32 %v4349, %v4381
        %v4414 = vadd.f32 %v4350, %v4382
        %v4415 = vadd.f32 %v4351, %v4383
        %v4416 = vadd.f32 %v4352, %v4384
        %v4417 = vadd.f32 %v4353, %v4385
        %v4418 = vadd.f32 %v4354, %v4386
        %v4419 = vadd.f32 %v4355, %v4387
        %v4420 = vadd.f32 %v4356, %v4388
        %v4421 = vadd.f32 %v4357, %v4389
        %v4422 = vadd.f32 %v4358, %v4390
        %v4423 = vadd.f32 %v4359, %v4391
        %v4424 = vadd.f32 %v4360, %v4392
        %v4425 = vadd.f32 %v4361, %v4393
        %v4426 = vadd.f32 %v4362, %v4394
        %v4427 = vadd.f32 %v4363, %v4395
        %v4428 = vadd.f32 %v4364, %v4396
        %v4429 = vadd.f32 %v4365, %v4397
        %v4430 = vadd.f32 %v4366, %v4398
        %v4431 = vadd.f32 %v4367, %v4399
        %v4432 = vadd.f32 %v4368, %v4400
        %v4433 = vadd.f32 %v4369, %v4401
        %v4434 = vadd.f32 %v4370, %v4402
        %v4435 = vadd.f32 %v4371, %v4403
        %v4436 = vadd.f32 %v4372, %v4404
        %v4437 = vadd.f32 %v4373, %v4405
        %v4438 = vadd.f32 %v4374, %v4406
        %v4439 = vadd.f32 %v4375, %v4407
        %v4440 = vadd.f32 %v4376, %v4408
        %v4441 = vadd.f32 %v4377, %v4409
        %v4442 = vadd.f32 %v4378, %v4410
        %v4443 = vadd.f32 %v4379, %v4411
        %v4444 = vadd.f32 %v4380, %v4412
        %v4445 = vld [vmem:[#allocation2 + $0x2] sm:$0xff]
        %v4446 = vld [vmem:[#allocation2 + $0xa] sm:$0xff]
        %v4447 = vld [vmem:[#allocation2 + $0x22] sm:$0xff]
        %v4448 = vld [vmem:[#allocation2 + $0x2a] sm:$0xff]
        %v4449 = vld [vmem:[#allocation2 + $0x42] sm:$0xff]
        %v4450 = vld [vmem:[#allocation2 + $0x4a] sm:$0xff]
        %v4451 = vld [vmem:[#allocation2 + $0x62] sm:$0xff]
        %v4452 = vld [vmem:[#allocation2 + $0x6a] sm:$0xff]
        %v4453 = vld [vmem:[#allocation2 + $0x82] sm:$0xff]
        %v4454 = vld [vmem:[#allocation2 + $0x8a] sm:$0xff]
        %v4455 = vld [vmem:[#allocation2 + $0xa2] sm:$0xff]
        %v4456 = vld [vmem:[#allocation2 + $0xaa] sm:$0xff]
        %v4457 = vld [vmem:[#allocation2 + $0xc2] sm:$0xff]
        %v4458 = vld [vmem:[#allocation2 + $0xca] sm:$0xff]
        %v4459 = vld [vmem:[#allocation2 + $0xe2] sm:$0xff]
        %v4460 = vld [vmem:[#allocation2 + $0xea] sm:$0xff]
        %v4461 = vld [vmem:[#allocation2 + $0x102] sm:$0xff]
        %v4462 = vld [vmem:[#allocation2 + $0x10a] sm:$0xff]
        %v4463 = vld [vmem:[#allocation2 + $0x122] sm:$0xff]
        %v4464 = vld [vmem:[#allocation2 + $0x12a] sm:$0xff]
        %v4465 = vld [vmem:[#allocation2 + $0x142] sm:$0xff]
        %v4466 = vld [vmem:[#allocation2 + $0x14a] sm:$0xff]
        %v4467 = vld [vmem:[#allocation2 + $0x162] sm:$0xff]
        %v4468 = vld [vmem:[#allocation2 + $0x16a] sm:$0xff]
        %v4469 = vld [vmem:[#allocation2 + $0x182] sm:$0xff]
        %v4470 = vld [vmem:[#allocation2 + $0x18a] sm:$0xff]
        %v4471 = vld [vmem:[#allocation2 + $0x1a2] sm:$0xff]
        %v4472 = vld [vmem:[#allocation2 + $0x1aa] sm:$0xff]
        %v4473 = vld [vmem:[#allocation2 + $0x1c2] sm:$0xff]
        %v4474 = vld [vmem:[#allocation2 + $0x1ca] sm:$0xff]
        %v4475 = vld [vmem:[#allocation2 + $0x1e2] sm:$0xff]
        %v4476 = vld [vmem:[#allocation2 + $0x1ea] sm:$0xff]
        %v4477 = vadd.f32 %v4413, %v4445
        %v4478 = vadd.f32 %v4414, %v4446
        %v4479 = vadd.f32 %v4415, %v4447
        %v4480 = vadd.f32 %v4416, %v4448
        %v4481 = vadd.f32 %v4417, %v4449
        %v4482 = vadd.f32 %v4418, %v4450
        %v4483 = vadd.f32 %v4419, %v4451
        %v4484 = vadd.f32 %v4420, %v4452
        %v4485 = vadd.f32 %v4421, %v4453
        %v4486 = vadd.f32 %v4422, %v4454
        %v4487 = vadd.f32 %v4423, %v4455
        %v4488 = vadd.f32 %v4424, %v4456
        %v4489 = vadd.f32 %v4425, %v4457
        %v4490 = vadd.f32 %v4426, %v4458
        %v4491 = vadd.f32 %v4427, %v4459
        %v4492 = vadd.f32 %v4428, %v4460
        %v4493 = vadd.f32 %v4429, %v4461
        %v4494 = vadd.f32 %v4430, %v4462
        %v4495 = vadd.f32 %v4431, %v4463
        %v4496 = vadd.f32 %v4432, %v4464
        %v4497 = vadd.f32 %v4433, %v4465
        %v4498 = vadd.f32 %v4434, %v4466
        %v4499 = vadd.f32 %v4435, %v4467
        %v4500 = vadd.f32 %v4436, %v4468
        %v4501 = vadd.f32 %v4437, %v4469
        %v4502 = vadd.f32 %v4438, %v4470
        %v4503 = vadd.f32 %v4439, %v4471
        %v4504 = vadd.f32 %v4440, %v4472
        %v4505 = vadd.f32 %v4441, %v4473
        %v4506 = vadd.f32 %v4442, %v4474
        %v4507 = vadd.f32 %v4443, %v4475
        %v4508 = vadd.f32 %v4444, %v4476
        %v4509 = vld [vmem:[#allocation2 + $0x3] sm:$0xff]
        %v4510 = vld [vmem:[#allocation2 + $0xb] sm:$0xff]
        %v4511 = vld [vmem:[#allocation2 + $0x23] sm:$0xff]
        %v4512 = vld [vmem:[#allocation2 + $0x2b] sm:$0xff]
        %v4513 = vld [vmem:[#allocation2 + $0x43] sm:$0xff]
        %v4514 = vld [vmem:[#allocation2 + $0x4b] sm:$0xff]
        %v4515 = vld [vmem:[#allocation2 + $0x63] sm:$0xff]
        %v4516 = vld [vmem:[#allocation2 + $0x6b] sm:$0xff]
        %v4517 = vld [vmem:[#allocation2 + $0x83] sm:$0xff]
        %v4518 = vld [vmem:[#allocation2 + $0x8b] sm:$0xff]
        %v4519 = vld [vmem:[#allocation2 + $0xa3] sm:$0xff]
        %v4520 = vld [vmem:[#allocation2 + $0xab] sm:$0xff]
        %v4521 = vld [vmem:[#allocation2 + $0xc3] sm:$0xff]
        %v4522 = vld [vmem:[#allocation2 + $0xcb] sm:$0xff]
        %v4523 = vld [vmem:[#allocation2 + $0xe3] sm:$0xff]
        %v4524 = vld [vmem:[#allocation2 + $0xeb] sm:$0xff]
        %v4525 = vld [vmem:[#allocation2 + $0x103] sm:$0xff]
        %v4526 = vld [vmem:[#allocation2 + $0x10b] sm:$0xff]
        %v4527 = vld [vmem:[#allocation2 + $0x123] sm:$0xff]
        %v4528 = vld [vmem:[#allocation2 + $0x12b] sm:$0xff]
        %v4529 = vld [vmem:[#allocation2 + $0x143] sm:$0xff]
        %v4530 = vld [vmem:[#allocation2 + $0x14b] sm:$0xff]
        %v4531 = vld [vmem:[#allocation2 + $0x163] sm:$0xff]
        %v4532 = vld [vmem:[#allocation2 + $0x16b] sm:$0xff]
        %v4533 = vld [vmem:[#allocation2 + $0x183] sm:$0xff]
        %v4534 = vld [vmem:[#allocation2 + $0x18b] sm:$0xff]
        %v4535 = vld [vmem:[#allocation2 + $0x1a3] sm:$0xff]
        %v4536 = vld [vmem:[#allocation2 + $0x1ab] sm:$0xff]
        %v4537 = vld [vmem:[#allocation2 + $0x1c3] sm:$0xff]
        %v4538 = vld [vmem:[#allocation2 + $0x1cb] sm:$0xff]
        %v4539 = vld [vmem:[#allocation2 + $0x1e3] sm:$0xff]
        %v4540 = vld [vmem:[#allocation2 + $0x1eb] sm:$0xff]
        %v4541 = vadd.f32 %v4477, %v4509
        %v4542 = vadd.f32 %v4478, %v4510
        %v4543 = vadd.f32 %v4479, %v4511
        %v4544 = vadd.f32 %v4480, %v4512
        %v4545 = vadd.f32 %v4481, %v4513
        %v4546 = vadd.f32 %v4482, %v4514
        %v4547 = vadd.f32 %v4483, %v4515
        %v4548 = vadd.f32 %v4484, %v4516
        %v4549 = vadd.f32 %v4485, %v4517
        %v4550 = vadd.f32 %v4486, %v4518
        %v4551 = vadd.f32 %v4487, %v4519
        %v4552 = vadd.f32 %v4488, %v4520
        %v4553 = vadd.f32 %v4489, %v4521
        %v4554 = vadd.f32 %v4490, %v4522
        %v4555 = vadd.f32 %v4491, %v4523
        %v4556 = vadd.f32 %v4492, %v4524
        %v4557 = vadd.f32 %v4493, %v4525
        %v4558 = vadd.f32 %v4494, %v4526
        %v4559 = vadd.f32 %v4495, %v4527
        %v4560 = vadd.f32 %v4496, %v4528
        %v4561 = vadd.f32 %v4497, %v4529
        %v4562 = vadd.f32 %v4498, %v4530
        %v4563 = vadd.f32 %v4499, %v4531
        %v4564 = vadd.f32 %v4500, %v4532
        %v4565 = vadd.f32 %v4501, %v4533
        %v4566 = vadd.f32 %v4502, %v4534
        %v4567 = vadd.f32 %v4503, %v4535
        %v4568 = vadd.f32 %v4504, %v4536
        %v4569 = vadd.f32 %v4505, %v4537
        %v4570 = vadd.f32 %v4506, %v4538
        %v4571 = vadd.f32 %v4507, %v4539
        %v4572 = vadd.f32 %v4508, %v4540
        %v4573 = vld [vmem:[#allocation2 + $0x4] sm:$0xff]
        %v4574 = vld [vmem:[#allocation2 + $0xc] sm:$0xff]
        %v4575 = vld [vmem:[#allocation2 + $0x24] sm:$0xff]
        %v4576 = vld [vmem:[#allocation2 + $0x2c] sm:$0xff]
        %v4577 = vld [vmem:[#allocation2 + $0x44] sm:$0xff]
        %v4578 = vld [vmem:[#allocation2 + $0x4c] sm:$0xff]
        %v4579 = vld [vmem:[#allocation2 + $0x64] sm:$0xff]
        %v4580 = vld [vmem:[#allocation2 + $0x6c] sm:$0xff]
        %v4581 = vld [vmem:[#allocation2 + $0x84] sm:$0xff]
        %v4582 = vld [vmem:[#allocation2 + $0x8c] sm:$0xff]
        %v4583 = vld [vmem:[#allocation2 + $0xa4] sm:$0xff]
        %v4584 = vld [vmem:[#allocation2 + $0xac] sm:$0xff]
        %v4585 = vld [vmem:[#allocation2 + $0xc4] sm:$0xff]
        %v4586 = vld [vmem:[#allocation2 + $0xcc] sm:$0xff]
        %v4587 = vld [vmem:[#allocation2 + $0xe4] sm:$0xff]
        %v4588 = vld [vmem:[#allocation2 + $0xec] sm:$0xff]
        %v4589 = vld [vmem:[#allocation2 + $0x104] sm:$0xff]
        %v4590 = vld [vmem:[#allocation2 + $0x10c] sm:$0xff]
        %v4591 = vld [vmem:[#allocation2 + $0x124] sm:$0xff]
        %v4592 = vld [vmem:[#allocation2 + $0x12c] sm:$0xff]
        %v4593 = vld [vmem:[#allocation2 + $0x144] sm:$0xff]
        %v4594 = vld [vmem:[#allocation2 + $0x14c] sm:$0xff]
        %v4595 = vld [vmem:[#allocation2 + $0x164] sm:$0xff]
        %v4596 = vld [vmem:[#allocation2 + $0x16c] sm:$0xff]
        %v4597 = vld [vmem:[#allocation2 + $0x184] sm:$0xff]
        %v4598 = vld [vmem:[#allocation2 + $0x18c] sm:$0xff]
        %v4599 = vld [vmem:[#allocation2 + $0x1a4] sm:$0xff]
        %v4600 = vld [vmem:[#allocation2 + $0x1ac] sm:$0xff]
        %v4601 = vld [vmem:[#allocation2 + $0x1c4] sm:$0xff]
        %v4602 = vld [vmem:[#allocation2 + $0x1cc] sm:$0xff]
        %v4603 = vld [vmem:[#allocation2 + $0x1e4] sm:$0xff]
        %v4604 = vld [vmem:[#allocation2 + $0x1ec] sm:$0xff]
        %v4605 = vadd.f32 %v4541, %v4573
        %v4606 = vadd.f32 %v4542, %v4574
        %v4607 = vadd.f32 %v4543, %v4575
        %v4608 = vadd.f32 %v4544, %v4576
        %v4609 = vadd.f32 %v4545, %v4577
        %v4610 = vadd.f32 %v4546, %v4578
        %v4611 = vadd.f32 %v4547, %v4579
        %v4612 = vadd.f32 %v4548, %v4580
        %v4613 = vadd.f32 %v4549, %v4581
        %v4614 = vadd.f32 %v4550, %v4582
        %v4615 = vadd.f32 %v4551, %v4583
        %v4616 = vadd.f32 %v4552, %v4584
        %v4617 = vadd.f32 %v4553, %v4585
        %v4618 = vadd.f32 %v4554, %v4586
        %v4619 = vadd.f32 %v4555, %v4587
        %v4620 = vadd.f32 %v4556, %v4588
        %v4621 = vadd.f32 %v4557, %v4589
        %v4622 = vadd.f32 %v4558, %v4590
        %v4623 = vadd.f32 %v4559, %v4591
        %v4624 = vadd.f32 %v4560, %v4592
        %v4625 = vadd.f32 %v4561, %v4593
        %v4626 = vadd.f32 %v4562, %v4594
        %v4627 = vadd.f32 %v4563, %v4595
        %v4628 = vadd.f32 %v4564, %v4596
        %v4629 = vadd.f32 %v4565, %v4597
        %v4630 = vadd.f32 %v4566, %v4598
        %v4631 = vadd.f32 %v4567, %v4599
        %v4632 = vadd.f32 %v4568, %v4600
        %v4633 = vadd.f32 %v4569, %v4601
        %v4634 = vadd.f32 %v4570, %v4602
        %v4635 = vadd.f32 %v4571, %v4603
        %v4636 = vadd.f32 %v4572, %v4604
        %v4637 = vld [vmem:[#allocation2 + $0x5] sm:$0xff]
        %v4638 = vld [vmem:[#allocation2 + $0xd] sm:$0xff]
        %v4639 = vld [vmem:[#allocation2 + $0x25] sm:$0xff]
        %v4640 = vld [vmem:[#allocation2 + $0x2d] sm:$0xff]
        %v4641 = vld [vmem:[#allocation2 + $0x45] sm:$0xff]
        %v4642 = vld [vmem:[#allocation2 + $0x4d] sm:$0xff]
        %v4643 = vld [vmem:[#allocation2 + $0x65] sm:$0xff]
        %v4644 = vld [vmem:[#allocation2 + $0x6d] sm:$0xff]
        %v4645 = vld [vmem:[#allocation2 + $0x85] sm:$0xff]
        %v4646 = vld [vmem:[#allocation2 + $0x8d] sm:$0xff]
        %v4647 = vld [vmem:[#allocation2 + $0xa5] sm:$0xff]
        %v4648 = vld [vmem:[#allocation2 + $0xad] sm:$0xff]
        %v4649 = vld [vmem:[#allocation2 + $0xc5] sm:$0xff]
        %v4650 = vld [vmem:[#allocation2 + $0xcd] sm:$0xff]
        %v4651 = vld [vmem:[#allocation2 + $0xe5] sm:$0xff]
        %v4652 = vld [vmem:[#allocation2 + $0xed] sm:$0xff]
        %v4653 = vld [vmem:[#allocation2 + $0x105] sm:$0xff]
        %v4654 = vld [vmem:[#allocation2 + $0x10d] sm:$0xff]
        %v4655 = vld [vmem:[#allocation2 + $0x125] sm:$0xff]
        %v4656 = vld [vmem:[#allocation2 + $0x12d] sm:$0xff]
        %v4657 = vld [vmem:[#allocation2 + $0x145] sm:$0xff]
        %v4658 = vld [vmem:[#allocation2 + $0x14d] sm:$0xff]
        %v4659 = vld [vmem:[#allocation2 + $0x165] sm:$0xff]
        %v4660 = vld [vmem:[#allocation2 + $0x16d] sm:$0xff]
        %v4661 = vld [vmem:[#allocation2 + $0x185] sm:$0xff]
        %v4662 = vld [vmem:[#allocation2 + $0x18d] sm:$0xff]
        %v4663 = vld [vmem:[#allocation2 + $0x1a5] sm:$0xff]
        %v4664 = vld [vmem:[#allocation2 + $0x1ad] sm:$0xff]
        %v4665 = vld [vmem:[#allocation2 + $0x1c5] sm:$0xff]
        %v4666 = vld [vmem:[#allocation2 + $0x1cd] sm:$0xff]
        %v4667 = vld [vmem:[#allocation2 + $0x1e5] sm:$0xff]
        %v4668 = vld [vmem:[#allocation2 + $0x1ed] sm:$0xff]
        %v4669 = vadd.f32 %v4605, %v4637
        %v4670 = vadd.f32 %v4606, %v4638
        %v4671 = vadd.f32 %v4607, %v4639
        %v4672 = vadd.f32 %v4608, %v4640
        %v4673 = vadd.f32 %v4609, %v4641
        %v4674 = vadd.f32 %v4610, %v4642
        %v4675 = vadd.f32 %v4611, %v4643
        %v4676 = vadd.f32 %v4612, %v4644
        %v4677 = vadd.f32 %v4613, %v4645
        %v4678 = vadd.f32 %v4614, %v4646
        %v4679 = vadd.f32 %v4615, %v4647
        %v4680 = vadd.f32 %v4616, %v4648
        %v4681 = vadd.f32 %v4617, %v4649
        %v4682 = vadd.f32 %v4618, %v4650
        %v4683 = vadd.f32 %v4619, %v4651
        %v4684 = vadd.f32 %v4620, %v4652
        %v4685 = vadd.f32 %v4621, %v4653
        %v4686 = vadd.f32 %v4622, %v4654
        %v4687 = vadd.f32 %v4623, %v4655
        %v4688 = vadd.f32 %v4624, %v4656
        %v4689 = vadd.f32 %v4625, %v4657
        %v4690 = vadd.f32 %v4626, %v4658
        %v4691 = vadd.f32 %v4627, %v4659
        %v4692 = vadd.f32 %v4628, %v4660
        %v4693 = vadd.f32 %v4629, %v4661
        %v4694 = vadd.f32 %v4630, %v4662
        %v4695 = vadd.f32 %v4631, %v4663
        %v4696 = vadd.f32 %v4632, %v4664
        %v4697 = vadd.f32 %v4633, %v4665
        %v4698 = vadd.f32 %v4634, %v4666
        %v4699 = vadd.f32 %v4635, %v4667
        %v4700 = vadd.f32 %v4636, %v4668
        %v4701 = vld [vmem:[#allocation2 + $0x6] sm:$0xff]
        %v4702 = vld [vmem:[#allocation2 + $0xe] sm:$0xff]
        %v4703 = vld [vmem:[#allocation2 + $0x26] sm:$0xff]
        %v4704 = vld [vmem:[#allocation2 + $0x2e] sm:$0xff]
        %v4705 = vld [vmem:[#allocation2 + $0x46] sm:$0xff]
        %v4706 = vld [vmem:[#allocation2 + $0x4e] sm:$0xff]
        %v4707 = vld [vmem:[#allocation2 + $0x66] sm:$0xff]
        %v4708 = vld [vmem:[#allocation2 + $0x6e] sm:$0xff]
        %v4709 = vld [vmem:[#allocation2 + $0x86] sm:$0xff]
        %v4710 = vld [vmem:[#allocation2 + $0x8e] sm:$0xff]
        %v4711 = vld [vmem:[#allocation2 + $0xa6] sm:$0xff]
        %v4712 = vld [vmem:[#allocation2 + $0xae] sm:$0xff]
        %v4713 = vld [vmem:[#allocation2 + $0xc6] sm:$0xff]
        %v4714 = vld [vmem:[#allocation2 + $0xce] sm:$0xff]
        %v4715 = vld [vmem:[#allocation2 + $0xe6] sm:$0xff]
        %v4716 = vld [vmem:[#allocation2 + $0xee] sm:$0xff]
        %v4717 = vld [vmem:[#allocation2 + $0x106] sm:$0xff]
        %v4718 = vld [vmem:[#allocation2 + $0x10e] sm:$0xff]
        %v4719 = vld [vmem:[#allocation2 + $0x126] sm:$0xff]
        %v4720 = vld [vmem:[#allocation2 + $0x12e] sm:$0xff]
        %v4721 = vld [vmem:[#allocation2 + $0x146] sm:$0xff]
        %v4722 = vld [vmem:[#allocation2 + $0x14e] sm:$0xff]
        %v4723 = vld [vmem:[#allocation2 + $0x166] sm:$0xff]
        %v4724 = vld [vmem:[#allocation2 + $0x16e] sm:$0xff]
        %v4725 = vld [vmem:[#allocation2 + $0x186] sm:$0xff]
        %v4726 = vld [vmem:[#allocation2 + $0x18e] sm:$0xff]
        %v4727 = vld [vmem:[#allocation2 + $0x1a6] sm:$0xff]
        %v4728 = vld [vmem:[#allocation2 + $0x1ae] sm:$0xff]
        %v4729 = vld [vmem:[#allocation2 + $0x1c6] sm:$0xff]
        %v4730 = vld [vmem:[#allocation2 + $0x1ce] sm:$0xff]
        %v4731 = vld [vmem:[#allocation2 + $0x1e6] sm:$0xff]
        %v4732 = vld [vmem:[#allocation2 + $0x1ee] sm:$0xff]
        %v4733 = vadd.f32 %v4669, %v4701
        %v4734 = vadd.f32 %v4670, %v4702
        %v4735 = vadd.f32 %v4671, %v4703
        %v4736 = vadd.f32 %v4672, %v4704
        %v4737 = vadd.f32 %v4673, %v4705
        %v4738 = vadd.f32 %v4674, %v4706
        %v4739 = vadd.f32 %v4675, %v4707
        %v4740 = vadd.f32 %v4676, %v4708
        %v4741 = vadd.f32 %v4677, %v4709
        %v4742 = vadd.f32 %v4678, %v4710
        %v4743 = vadd.f32 %v4679, %v4711
        %v4744 = vadd.f32 %v4680, %v4712
        %v4745 = vadd.f32 %v4681, %v4713
        %v4746 = vadd.f32 %v4682, %v4714
        %v4747 = vadd.f32 %v4683, %v4715
        %v4748 = vadd.f32 %v4684, %v4716
        %v4749 = vadd.f32 %v4685, %v4717
        %v4750 = vadd.f32 %v4686, %v4718
        %v4751 = vadd.f32 %v4687, %v4719
        %v4752 = vadd.f32 %v4688, %v4720
        %v4753 = vadd.f32 %v4689, %v4721
        %v4754 = vadd.f32 %v4690, %v4722
        %v4755 = vadd.f32 %v4691, %v4723
        %v4756 = vadd.f32 %v4692, %v4724
        %v4757 = vadd.f32 %v4693, %v4725
        %v4758 = vadd.f32 %v4694, %v4726
        %v4759 = vadd.f32 %v4695, %v4727
        %v4760 = vadd.f32 %v4696, %v4728
        %v4761 = vadd.f32 %v4697, %v4729
        %v4762 = vadd.f32 %v4698, %v4730
        %v4763 = vadd.f32 %v4699, %v4731
        %v4764 = vadd.f32 %v4700, %v4732
        %v4765 = vld [vmem:[#allocation2 + $0x7] sm:$0xff]
        %v4766 = vld [vmem:[#allocation2 + $0xf] sm:$0xff]
        %v4767 = vld [vmem:[#allocation2 + $0x27] sm:$0xff]
        %v4768 = vld [vmem:[#allocation2 + $0x2f] sm:$0xff]
        %v4769 = vld [vmem:[#allocation2 + $0x47] sm:$0xff]
        %v4770 = vld [vmem:[#allocation2 + $0x4f] sm:$0xff]
        %v4771 = vld [vmem:[#allocation2 + $0x67] sm:$0xff]
        %v4772 = vld [vmem:[#allocation2 + $0x6f] sm:$0xff]
        %v4773 = vld [vmem:[#allocation2 + $0x87] sm:$0xff]
        %v4774 = vld [vmem:[#allocation2 + $0x8f] sm:$0xff]
        %v4775 = vld [vmem:[#allocation2 + $0xa7] sm:$0xff]
        %v4776 = vld [vmem:[#allocation2 + $0xaf] sm:$0xff]
        %v4777 = vld [vmem:[#allocation2 + $0xc7] sm:$0xff]
        %v4778 = vld [vmem:[#allocation2 + $0xcf] sm:$0xff]
        %v4779 = vld [vmem:[#allocation2 + $0xe7] sm:$0xff]
        %v4780 = vld [vmem:[#allocation2 + $0xef] sm:$0xff]
        %v4781 = vld [vmem:[#allocation2 + $0x107] sm:$0xff]
        %v4782 = vld [vmem:[#allocation2 + $0x10f] sm:$0xff]
        %v4783 = vld [vmem:[#allocation2 + $0x127] sm:$0xff]
        %v4784 = vld [vmem:[#allocation2 + $0x12f] sm:$0xff]
        %v4785 = vld [vmem:[#allocation2 + $0x147] sm:$0xff]
        %v4786 = vld [vmem:[#allocation2 + $0x14f] sm:$0xff]
        %v4787 = vld [vmem:[#allocation2 + $0x167] sm:$0xff]
        %v4788 = vld [vmem:[#allocation2 + $0x16f] sm:$0xff]
        %v4789 = vld [vmem:[#allocation2 + $0x187] sm:$0xff]
        %v4790 = vld [vmem:[#allocation2 + $0x18f] sm:$0xff]
        %v4791 = vld [vmem:[#allocation2 + $0x1a7] sm:$0xff]
        %v4792 = vld [vmem:[#allocation2 + $0x1af] sm:$0xff]
        %v4793 = vld [vmem:[#allocation2 + $0x1c7] sm:$0xff]
        %v4794 = vld [vmem:[#allocation2 + $0x1cf] sm:$0xff]
        %v4795 = vld [vmem:[#allocation2 + $0x1e7] sm:$0xff]
        %v4796 = vld [vmem:[#allocation2 + $0x1ef] sm:$0xff]
        %v4797 = vadd.f32 %v4733, %v4765
        %v4798 = vadd.f32 %v4734, %v4766
        %v4799 = vadd.f32 %v4735, %v4767
        %v4800 = vadd.f32 %v4736, %v4768
        %v4801 = vadd.f32 %v4737, %v4769
        %v4802 = vadd.f32 %v4738, %v4770
        %v4803 = vadd.f32 %v4739, %v4771
        %v4804 = vadd.f32 %v4740, %v4772
        %v4805 = vadd.f32 %v4741, %v4773
        %v4806 = vadd.f32 %v4742, %v4774
        %v4807 = vadd.f32 %v4743, %v4775
        %v4808 = vadd.f32 %v4744, %v4776
        %v4809 = vadd.f32 %v4745, %v4777
        %v4810 = vadd.f32 %v4746, %v4778
        %v4811 = vadd.f32 %v4747, %v4779
        %v4812 = vadd.f32 %v4748, %v4780
        %v4813 = vadd.f32 %v4749, %v4781
        %v4814 = vadd.f32 %v4750, %v4782
        %v4815 = vadd.f32 %v4751, %v4783
        %v4816 = vadd.f32 %v4752, %v4784
        %v4817 = vadd.f32 %v4753, %v4785
        %v4818 = vadd.f32 %v4754, %v4786
        %v4819 = vadd.f32 %v4755, %v4787
        %v4820 = vadd.f32 %v4756, %v4788
        %v4821 = vadd.f32 %v4757, %v4789
        %v4822 = vadd.f32 %v4758, %v4790
        %v4823 = vadd.f32 %v4759, %v4791
        %v4824 = vadd.f32 %v4760, %v4792
        %v4825 = vadd.f32 %v4761, %v4793
        %v4826 = vadd.f32 %v4762, %v4794
        %v4827 = vadd.f32 %v4763, %v4795
        %v4828 = vadd.f32 %v4764, %v4796
        %v4829 = vld [vmem:[#allocation2 + $0x10] sm:$0xff]
        %v4830 = vld [vmem:[#allocation2 + $0x30] sm:$0xff]
        %v4831 = vld [vmem:[#allocation2 + $0x50] sm:$0xff]
        %v4832 = vld [vmem:[#allocation2 + $0x70] sm:$0xff]
        %v4833 = vld [vmem:[#allocation2 + $0x90] sm:$0xff]
        %v4834 = vld [vmem:[#allocation2 + $0xb0] sm:$0xff]
        %v4835 = vld [vmem:[#allocation2 + $0xd0] sm:$0xff]
        %v4836 = vld [vmem:[#allocation2 + $0xf0] sm:$0xff]
        %v4837 = vld [vmem:[#allocation2 + $0x110] sm:$0xff]
        %v4838 = vld [vmem:[#allocation2 + $0x130] sm:$0xff]
        %v4839 = vld [vmem:[#allocation2 + $0x150] sm:$0xff]
        %v4840 = vld [vmem:[#allocation2 + $0x170] sm:$0xff]
        %v4841 = vld [vmem:[#allocation2 + $0x190] sm:$0xff]
        %v4842 = vld [vmem:[#allocation2 + $0x1b0] sm:$0xff]
        %v4843 = vld [vmem:[#allocation2 + $0x1d0] sm:$0xff]
        %v4844 = vld [vmem:[#allocation2 + $0x1f0] sm:$0xff]
        %v4845 = vadd.f32 %v4797, %v4350
        %v4846 = vadd.f32 %v4798, %v4829
        %v4847 = vadd.f32 %v4799, %v4352
        %v4848 = vadd.f32 %v4800, %v4830
        %v4849 = vadd.f32 %v4801, %v4354
        %v4850 = vadd.f32 %v4802, %v4831
        %v4851 = vadd.f32 %v4803, %v4356
        %v4852 = vadd.f32 %v4804, %v4832
        %v4853 = vadd.f32 %v4805, %v4358
        %v4854 = vadd.f32 %v4806, %v4833
        %v4855 = vadd.f32 %v4807, %v4360
        %v4856 = vadd.f32 %v4808, %v4834
        %v4857 = vadd.f32 %v4809, %v4362
        %v4858 = vadd.f32 %v4810, %v4835
        %v4859 = vadd.f32 %v4811, %v4364
        %v4860 = vadd.f32 %v4812, %v4836
        %v4861 = vadd.f32 %v4813, %v4366
        %v4862 = vadd.f32 %v4814, %v4837
        %v4863 = vadd.f32 %v4815, %v4368
        %v4864 = vadd.f32 %v4816, %v4838
        %v4865 = vadd.f32 %v4817, %v4370
        %v4866 = vadd.f32 %v4818, %v4839
        %v4867 = vadd.f32 %v4819, %v4372
        %v4868 = vadd.f32 %v4820, %v4840
        %v4869 = vadd.f32 %v4821, %v4374
        %v4870 = vadd.f32 %v4822, %v4841
        %v4871 = vadd.f32 %v4823, %v4376
        %v4872 = vadd.f32 %v4824, %v4842
        %v4873 = vadd.f32 %v4825, %v4378
        %v4874 = vadd.f32 %v4826, %v4843
        %v4875 = vadd.f32 %v4827, %v4380
        %v4876 = vadd.f32 %v4828, %v4844
        %v4877 = vld [vmem:[#allocation2 + $0x11] sm:$0xff]
        %v4878 = vld [vmem:[#allocation2 + $0x31] sm:$0xff]
        %v4879 = vld [vmem:[#allocation2 + $0x51] sm:$0xff]
        %v4880 = vld [vmem:[#allocation2 + $0x71] sm:$0xff]
        %v4881 = vld [vmem:[#allocation2 + $0x91] sm:$0xff]
        %v4882 = vld [vmem:[#allocation2 + $0xb1] sm:$0xff]
        %v4883 = vld [vmem:[#allocation2 + $0xd1] sm:$0xff]
        %v4884 = vld [vmem:[#allocation2 + $0xf1] sm:$0xff]
        %v4885 = vld [vmem:[#allocation2 + $0x111] sm:$0xff]
        %v4886 = vld [vmem:[#allocation2 + $0x131] sm:$0xff]
        %v4887 = vld [vmem:[#allocation2 + $0x151] sm:$0xff]
        %v4888 = vld [vmem:[#allocation2 + $0x171] sm:$0xff]
        %v4889 = vld [vmem:[#allocation2 + $0x191] sm:$0xff]
        %v4890 = vld [vmem:[#allocation2 + $0x1b1] sm:$0xff]
        %v4891 = vld [vmem:[#allocation2 + $0x1d1] sm:$0xff]
        %v4892 = vld [vmem:[#allocation2 + $0x1f1] sm:$0xff]
        %v4893 = vadd.f32 %v4845, %v4382
        %v4894 = vadd.f32 %v4846, %v4877
        %v4895 = vadd.f32 %v4847, %v4384
        %v4896 = vadd.f32 %v4848, %v4878
        %v4897 = vadd.f32 %v4849, %v4386
        %v4898 = vadd.f32 %v4850, %v4879
        %v4899 = vadd.f32 %v4851, %v4388
        %v4900 = vadd.f32 %v4852, %v4880
        %v4901 = vadd.f32 %v4853, %v4390
        %v4902 = vadd.f32 %v4854, %v4881
        %v4903 = vadd.f32 %v4855, %v4392
        %v4904 = vadd.f32 %v4856, %v4882
        %v4905 = vadd.f32 %v4857, %v4394
        %v4906 = vadd.f32 %v4858, %v4883
        %v4907 = vadd.f32 %v4859, %v4396
        %v4908 = vadd.f32 %v4860, %v4884
        %v4909 = vadd.f32 %v4861, %v4398
        %v4910 = vadd.f32 %v4862, %v4885
        %v4911 = vadd.f32 %v4863, %v4400
        %v4912 = vadd.f32 %v4864, %v4886
        %v4913 = vadd.f32 %v4865, %v4402
        %v4914 = vadd.f32 %v4866, %v4887
        %v4915 = vadd.f32 %v4867, %v4404
        %v4916 = vadd.f32 %v4868, %v4888
        %v4917 = vadd.f32 %v4869, %v4406
        %v4918 = vadd.f32 %v4870, %v4889
        %v4919 = vadd.f32 %v4871, %v4408
        %v4920 = vadd.f32 %v4872, %v4890
        %v4921 = vadd.f32 %v4873, %v4410
        %v4922 = vadd.f32 %v4874, %v4891
        %v4923 = vadd.f32 %v4875, %v4412
        %v4924 = vadd.f32 %v4876, %v4892
        %v4925 = vld [vmem:[#allocation2 + $0x12] sm:$0xff]
        %v4926 = vld [vmem:[#allocation2 + $0x32] sm:$0xff]
        %v4927 = vld [vmem:[#allocation2 + $0x52] sm:$0xff]
        %v4928 = vld [vmem:[#allocation2 + $0x72] sm:$0xff]
        %v4929 = vld [vmem:[#allocation2 + $0x92] sm:$0xff]
        %v4930 = vld [vmem:[#allocation2 + $0xb2] sm:$0xff]
        %v4931 = vld [vmem:[#allocation2 + $0xd2] sm:$0xff]
        %v4932 = vld [vmem:[#allocation2 + $0xf2] sm:$0xff]
        %v4933 = vld [vmem:[#allocation2 + $0x112] sm:$0xff]
        %v4934 = vld [vmem:[#allocation2 + $0x132] sm:$0xff]
        %v4935 = vld [vmem:[#allocation2 + $0x152] sm:$0xff]
        %v4936 = vld [vmem:[#allocation2 + $0x172] sm:$0xff]
        %v4937 = vld [vmem:[#allocation2 + $0x192] sm:$0xff]
        %v4938 = vld [vmem:[#allocation2 + $0x1b2] sm:$0xff]
        %v4939 = vld [vmem:[#allocation2 + $0x1d2] sm:$0xff]
        %v4940 = vld [vmem:[#allocation2 + $0x1f2] sm:$0xff]
        %v4941 = vadd.f32 %v4893, %v4446
        %v4942 = vadd.f32 %v4894, %v4925
        %v4943 = vadd.f32 %v4895, %v4448
        %v4944 = vadd.f32 %v4896, %v4926
        %v4945 = vadd.f32 %v4897, %v4450
        %v4946 = vadd.f32 %v4898, %v4927
        %v4947 = vadd.f32 %v4899, %v4452
        %v4948 = vadd.f32 %v4900, %v4928
        %v4949 = vadd.f32 %v4901, %v4454
        %v4950 = vadd.f32 %v4902, %v4929
        %v4951 = vadd.f32 %v4903, %v4456
        %v4952 = vadd.f32 %v4904, %v4930
        %v4953 = vadd.f32 %v4905, %v4458
        %v4954 = vadd.f32 %v4906, %v4931
        %v4955 = vadd.f32 %v4907, %v4460
        %v4956 = vadd.f32 %v4908, %v4932
        %v4957 = vadd.f32 %v4909, %v4462
        %v4958 = vadd.f32 %v4910, %v4933
        %v4959 = vadd.f32 %v4911, %v4464
        %v4960 = vadd.f32 %v4912, %v4934
        %v4961 = vadd.f32 %v4913, %v4466
        %v4962 = vadd.f32 %v4914, %v4935
        %v4963 = vadd.f32 %v4915, %v4468
        %v4964 = vadd.f32 %v4916, %v4936
        %v4965 = vadd.f32 %v4917, %v4470
        %v4966 = vadd.f32 %v4918, %v4937
        %v4967 = vadd.f32 %v4919, %v4472
        %v4968 = vadd.f32 %v4920, %v4938
        %v4969 = vadd.f32 %v4921, %v4474
        %v4970 = vadd.f32 %v4922, %v4939
        %v4971 = vadd.f32 %v4923, %v4476
        %v4972 = vadd.f32 %v4924, %v4940
        %v4973 = vld [vmem:[#allocation2 + $0x13] sm:$0xff]
        %v4974 = vld [vmem:[#allocation2 + $0x33] sm:$0xff]
        %v4975 = vld [vmem:[#allocation2 + $0x53] sm:$0xff]
        %v4976 = vld [vmem:[#allocation2 + $0x73] sm:$0xff]
        %v4977 = vld [vmem:[#allocation2 + $0x93] sm:$0xff]
        %v4978 = vld [vmem:[#allocation2 + $0xb3] sm:$0xff]
        %v4979 = vld [vmem:[#allocation2 + $0xd3] sm:$0xff]
        %v4980 = vld [vmem:[#allocation2 + $0xf3] sm:$0xff]
        %v4981 = vld [vmem:[#allocation2 + $0x113] sm:$0xff]
        %v4982 = vld [vmem:[#allocation2 + $0x133] sm:$0xff]
        %v4983 = vld [vmem:[#allocation2 + $0x153] sm:$0xff]
        %v4984 = vld [vmem:[#allocation2 + $0x173] sm:$0xff]
        %v4985 = vld [vmem:[#allocation2 + $0x193] sm:$0xff]
        %v4986 = vld [vmem:[#allocation2 + $0x1b3] sm:$0xff]
        %v4987 = vld [vmem:[#allocation2 + $0x1d3] sm:$0xff]
        %v4988 = vld [vmem:[#allocation2 + $0x1f3] sm:$0xff]
        %v4989 = vadd.f32 %v4941, %v4510
        %v4990 = vadd.f32 %v4942, %v4973
        %v4991 = vadd.f32 %v4943, %v4512
        %v4992 = vadd.f32 %v4944, %v4974
        %v4993 = vadd.f32 %v4945, %v4514
        %v4994 = vadd.f32 %v4946, %v4975
        %v4995 = vadd.f32 %v4947, %v4516
        %v4996 = vadd.f32 %v4948, %v4976
        %v4997 = vadd.f32 %v4949, %v4518
        %v4998 = vadd.f32 %v4950, %v4977
        %v4999 = vadd.f32 %v4951, %v4520
        %v5000 = vadd.f32 %v4952, %v4978
        %v5001 = vadd.f32 %v4953, %v4522
        %v5002 = vadd.f32 %v4954, %v4979
        %v5003 = vadd.f32 %v4955, %v4524
        %v5004 = vadd.f32 %v4956, %v4980
        %v5005 = vadd.f32 %v4957, %v4526
        %v5006 = vadd.f32 %v4958, %v4981
        %v5007 = vadd.f32 %v4959, %v4528
        %v5008 = vadd.f32 %v4960, %v4982
        %v5009 = vadd.f32 %v4961, %v4530
        %v5010 = vadd.f32 %v4962, %v4983
        %v5011 = vadd.f32 %v4963, %v4532
        %v5012 = vadd.f32 %v4964, %v4984
        %v5013 = vadd.f32 %v4965, %v4534
        %v5014 = vadd.f32 %v4966, %v4985
        %v5015 = vadd.f32 %v4967, %v4536
        %v5016 = vadd.f32 %v4968, %v4986
        %v5017 = vadd.f32 %v4969, %v4538
        %v5018 = vadd.f32 %v4970, %v4987
        %v5019 = vadd.f32 %v4971, %v4540
        %v5020 = vadd.f32 %v4972, %v4988
        %v5021 = vld [vmem:[#allocation2 + $0x14] sm:$0xff]
        %v5022 = vld [vmem:[#allocation2 + $0x34] sm:$0xff]
        %v5023 = vld [vmem:[#allocation2 + $0x54] sm:$0xff]
        %v5024 = vld [vmem:[#allocation2 + $0x74] sm:$0xff]
        %v5025 = vld [vmem:[#allocation2 + $0x94] sm:$0xff]
        %v5026 = vld [vmem:[#allocation2 + $0xb4] sm:$0xff]
        %v5027 = vld [vmem:[#allocation2 + $0xd4] sm:$0xff]
        %v5028 = vld [vmem:[#allocation2 + $0xf4] sm:$0xff]
        %v5029 = vld [vmem:[#allocation2 + $0x114] sm:$0xff]
        %v5030 = vld [vmem:[#allocation2 + $0x134] sm:$0xff]
        %v5031 = vld [vmem:[#allocation2 + $0x154] sm:$0xff]
        %v5032 = vld [vmem:[#allocation2 + $0x174] sm:$0xff]
        %v5033 = vld [vmem:[#allocation2 + $0x194] sm:$0xff]
        %v5034 = vld [vmem:[#allocation2 + $0x1b4] sm:$0xff]
        %v5035 = vld [vmem:[#allocation2 + $0x1d4] sm:$0xff]
        %v5036 = vld [vmem:[#allocation2 + $0x1f4] sm:$0xff]
        %v5037 = vadd.f32 %v4989, %v4574
        %v5038 = vadd.f32 %v4990, %v5021
        %v5039 = vadd.f32 %v4991, %v4576
        %v5040 = vadd.f32 %v4992, %v5022
        %v5041 = vadd.f32 %v4993, %v4578
        %v5042 = vadd.f32 %v4994, %v5023
        %v5043 = vadd.f32 %v4995, %v4580
        %v5044 = vadd.f32 %v4996, %v5024
        %v5045 = vadd.f32 %v4997, %v4582
        %v5046 = vadd.f32 %v4998, %v5025
        %v5047 = vadd.f32 %v4999, %v4584
        %v5048 = vadd.f32 %v5000, %v5026
        %v5049 = vadd.f32 %v5001, %v4586
        %v5050 = vadd.f32 %v5002, %v5027
        %v5051 = vadd.f32 %v5003, %v4588
        %v5052 = vadd.f32 %v5004, %v5028
        %v5053 = vadd.f32 %v5005, %v4590
        %v5054 = vadd.f32 %v5006, %v5029
        %v5055 = vadd.f32 %v5007, %v4592
        %v5056 = vadd.f32 %v5008, %v5030
        %v5057 = vadd.f32 %v5009, %v4594
        %v5058 = vadd.f32 %v5010, %v5031
        %v5059 = vadd.f32 %v5011, %v4596
        %v5060 = vadd.f32 %v5012, %v5032
        %v5061 = vadd.f32 %v5013, %v4598
        %v5062 = vadd.f32 %v5014, %v5033
        %v5063 = vadd.f32 %v5015, %v4600
        %v5064 = vadd.f32 %v5016, %v5034
        %v5065 = vadd.f32 %v5017, %v4602
        %v5066 = vadd.f32 %v5018, %v5035
        %v5067 = vadd.f32 %v5019, %v4604
        %v5068 = vadd.f32 %v5020, %v5036
        %v5069 = vld [vmem:[#allocation2 + $0x15] sm:$0xff]
        %v5070 = vld [vmem:[#allocation2 + $0x35] sm:$0xff]
        %v5071 = vld [vmem:[#allocation2 + $0x55] sm:$0xff]
        %v5072 = vld [vmem:[#allocation2 + $0x75] sm:$0xff]
        %v5073 = vld [vmem:[#allocation2 + $0x95] sm:$0xff]
        %v5074 = vld [vmem:[#allocation2 + $0xb5] sm:$0xff]
        %v5075 = vld [vmem:[#allocation2 + $0xd5] sm:$0xff]
        %v5076 = vld [vmem:[#allocation2 + $0xf5] sm:$0xff]
        %v5077 = vld [vmem:[#allocation2 + $0x115] sm:$0xff]
        %v5078 = vld [vmem:[#allocation2 + $0x135] sm:$0xff]
        %v5079 = vld [vmem:[#allocation2 + $0x155] sm:$0xff]
        %v5080 = vld [vmem:[#allocation2 + $0x175] sm:$0xff]
        %v5081 = vld [vmem:[#allocation2 + $0x195] sm:$0xff]
        %v5082 = vld [vmem:[#allocation2 + $0x1b5] sm:$0xff]
        %v5083 = vld [vmem:[#allocation2 + $0x1d5] sm:$0xff]
        %v5084 = vld [vmem:[#allocation2 + $0x1f5] sm:$0xff]
        %v5085 = vadd.f32 %v5037, %v4638
        %v5086 = vadd.f32 %v5038, %v5069
        %v5087 = vadd.f32 %v5039, %v4640
        %v5088 = vadd.f32 %v5040, %v5070
        %v5089 = vadd.f32 %v5041, %v4642
        %v5090 = vadd.f32 %v5042, %v5071
        %v5091 = vadd.f32 %v5043, %v4644
        %v5092 = vadd.f32 %v5044, %v5072
        %v5093 = vadd.f32 %v5045, %v4646
        %v5094 = vadd.f32 %v5046, %v5073
        %v5095 = vadd.f32 %v5047, %v4648
        %v5096 = vadd.f32 %v5048, %v5074
        %v5097 = vadd.f32 %v5049, %v4650
        %v5098 = vadd.f32 %v5050, %v5075
        %v5099 = vadd.f32 %v5051, %v4652
        %v5100 = vadd.f32 %v5052, %v5076
        %v5101 = vadd.f32 %v5053, %v4654
        %v5102 = vadd.f32 %v5054, %v5077
        %v5103 = vadd.f32 %v5055, %v4656
        %v5104 = vadd.f32 %v5056, %v5078
        %v5105 = vadd.f32 %v5057, %v4658
        %v5106 = vadd.f32 %v5058, %v5079
        %v5107 = vadd.f32 %v5059, %v4660
        %v5108 = vadd.f32 %v5060, %v5080
        %v5109 = vadd.f32 %v5061, %v4662
        %v5110 = vadd.f32 %v5062, %v5081
        %v5111 = vadd.f32 %v5063, %v4664
        %v5112 = vadd.f32 %v5064, %v5082
        %v5113 = vadd.f32 %v5065, %v4666
        %v5114 = vadd.f32 %v5066, %v5083
        %v5115 = vadd.f32 %v5067, %v4668
        %v5116 = vadd.f32 %v5068, %v5084
        %v5117 = vld [vmem:[#allocation2 + $0x16] sm:$0xff]
        %v5118 = vld [vmem:[#allocation2 + $0x36] sm:$0xff]
        %v5119 = vld [vmem:[#allocation2 + $0x56] sm:$0xff]
        %v5120 = vld [vmem:[#allocation2 + $0x76] sm:$0xff]
        %v5121 = vld [vmem:[#allocation2 + $0x96] sm:$0xff]
        %v5122 = vld [vmem:[#allocation2 + $0xb6] sm:$0xff]
        %v5123 = vld [vmem:[#allocation2 + $0xd6] sm:$0xff]
        %v5124 = vld [vmem:[#allocation2 + $0xf6] sm:$0xff]
        %v5125 = vld [vmem:[#allocation2 + $0x116] sm:$0xff]
        %v5126 = vld [vmem:[#allocation2 + $0x136] sm:$0xff]
        %v5127 = vld [vmem:[#allocation2 + $0x156] sm:$0xff]
        %v5128 = vld [vmem:[#allocation2 + $0x176] sm:$0xff]
        %v5129 = vld [vmem:[#allocation2 + $0x196] sm:$0xff]
        %v5130 = vld [vmem:[#allocation2 + $0x1b6] sm:$0xff]
        %v5131 = vld [vmem:[#allocation2 + $0x1d6] sm:$0xff]
        %v5132 = vld [vmem:[#allocation2 + $0x1f6] sm:$0xff]
        %v5133 = vadd.f32 %v5085, %v4702
        %v5134 = vadd.f32 %v5086, %v5117
        %v5135 = vadd.f32 %v5087, %v4704
        %v5136 = vadd.f32 %v5088, %v5118
        %v5137 = vadd.f32 %v5089, %v4706
        %v5138 = vadd.f32 %v5090, %v5119
        %v5139 = vadd.f32 %v5091, %v4708
        %v5140 = vadd.f32 %v5092, %v5120
        %v5141 = vadd.f32 %v5093, %v4710
        %v5142 = vadd.f32 %v5094, %v5121
        %v5143 = vadd.f32 %v5095, %v4712
        %v5144 = vadd.f32 %v5096, %v5122
        %v5145 = vadd.f32 %v5097, %v4714
        %v5146 = vadd.f32 %v5098, %v5123
        %v5147 = vadd.f32 %v5099, %v4716
        %v5148 = vadd.f32 %v5100, %v5124
        %v5149 = vadd.f32 %v5101, %v4718
        %v5150 = vadd.f32 %v5102, %v5125
        %v5151 = vadd.f32 %v5103, %v4720
        %v5152 = vadd.f32 %v5104, %v5126
        %v5153 = vadd.f32 %v5105, %v4722
        %v5154 = vadd.f32 %v5106, %v5127
        %v5155 = vadd.f32 %v5107, %v4724
        %v5156 = vadd.f32 %v5108, %v5128
        %v5157 = vadd.f32 %v5109, %v4726
        %v5158 = vadd.f32 %v5110, %v5129
        %v5159 = vadd.f32 %v5111, %v4728
        %v5160 = vadd.f32 %v5112, %v5130
        %v5161 = vadd.f32 %v5113, %v4730
        %v5162 = vadd.f32 %v5114, %v5131
        %v5163 = vadd.f32 %v5115, %v4732
        %v5164 = vadd.f32 %v5116, %v5132
        %v5165 = vld [vmem:[#allocation2 + $0x17] sm:$0xff]
        %v5166 = vld [vmem:[#allocation2 + $0x37] sm:$0xff]
        %v5167 = vld [vmem:[#allocation2 + $0x57] sm:$0xff]
        %v5168 = vld [vmem:[#allocation2 + $0x77] sm:$0xff]
        %v5169 = vld [vmem:[#allocation2 + $0x97] sm:$0xff]
        %v5170 = vld [vmem:[#allocation2 + $0xb7] sm:$0xff]
        %v5171 = vld [vmem:[#allocation2 + $0xd7] sm:$0xff]
        %v5172 = vld [vmem:[#allocation2 + $0xf7] sm:$0xff]
        %v5173 = vld [vmem:[#allocation2 + $0x117] sm:$0xff]
        %v5174 = vld [vmem:[#allocation2 + $0x137] sm:$0xff]
        %v5175 = vld [vmem:[#allocation2 + $0x157] sm:$0xff]
        %v5176 = vld [vmem:[#allocation2 + $0x177] sm:$0xff]
        %v5177 = vld [vmem:[#allocation2 + $0x197] sm:$0xff]
        %v5178 = vld [vmem:[#allocation2 + $0x1b7] sm:$0xff]
        %v5179 = vld [vmem:[#allocation2 + $0x1d7] sm:$0xff]
        %v5180 = vld [vmem:[#allocation2 + $0x1f7] sm:$0xff]
        %v5181 = vadd.f32 %v5133, %v4766
        %v5182 = vadd.f32 %v5134, %v5165
        %v5183 = vadd.f32 %v5135, %v4768
        %v5184 = vadd.f32 %v5136, %v5166
        %v5185 = vadd.f32 %v5137, %v4770
        %v5186 = vadd.f32 %v5138, %v5167
        %v5187 = vadd.f32 %v5139, %v4772
        %v5188 = vadd.f32 %v5140, %v5168
        %v5189 = vadd.f32 %v5141, %v4774
        %v5190 = vadd.f32 %v5142, %v5169
        %v5191 = vadd.f32 %v5143, %v4776
        %v5192 = vadd.f32 %v5144, %v5170
        %v5193 = vadd.f32 %v5145, %v4778
        %v5194 = vadd.f32 %v5146, %v5171
        %v5195 = vadd.f32 %v5147, %v4780
        %v5196 = vadd.f32 %v5148, %v5172
        %v5197 = vadd.f32 %v5149, %v4782
        %v5198 = vadd.f32 %v5150, %v5173
        %v5199 = vadd.f32 %v5151, %v4784
        %v5200 = vadd.f32 %v5152, %v5174
        %v5201 = vadd.f32 %v5153, %v4786
        %v5202 = vadd.f32 %v5154, %v5175
        %v5203 = vadd.f32 %v5155, %v4788
        %v5204 = vadd.f32 %v5156, %v5176
        %v5205 = vadd.f32 %v5157, %v4790
        %v5206 = vadd.f32 %v5158, %v5177
        %v5207 = vadd.f32 %v5159, %v4792
        %v5208 = vadd.f32 %v5160, %v5178
        %v5209 = vadd.f32 %v5161, %v4794
        %v5210 = vadd.f32 %v5162, %v5179
        %v5211 = vadd.f32 %v5163, %v4796
        %v5212 = vadd.f32 %v5164, %v5180
        %v5213 = vld [vmem:[#allocation2 + $0x18] sm:$0xff]
        %v5214 = vld [vmem:[#allocation2 + $0x38] sm:$0xff]
        %v5215 = vld [vmem:[#allocation2 + $0x58] sm:$0xff]
        %v5216 = vld [vmem:[#allocation2 + $0x78] sm:$0xff]
        %v5217 = vld [vmem:[#allocation2 + $0x98] sm:$0xff]
        %v5218 = vld [vmem:[#allocation2 + $0xb8] sm:$0xff]
        %v5219 = vld [vmem:[#allocation2 + $0xd8] sm:$0xff]
        %v5220 = vld [vmem:[#allocation2 + $0xf8] sm:$0xff]
        %v5221 = vld [vmem:[#allocation2 + $0x118] sm:$0xff]
        %v5222 = vld [vmem:[#allocation2 + $0x138] sm:$0xff]
        %v5223 = vld [vmem:[#allocation2 + $0x158] sm:$0xff]
        %v5224 = vld [vmem:[#allocation2 + $0x178] sm:$0xff]
        %v5225 = vld [vmem:[#allocation2 + $0x198] sm:$0xff]
        %v5226 = vld [vmem:[#allocation2 + $0x1b8] sm:$0xff]
        %v5227 = vld [vmem:[#allocation2 + $0x1d8] sm:$0xff]
        %v5228 = vld [vmem:[#allocation2 + $0x1f8] sm:$0xff]
        %v5229 = vadd.f32 %v5181, %v4829
        %v5230 = vadd.f32 %v5182, %v5213
        %v5231 = vadd.f32 %v5183, %v4830
        %v5232 = vadd.f32 %v5184, %v5214
        %v5233 = vadd.f32 %v5185, %v4831
        %v5234 = vadd.f32 %v5186, %v5215
        %v5235 = vadd.f32 %v5187, %v4832
        %v5236 = vadd.f32 %v5188, %v5216
        %v5237 = vadd.f32 %v5189, %v4833
        %v5238 = vadd.f32 %v5190, %v5217
        %v5239 = vadd.f32 %v5191, %v4834
        %v5240 = vadd.f32 %v5192, %v5218
        %v5241 = vadd.f32 %v5193, %v4835
        %v5242 = vadd.f32 %v5194, %v5219
        %v5243 = vadd.f32 %v5195, %v4836
        %v5244 = vadd.f32 %v5196, %v5220
        %v5245 = vadd.f32 %v5197, %v4837
        %v5246 = vadd.f32 %v5198, %v5221
        %v5247 = vadd.f32 %v5199, %v4838
        %v5248 = vadd.f32 %v5200, %v5222
        %v5249 = vadd.f32 %v5201, %v4839
        %v5250 = vadd.f32 %v5202, %v5223
        %v5251 = vadd.f32 %v5203, %v4840
        %v5252 = vadd.f32 %v5204, %v5224
        %v5253 = vadd.f32 %v5205, %v4841
        %v5254 = vadd.f32 %v5206, %v5225
        %v5255 = vadd.f32 %v5207, %v4842
        %v5256 = vadd.f32 %v5208, %v5226
        %v5257 = vadd.f32 %v5209, %v4843
        %v5258 = vadd.f32 %v5210, %v5227
        %v5259 = vadd.f32 %v5211, %v4844
        %v5260 = vadd.f32 %v5212, %v5228
        %5261 = vst.msk [vmem:[%s1518] sm:$0xff] %vm239, %v5229
        %5262 = vst.msk [vmem:[%s1518 + $0x8] sm:$0xff] %vm239, %v5230
        %5263 = vst.msk [vmem:[%s1518 + $0x10] sm:$0xff] %vm239, %v5231
        %5264 = vst.msk [vmem:[%s1518 + $0x18] sm:$0xff] %vm239, %v5232
        %5265 = vst.msk [vmem:[%s1518 + $0x20] sm:$0xff] %vm239, %v5233
        %5266 = vst.msk [vmem:[%s1518 + $0x28] sm:$0xff] %vm239, %v5234
        %5267 = vst.msk [vmem:[%s1518 + $0x30] sm:$0xff] %vm239, %v5235
        %5268 = vst.msk [vmem:[%s1518 + $0x38] sm:$0xff] %vm239, %v5236
        %5269 = vst.msk [vmem:[%s1518 + $0x40] sm:$0xff] %vm239, %v5237
        %5270 = vst.msk [vmem:[%s1518 + $0x48] sm:$0xff] %vm239, %v5238
        %5271 = vst.msk [vmem:[%s1518 + $0x50] sm:$0xff] %vm239, %v5239
        %5272 = vst.msk [vmem:[%s1518 + $0x58] sm:$0xff] %vm239, %v5240
        %5273 = vst.msk [vmem:[%s1518 + $0x60] sm:$0xff] %vm239, %v5241
        %5274 = vst.msk [vmem:[%s1518 + $0x68] sm:$0xff] %vm239, %v5242
        %5275 = vst.msk [vmem:[%s1518 + $0x70] sm:$0xff] %vm239, %v5243
        %5276 = vst.msk [vmem:[%s1518 + $0x78] sm:$0xff] %vm239, %v5244
        %5277 = vst.msk [vmem:[%s1518 + $0x80] sm:$0xff] %vm239, %v5245
        %5278 = vst.msk [vmem:[%s1518 + $0x88] sm:$0xff] %vm239, %v5246
        %5279 = vst.msk [vmem:[%s1518 + $0x90] sm:$0xff] %vm239, %v5247
        %5280 = vst.msk [vmem:[%s1518 + $0x98] sm:$0xff] %vm239, %v5248
        %5281 = vst.msk [vmem:[%s1518 + $0xa0] sm:$0xff] %vm239, %v5249
        %5282 = vst.msk [vmem:[%s1518 + $0xa8] sm:$0xff] %vm239, %v5250
        %5283 = vst.msk [vmem:[%s1518 + $0xb0] sm:$0xff] %vm239, %v5251
        %5284 = vst.msk [vmem:[%s1518 + $0xb8] sm:$0xff] %vm239, %v5252
        %5285 = vst.msk [vmem:[%s1518 + $0xc0] sm:$0xff] %vm239, %v5253
        %5286 = vst.msk [vmem:[%s1518 + $0xc8] sm:$0xff] %vm239, %v5254
        %5287 = vst.msk [vmem:[%s1518 + $0xd0] sm:$0xff] %vm239, %v5255
        %5288 = vst.msk [vmem:[%s1518 + $0xd8] sm:$0xff] %vm239, %v5256
        %5289 = vst.msk [vmem:[%s1518 + $0xe0] sm:$0xff] %vm239, %v5257
        %5290 = vst.msk [vmem:[%s1518 + $0xe8] sm:$0xff] %vm239, %v5258
        %5291 = vst.msk [vmem:[%s1518 + $0xf0] sm:$0xff] %vm239, %v5259
        %5292 = vst.msk [vmem:[%s1518 + $0xf8] sm:$0xff] %vm239, %v5260
        %v5293 = vld [vmem:[#allocation3] sm:$0xff]
        %v5294 = vld [vmem:[#allocation3 + $0x8] sm:$0xff]
        %v5295 = vld [vmem:[#allocation3 + $0x10] sm:$0xff]
        %v5296 = vld [vmem:[#allocation3 + $0x18] sm:$0xff]
        %v5297 = vld [vmem:[#allocation3 + $0x20] sm:$0xff]
        %v5298 = vld [vmem:[#allocation3 + $0x28] sm:$0xff]
        %v5299 = vld [vmem:[#allocation3 + $0x30] sm:$0xff]
        %v5300 = vld [vmem:[#allocation3 + $0x38] sm:$0xff]
        %v5301 = vld [vmem:[#allocation3 + $0x40] sm:$0xff]
        %v5302 = vld [vmem:[#allocation3 + $0x48] sm:$0xff]
        %v5303 = vld [vmem:[#allocation3 + $0x50] sm:$0xff]
        %v5304 = vld [vmem:[#allocation3 + $0x58] sm:$0xff]
        %v5305 = vld [vmem:[#allocation3 + $0x60] sm:$0xff]
        %v5306 = vld [vmem:[#allocation3 + $0x68] sm:$0xff]
        %v5307 = vld [vmem:[#allocation3 + $0x70] sm:$0xff]
        %v5308 = vld [vmem:[#allocation3 + $0x78] sm:$0xff]
        %v5309 = vld [vmem:[#allocation3 + $0x80] sm:$0xff]
        %v5310 = vld [vmem:[#allocation3 + $0x88] sm:$0xff]
        %v5311 = vld [vmem:[#allocation3 + $0x90] sm:$0xff]
        %v5312 = vld [vmem:[#allocation3 + $0x98] sm:$0xff]
        %v5313 = vld [vmem:[#allocation3 + $0xa0] sm:$0xff]
        %v5314 = vld [vmem:[#allocation3 + $0xa8] sm:$0xff]
        %v5315 = vld [vmem:[#allocation3 + $0xb0] sm:$0xff]
        %v5316 = vld [vmem:[#allocation3 + $0xb8] sm:$0xff]
        %v5317 = vld [vmem:[#allocation3 + $0xc0] sm:$0xff]
        %v5318 = vld [vmem:[#allocation3 + $0xc8] sm:$0xff]
        %v5319 = vld [vmem:[#allocation3 + $0xd0] sm:$0xff]
        %v5320 = vld [vmem:[#allocation3 + $0xd8] sm:$0xff]
        %v5321 = vld [vmem:[#allocation3 + $0xe0] sm:$0xff]
        %v5322 = vld [vmem:[#allocation3 + $0xe8] sm:$0xff]
        %v5323 = vld [vmem:[#allocation3 + $0xf0] sm:$0xff]
        %v5324 = vld [vmem:[#allocation3 + $0xf8] sm:$0xff]
        %s5325 = scalar_lea.vmem [#allocation3], 16
        %v5326 = vld [vmem:[%s5325] sm:$0xff]
        %v5327 = vld [vmem:[%s5325 + $0x8] sm:$0xff]
        %v5328 = vld [vmem:[%s5325 + $0x10] sm:$0xff]
        %v5329 = vld [vmem:[%s5325 + $0x18] sm:$0xff]
        %v5330 = vld [vmem:[%s5325 + $0x20] sm:$0xff]
        %v5331 = vld [vmem:[%s5325 + $0x28] sm:$0xff]
        %v5332 = vld [vmem:[%s5325 + $0x30] sm:$0xff]
        %v5333 = vld [vmem:[%s5325 + $0x38] sm:$0xff]
        %v5334 = vld [vmem:[%s5325 + $0x40] sm:$0xff]
        %v5335 = vld [vmem:[%s5325 + $0x48] sm:$0xff]
        %v5336 = vld [vmem:[%s5325 + $0x50] sm:$0xff]
        %v5337 = vld [vmem:[%s5325 + $0x58] sm:$0xff]
        %v5338 = vld [vmem:[%s5325 + $0x60] sm:$0xff]
        %v5339 = vld [vmem:[%s5325 + $0x68] sm:$0xff]
        %v5340 = vld [vmem:[%s5325 + $0x70] sm:$0xff]
        %v5341 = vld [vmem:[%s5325 + $0x78] sm:$0xff]
        %v5342 = vld [vmem:[%s5325 + $0x80] sm:$0xff]
        %v5343 = vld [vmem:[%s5325 + $0x88] sm:$0xff]
        %v5344 = vld [vmem:[%s5325 + $0x90] sm:$0xff]
        %v5345 = vld [vmem:[%s5325 + $0x98] sm:$0xff]
        %v5346 = vld [vmem:[%s5325 + $0xa0] sm:$0xff]
        %v5347 = vld [vmem:[%s5325 + $0xa8] sm:$0xff]
        %v5348 = vld [vmem:[%s5325 + $0xb0] sm:$0xff]
        %v5349 = vld [vmem:[%s5325 + $0xb8] sm:$0xff]
        %v5350 = vld [vmem:[%s5325 + $0xc0] sm:$0xff]
        %v5351 = vld [vmem:[%s5325 + $0xc8] sm:$0xff]
        %v5352 = vld [vmem:[%s5325 + $0xd0] sm:$0xff]
        %v5353 = vld [vmem:[%s5325 + $0xd8] sm:$0xff]
        %v5354 = vld [vmem:[%s5325 + $0xe0] sm:$0xff]
        %v5355 = vld [vmem:[%s5325 + $0xe8] sm:$0xff]
        %v5356 = vld [vmem:[%s5325 + $0xf0] sm:$0xff]
        %v5357 = vld [vmem:[%s5325 + $0xf8] sm:$0xff]
        %v5358 = vadd.f32 %v5293, %v5326
        %v5359 = vadd.f32 %v5294, %v5327
        %v5360 = vadd.f32 %v5295, %v5328
        %v5361 = vadd.f32 %v5296, %v5329
        %v5362 = vadd.f32 %v5297, %v5330
        %v5363 = vadd.f32 %v5298, %v5331
        %v5364 = vadd.f32 %v5299, %v5332
        %v5365 = vadd.f32 %v5300, %v5333
        %v5366 = vadd.f32 %v5301, %v5334
        %v5367 = vadd.f32 %v5302, %v5335
        %v5368 = vadd.f32 %v5303, %v5336
        %v5369 = vadd.f32 %v5304, %v5337
        %v5370 = vadd.f32 %v5305, %v5338
        %v5371 = vadd.f32 %v5306, %v5339
        %v5372 = vadd.f32 %v5307, %v5340
        %v5373 = vadd.f32 %v5308, %v5341
        %v5374 = vadd.f32 %v5309, %v5342
        %v5375 = vadd.f32 %v5310, %v5343
        %v5376 = vadd.f32 %v5311, %v5344
        %v5377 = vadd.f32 %v5312, %v5345
        %v5378 = vadd.f32 %v5313, %v5346
        %v5379 = vadd.f32 %v5314, %v5347
        %v5380 = vadd.f32 %v5315, %v5348
        %v5381 = vadd.f32 %v5316, %v5349
        %v5382 = vadd.f32 %v5317, %v5350
        %v5383 = vadd.f32 %v5318, %v5351
        %v5384 = vadd.f32 %v5319, %v5352
        %v5385 = vadd.f32 %v5320, %v5353
        %v5386 = vadd.f32 %v5321, %v5354
        %v5387 = vadd.f32 %v5322, %v5355
        %v5388 = vadd.f32 %v5323, %v5356
        %v5389 = vadd.f32 %v5324, %v5357
        %s5390 = scalar_lea.vmem [#allocation3], 32
        %v5391 = vld [vmem:[%s5390] sm:$0xff]
        %v5392 = vld [vmem:[%s5390 + $0x8] sm:$0xff]
        %v5393 = vld [vmem:[%s5390 + $0x10] sm:$0xff]
        %v5394 = vld [vmem:[%s5390 + $0x18] sm:$0xff]
        %v5395 = vld [vmem:[%s5390 + $0x20] sm:$0xff]
        %v5396 = vld [vmem:[%s5390 + $0x28] sm:$0xff]
        %v5397 = vld [vmem:[%s5390 + $0x30] sm:$0xff]
        %v5398 = vld [vmem:[%s5390 + $0x38] sm:$0xff]
        %v5399 = vld [vmem:[%s5390 + $0x40] sm:$0xff]
        %v5400 = vld [vmem:[%s5390 + $0x48] sm:$0xff]
        %v5401 = vld [vmem:[%s5390 + $0x50] sm:$0xff]
        %v5402 = vld [vmem:[%s5390 + $0x58] sm:$0xff]
        %v5403 = vld [vmem:[%s5390 + $0x60] sm:$0xff]
        %v5404 = vld [vmem:[%s5390 + $0x68] sm:$0xff]
        %v5405 = vld [vmem:[%s5390 + $0x70] sm:$0xff]
        %v5406 = vld [vmem:[%s5390 + $0x78] sm:$0xff]
        %v5407 = vld [vmem:[%s5390 + $0x80] sm:$0xff]
        %v5408 = vld [vmem:[%s5390 + $0x88] sm:$0xff]
        %v5409 = vld [vmem:[%s5390 + $0x90] sm:$0xff]
        %v5410 = vld [vmem:[%s5390 + $0x98] sm:$0xff]
        %v5411 = vld [vmem:[%s5390 + $0xa0] sm:$0xff]
        %v5412 = vld [vmem:[%s5390 + $0xa8] sm:$0xff]
        %v5413 = vld [vmem:[%s5390 + $0xb0] sm:$0xff]
        %v5414 = vld [vmem:[%s5390 + $0xb8] sm:$0xff]
        %v5415 = vld [vmem:[%s5390 + $0xc0] sm:$0xff]
        %v5416 = vld [vmem:[%s5390 + $0xc8] sm:$0xff]
        %v5417 = vld [vmem:[%s5390 + $0xd0] sm:$0xff]
        %v5418 = vld [vmem:[%s5390 + $0xd8] sm:$0xff]
        %v5419 = vld [vmem:[%s5390 + $0xe0] sm:$0xff]
        %v5420 = vld [vmem:[%s5390 + $0xe8] sm:$0xff]
        %v5421 = vld [vmem:[%s5390 + $0xf0] sm:$0xff]
        %v5422 = vld [vmem:[%s5390 + $0xf8] sm:$0xff]
        %v5423 = vadd.f32 %v5358, %v5391
        %v5424 = vadd.f32 %v5359, %v5392
        %v5425 = vadd.f32 %v5360, %v5393
        %v5426 = vadd.f32 %v5361, %v5394
        %v5427 = vadd.f32 %v5362, %v5395
        %v5428 = vadd.f32 %v5363, %v5396
        %v5429 = vadd.f32 %v5364, %v5397
        %v5430 = vadd.f32 %v5365, %v5398
        %v5431 = vadd.f32 %v5366, %v5399
        %v5432 = vadd.f32 %v5367, %v5400
        %v5433 = vadd.f32 %v5368, %v5401
        %v5434 = vadd.f32 %v5369, %v5402
        %v5435 = vadd.f32 %v5370, %v5403
        %v5436 = vadd.f32 %v5371, %v5404
        %v5437 = vadd.f32 %v5372, %v5405
        %v5438 = vadd.f32 %v5373, %v5406
        %v5439 = vadd.f32 %v5374, %v5407
        %v5440 = vadd.f32 %v5375, %v5408
        %v5441 = vadd.f32 %v5376, %v5409
        %v5442 = vadd.f32 %v5377, %v5410
        %v5443 = vadd.f32 %v5378, %v5411
        %v5444 = vadd.f32 %v5379, %v5412
        %v5445 = vadd.f32 %v5380, %v5413
        %v5446 = vadd.f32 %v5381, %v5414
        %v5447 = vadd.f32 %v5382, %v5415
        %v5448 = vadd.f32 %v5383, %v5416
        %v5449 = vadd.f32 %v5384, %v5417
        %v5450 = vadd.f32 %v5385, %v5418
        %v5451 = vadd.f32 %v5386, %v5419
        %v5452 = vadd.f32 %v5387, %v5420
        %v5453 = vadd.f32 %v5388, %v5421
        %v5454 = vadd.f32 %v5389, %v5422
        %s5455 = scalar_lea.vmem [#allocation3], 48
        %v5456 = vld [vmem:[%s5455] sm:$0xff]
        %v5457 = vld [vmem:[%s5455 + $0x8] sm:$0xff]
        %v5458 = vld [vmem:[%s5455 + $0x10] sm:$0xff]
        %v5459 = vld [vmem:[%s5455 + $0x18] sm:$0xff]
        %v5460 = vld [vmem:[%s5455 + $0x20] sm:$0xff]
        %v5461 = vld [vmem:[%s5455 + $0x28] sm:$0xff]
        %v5462 = vld [vmem:[%s5455 + $0x30] sm:$0xff]
        %v5463 = vld [vmem:[%s5455 + $0x38] sm:$0xff]
        %v5464 = vld [vmem:[%s5455 + $0x40] sm:$0xff]
        %v5465 = vld [vmem:[%s5455 + $0x48] sm:$0xff]
        %v5466 = vld [vmem:[%s5455 + $0x50] sm:$0xff]
        %v5467 = vld [vmem:[%s5455 + $0x58] sm:$0xff]
        %v5468 = vld [vmem:[%s5455 + $0x60] sm:$0xff]
        %v5469 = vld [vmem:[%s5455 + $0x68] sm:$0xff]
        %v5470 = vld [vmem:[%s5455 + $0x70] sm:$0xff]
        %v5471 = vld [vmem:[%s5455 + $0x78] sm:$0xff]
        %v5472 = vld [vmem:[%s5455 + $0x80] sm:$0xff]
        %v5473 = vld [vmem:[%s5455 + $0x88] sm:$0xff]
        %v5474 = vld [vmem:[%s5455 + $0x90] sm:$0xff]
        %v5475 = vld [vmem:[%s5455 + $0x98] sm:$0xff]
        %v5476 = vld [vmem:[%s5455 + $0xa0] sm:$0xff]
        %v5477 = vld [vmem:[%s5455 + $0xa8] sm:$0xff]
        %v5478 = vld [vmem:[%s5455 + $0xb0] sm:$0xff]
        %v5479 = vld [vmem:[%s5455 + $0xb8] sm:$0xff]
        %v5480 = vld [vmem:[%s5455 + $0xc0] sm:$0xff]
        %v5481 = vld [vmem:[%s5455 + $0xc8] sm:$0xff]
        %v5482 = vld [vmem:[%s5455 + $0xd0] sm:$0xff]
        %v5483 = vld [vmem:[%s5455 + $0xd8] sm:$0xff]
        %v5484 = vld [vmem:[%s5455 + $0xe0] sm:$0xff]
        %v5485 = vld [vmem:[%s5455 + $0xe8] sm:$0xff]
        %v5486 = vld [vmem:[%s5455 + $0xf0] sm:$0xff]
        %v5487 = vld [vmem:[%s5455 + $0xf8] sm:$0xff]
        %v5488 = vadd.f32 %v5423, %v5456
        %v5489 = vadd.f32 %v5424, %v5457
        %v5490 = vadd.f32 %v5425, %v5458
        %v5491 = vadd.f32 %v5426, %v5459
        %v5492 = vadd.f32 %v5427, %v5460
        %v5493 = vadd.f32 %v5428, %v5461
        %v5494 = vadd.f32 %v5429, %v5462
        %v5495 = vadd.f32 %v5430, %v5463
        %v5496 = vadd.f32 %v5431, %v5464
        %v5497 = vadd.f32 %v5432, %v5465
        %v5498 = vadd.f32 %v5433, %v5466
        %v5499 = vadd.f32 %v5434, %v5467
        %v5500 = vadd.f32 %v5435, %v5468
        %v5501 = vadd.f32 %v5436, %v5469
        %v5502 = vadd.f32 %v5437, %v5470
        %v5503 = vadd.f32 %v5438, %v5471
        %v5504 = vadd.f32 %v5439, %v5472
        %v5505 = vadd.f32 %v5440, %v5473
        %v5506 = vadd.f32 %v5441, %v5474
        %v5507 = vadd.f32 %v5442, %v5475
        %v5508 = vadd.f32 %v5443, %v5476
        %v5509 = vadd.f32 %v5444, %v5477
        %v5510 = vadd.f32 %v5445, %v5478
        %v5511 = vadd.f32 %v5446, %v5479
        %v5512 = vadd.f32 %v5447, %v5480
        %v5513 = vadd.f32 %v5448, %v5481
        %v5514 = vadd.f32 %v5449, %v5482
        %v5515 = vadd.f32 %v5450, %v5483
        %v5516 = vadd.f32 %v5451, %v5484
        %v5517 = vadd.f32 %v5452, %v5485
        %v5518 = vadd.f32 %v5453, %v5486
        %v5519 = vadd.f32 %v5454, %v5487
        %v5520 = vld [vmem:[%s3101] sm:$0xff]
        %v5521 = vld [vmem:[%s3101 + $0x8] sm:$0xff]
        %v5522 = vld [vmem:[%s3101 + $0x10] sm:$0xff]
        %v5523 = vld [vmem:[%s3101 + $0x18] sm:$0xff]
        %v5524 = vld [vmem:[%s3101 + $0x20] sm:$0xff]
        %v5525 = vld [vmem:[%s3101 + $0x28] sm:$0xff]
        %v5526 = vld [vmem:[%s3101 + $0x30] sm:$0xff]
        %v5527 = vld [vmem:[%s3101 + $0x38] sm:$0xff]
        %v5528 = vld [vmem:[%s3101 + $0x40] sm:$0xff]
        %v5529 = vld [vmem:[%s3101 + $0x48] sm:$0xff]
        %v5530 = vld [vmem:[%s3101 + $0x50] sm:$0xff]
        %v5531 = vld [vmem:[%s3101 + $0x58] sm:$0xff]
        %v5532 = vld [vmem:[%s3101 + $0x60] sm:$0xff]
        %v5533 = vld [vmem:[%s3101 + $0x68] sm:$0xff]
        %v5534 = vld [vmem:[%s3101 + $0x70] sm:$0xff]
        %v5535 = vld [vmem:[%s3101 + $0x78] sm:$0xff]
        %v5536 = vld [vmem:[%s3101 + $0x80] sm:$0xff]
        %v5537 = vld [vmem:[%s3101 + $0x88] sm:$0xff]
        %v5538 = vld [vmem:[%s3101 + $0x90] sm:$0xff]
        %v5539 = vld [vmem:[%s3101 + $0x98] sm:$0xff]
        %v5540 = vld [vmem:[%s3101 + $0xa0] sm:$0xff]
        %v5541 = vld [vmem:[%s3101 + $0xa8] sm:$0xff]
        %v5542 = vld [vmem:[%s3101 + $0xb0] sm:$0xff]
        %v5543 = vld [vmem:[%s3101 + $0xb8] sm:$0xff]
        %v5544 = vld [vmem:[%s3101 + $0xc0] sm:$0xff]
        %v5545 = vld [vmem:[%s3101 + $0xc8] sm:$0xff]
        %v5546 = vld [vmem:[%s3101 + $0xd0] sm:$0xff]
        %v5547 = vld [vmem:[%s3101 + $0xd8] sm:$0xff]
        %v5548 = vld [vmem:[%s3101 + $0xe0] sm:$0xff]
        %v5549 = vld [vmem:[%s3101 + $0xe8] sm:$0xff]
        %v5550 = vld [vmem:[%s3101 + $0xf0] sm:$0xff]
        %v5551 = vld [vmem:[%s3101 + $0xf8] sm:$0xff]
        %v5552 = vadd.f32 %v5488, %v5520
        %v5553 = vadd.f32 %v5489, %v5521
        %v5554 = vadd.f32 %v5490, %v5522
        %v5555 = vadd.f32 %v5491, %v5523
        %v5556 = vadd.f32 %v5492, %v5524
        %v5557 = vadd.f32 %v5493, %v5525
        %v5558 = vadd.f32 %v5494, %v5526
        %v5559 = vadd.f32 %v5495, %v5527
        %v5560 = vadd.f32 %v5496, %v5528
        %v5561 = vadd.f32 %v5497, %v5529
        %v5562 = vadd.f32 %v5498, %v5530
        %v5563 = vadd.f32 %v5499, %v5531
        %v5564 = vadd.f32 %v5500, %v5532
        %v5565 = vadd.f32 %v5501, %v5533
        %v5566 = vadd.f32 %v5502, %v5534
        %v5567 = vadd.f32 %v5503, %v5535
        %v5568 = vadd.f32 %v5504, %v5536
        %v5569 = vadd.f32 %v5505, %v5537
        %v5570 = vadd.f32 %v5506, %v5538
        %v5571 = vadd.f32 %v5507, %v5539
        %v5572 = vadd.f32 %v5508, %v5540
        %v5573 = vadd.f32 %v5509, %v5541
        %v5574 = vadd.f32 %v5510, %v5542
        %v5575 = vadd.f32 %v5511, %v5543
        %v5576 = vadd.f32 %v5512, %v5544
        %v5577 = vadd.f32 %v5513, %v5545
        %v5578 = vadd.f32 %v5514, %v5546
        %v5579 = vadd.f32 %v5515, %v5547
        %v5580 = vadd.f32 %v5516, %v5548
        %v5581 = vadd.f32 %v5517, %v5549
        %v5582 = vadd.f32 %v5518, %v5550
        %v5583 = vadd.f32 %v5519, %v5551
        %v5584 = vld [vmem:[%s3134] sm:$0xff]
        %v5585 = vld [vmem:[%s3134 + $0x8] sm:$0xff]
        %v5586 = vld [vmem:[%s3134 + $0x10] sm:$0xff]
        %v5587 = vld [vmem:[%s3134 + $0x18] sm:$0xff]
        %v5588 = vld [vmem:[%s3134 + $0x20] sm:$0xff]
        %v5589 = vld [vmem:[%s3134 + $0x28] sm:$0xff]
        %v5590 = vld [vmem:[%s3134 + $0x30] sm:$0xff]
        %v5591 = vld [vmem:[%s3134 + $0x38] sm:$0xff]
        %v5592 = vld [vmem:[%s3134 + $0x40] sm:$0xff]
        %v5593 = vld [vmem:[%s3134 + $0x48] sm:$0xff]
        %v5594 = vld [vmem:[%s3134 + $0x50] sm:$0xff]
        %v5595 = vld [vmem:[%s3134 + $0x58] sm:$0xff]
        %v5596 = vld [vmem:[%s3134 + $0x60] sm:$0xff]
        %v5597 = vld [vmem:[%s3134 + $0x68] sm:$0xff]
        %v5598 = vld [vmem:[%s3134 + $0x70] sm:$0xff]
        %v5599 = vld [vmem:[%s3134 + $0x78] sm:$0xff]
        %v5600 = vld [vmem:[%s3134 + $0x80] sm:$0xff]
        %v5601 = vld [vmem:[%s3134 + $0x88] sm:$0xff]
        %v5602 = vld [vmem:[%s3134 + $0x90] sm:$0xff]
        %v5603 = vld [vmem:[%s3134 + $0x98] sm:$0xff]
        %v5604 = vld [vmem:[%s3134 + $0xa0] sm:$0xff]
        %v5605 = vld [vmem:[%s3134 + $0xa8] sm:$0xff]
        %v5606 = vld [vmem:[%s3134 + $0xb0] sm:$0xff]
        %v5607 = vld [vmem:[%s3134 + $0xb8] sm:$0xff]
        %v5608 = vld [vmem:[%s3134 + $0xc0] sm:$0xff]
        %v5609 = vld [vmem:[%s3134 + $0xc8] sm:$0xff]
        %v5610 = vld [vmem:[%s3134 + $0xd0] sm:$0xff]
        %v5611 = vld [vmem:[%s3134 + $0xd8] sm:$0xff]
        %v5612 = vld [vmem:[%s3134 + $0xe0] sm:$0xff]
        %v5613 = vld [vmem:[%s3134 + $0xe8] sm:$0xff]
        %v5614 = vld [vmem:[%s3134 + $0xf0] sm:$0xff]
        %v5615 = vld [vmem:[%s3134 + $0xf8] sm:$0xff]
        %v5616 = vadd.f32 %v5552, %v5584
        %v5617 = vadd.f32 %v5553, %v5585
        %v5618 = vadd.f32 %v5554, %v5586
        %v5619 = vadd.f32 %v5555, %v5587
        %v5620 = vadd.f32 %v5556, %v5588
        %v5621 = vadd.f32 %v5557, %v5589
        %v5622 = vadd.f32 %v5558, %v5590
        %v5623 = vadd.f32 %v5559, %v5591
        %v5624 = vadd.f32 %v5560, %v5592
        %v5625 = vadd.f32 %v5561, %v5593
        %v5626 = vadd.f32 %v5562, %v5594
        %v5627 = vadd.f32 %v5563, %v5595
        %v5628 = vadd.f32 %v5564, %v5596
        %v5629 = vadd.f32 %v5565, %v5597
        %v5630 = vadd.f32 %v5566, %v5598
        %v5631 = vadd.f32 %v5567, %v5599
        %v5632 = vadd.f32 %v5568, %v5600
        %v5633 = vadd.f32 %v5569, %v5601
        %v5634 = vadd.f32 %v5570, %v5602
        %v5635 = vadd.f32 %v5571, %v5603
        %v5636 = vadd.f32 %v5572, %v5604
        %v5637 = vadd.f32 %v5573, %v5605
        %v5638 = vadd.f32 %v5574, %v5606
        %v5639 = vadd.f32 %v5575, %v5607
        %v5640 = vadd.f32 %v5576, %v5608
        %v5641 = vadd.f32 %v5577, %v5609
        %v5642 = vadd.f32 %v5578, %v5610
        %v5643 = vadd.f32 %v5579, %v5611
        %v5644 = vadd.f32 %v5580, %v5612
        %v5645 = vadd.f32 %v5581, %v5613
        %v5646 = vadd.f32 %v5582, %v5614
        %v5647 = vadd.f32 %v5583, %v5615
        %v5648 = vld [vmem:[%s1551] sm:$0xff]
        %v5649 = vld [vmem:[%s1551 + $0x8] sm:$0xff]
        %v5650 = vld [vmem:[%s1551 + $0x10] sm:$0xff]
        %v5651 = vld [vmem:[%s1551 + $0x18] sm:$0xff]
        %v5652 = vld [vmem:[%s1551 + $0x20] sm:$0xff]
        %v5653 = vld [vmem:[%s1551 + $0x28] sm:$0xff]
        %v5654 = vld [vmem:[%s1551 + $0x30] sm:$0xff]
        %v5655 = vld [vmem:[%s1551 + $0x38] sm:$0xff]
        %v5656 = vld [vmem:[%s1551 + $0x40] sm:$0xff]
        %v5657 = vld [vmem:[%s1551 + $0x48] sm:$0xff]
        %v5658 = vld [vmem:[%s1551 + $0x50] sm:$0xff]
        %v5659 = vld [vmem:[%s1551 + $0x58] sm:$0xff]
        %v5660 = vld [vmem:[%s1551 + $0x60] sm:$0xff]
        %v5661 = vld [vmem:[%s1551 + $0x68] sm:$0xff]
        %v5662 = vld [vmem:[%s1551 + $0x70] sm:$0xff]
        %v5663 = vld [vmem:[%s1551 + $0x78] sm:$0xff]
        %v5664 = vld [vmem:[%s1551 + $0x80] sm:$0xff]
        %v5665 = vld [vmem:[%s1551 + $0x88] sm:$0xff]
        %v5666 = vld [vmem:[%s1551 + $0x90] sm:$0xff]
        %v5667 = vld [vmem:[%s1551 + $0x98] sm:$0xff]
        %v5668 = vld [vmem:[%s1551 + $0xa0] sm:$0xff]
        %v5669 = vld [vmem:[%s1551 + $0xa8] sm:$0xff]
        %v5670 = vld [vmem:[%s1551 + $0xb0] sm:$0xff]
        %v5671 = vld [vmem:[%s1551 + $0xb8] sm:$0xff]
        %v5672 = vld [vmem:[%s1551 + $0xc0] sm:$0xff]
        %v5673 = vld [vmem:[%s1551 + $0xc8] sm:$0xff]
        %v5674 = vld [vmem:[%s1551 + $0xd0] sm:$0xff]
        %v5675 = vld [vmem:[%s1551 + $0xd8] sm:$0xff]
        %v5676 = vld [vmem:[%s1551 + $0xe0] sm:$0xff]
        %v5677 = vld [vmem:[%s1551 + $0xe8] sm:$0xff]
        %v5678 = vld [vmem:[%s1551 + $0xf0] sm:$0xff]
        %v5679 = vld [vmem:[%s1551 + $0xf8] sm:$0xff]
        %v5680 = vadd.f32 %v5616, %v5648
        %v5681 = vadd.f32 %v5617, %v5649
        %v5682 = vadd.f32 %v5618, %v5650
        %v5683 = vadd.f32 %v5619, %v5651
        %v5684 = vadd.f32 %v5620, %v5652
        %v5685 = vadd.f32 %v5621, %v5653
        %v5686 = vadd.f32 %v5622, %v5654
        %v5687 = vadd.f32 %v5623, %v5655
        %v5688 = vadd.f32 %v5624, %v5656
        %v5689 = vadd.f32 %v5625, %v5657
        %v5690 = vadd.f32 %v5626, %v5658
        %v5691 = vadd.f32 %v5627, %v5659
        %v5692 = vadd.f32 %v5628, %v5660
        %v5693 = vadd.f32 %v5629, %v5661
        %v5694 = vadd.f32 %v5630, %v5662
        %v5695 = vadd.f32 %v5631, %v5663
        %v5696 = vadd.f32 %v5632, %v5664
        %v5697 = vadd.f32 %v5633, %v5665
        %v5698 = vadd.f32 %v5634, %v5666
        %v5699 = vadd.f32 %v5635, %v5667
        %v5700 = vadd.f32 %v5636, %v5668
        %v5701 = vadd.f32 %v5637, %v5669
        %v5702 = vadd.f32 %v5638, %v5670
        %v5703 = vadd.f32 %v5639, %v5671
        %v5704 = vadd.f32 %v5640, %v5672
        %v5705 = vadd.f32 %v5641, %v5673
        %v5706 = vadd.f32 %v5642, %v5674
        %v5707 = vadd.f32 %v5643, %v5675
        %v5708 = vadd.f32 %v5644, %v5676
        %v5709 = vadd.f32 %v5645, %v5677
        %v5710 = vadd.f32 %v5646, %v5678
        %v5711 = vadd.f32 %v5647, %v5679
        %v5712 = vld [vmem:[%s1584] sm:$0xff]
        %v5713 = vld [vmem:[%s1584 + $0x8] sm:$0xff]
        %v5714 = vld [vmem:[%s1584 + $0x10] sm:$0xff]
        %v5715 = vld [vmem:[%s1584 + $0x18] sm:$0xff]
        %v5716 = vld [vmem:[%s1584 + $0x20] sm:$0xff]
        %v5717 = vld [vmem:[%s1584 + $0x28] sm:$0xff]
        %v5718 = vld [vmem:[%s1584 + $0x30] sm:$0xff]
        %v5719 = vld [vmem:[%s1584 + $0x38] sm:$0xff]
        %v5720 = vld [vmem:[%s1584 + $0x40] sm:$0xff]
        %v5721 = vld [vmem:[%s1584 + $0x48] sm:$0xff]
        %v5722 = vld [vmem:[%s1584 + $0x50] sm:$0xff]
        %v5723 = vld [vmem:[%s1584 + $0x58] sm:$0xff]
        %v5724 = vld [vmem:[%s1584 + $0x60] sm:$0xff]
        %v5725 = vld [vmem:[%s1584 + $0x68] sm:$0xff]
        %v5726 = vld [vmem:[%s1584 + $0x70] sm:$0xff]
        %v5727 = vld [vmem:[%s1584 + $0x78] sm:$0xff]
        %v5728 = vld [vmem:[%s1584 + $0x80] sm:$0xff]
        %v5729 = vld [vmem:[%s1584 + $0x88] sm:$0xff]
        %v5730 = vld [vmem:[%s1584 + $0x90] sm:$0xff]
        %v5731 = vld [vmem:[%s1584 + $0x98] sm:$0xff]
        %v5732 = vld [vmem:[%s1584 + $0xa0] sm:$0xff]
        %v5733 = vld [vmem:[%s1584 + $0xa8] sm:$0xff]
        %v5734 = vld [vmem:[%s1584 + $0xb0] sm:$0xff]
        %v5735 = vld [vmem:[%s1584 + $0xb8] sm:$0xff]
        %v5736 = vld [vmem:[%s1584 + $0xc0] sm:$0xff]
        %v5737 = vld [vmem:[%s1584 + $0xc8] sm:$0xff]
        %v5738 = vld [vmem:[%s1584 + $0xd0] sm:$0xff]
        %v5739 = vld [vmem:[%s1584 + $0xd8] sm:$0xff]
        %v5740 = vld [vmem:[%s1584 + $0xe0] sm:$0xff]
        %v5741 = vld [vmem:[%s1584 + $0xe8] sm:$0xff]
        %v5742 = vld [vmem:[%s1584 + $0xf0] sm:$0xff]
        %v5743 = vld [vmem:[%s1584 + $0xf8] sm:$0xff]
        %v5744 = vadd.f32 %v5680, %v5712
        %v5745 = vadd.f32 %v5681, %v5713
        %v5746 = vadd.f32 %v5682, %v5714
        %v5747 = vadd.f32 %v5683, %v5715
        %v5748 = vadd.f32 %v5684, %v5716
        %v5749 = vadd.f32 %v5685, %v5717
        %v5750 = vadd.f32 %v5686, %v5718
        %v5751 = vadd.f32 %v5687, %v5719
        %v5752 = vadd.f32 %v5688, %v5720
        %v5753 = vadd.f32 %v5689, %v5721
        %v5754 = vadd.f32 %v5690, %v5722
        %v5755 = vadd.f32 %v5691, %v5723
        %v5756 = vadd.f32 %v5692, %v5724
        %v5757 = vadd.f32 %v5693, %v5725
        %v5758 = vadd.f32 %v5694, %v5726
        %v5759 = vadd.f32 %v5695, %v5727
        %v5760 = vadd.f32 %v5696, %v5728
        %v5761 = vadd.f32 %v5697, %v5729
        %v5762 = vadd.f32 %v5698, %v5730
        %v5763 = vadd.f32 %v5699, %v5731
        %v5764 = vadd.f32 %v5700, %v5732
        %v5765 = vadd.f32 %v5701, %v5733
        %v5766 = vadd.f32 %v5702, %v5734
        %v5767 = vadd.f32 %v5703, %v5735
        %v5768 = vadd.f32 %v5704, %v5736
        %v5769 = vadd.f32 %v5705, %v5737
        %v5770 = vadd.f32 %v5706, %v5738
        %v5771 = vadd.f32 %v5707, %v5739
        %v5772 = vadd.f32 %v5708, %v5740
        %v5773 = vadd.f32 %v5709, %v5741
        %v5774 = vadd.f32 %v5710, %v5742
        %v5775 = vadd.f32 %v5711, %v5743
        %v5776 = vld [vmem:[%s1518] sm:$0xff]
        %v5777 = vld [vmem:[%s1518 + $0x8] sm:$0xff]
        %v5778 = vld [vmem:[%s1518 + $0x10] sm:$0xff]
        %v5779 = vld [vmem:[%s1518 + $0x18] sm:$0xff]
        %v5780 = vld [vmem:[%s1518 + $0x20] sm:$0xff]
        %v5781 = vld [vmem:[%s1518 + $0x28] sm:$0xff]
        %v5782 = vld [vmem:[%s1518 + $0x30] sm:$0xff]
        %v5783 = vld [vmem:[%s1518 + $0x38] sm:$0xff]
        %v5784 = vld [vmem:[%s1518 + $0x40] sm:$0xff]
        %v5785 = vld [vmem:[%s1518 + $0x48] sm:$0xff]
        %v5786 = vld [vmem:[%s1518 + $0x50] sm:$0xff]
        %v5787 = vld [vmem:[%s1518 + $0x58] sm:$0xff]
        %v5788 = vld [vmem:[%s1518 + $0x60] sm:$0xff]
        %v5789 = vld [vmem:[%s1518 + $0x68] sm:$0xff]
        %v5790 = vld [vmem:[%s1518 + $0x70] sm:$0xff]
        %v5791 = vld [vmem:[%s1518 + $0x78] sm:$0xff]
        %v5792 = vld [vmem:[%s1518 + $0x80] sm:$0xff]
        %v5793 = vld [vmem:[%s1518 + $0x88] sm:$0xff]
        %v5794 = vld [vmem:[%s1518 + $0x90] sm:$0xff]
        %v5795 = vld [vmem:[%s1518 + $0x98] sm:$0xff]
        %v5796 = vld [vmem:[%s1518 + $0xa0] sm:$0xff]
        %v5797 = vld [vmem:[%s1518 + $0xa8] sm:$0xff]
        %v5798 = vld [vmem:[%s1518 + $0xb0] sm:$0xff]
        %v5799 = vld [vmem:[%s1518 + $0xb8] sm:$0xff]
        %v5800 = vld [vmem:[%s1518 + $0xc0] sm:$0xff]
        %v5801 = vld [vmem:[%s1518 + $0xc8] sm:$0xff]
        %v5802 = vld [vmem:[%s1518 + $0xd0] sm:$0xff]
        %v5803 = vld [vmem:[%s1518 + $0xd8] sm:$0xff]
        %v5804 = vld [vmem:[%s1518 + $0xe0] sm:$0xff]
        %v5805 = vld [vmem:[%s1518 + $0xe8] sm:$0xff]
        %v5806 = vld [vmem:[%s1518 + $0xf0] sm:$0xff]
        %v5807 = vld [vmem:[%s1518 + $0xf8] sm:$0xff]
        %v5808 = vadd.f32 %v5744, %v5776
        %v5809 = vadd.f32 %v5745, %v5777
        %v5810 = vadd.f32 %v5746, %v5778
        %v5811 = vadd.f32 %v5747, %v5779
        %v5812 = vadd.f32 %v5748, %v5780
        %v5813 = vadd.f32 %v5749, %v5781
        %v5814 = vadd.f32 %v5750, %v5782
        %v5815 = vadd.f32 %v5751, %v5783
        %v5816 = vadd.f32 %v5752, %v5784
        %v5817 = vadd.f32 %v5753, %v5785
        %v5818 = vadd.f32 %v5754, %v5786
        %v5819 = vadd.f32 %v5755, %v5787
        %v5820 = vadd.f32 %v5756, %v5788
        %v5821 = vadd.f32 %v5757, %v5789
        %v5822 = vadd.f32 %v5758, %v5790
        %v5823 = vadd.f32 %v5759, %v5791
        %v5824 = vadd.f32 %v5760, %v5792
        %v5825 = vadd.f32 %v5761, %v5793
        %v5826 = vadd.f32 %v5762, %v5794
        %v5827 = vadd.f32 %v5763, %v5795
        %v5828 = vadd.f32 %v5764, %v5796
        %v5829 = vadd.f32 %v5765, %v5797
        %v5830 = vadd.f32 %v5766, %v5798
        %v5831 = vadd.f32 %v5767, %v5799
        %v5832 = vadd.f32 %v5768, %v5800
        %v5833 = vadd.f32 %v5769, %v5801
        %v5834 = vadd.f32 %v5770, %v5802
        %v5835 = vadd.f32 %v5771, %v5803
        %v5836 = vadd.f32 %v5772, %v5804
        %v5837 = vadd.f32 %v5773, %v5805
        %v5838 = vadd.f32 %v5774, %v5806
        %v5839 = vadd.f32 %v5775, %v5807
        %v5840 = vld [vmem:[%s1713] sm:$0xff]
        %v5841 = vld [vmem:[%s1713 + $0x8] sm:$0xff]
        %v5842 = vld [vmem:[%s1713 + $0x10] sm:$0xff]
        %v5843 = vld [vmem:[%s1713 + $0x18] sm:$0xff]
        %v5844 = vld [vmem:[%s1713 + $0x20] sm:$0xff]
        %v5845 = vld [vmem:[%s1713 + $0x28] sm:$0xff]
        %v5846 = vld [vmem:[%s1713 + $0x30] sm:$0xff]
        %v5847 = vld [vmem:[%s1713 + $0x38] sm:$0xff]
        %v5848 = vld [vmem:[%s1713 + $0x40] sm:$0xff]
        %v5849 = vld [vmem:[%s1713 + $0x48] sm:$0xff]
        %v5850 = vld [vmem:[%s1713 + $0x50] sm:$0xff]
        %v5851 = vld [vmem:[%s1713 + $0x58] sm:$0xff]
        %v5852 = vld [vmem:[%s1713 + $0x60] sm:$0xff]
        %v5853 = vld [vmem:[%s1713 + $0x68] sm:$0xff]
        %v5854 = vld [vmem:[%s1713 + $0x70] sm:$0xff]
        %v5855 = vld [vmem:[%s1713 + $0x78] sm:$0xff]
        %v5856 = vld [vmem:[%s1713 + $0x80] sm:$0xff]
        %v5857 = vld [vmem:[%s1713 + $0x88] sm:$0xff]
        %v5858 = vld [vmem:[%s1713 + $0x90] sm:$0xff]
        %v5859 = vld [vmem:[%s1713 + $0x98] sm:$0xff]
        %v5860 = vld [vmem:[%s1713 + $0xa0] sm:$0xff]
        %v5861 = vld [vmem:[%s1713 + $0xa8] sm:$0xff]
        %v5862 = vld [vmem:[%s1713 + $0xb0] sm:$0xff]
        %v5863 = vld [vmem:[%s1713 + $0xb8] sm:$0xff]
        %v5864 = vld [vmem:[%s1713 + $0xc0] sm:$0xff]
        %v5865 = vld [vmem:[%s1713 + $0xc8] sm:$0xff]
        %v5866 = vld [vmem:[%s1713 + $0xd0] sm:$0xff]
        %v5867 = vld [vmem:[%s1713 + $0xd8] sm:$0xff]
        %v5868 = vld [vmem:[%s1713 + $0xe0] sm:$0xff]
        %v5869 = vld [vmem:[%s1713 + $0xe8] sm:$0xff]
        %v5870 = vld [vmem:[%s1713 + $0xf0] sm:$0xff]
        %v5871 = vld [vmem:[%s1713 + $0xf8] sm:$0xff]
        %v5872 = vadd.f32 %v5808, %v5840
        %v5873 = vadd.f32 %v5809, %v5841
        %v5874 = vadd.f32 %v5810, %v5842
        %v5875 = vadd.f32 %v5811, %v5843
        %v5876 = vadd.f32 %v5812, %v5844
        %v5877 = vadd.f32 %v5813, %v5845
        %v5878 = vadd.f32 %v5814, %v5846
        %v5879 = vadd.f32 %v5815, %v5847
        %v5880 = vadd.f32 %v5816, %v5848
        %v5881 = vadd.f32 %v5817, %v5849
        %v5882 = vadd.f32 %v5818, %v5850
        %v5883 = vadd.f32 %v5819, %v5851
        %v5884 = vadd.f32 %v5820, %v5852
        %v5885 = vadd.f32 %v5821, %v5853
        %v5886 = vadd.f32 %v5822, %v5854
        %v5887 = vadd.f32 %v5823, %v5855
        %v5888 = vadd.f32 %v5824, %v5856
        %v5889 = vadd.f32 %v5825, %v5857
        %v5890 = vadd.f32 %v5826, %v5858
        %v5891 = vadd.f32 %v5827, %v5859
        %v5892 = vadd.f32 %v5828, %v5860
        %v5893 = vadd.f32 %v5829, %v5861
        %v5894 = vadd.f32 %v5830, %v5862
        %v5895 = vadd.f32 %v5831, %v5863
        %v5896 = vadd.f32 %v5832, %v5864
        %v5897 = vadd.f32 %v5833, %v5865
        %v5898 = vadd.f32 %v5834, %v5866
        %v5899 = vadd.f32 %v5835, %v5867
        %v5900 = vadd.f32 %v5836, %v5868
        %v5901 = vadd.f32 %v5837, %v5869
        %v5902 = vadd.f32 %v5838, %v5870
        %v5903 = vadd.f32 %v5839, %v5871
        %v5904 = vld [vmem:[%s1778] sm:$0xff]
        %v5905 = vld [vmem:[%s1778 + $0x8] sm:$0xff]
        %v5906 = vld [vmem:[%s1778 + $0x10] sm:$0xff]
        %v5907 = vld [vmem:[%s1778 + $0x18] sm:$0xff]
        %v5908 = vld [vmem:[%s1778 + $0x20] sm:$0xff]
        %v5909 = vld [vmem:[%s1778 + $0x28] sm:$0xff]
        %v5910 = vld [vmem:[%s1778 + $0x30] sm:$0xff]
        %v5911 = vld [vmem:[%s1778 + $0x38] sm:$0xff]
        %v5912 = vld [vmem:[%s1778 + $0x40] sm:$0xff]
        %v5913 = vld [vmem:[%s1778 + $0x48] sm:$0xff]
        %v5914 = vld [vmem:[%s1778 + $0x50] sm:$0xff]
        %v5915 = vld [vmem:[%s1778 + $0x58] sm:$0xff]
        %v5916 = vld [vmem:[%s1778 + $0x60] sm:$0xff]
        %v5917 = vld [vmem:[%s1778 + $0x68] sm:$0xff]
        %v5918 = vld [vmem:[%s1778 + $0x70] sm:$0xff]
        %v5919 = vld [vmem:[%s1778 + $0x78] sm:$0xff]
        %v5920 = vld [vmem:[%s1778 + $0x80] sm:$0xff]
        %v5921 = vld [vmem:[%s1778 + $0x88] sm:$0xff]
        %v5922 = vld [vmem:[%s1778 + $0x90] sm:$0xff]
        %v5923 = vld [vmem:[%s1778 + $0x98] sm:$0xff]
        %v5924 = vld [vmem:[%s1778 + $0xa0] sm:$0xff]
        %v5925 = vld [vmem:[%s1778 + $0xa8] sm:$0xff]
        %v5926 = vld [vmem:[%s1778 + $0xb0] sm:$0xff]
        %v5927 = vld [vmem:[%s1778 + $0xb8] sm:$0xff]
        %v5928 = vld [vmem:[%s1778 + $0xc0] sm:$0xff]
        %v5929 = vld [vmem:[%s1778 + $0xc8] sm:$0xff]
        %v5930 = vld [vmem:[%s1778 + $0xd0] sm:$0xff]
        %v5931 = vld [vmem:[%s1778 + $0xd8] sm:$0xff]
        %v5932 = vld [vmem:[%s1778 + $0xe0] sm:$0xff]
        %v5933 = vld [vmem:[%s1778 + $0xe8] sm:$0xff]
        %v5934 = vld [vmem:[%s1778 + $0xf0] sm:$0xff]
        %v5935 = vld [vmem:[%s1778 + $0xf8] sm:$0xff]
        %v5936 = vadd.f32 %v5872, %v5904
        %v5937 = vadd.f32 %v5873, %v5905
        %v5938 = vadd.f32 %v5874, %v5906
        %v5939 = vadd.f32 %v5875, %v5907
        %v5940 = vadd.f32 %v5876, %v5908
        %v5941 = vadd.f32 %v5877, %v5909
        %v5942 = vadd.f32 %v5878, %v5910
        %v5943 = vadd.f32 %v5879, %v5911
        %v5944 = vadd.f32 %v5880, %v5912
        %v5945 = vadd.f32 %v5881, %v5913
        %v5946 = vadd.f32 %v5882, %v5914
        %v5947 = vadd.f32 %v5883, %v5915
        %v5948 = vadd.f32 %v5884, %v5916
        %v5949 = vadd.f32 %v5885, %v5917
        %v5950 = vadd.f32 %v5886, %v5918
        %v5951 = vadd.f32 %v5887, %v5919
        %v5952 = vadd.f32 %v5888, %v5920
        %v5953 = vadd.f32 %v5889, %v5921
        %v5954 = vadd.f32 %v5890, %v5922
        %v5955 = vadd.f32 %v5891, %v5923
        %v5956 = vadd.f32 %v5892, %v5924
        %v5957 = vadd.f32 %v5893, %v5925
        %v5958 = vadd.f32 %v5894, %v5926
        %v5959 = vadd.f32 %v5895, %v5927
        %v5960 = vadd.f32 %v5896, %v5928
        %v5961 = vadd.f32 %v5897, %v5929
        %v5962 = vadd.f32 %v5898, %v5930
        %v5963 = vadd.f32 %v5899, %v5931
        %v5964 = vadd.f32 %v5900, %v5932
        %v5965 = vadd.f32 %v5901, %v5933
        %v5966 = vadd.f32 %v5902, %v5934
        %v5967 = vadd.f32 %v5903, %v5935
        %v5968 = vld [vmem:[%s3519] sm:$0xff]
        %v5969 = vld [vmem:[%s3519 + $0x8] sm:$0xff]
        %v5970 = vld [vmem:[%s3519 + $0x10] sm:$0xff]
        %v5971 = vld [vmem:[%s3519 + $0x18] sm:$0xff]
        %v5972 = vld [vmem:[%s3519 + $0x20] sm:$0xff]
        %v5973 = vld [vmem:[%s3519 + $0x28] sm:$0xff]
        %v5974 = vld [vmem:[%s3519 + $0x30] sm:$0xff]
        %v5975 = vld [vmem:[%s3519 + $0x38] sm:$0xff]
        %v5976 = vld [vmem:[%s3519 + $0x40] sm:$0xff]
        %v5977 = vld [vmem:[%s3519 + $0x48] sm:$0xff]
        %v5978 = vld [vmem:[%s3519 + $0x50] sm:$0xff]
        %v5979 = vld [vmem:[%s3519 + $0x58] sm:$0xff]
        %v5980 = vld [vmem:[%s3519 + $0x60] sm:$0xff]
        %v5981 = vld [vmem:[%s3519 + $0x68] sm:$0xff]
        %v5982 = vld [vmem:[%s3519 + $0x70] sm:$0xff]
        %v5983 = vld [vmem:[%s3519 + $0x78] sm:$0xff]
        %v5984 = vld [vmem:[%s3519 + $0x80] sm:$0xff]
        %v5985 = vld [vmem:[%s3519 + $0x88] sm:$0xff]
        %v5986 = vld [vmem:[%s3519 + $0x90] sm:$0xff]
        %v5987 = vld [vmem:[%s3519 + $0x98] sm:$0xff]
        %v5988 = vld [vmem:[%s3519 + $0xa0] sm:$0xff]
        %v5989 = vld [vmem:[%s3519 + $0xa8] sm:$0xff]
        %v5990 = vld [vmem:[%s3519 + $0xb0] sm:$0xff]
        %v5991 = vld [vmem:[%s3519 + $0xb8] sm:$0xff]
        %v5992 = vld [vmem:[%s3519 + $0xc0] sm:$0xff]
        %v5993 = vld [vmem:[%s3519 + $0xc8] sm:$0xff]
        %v5994 = vld [vmem:[%s3519 + $0xd0] sm:$0xff]
        %v5995 = vld [vmem:[%s3519 + $0xd8] sm:$0xff]
        %v5996 = vld [vmem:[%s3519 + $0xe0] sm:$0xff]
        %v5997 = vld [vmem:[%s3519 + $0xe8] sm:$0xff]
        %v5998 = vld [vmem:[%s3519 + $0xf0] sm:$0xff]
        %v5999 = vld [vmem:[%s3519 + $0xf8] sm:$0xff]
        %v6000 = vadd.f32 %v5936, %v5968
        %v6001 = vadd.f32 %v5937, %v5969
        %v6002 = vadd.f32 %v5938, %v5970
        %v6003 = vadd.f32 %v5939, %v5971
        %v6004 = vadd.f32 %v5940, %v5972
        %v6005 = vadd.f32 %v5941, %v5973
        %v6006 = vadd.f32 %v5942, %v5974
        %v6007 = vadd.f32 %v5943, %v5975
        %v6008 = vadd.f32 %v5944, %v5976
        %v6009 = vadd.f32 %v5945, %v5977
        %v6010 = vadd.f32 %v5946, %v5978
        %v6011 = vadd.f32 %v5947, %v5979
        %v6012 = vadd.f32 %v5948, %v5980
        %v6013 = vadd.f32 %v5949, %v5981
        %v6014 = vadd.f32 %v5950, %v5982
        %v6015 = vadd.f32 %v5951, %v5983
        %v6016 = vadd.f32 %v5952, %v5984
        %v6017 = vadd.f32 %v5953, %v5985
        %v6018 = vadd.f32 %v5954, %v5986
        %v6019 = vadd.f32 %v5955, %v5987
        %v6020 = vadd.f32 %v5956, %v5988
        %v6021 = vadd.f32 %v5957, %v5989
        %v6022 = vadd.f32 %v5958, %v5990
        %v6023 = vadd.f32 %v5959, %v5991
        %v6024 = vadd.f32 %v5960, %v5992
        %v6025 = vadd.f32 %v5961, %v5993
        %v6026 = vadd.f32 %v5962, %v5994
        %v6027 = vadd.f32 %v5963, %v5995
        %v6028 = vadd.f32 %v5964, %v5996
        %v6029 = vadd.f32 %v5965, %v5997
        %v6030 = vadd.f32 %v5966, %v5998
        %v6031 = vadd.f32 %v5967, %v5999
        %v6032 = vld [vmem:[%s3584] sm:$0xff]
        %v6033 = vld [vmem:[%s3584 + $0x8] sm:$0xff]
        %v6034 = vld [vmem:[%s3584 + $0x10] sm:$0xff]
        %v6035 = vld [vmem:[%s3584 + $0x18] sm:$0xff]
        %v6036 = vld [vmem:[%s3584 + $0x20] sm:$0xff]
        %v6037 = vld [vmem:[%s3584 + $0x28] sm:$0xff]
        %v6038 = vld [vmem:[%s3584 + $0x30] sm:$0xff]
        %v6039 = vld [vmem:[%s3584 + $0x38] sm:$0xff]
        %v6040 = vld [vmem:[%s3584 + $0x40] sm:$0xff]
        %v6041 = vld [vmem:[%s3584 + $0x48] sm:$0xff]
        %v6042 = vld [vmem:[%s3584 + $0x50] sm:$0xff]
        %v6043 = vld [vmem:[%s3584 + $0x58] sm:$0xff]
        %v6044 = vld [vmem:[%s3584 + $0x60] sm:$0xff]
        %v6045 = vld [vmem:[%s3584 + $0x68] sm:$0xff]
        %v6046 = vld [vmem:[%s3584 + $0x70] sm:$0xff]
        %v6047 = vld [vmem:[%s3584 + $0x78] sm:$0xff]
        %v6048 = vld [vmem:[%s3584 + $0x80] sm:$0xff]
        %v6049 = vld [vmem:[%s3584 + $0x88] sm:$0xff]
        %v6050 = vld [vmem:[%s3584 + $0x90] sm:$0xff]
        %v6051 = vld [vmem:[%s3584 + $0x98] sm:$0xff]
        %v6052 = vld [vmem:[%s3584 + $0xa0] sm:$0xff]
        %v6053 = vld [vmem:[%s3584 + $0xa8] sm:$0xff]
        %v6054 = vld [vmem:[%s3584 + $0xb0] sm:$0xff]
        %v6055 = vld [vmem:[%s3584 + $0xb8] sm:$0xff]
        %v6056 = vld [vmem:[%s3584 + $0xc0] sm:$0xff]
        %v6057 = vld [vmem:[%s3584 + $0xc8] sm:$0xff]
        %v6058 = vld [vmem:[%s3584 + $0xd0] sm:$0xff]
        %v6059 = vld [vmem:[%s3584 + $0xd8] sm:$0xff]
        %v6060 = vld [vmem:[%s3584 + $0xe0] sm:$0xff]
        %v6061 = vld [vmem:[%s3584 + $0xe8] sm:$0xff]
        %v6062 = vld [vmem:[%s3584 + $0xf0] sm:$0xff]
        %v6063 = vld [vmem:[%s3584 + $0xf8] sm:$0xff]
        %v6064 = vadd.f32 %v6000, %v6032
        %v6065 = vadd.f32 %v6001, %v6033
        %v6066 = vadd.f32 %v6002, %v6034
        %v6067 = vadd.f32 %v6003, %v6035
        %v6068 = vadd.f32 %v6004, %v6036
        %v6069 = vadd.f32 %v6005, %v6037
        %v6070 = vadd.f32 %v6006, %v6038
        %v6071 = vadd.f32 %v6007, %v6039
        %v6072 = vadd.f32 %v6008, %v6040
        %v6073 = vadd.f32 %v6009, %v6041
        %v6074 = vadd.f32 %v6010, %v6042
        %v6075 = vadd.f32 %v6011, %v6043
        %v6076 = vadd.f32 %v6012, %v6044
        %v6077 = vadd.f32 %v6013, %v6045
        %v6078 = vadd.f32 %v6014, %v6046
        %v6079 = vadd.f32 %v6015, %v6047
        %v6080 = vadd.f32 %v6016, %v6048
        %v6081 = vadd.f32 %v6017, %v6049
        %v6082 = vadd.f32 %v6018, %v6050
        %v6083 = vadd.f32 %v6019, %v6051
        %v6084 = vadd.f32 %v6020, %v6052
        %v6085 = vadd.f32 %v6021, %v6053
        %v6086 = vadd.f32 %v6022, %v6054
        %v6087 = vadd.f32 %v6023, %v6055
        %v6088 = vadd.f32 %v6024, %v6056
        %v6089 = vadd.f32 %v6025, %v6057
        %v6090 = vadd.f32 %v6026, %v6058
        %v6091 = vadd.f32 %v6027, %v6059
        %v6092 = vadd.f32 %v6028, %v6060
        %v6093 = vadd.f32 %v6029, %v6061
        %v6094 = vadd.f32 %v6030, %v6062
        %v6095 = vadd.f32 %v6031, %v6063
        %s6096 = scalar_lea.vmem [#allocation3], 208
        %v6097 = vld [vmem:[%s6096] sm:$0xff]
        %v6098 = vld [vmem:[%s6096 + $0x8] sm:$0xff]
        %v6099 = vld [vmem:[%s6096 + $0x10] sm:$0xff]
        %v6100 = vld [vmem:[%s6096 + $0x18] sm:$0xff]
        %v6101 = vld [vmem:[%s6096 + $0x20] sm:$0xff]
        %v6102 = vld [vmem:[%s6096 + $0x28] sm:$0xff]
        %v6103 = vld [vmem:[%s6096 + $0x30] sm:$0xff]
        %v6104 = vld [vmem:[%s6096 + $0x38] sm:$0xff]
        %v6105 = vld [vmem:[%s6096 + $0x40] sm:$0xff]
        %v6106 = vld [vmem:[%s6096 + $0x48] sm:$0xff]
        %v6107 = vld [vmem:[%s6096 + $0x50] sm:$0xff]
        %v6108 = vld [vmem:[%s6096 + $0x58] sm:$0xff]
        %v6109 = vld [vmem:[%s6096 + $0x60] sm:$0xff]
        %v6110 = vld [vmem:[%s6096 + $0x68] sm:$0xff]
        %v6111 = vld [vmem:[%s6096 + $0x70] sm:$0xff]
        %v6112 = vld [vmem:[%s6096 + $0x78] sm:$0xff]
        %v6113 = vld [vmem:[%s6096 + $0x80] sm:$0xff]
        %v6114 = vld [vmem:[%s6096 + $0x88] sm:$0xff]
        %v6115 = vld [vmem:[%s6096 + $0x90] sm:$0xff]
        %v6116 = vld [vmem:[%s6096 + $0x98] sm:$0xff]
        %v6117 = vld [vmem:[%s6096 + $0xa0] sm:$0xff]
        %v6118 = vld [vmem:[%s6096 + $0xa8] sm:$0xff]
        %v6119 = vld [vmem:[%s6096 + $0xb0] sm:$0xff]
        %v6120 = vld [vmem:[%s6096 + $0xb8] sm:$0xff]
        %v6121 = vld [vmem:[%s6096 + $0xc0] sm:$0xff]
        %v6122 = vld [vmem:[%s6096 + $0xc8] sm:$0xff]
        %v6123 = vld [vmem:[%s6096 + $0xd0] sm:$0xff]
        %v6124 = vld [vmem:[%s6096 + $0xd8] sm:$0xff]
        %v6125 = vld [vmem:[%s6096 + $0xe0] sm:$0xff]
        %v6126 = vld [vmem:[%s6096 + $0xe8] sm:$0xff]
        %v6127 = vld [vmem:[%s6096 + $0xf0] sm:$0xff]
        %v6128 = vld [vmem:[%s6096 + $0xf8] sm:$0xff]
        %v6129 = vadd.f32 %v6064, %v6097
        %v6130 = vadd.f32 %v6065, %v6098
        %v6131 = vadd.f32 %v6066, %v6099
        %v6132 = vadd.f32 %v6067, %v6100
        %v6133 = vadd.f32 %v6068, %v6101
        %v6134 = vadd.f32 %v6069, %v6102
        %v6135 = vadd.f32 %v6070, %v6103
        %v6136 = vadd.f32 %v6071, %v6104
        %v6137 = vadd.f32 %v6072, %v6105
        %v6138 = vadd.f32 %v6073, %v6106
        %v6139 = vadd.f32 %v6074, %v6107
        %v6140 = vadd.f32 %v6075, %v6108
        %v6141 = vadd.f32 %v6076, %v6109
        %v6142 = vadd.f32 %v6077, %v6110
        %v6143 = vadd.f32 %v6078, %v6111
        %v6144 = vadd.f32 %v6079, %v6112
        %v6145 = vadd.f32 %v6080, %v6113
        %v6146 = vadd.f32 %v6081, %v6114
        %v6147 = vadd.f32 %v6082, %v6115
        %v6148 = vadd.f32 %v6083, %v6116
        %v6149 = vadd.f32 %v6084, %v6117
        %v6150 = vadd.f32 %v6085, %v6118
        %v6151 = vadd.f32 %v6086, %v6119
        %v6152 = vadd.f32 %v6087, %v6120
        %v6153 = vadd.f32 %v6088, %v6121
        %v6154 = vadd.f32 %v6089, %v6122
        %v6155 = vadd.f32 %v6090, %v6123
        %v6156 = vadd.f32 %v6091, %v6124
        %v6157 = vadd.f32 %v6092, %v6125
        %v6158 = vadd.f32 %v6093, %v6126
        %v6159 = vadd.f32 %v6094, %v6127
        %v6160 = vadd.f32 %v6095, %v6128
        %s6161 = scalar_lea.vmem [#allocation3], 224
        %v6162 = vld [vmem:[%s6161] sm:$0xff]
        %v6163 = vld [vmem:[%s6161 + $0x8] sm:$0xff]
        %v6164 = vld [vmem:[%s6161 + $0x10] sm:$0xff]
        %v6165 = vld [vmem:[%s6161 + $0x18] sm:$0xff]
        %v6166 = vld [vmem:[%s6161 + $0x20] sm:$0xff]
        %v6167 = vld [vmem:[%s6161 + $0x28] sm:$0xff]
        %v6168 = vld [vmem:[%s6161 + $0x30] sm:$0xff]
        %v6169 = vld [vmem:[%s6161 + $0x38] sm:$0xff]
        %v6170 = vld [vmem:[%s6161 + $0x40] sm:$0xff]
        %v6171 = vld [vmem:[%s6161 + $0x48] sm:$0xff]
        %v6172 = vld [vmem:[%s6161 + $0x50] sm:$0xff]
        %v6173 = vld [vmem:[%s6161 + $0x58] sm:$0xff]
        %v6174 = vld [vmem:[%s6161 + $0x60] sm:$0xff]
        %v6175 = vld [vmem:[%s6161 + $0x68] sm:$0xff]
        %v6176 = vld [vmem:[%s6161 + $0x70] sm:$0xff]
        %v6177 = vld [vmem:[%s6161 + $0x78] sm:$0xff]
        %v6178 = vld [vmem:[%s6161 + $0x80] sm:$0xff]
        %v6179 = vld [vmem:[%s6161 + $0x88] sm:$0xff]
        %v6180 = vld [vmem:[%s6161 + $0x90] sm:$0xff]
        %v6181 = vld [vmem:[%s6161 + $0x98] sm:$0xff]
        %v6182 = vld [vmem:[%s6161 + $0xa0] sm:$0xff]
        %v6183 = vld [vmem:[%s6161 + $0xa8] sm:$0xff]
        %v6184 = vld [vmem:[%s6161 + $0xb0] sm:$0xff]
        %v6185 = vld [vmem:[%s6161 + $0xb8] sm:$0xff]
        %v6186 = vld [vmem:[%s6161 + $0xc0] sm:$0xff]
        %v6187 = vld [vmem:[%s6161 + $0xc8] sm:$0xff]
        %v6188 = vld [vmem:[%s6161 + $0xd0] sm:$0xff]
        %v6189 = vld [vmem:[%s6161 + $0xd8] sm:$0xff]
        %v6190 = vld [vmem:[%s6161 + $0xe0] sm:$0xff]
        %v6191 = vld [vmem:[%s6161 + $0xe8] sm:$0xff]
        %v6192 = vld [vmem:[%s6161 + $0xf0] sm:$0xff]
        %v6193 = vld [vmem:[%s6161 + $0xf8] sm:$0xff]
        %v6194 = vadd.f32 %v6129, %v6162
        %v6195 = vadd.f32 %v6130, %v6163
        %v6196 = vadd.f32 %v6131, %v6164
        %v6197 = vadd.f32 %v6132, %v6165
        %v6198 = vadd.f32 %v6133, %v6166
        %v6199 = vadd.f32 %v6134, %v6167
        %v6200 = vadd.f32 %v6135, %v6168
        %v6201 = vadd.f32 %v6136, %v6169
        %v6202 = vadd.f32 %v6137, %v6170
        %v6203 = vadd.f32 %v6138, %v6171
        %v6204 = vadd.f32 %v6139, %v6172
        %v6205 = vadd.f32 %v6140, %v6173
        %v6206 = vadd.f32 %v6141, %v6174
        %v6207 = vadd.f32 %v6142, %v6175
        %v6208 = vadd.f32 %v6143, %v6176
        %v6209 = vadd.f32 %v6144, %v6177
        %v6210 = vadd.f32 %v6145, %v6178
        %v6211 = vadd.f32 %v6146, %v6179
        %v6212 = vadd.f32 %v6147, %v6180
        %v6213 = vadd.f32 %v6148, %v6181
        %v6214 = vadd.f32 %v6149, %v6182
        %v6215 = vadd.f32 %v6150, %v6183
        %v6216 = vadd.f32 %v6151, %v6184
        %v6217 = vadd.f32 %v6152, %v6185
        %v6218 = vadd.f32 %v6153, %v6186
        %v6219 = vadd.f32 %v6154, %v6187
        %v6220 = vadd.f32 %v6155, %v6188
        %v6221 = vadd.f32 %v6156, %v6189
        %v6222 = vadd.f32 %v6157, %v6190
        %v6223 = vadd.f32 %v6158, %v6191
        %v6224 = vadd.f32 %v6159, %v6192
        %v6225 = vadd.f32 %v6160, %v6193
        %s6226 = scalar_lea.vmem [#allocation3], 240
        %v6227 = vld [vmem:[%s6226] sm:$0xff]
        %v6228 = vld [vmem:[%s6226 + $0x8] sm:$0xff]
        %v6229 = vld [vmem:[%s6226 + $0x10] sm:$0xff]
        %v6230 = vld [vmem:[%s6226 + $0x18] sm:$0xff]
        %v6231 = vld [vmem:[%s6226 + $0x20] sm:$0xff]
        %v6232 = vld [vmem:[%s6226 + $0x28] sm:$0xff]
        %v6233 = vld [vmem:[%s6226 + $0x30] sm:$0xff]
        %v6234 = vld [vmem:[%s6226 + $0x38] sm:$0xff]
        %v6235 = vld [vmem:[%s6226 + $0x40] sm:$0xff]
        %v6236 = vld [vmem:[%s6226 + $0x48] sm:$0xff]
        %v6237 = vld [vmem:[%s6226 + $0x50] sm:$0xff]
        %v6238 = vld [vmem:[%s6226 + $0x58] sm:$0xff]
        %v6239 = vld [vmem:[%s6226 + $0x60] sm:$0xff]
        %v6240 = vld [vmem:[%s6226 + $0x68] sm:$0xff]
        %v6241 = vld [vmem:[%s6226 + $0x70] sm:$0xff]
        %v6242 = vld [vmem:[%s6226 + $0x78] sm:$0xff]
        %v6243 = vld [vmem:[%s6226 + $0x80] sm:$0xff]
        %v6244 = vld [vmem:[%s6226 + $0x88] sm:$0xff]
        %v6245 = vld [vmem:[%s6226 + $0x90] sm:$0xff]
        %v6246 = vld [vmem:[%s6226 + $0x98] sm:$0xff]
        %v6247 = vld [vmem:[%s6226 + $0xa0] sm:$0xff]
        %v6248 = vld [vmem:[%s6226 + $0xa8] sm:$0xff]
        %v6249 = vld [vmem:[%s6226 + $0xb0] sm:$0xff]
        %v6250 = vld [vmem:[%s6226 + $0xb8] sm:$0xff]
        %v6251 = vld [vmem:[%s6226 + $0xc0] sm:$0xff]
        %v6252 = vld [vmem:[%s6226 + $0xc8] sm:$0xff]
        %v6253 = vld [vmem:[%s6226 + $0xd0] sm:$0xff]
        %v6254 = vld [vmem:[%s6226 + $0xd8] sm:$0xff]
        %v6255 = vld [vmem:[%s6226 + $0xe0] sm:$0xff]
        %v6256 = vld [vmem:[%s6226 + $0xe8] sm:$0xff]
        %v6257 = vld [vmem:[%s6226 + $0xf0] sm:$0xff]
        %v6258 = vld [vmem:[%s6226 + $0xf8] sm:$0xff]
        %v6259 = vadd.f32 %v6194, %v6227
        %v6260 = vadd.f32 %v6195, %v6228
        %v6261 = vadd.f32 %v6196, %v6229
        %v6262 = vadd.f32 %v6197, %v6230
        %v6263 = vadd.f32 %v6198, %v6231
        %v6264 = vadd.f32 %v6199, %v6232
        %v6265 = vadd.f32 %v6200, %v6233
        %v6266 = vadd.f32 %v6201, %v6234
        %v6267 = vadd.f32 %v6202, %v6235
        %v6268 = vadd.f32 %v6203, %v6236
        %v6269 = vadd.f32 %v6204, %v6237
        %v6270 = vadd.f32 %v6205, %v6238
        %v6271 = vadd.f32 %v6206, %v6239
        %v6272 = vadd.f32 %v6207, %v6240
        %v6273 = vadd.f32 %v6208, %v6241
        %v6274 = vadd.f32 %v6209, %v6242
        %v6275 = vadd.f32 %v6210, %v6243
        %v6276 = vadd.f32 %v6211, %v6244
        %v6277 = vadd.f32 %v6212, %v6245
        %v6278 = vadd.f32 %v6213, %v6246
        %v6279 = vadd.f32 %v6214, %v6247
        %v6280 = vadd.f32 %v6215, %v6248
        %v6281 = vadd.f32 %v6216, %v6249
        %v6282 = vadd.f32 %v6217, %v6250
        %v6283 = vadd.f32 %v6218, %v6251
        %v6284 = vadd.f32 %v6219, %v6252
        %v6285 = vadd.f32 %v6220, %v6253
        %v6286 = vadd.f32 %v6221, %v6254
        %v6287 = vadd.f32 %v6222, %v6255
        %v6288 = vadd.f32 %v6223, %v6256
        %v6289 = vadd.f32 %v6224, %v6257
        %v6290 = vadd.f32 %v6225, %v6258
        %s6291 = scalar_lea.vmem [#allocation3], 256
        %v6292 = vld [vmem:[%s6291] sm:$0xff]
        %v6293 = vld [vmem:[%s6291 + $0x8] sm:$0xff]
        %v6294 = vld [vmem:[%s6291 + $0x10] sm:$0xff]
        %v6295 = vld [vmem:[%s6291 + $0x18] sm:$0xff]
        %v6296 = vld [vmem:[%s6291 + $0x20] sm:$0xff]
        %v6297 = vld [vmem:[%s6291 + $0x28] sm:$0xff]
        %v6298 = vld [vmem:[%s6291 + $0x30] sm:$0xff]
        %v6299 = vld [vmem:[%s6291 + $0x38] sm:$0xff]
        %v6300 = vld [vmem:[%s6291 + $0x40] sm:$0xff]
        %v6301 = vld [vmem:[%s6291 + $0x48] sm:$0xff]
        %v6302 = vld [vmem:[%s6291 + $0x50] sm:$0xff]
        %v6303 = vld [vmem:[%s6291 + $0x58] sm:$0xff]
        %v6304 = vld [vmem:[%s6291 + $0x60] sm:$0xff]
        %v6305 = vld [vmem:[%s6291 + $0x68] sm:$0xff]
        %v6306 = vld [vmem:[%s6291 + $0x70] sm:$0xff]
        %v6307 = vld [vmem:[%s6291 + $0x78] sm:$0xff]
        %v6308 = vld [vmem:[%s6291 + $0x80] sm:$0xff]
        %v6309 = vld [vmem:[%s6291 + $0x88] sm:$0xff]
        %v6310 = vld [vmem:[%s6291 + $0x90] sm:$0xff]
        %v6311 = vld [vmem:[%s6291 + $0x98] sm:$0xff]
        %v6312 = vld [vmem:[%s6291 + $0xa0] sm:$0xff]
        %v6313 = vld [vmem:[%s6291 + $0xa8] sm:$0xff]
        %v6314 = vld [vmem:[%s6291 + $0xb0] sm:$0xff]
        %v6315 = vld [vmem:[%s6291 + $0xb8] sm:$0xff]
        %v6316 = vld [vmem:[%s6291 + $0xc0] sm:$0xff]
        %v6317 = vld [vmem:[%s6291 + $0xc8] sm:$0xff]
        %v6318 = vld [vmem:[%s6291 + $0xd0] sm:$0xff]
        %v6319 = vld [vmem:[%s6291 + $0xd8] sm:$0xff]
        %v6320 = vld [vmem:[%s6291 + $0xe0] sm:$0xff]
        %v6321 = vld [vmem:[%s6291 + $0xe8] sm:$0xff]
        %v6322 = vld [vmem:[%s6291 + $0xf0] sm:$0xff]
        %v6323 = vld [vmem:[%s6291 + $0xf8] sm:$0xff]
        %v6324 = vadd.f32 %v6259, %v6292
        %v6325 = vadd.f32 %v6260, %v6293
        %v6326 = vadd.f32 %v6261, %v6294
        %v6327 = vadd.f32 %v6262, %v6295
        %v6328 = vadd.f32 %v6263, %v6296
        %v6329 = vadd.f32 %v6264, %v6297
        %v6330 = vadd.f32 %v6265, %v6298
        %v6331 = vadd.f32 %v6266, %v6299
        %v6332 = vadd.f32 %v6267, %v6300
        %v6333 = vadd.f32 %v6268, %v6301
        %v6334 = vadd.f32 %v6269, %v6302
        %v6335 = vadd.f32 %v6270, %v6303
        %v6336 = vadd.f32 %v6271, %v6304
        %v6337 = vadd.f32 %v6272, %v6305
        %v6338 = vadd.f32 %v6273, %v6306
        %v6339 = vadd.f32 %v6274, %v6307
        %v6340 = vadd.f32 %v6275, %v6308
        %v6341 = vadd.f32 %v6276, %v6309
        %v6342 = vadd.f32 %v6277, %v6310
        %v6343 = vadd.f32 %v6278, %v6311
        %v6344 = vadd.f32 %v6279, %v6312
        %v6345 = vadd.f32 %v6280, %v6313
        %v6346 = vadd.f32 %v6281, %v6314
        %v6347 = vadd.f32 %v6282, %v6315
        %v6348 = vadd.f32 %v6283, %v6316
        %v6349 = vadd.f32 %v6284, %v6317
        %v6350 = vadd.f32 %v6285, %v6318
        %v6351 = vadd.f32 %v6286, %v6319
        %v6352 = vadd.f32 %v6287, %v6320
        %v6353 = vadd.f32 %v6288, %v6321
        %v6354 = vadd.f32 %v6289, %v6322
        %v6355 = vadd.f32 %v6290, %v6323
        %v6356 = vmul.f32 %v6324, 0.0034602077
        %v6357 = vmul.f32 %v6325, 0.0034602077
        %v6358 = vmul.f32 %v6326, 0.0034602077
        %v6359 = vmul.f32 %v6327, 0.0034602077
        %v6360 = vmul.f32 %v6328, 0.0034602077
        %v6361 = vmul.f32 %v6329, 0.0034602077
        %v6362 = vmul.f32 %v6330, 0.0034602077
        %v6363 = vmul.f32 %v6331, 0.0034602077
        %v6364 = vmul.f32 %v6332, 0.0034602077
        %v6365 = vmul.f32 %v6333, 0.0034602077
        %v6366 = vmul.f32 %v6334, 0.0034602077
        %v6367 = vmul.f32 %v6335, 0.0034602077
        %v6368 = vmul.f32 %v6336, 0.0034602077
        %v6369 = vmul.f32 %v6337, 0.0034602077
        %v6370 = vmul.f32 %v6338, 0.0034602077
        %v6371 = vmul.f32 %v6339, 0.0034602077
        %v6372 = vmul.f32 %v6340, 0.0034602077
        %v6373 = vmul.f32 %v6341, 0.0034602077
        %v6374 = vmul.f32 %v6342, 0.0034602077
        %v6375 = vmul.f32 %v6343, 0.0034602077
        %v6376 = vmul.f32 %v6344, 0.0034602077
        %v6377 = vmul.f32 %v6345, 0.0034602077
        %v6378 = vmul.f32 %v6346, 0.0034602077
        %v6379 = vmul.f32 %v6347, 0.0034602077
        %v6380 = vmul.f32 %v6348, 0.0034602077
        %v6381 = vmul.f32 %v6349, 0.0034602077
        %v6382 = vmul.f32 %v6350, 0.0034602077
        %v6383 = vmul.f32 %v6351, 0.0034602077
        %v6384 = vmul.f32 %v6352, 0.0034602077
        %v6385 = vmul.f32 %v6353, 0.0034602077
        %v6386 = vmul.f32 %v6354, 0.0034602077
        %v6387 = vmul.f32 %v6355, 0.0034602077
        %s6388 = scalar_lea.vmem [#allocation5], 2
        %v6389 = vld [vmem:[%s6388] sm:$0x1]
        %v6391 = vlaneseq
        %v6392 = vshrl.u32 %v6391, 7
        %v6393 = vsub.s32 0, %v6392
        %v6394 = vrot.slane %v6389, %v6393
        %v6396 = vadd.f32 %v6356, %v6394
        %v6397 = vadd.f32 %v6357, %v6394
        %v6398 = vadd.f32 %v6358, %v6394
        %v6399 = vadd.f32 %v6359, %v6394
        %v6400 = vadd.f32 %v6360, %v6394
        %v6401 = vadd.f32 %v6361, %v6394
        %v6402 = vadd.f32 %v6362, %v6394
        %v6403 = vadd.f32 %v6363, %v6394
        %v6404 = vadd.f32 %v6364, %v6394
        %v6405 = vadd.f32 %v6365, %v6394
        %v6406 = vadd.f32 %v6366, %v6394
        %v6407 = vadd.f32 %v6367, %v6394
        %v6408 = vadd.f32 %v6368, %v6394
        %v6409 = vadd.f32 %v6369, %v6394
        %v6410 = vadd.f32 %v6370, %v6394
        %v6411 = vadd.f32 %v6371, %v6394
        %v6412 = vadd.f32 %v6372, %v6394
        %v6413 = vadd.f32 %v6373, %v6394
        %v6414 = vadd.f32 %v6374, %v6394
        %v6415 = vadd.f32 %v6375, %v6394
        %v6416 = vadd.f32 %v6376, %v6394
        %v6417 = vadd.f32 %v6377, %v6394
        %v6418 = vadd.f32 %v6378, %v6394
        %v6419 = vadd.f32 %v6379, %v6394
        %v6420 = vadd.f32 %v6380, %v6394
        %v6421 = vadd.f32 %v6381, %v6394
        %v6422 = vadd.f32 %v6382, %v6394
        %v6423 = vadd.f32 %v6383, %v6394
        %v6424 = vadd.f32 %v6384, %v6394
        %v6425 = vadd.f32 %v6385, %v6394
        %v6426 = vadd.f32 %v6386, %v6394
        %v6427 = vadd.f32 %v6387, %v6394
        %v6428 = vmax.f32 %v6396, 0.0
        %v6429 = vmax.f32 %v6397, 0.0
        %v6430 = vmax.f32 %v6398, 0.0
        %v6431 = vmax.f32 %v6399, 0.0
        %v6432 = vmax.f32 %v6400, 0.0
        %v6433 = vmax.f32 %v6401, 0.0
        %v6434 = vmax.f32 %v6402, 0.0
        %v6435 = vmax.f32 %v6403, 0.0
        %v6436 = vmax.f32 %v6404, 0.0
        %v6437 = vmax.f32 %v6405, 0.0
        %v6438 = vmax.f32 %v6406, 0.0
        %v6439 = vmax.f32 %v6407, 0.0
        %v6440 = vmax.f32 %v6408, 0.0
        %v6441 = vmax.f32 %v6409, 0.0
        %v6442 = vmax.f32 %v6410, 0.0
        %v6443 = vmax.f32 %v6411, 0.0
        %v6444 = vmax.f32 %v6412, 0.0
        %v6445 = vmax.f32 %v6413, 0.0
        %v6446 = vmax.f32 %v6414, 0.0
        %v6447 = vmax.f32 %v6415, 0.0
        %v6448 = vmax.f32 %v6416, 0.0
        %v6449 = vmax.f32 %v6417, 0.0
        %v6450 = vmax.f32 %v6418, 0.0
        %v6451 = vmax.f32 %v6419, 0.0
        %v6452 = vmax.f32 %v6420, 0.0
        %v6453 = vmax.f32 %v6421, 0.0
        %v6454 = vmax.f32 %v6422, 0.0
        %v6455 = vmax.f32 %v6423, 0.0
        %v6456 = vmax.f32 %v6424, 0.0
        %v6457 = vmax.f32 %v6425, 0.0
        %v6458 = vmax.f32 %v6426, 0.0
        %v6459 = vmax.f32 %v6427, 0.0
        %v6460 = vld [vmem:[#allocation4] sm:$0xff]
        %v6461 = vld [vmem:[#allocation4 + $0x8] sm:$0xff]
        %v6462 = vld [vmem:[#allocation4 + $0x10] sm:$0xff]
        %v6463 = vld [vmem:[#allocation4 + $0x18] sm:$0xff]
        %v6464 = vld [vmem:[#allocation4 + $0x20] sm:$0xff]
        %v6465 = vld [vmem:[#allocation4 + $0x28] sm:$0xff]
        %v6466 = vld [vmem:[#allocation4 + $0x30] sm:$0xff]
        %v6467 = vld [vmem:[#allocation4 + $0x38] sm:$0xff]
        %v6468 = vld [vmem:[#allocation4 + $0x40] sm:$0xff]
        %v6469 = vld [vmem:[#allocation4 + $0x48] sm:$0xff]
        %v6470 = vld [vmem:[#allocation4 + $0x50] sm:$0xff]
        %v6471 = vld [vmem:[#allocation4 + $0x58] sm:$0xff]
        %v6472 = vld [vmem:[#allocation4 + $0x60] sm:$0xff]
        %v6473 = vld [vmem:[#allocation4 + $0x68] sm:$0xff]
        %v6474 = vld [vmem:[#allocation4 + $0x70] sm:$0xff]
        %v6475 = vld [vmem:[#allocation4 + $0x78] sm:$0xff]
        %v6476 = vld [vmem:[#allocation4 + $0x80] sm:$0xff]
        %v6477 = vld [vmem:[#allocation4 + $0x88] sm:$0xff]
        %v6478 = vld [vmem:[#allocation4 + $0x90] sm:$0xff]
        %v6479 = vld [vmem:[#allocation4 + $0x98] sm:$0xff]
        %v6480 = vld [vmem:[#allocation4 + $0xa0] sm:$0xff]
        %v6481 = vld [vmem:[#allocation4 + $0xa8] sm:$0xff]
        %v6482 = vld [vmem:[#allocation4 + $0xb0] sm:$0xff]
        %v6483 = vld [vmem:[#allocation4 + $0xb8] sm:$0xff]
        %v6484 = vld [vmem:[#allocation4 + $0xc0] sm:$0xff]
        %v6485 = vld [vmem:[#allocation4 + $0xc8] sm:$0xff]
        %v6486 = vld [vmem:[#allocation4 + $0xd0] sm:$0xff]
        %v6487 = vld [vmem:[#allocation4 + $0xd8] sm:$0xff]
        %v6488 = vld [vmem:[#allocation4 + $0xe0] sm:$0xff]
        %v6489 = vld [vmem:[#allocation4 + $0xe8] sm:$0xff]
        %v6490 = vld [vmem:[#allocation4 + $0xf0] sm:$0xff]
        %v6491 = vld [vmem:[#allocation4 + $0xf8] sm:$0xff]
        %v6492 = vpack.c.bf16 %v6429, %v6428
        %v6493 = vpack.c.bf16 %v6431, %v6430
        %v6494 = vpack.c.bf16 %v6433, %v6432
        %v6495 = vpack.c.bf16 %v6435, %v6434
        %v6496 = vpack.c.bf16 %v6437, %v6436
        %v6497 = vpack.c.bf16 %v6439, %v6438
        %v6498 = vpack.c.bf16 %v6441, %v6440
        %v6499 = vpack.c.bf16 %v6443, %v6442
        %v6500 = vpack.c.bf16 %v6445, %v6444
        %v6501 = vpack.c.bf16 %v6447, %v6446
        %v6502 = vpack.c.bf16 %v6449, %v6448
        %v6503 = vpack.c.bf16 %v6451, %v6450
        %v6504 = vpack.c.bf16 %v6453, %v6452
        %v6505 = vpack.c.bf16 %v6455, %v6454
        %v6506 = vpack.c.bf16 %v6457, %v6456
        %v6507 = vpack.c.bf16 %v6459, %v6458
        %s6508 = scalar_lea.vmem %s3, 32
        %v6509 = vld [vmem:[%s6508] sm:$0xf]
        %v6510 = vld [vmem:[%s6508 + $0x4] sm:$0xf]
        %v6511 = vld [vmem:[%s6508 + $0x8] sm:$0xf]
        %v6512 = vld [vmem:[%s6508 + $0xc] sm:$0xf]
        %v6517 = vunpack.c.l.b16 %v6509
        %v6518 = vunpack.c.l.b16 %v6510
        %v6519 = vunpack.c.l.b16 %v6511
        %v6520 = vunpack.c.l.b16 %v6512
        %v6521 = vpack.c.b16 %v6518, %v6517
        %v6522 = vpack.c.b16 %v6520, %v6519
        %v6526 = vsel %vm239, %v6492, 0
        %v6529 = vsel %vm239, %v6493, 0
        %v6532 = vsel %vm239, %v6494, 0
        %v6535 = vsel %vm239, %v6495, 0
        %v6538 = vsel %vm239, %v6496, 0
        %v6541 = vsel %vm239, %v6497, 0
        %v6544 = vsel %vm239, %v6498, 0
        %v6547 = vsel %vm239, %v6499, 0
        %v6550 = vsel %vm239, %v6500, 0
        %v6553 = vsel %vm239, %v6501, 0
        %v6556 = vsel %vm239, %v6502, 0
        %v6559 = vsel %vm239, %v6503, 0
        %v6562 = vsel %vm239, %v6504, 0
        %v6565 = vsel %vm239, %v6505, 0
        %v6568 = vsel %vm239, %v6506, 0
        %v6571 = vsel %vm239, %v6507, 0
        %6573 = vmatprep.subr.bf16.mxu0 0
        %6574 = vmatpush1.bf16.msra.mxu0 0
        %6575 = vmatprep.subr.bf16.mxu0 0
        %6576 = vmatpush1.bf16.msra.mxu0 0
        %6577 = vmatprep.subr.bf16.mxu0 0
        %6578 = vmatpush1.bf16.msra.mxu0 0
        %6579 = vmatprep.subr.bf16.mxu0 0
        %6580 = vmatpush1.bf16.msra.mxu0 0
        %6581 = vmatprep.subr.bf16.mxu0 0
        %6582 = vmatpush1.bf16.msra.mxu0 0
        %6583 = vmatprep.subr.bf16.mxu0 0
        %6584 = vmatpush1.bf16.msra.mxu0 0
        %6585 = vmatprep.subr.bf16.mxu0 0
        %6586 = vmatpush1.bf16.msra.mxu0 %v6522
        %6587 = vmatprep.subr.bf16.mxu0 0
        %6588 = vmatpush1.bf16.msra.mxu0 %v6521
        %6589 = vmatprep.subr.bf16.mxu0 0
        %6590 = vmatpush2.bf16.msra.mxu0 0
        %6591 = vmatprep.subr.bf16.mxu0 0
        %6592 = vmatpush2.bf16.msra.mxu0 0
        %6593 = vmatprep.subr.bf16.mxu0 0
        %6594 = vmatpush2.bf16.msra.mxu0 0
        %6595 = vmatprep.subr.bf16.mxu0 0
        %6596 = vmatpush2.bf16.msra.mxu0 0
        %6597 = vmatprep.subr.bf16.mxu0 0
        %6598 = vmatpush2.bf16.msra.mxu0 0
        %6599 = vmatprep.subr.bf16.mxu0 0
        %6600 = vmatpush2.bf16.msra.mxu0 0
        %6601 = vmatprep.subr.bf16.mxu0 0
        %6602 = vmatpush2.bf16.msra.mxu0 0
        %6603 = vmatprep.subr.bf16.mxu0 0
        %6604 = vmatpush2.bf16.msra.mxu0 0
        %6605 = vmatprep.mubr.bf16.mxu0 0
        %6606 = vmatmul.mubr.bf16.gmra.mxu0 %v6526
        %v6607 = vpop.f32.mrf.mxu0
        %v6608 = vadd.f32 0.0, %v6607
        %v6609 = vpop.f32.mrf.mxu0
        %v6610 = vpop.f32.mrf.mxu0
        %v6611 = vadd.f32 0.0, %v6610
        %v6612 = vpop.f32.mrf.mxu0
        %6613 = vmatprep.mubr.bf16.mxu0 0
        %6614 = vmatmul.mubr.bf16.gmra.mxu0 %v6529
        %v6615 = vpop.f32.mrf.mxu0
        %v6616 = vadd.f32 0.0, %v6615
        %v6617 = vpop.f32.mrf.mxu0
        %v6618 = vpop.f32.mrf.mxu0
        %v6619 = vadd.f32 0.0, %v6618
        %v6620 = vpop.f32.mrf.mxu0
        %6621 = vmatprep.mubr.bf16.mxu0 0
        %6622 = vmatmul.mubr.bf16.gmra.mxu0 %v6532
        %v6623 = vpop.f32.mrf.mxu0
        %v6624 = vadd.f32 0.0, %v6623
        %v6625 = vpop.f32.mrf.mxu0
        %v6626 = vpop.f32.mrf.mxu0
        %v6627 = vadd.f32 0.0, %v6626
        %v6628 = vpop.f32.mrf.mxu0
        %6629 = vmatprep.mubr.bf16.mxu0 0
        %6630 = vmatmul.mubr.bf16.gmra.mxu0 %v6535
        %v6631 = vpop.f32.mrf.mxu0
        %v6632 = vadd.f32 0.0, %v6631
        %v6633 = vpop.f32.mrf.mxu0
        %v6634 = vpop.f32.mrf.mxu0
        %v6635 = vadd.f32 0.0, %v6634
        %v6636 = vpop.f32.mrf.mxu0
        %6637 = vmatprep.mubr.bf16.mxu0 0
        %6638 = vmatmul.mubr.bf16.gmra.mxu0 %v6538
        %v6639 = vpop.f32.mrf.mxu0
        %v6640 = vadd.f32 0.0, %v6639
        %v6641 = vpop.f32.mrf.mxu0
        %v6642 = vpop.f32.mrf.mxu0
        %v6643 = vadd.f32 0.0, %v6642
        %v6644 = vpop.f32.mrf.mxu0
        %6645 = vmatprep.mubr.bf16.mxu0 0
        %6646 = vmatmul.mubr.bf16.gmra.mxu0 %v6541
        %v6647 = vpop.f32.mrf.mxu0
        %v6648 = vadd.f32 0.0, %v6647
        %v6649 = vpop.f32.mrf.mxu0
        %v6650 = vpop.f32.mrf.mxu0
        %v6651 = vadd.f32 0.0, %v6650
        %v6652 = vpop.f32.mrf.mxu0
        %6653 = vmatprep.mubr.bf16.mxu0 0
        %6654 = vmatmul.mubr.bf16.gmra.mxu0 %v6544
        %v6655 = vpop.f32.mrf.mxu0
        %v6656 = vadd.f32 0.0, %v6655
        %v6657 = vpop.f32.mrf.mxu0
        %v6658 = vpop.f32.mrf.mxu0
        %v6659 = vadd.f32 0.0, %v6658
        %v6660 = vpop.f32.mrf.mxu0
        %6661 = vmatprep.mubr.bf16.mxu0 0
        %6662 = vmatmul.mubr.bf16.gmra.mxu0 %v6547
        %v6663 = vpop.f32.mrf.mxu0
        %v6664 = vadd.f32 0.0, %v6663
        %v6665 = vpop.f32.mrf.mxu0
        %v6666 = vpop.f32.mrf.mxu0
        %v6667 = vadd.f32 0.0, %v6666
        %v6668 = vpop.f32.mrf.mxu0
        %6669 = vmatprep.mubr.bf16.mxu0 0
        %6670 = vmatmul.mubr.bf16.gmra.mxu0 %v6550
        %v6671 = vpop.f32.mrf.mxu0
        %v6672 = vadd.f32 0.0, %v6671
        %v6673 = vpop.f32.mrf.mxu0
        %v6674 = vpop.f32.mrf.mxu0
        %v6675 = vadd.f32 0.0, %v6674
        %v6676 = vpop.f32.mrf.mxu0
        %6677 = vmatprep.mubr.bf16.mxu0 0
        %6678 = vmatmul.mubr.bf16.gmra.mxu0 %v6553
        %v6679 = vpop.f32.mrf.mxu0
        %v6680 = vadd.f32 0.0, %v6679
        %v6681 = vpop.f32.mrf.mxu0
        %v6682 = vpop.f32.mrf.mxu0
        %v6683 = vadd.f32 0.0, %v6682
        %v6684 = vpop.f32.mrf.mxu0
        %6685 = vmatprep.mubr.bf16.mxu0 0
        %6686 = vmatmul.mubr.bf16.gmra.mxu0 %v6556
        %v6687 = vpop.f32.mrf.mxu0
        %v6688 = vadd.f32 0.0, %v6687
        %v6689 = vpop.f32.mrf.mxu0
        %v6690 = vpop.f32.mrf.mxu0
        %v6691 = vadd.f32 0.0, %v6690
        %v6692 = vpop.f32.mrf.mxu0
        %6693 = vmatprep.mubr.bf16.mxu0 0
        %6694 = vmatmul.mubr.bf16.gmra.mxu0 %v6559
        %v6695 = vpop.f32.mrf.mxu0
        %v6696 = vadd.f32 0.0, %v6695
        %v6697 = vpop.f32.mrf.mxu0
        %v6698 = vpop.f32.mrf.mxu0
        %v6699 = vadd.f32 0.0, %v6698
        %v6700 = vpop.f32.mrf.mxu0
        %6701 = vmatprep.mubr.bf16.mxu0 0
        %6702 = vmatmul.mubr.bf16.gmra.mxu0 %v6562
        %v6703 = vpop.f32.mrf.mxu0
        %v6704 = vadd.f32 0.0, %v6703
        %v6705 = vpop.f32.mrf.mxu0
        %v6706 = vpop.f32.mrf.mxu0
        %v6707 = vadd.f32 0.0, %v6706
        %v6708 = vpop.f32.mrf.mxu0
        %6709 = vmatprep.mubr.bf16.mxu0 0
        %6710 = vmatmul.mubr.bf16.gmra.mxu0 %v6565
        %v6711 = vpop.f32.mrf.mxu0
        %v6712 = vadd.f32 0.0, %v6711
        %v6713 = vpop.f32.mrf.mxu0
        %v6714 = vpop.f32.mrf.mxu0
        %v6715 = vadd.f32 0.0, %v6714
        %v6716 = vpop.f32.mrf.mxu0
        %6717 = vmatprep.mubr.bf16.mxu0 0
        %6718 = vmatmul.mubr.bf16.gmra.mxu0 %v6568
        %v6719 = vpop.f32.mrf.mxu0
        %v6720 = vadd.f32 0.0, %v6719
        %v6721 = vpop.f32.mrf.mxu0
        %v6722 = vpop.f32.mrf.mxu0
        %v6723 = vadd.f32 0.0, %v6722
        %v6724 = vpop.f32.mrf.mxu0
        %6725 = vmatprep.mubr.bf16.mxu0 0
        %6726 = vmatmul.mubr.bf16.gmra.mxu0 %v6571
        %v6727 = vpop.f32.mrf.mxu0
        %v6728 = vadd.f32 0.0, %v6727
        %v6729 = vpop.f32.mrf.mxu0
        %v6730 = vpop.f32.mrf.mxu0
        %v6731 = vadd.f32 0.0, %v6730
        %v6732 = vpop.f32.mrf.mxu0
        %6733 = vdwg.mxu0
        %v6734 = vadd.f32 %v6460, %v6608
        %v6735 = vadd.f32 %v6461, %v6611
        %v6736 = vadd.f32 %v6462, %v6616
        %v6737 = vadd.f32 %v6463, %v6619
        %v6738 = vadd.f32 %v6464, %v6624
        %v6739 = vadd.f32 %v6465, %v6627
        %v6740 = vadd.f32 %v6466, %v6632
        %v6741 = vadd.f32 %v6467, %v6635
        %v6742 = vadd.f32 %v6468, %v6640
        %v6743 = vadd.f32 %v6469, %v6643
        %v6744 = vadd.f32 %v6470, %v6648
        %v6745 = vadd.f32 %v6471, %v6651
        %v6746 = vadd.f32 %v6472, %v6656
        %v6747 = vadd.f32 %v6473, %v6659
        %v6748 = vadd.f32 %v6474, %v6664
        %v6749 = vadd.f32 %v6475, %v6667
        %v6750 = vadd.f32 %v6476, %v6672
        %v6751 = vadd.f32 %v6477, %v6675
        %v6752 = vadd.f32 %v6478, %v6680
        %v6753 = vadd.f32 %v6479, %v6683
        %v6754 = vadd.f32 %v6480, %v6688
        %v6755 = vadd.f32 %v6481, %v6691
        %v6756 = vadd.f32 %v6482, %v6696
        %v6757 = vadd.f32 %v6483, %v6699
        %v6758 = vadd.f32 %v6484, %v6704
        %v6759 = vadd.f32 %v6485, %v6707
        %v6760 = vadd.f32 %v6486, %v6712
        %v6761 = vadd.f32 %v6487, %v6715
        %v6762 = vadd.f32 %v6488, %v6720
        %v6763 = vadd.f32 %v6489, %v6723
        %v6764 = vadd.f32 %v6490, %v6728
        %v6765 = vadd.f32 %v6491, %v6731
        %6766 = vst [vmem:[#allocation4] sm:$0xff] %v6734
        %6767 = vst [vmem:[#allocation4 + $0x8] sm:$0xff] %v6735
        %6768 = vst [vmem:[#allocation4 + $0x10] sm:$0xff] %v6736
        %6769 = vst [vmem:[#allocation4 + $0x18] sm:$0xff] %v6737
        %6770 = vst [vmem:[#allocation4 + $0x20] sm:$0xff] %v6738
        %6771 = vst [vmem:[#allocation4 + $0x28] sm:$0xff] %v6739
        %6772 = vst [vmem:[#allocation4 + $0x30] sm:$0xff] %v6740
        %6773 = vst [vmem:[#allocation4 + $0x38] sm:$0xff] %v6741
        %6774 = vst [vmem:[#allocation4 + $0x40] sm:$0xff] %v6742
        %6775 = vst [vmem:[#allocation4 + $0x48] sm:$0xff] %v6743
        %6776 = vst [vmem:[#allocation4 + $0x50] sm:$0xff] %v6744
        %6777 = vst [vmem:[#allocation4 + $0x58] sm:$0xff] %v6745
        %6778 = vst [vmem:[#allocation4 + $0x60] sm:$0xff] %v6746
        %6779 = vst [vmem:[#allocation4 + $0x68] sm:$0xff] %v6747
        %6780 = vst [vmem:[#allocation4 + $0x70] sm:$0xff] %v6748
        %6781 = vst [vmem:[#allocation4 + $0x78] sm:$0xff] %v6749
        %6782 = vst [vmem:[#allocation4 + $0x80] sm:$0xff] %v6750
        %6783 = vst [vmem:[#allocation4 + $0x88] sm:$0xff] %v6751
        %6784 = vst [vmem:[#allocation4 + $0x90] sm:$0xff] %v6752
        %6785 = vst [vmem:[#allocation4 + $0x98] sm:$0xff] %v6753
        %6786 = vst [vmem:[#allocation4 + $0xa0] sm:$0xff] %v6754
        %6787 = vst [vmem:[#allocation4 + $0xa8] sm:$0xff] %v6755
        %6788 = vst [vmem:[#allocation4 + $0xb0] sm:$0xff] %v6756
        %6789 = vst [vmem:[#allocation4 + $0xb8] sm:$0xff] %v6757
        %6790 = vst [vmem:[#allocation4 + $0xc0] sm:$0xff] %v6758
        %6791 = vst [vmem:[#allocation4 + $0xc8] sm:$0xff] %v6759
        %6792 = vst [vmem:[#allocation4 + $0xd0] sm:$0xff] %v6760
        %6793 = vst [vmem:[#allocation4 + $0xd8] sm:$0xff] %v6761
        %6794 = vst [vmem:[#allocation4 + $0xe0] sm:$0xff] %v6762
        %6795 = vst [vmem:[#allocation4 + $0xe8] sm:$0xff] %v6763
        %6796 = vst [vmem:[#allocation4 + $0xf0] sm:$0xff] %v6764
        %6797 = vst [vmem:[#allocation4 + $0xf8] sm:$0xff] %v6765
        %v6798 = vld [vmem:[#allocation4] sm:$0xff]
        %v6799 = vld [vmem:[#allocation4 + $0x8] sm:$0xff]
        %v6800 = vld [vmem:[#allocation4 + $0x10] sm:$0xff]
        %v6801 = vld [vmem:[#allocation4 + $0x18] sm:$0xff]
        %v6802 = vld [vmem:[#allocation4 + $0x20] sm:$0xff]
        %v6803 = vld [vmem:[#allocation4 + $0x28] sm:$0xff]
        %v6804 = vld [vmem:[#allocation4 + $0x30] sm:$0xff]
        %v6805 = vld [vmem:[#allocation4 + $0x38] sm:$0xff]
        %v6806 = vld [vmem:[#allocation4 + $0x40] sm:$0xff]
        %v6807 = vld [vmem:[#allocation4 + $0x48] sm:$0xff]
        %v6808 = vld [vmem:[#allocation4 + $0x50] sm:$0xff]
        %v6809 = vld [vmem:[#allocation4 + $0x58] sm:$0xff]
        %v6810 = vld [vmem:[#allocation4 + $0x60] sm:$0xff]
        %v6811 = vld [vmem:[#allocation4 + $0x68] sm:$0xff]
        %v6812 = vld [vmem:[#allocation4 + $0x70] sm:$0xff]
        %v6813 = vld [vmem:[#allocation4 + $0x78] sm:$0xff]
        %v6814 = vld [vmem:[#allocation4 + $0x80] sm:$0xff]
        %v6815 = vld [vmem:[#allocation4 + $0x88] sm:$0xff]
        %v6816 = vld [vmem:[#allocation4 + $0x90] sm:$0xff]
        %v6817 = vld [vmem:[#allocation4 + $0x98] sm:$0xff]
        %v6818 = vld [vmem:[#allocation4 + $0xa0] sm:$0xff]
        %v6819 = vld [vmem:[#allocation4 + $0xa8] sm:$0xff]
        %v6820 = vld [vmem:[#allocation4 + $0xb0] sm:$0xff]
        %v6821 = vld [vmem:[#allocation4 + $0xb8] sm:$0xff]
        %v6822 = vld [vmem:[#allocation4 + $0xc0] sm:$0xff]
        %v6823 = vld [vmem:[#allocation4 + $0xc8] sm:$0xff]
        %v6824 = vld [vmem:[#allocation4 + $0xd0] sm:$0xff]
        %v6825 = vld [vmem:[#allocation4 + $0xd8] sm:$0xff]
        %v6826 = vld [vmem:[#allocation4 + $0xe0] sm:$0xff]
        %v6827 = vld [vmem:[#allocation4 + $0xe8] sm:$0xff]
        %v6828 = vld [vmem:[#allocation4 + $0xf0] sm:$0xff]
        %v6829 = vld [vmem:[#allocation4 + $0xf8] sm:$0xff]
        %v6830 = vld [vmem:[%s4] sm:$0x1]
        %v6832 = vlaneseq
        %v6833 = vshrl.u32 %v6832, 7
        %v6834 = vsub.s32 0, %v6833
        %v6835 = vrot.slane %v6830, %v6834
        %v6837 = vadd.f32 %v6798, %v6835
        %v6838 = vadd.f32 %v6799, %v6835
        %v6839 = vadd.f32 %v6800, %v6835
        %v6840 = vadd.f32 %v6801, %v6835
        %v6841 = vadd.f32 %v6802, %v6835
        %v6842 = vadd.f32 %v6803, %v6835
        %v6843 = vadd.f32 %v6804, %v6835
        %v6844 = vadd.f32 %v6805, %v6835
        %v6845 = vadd.f32 %v6806, %v6835
        %v6846 = vadd.f32 %v6807, %v6835
        %v6847 = vadd.f32 %v6808, %v6835
        %v6848 = vadd.f32 %v6809, %v6835
        %v6849 = vadd.f32 %v6810, %v6835
        %v6850 = vadd.f32 %v6811, %v6835
        %v6851 = vadd.f32 %v6812, %v6835
        %v6852 = vadd.f32 %v6813, %v6835
        %v6853 = vadd.f32 %v6814, %v6835
        %v6854 = vadd.f32 %v6815, %v6835
        %v6855 = vadd.f32 %v6816, %v6835
        %v6856 = vadd.f32 %v6817, %v6835
        %v6857 = vadd.f32 %v6818, %v6835
        %v6858 = vadd.f32 %v6819, %v6835
        %v6859 = vadd.f32 %v6820, %v6835
        %v6860 = vadd.f32 %v6821, %v6835
        %v6861 = vadd.f32 %v6822, %v6835
        %v6862 = vadd.f32 %v6823, %v6835
        %v6863 = vadd.f32 %v6824, %v6835
        %v6864 = vadd.f32 %v6825, %v6835
        %v6865 = vadd.f32 %v6826, %v6835
        %v6866 = vadd.f32 %v6827, %v6835
        %v6867 = vadd.f32 %v6828, %v6835
        %v6868 = vadd.f32 %v6829, %v6835
        %v6869 = vmax.f32 %v6837, 0.0
        %v6870 = vmax.f32 %v6838, 0.0
        %v6871 = vmax.f32 %v6839, 0.0
        %v6872 = vmax.f32 %v6840, 0.0
        %v6873 = vmax.f32 %v6841, 0.0
        %v6874 = vmax.f32 %v6842, 0.0
        %v6875 = vmax.f32 %v6843, 0.0
        %v6876 = vmax.f32 %v6844, 0.0
        %v6877 = vmax.f32 %v6845, 0.0
        %v6878 = vmax.f32 %v6846, 0.0
        %v6879 = vmax.f32 %v6847, 0.0
        %v6880 = vmax.f32 %v6848, 0.0
        %v6881 = vmax.f32 %v6849, 0.0
        %v6882 = vmax.f32 %v6850, 0.0
        %v6883 = vmax.f32 %v6851, 0.0
        %v6884 = vmax.f32 %v6852, 0.0
        %v6885 = vmax.f32 %v6853, 0.0
        %v6886 = vmax.f32 %v6854, 0.0
        %v6887 = vmax.f32 %v6855, 0.0
        %v6888 = vmax.f32 %v6856, 0.0
        %v6889 = vmax.f32 %v6857, 0.0
        %v6890 = vmax.f32 %v6858, 0.0
        %v6891 = vmax.f32 %v6859, 0.0
        %v6892 = vmax.f32 %v6860, 0.0
        %v6893 = vmax.f32 %v6861, 0.0
        %v6894 = vmax.f32 %v6862, 0.0
        %v6895 = vmax.f32 %v6863, 0.0
        %v6896 = vmax.f32 %v6864, 0.0
        %v6897 = vmax.f32 %v6865, 0.0
        %v6898 = vmax.f32 %v6866, 0.0
        %v6899 = vmax.f32 %v6867, 0.0
        %v6900 = vmax.f32 %v6868, 0.0
        %6901 = vst [vmem:[%s232] sm:$0xff] %v6869
        %6902 = vst [vmem:[%s232 + $0x8] sm:$0xff] %v6870
        %6903 = vst [vmem:[%s232 + $0x10] sm:$0xff] %v6871
        %6904 = vst [vmem:[%s232 + $0x18] sm:$0xff] %v6872
        %6905 = vst [vmem:[%s232 + $0x20] sm:$0xff] %v6873
        %6906 = vst [vmem:[%s232 + $0x28] sm:$0xff] %v6874
        %6907 = vst [vmem:[%s232 + $0x30] sm:$0xff] %v6875
        %6908 = vst [vmem:[%s232 + $0x38] sm:$0xff] %v6876
        %6909 = vst [vmem:[%s232 + $0x40] sm:$0xff] %v6877
        %6910 = vst [vmem:[%s232 + $0x48] sm:$0xff] %v6878
        %6911 = vst [vmem:[%s232 + $0x50] sm:$0xff] %v6879
        %6912 = vst [vmem:[%s232 + $0x58] sm:$0xff] %v6880
        %6913 = vst [vmem:[%s232 + $0x60] sm:$0xff] %v6881
        %6914 = vst [vmem:[%s232 + $0x68] sm:$0xff] %v6882
        %6915 = vst [vmem:[%s232 + $0x70] sm:$0xff] %v6883
        %6916 = vst [vmem:[%s232 + $0x78] sm:$0xff] %v6884
        %6917 = vst [vmem:[%s232 + $0x80] sm:$0xff] %v6885
        %6918 = vst [vmem:[%s232 + $0x88] sm:$0xff] %v6886
        %6919 = vst [vmem:[%s232 + $0x90] sm:$0xff] %v6887
        %6920 = vst [vmem:[%s232 + $0x98] sm:$0xff] %v6888
        %6921 = vst [vmem:[%s232 + $0xa0] sm:$0xff] %v6889
        %6922 = vst [vmem:[%s232 + $0xa8] sm:$0xff] %v6890
        %6923 = vst [vmem:[%s232 + $0xb0] sm:$0xff] %v6891
        %6924 = vst [vmem:[%s232 + $0xb8] sm:$0xff] %v6892
        %6925 = vst [vmem:[%s232 + $0xc0] sm:$0xff] %v6893
        %6926 = vst [vmem:[%s232 + $0xc8] sm:$0xff] %v6894
        %6927 = vst [vmem:[%s232 + $0xd0] sm:$0xff] %v6895
        %6928 = vst [vmem:[%s232 + $0xd8] sm:$0xff] %v6896
        %6929 = vst [vmem:[%s232 + $0xe0] sm:$0xff] %v6897
        %6930 = vst [vmem:[%s232 + $0xe8] sm:$0xff] %v6898
        %6931 = vst [vmem:[%s232 + $0xf0] sm:$0xff] %v6899
        %6932 = vst [vmem:[%s232 + $0xf8] sm:$0xff] %v6900
        %s6933 = sand.u32 %s138, 1
        %s6934 = scalar_lea.sflag [#allocation7], %s6933
        %s6935 = sand.u32 %s138, 1
        %s6936 = smul.addr %s6935, 256
        %s6937 = scalar_lea.vmem [#allocation8], %s6936
        // Predicated region
        $region45: #{tpu_custom_call.1} parent=39 // pred_check
          %p6938 = pneg %p148
        $region46: #{tpu_custom_call.1} parent=39 // pred_check_branch
          %6940 = sbr.rel (%p6938) target = $region48
        $region47: #{tpu_custom_call.1} parent=39 // pred_region
          %s6942 = ssub.s32 4096, 4096
          %6943 = vsyncadd %s6934, %s6942
          %s6944 = smul.addr %s20, 32
          %s6945 = smul.addr %s6944, 128
          %s6946 = scalar_lea.hbm %s5, %s6945
          %s6947 = sshll.u32 %s6937, 4
          %s6948 = int_to_ptr.vmem [resolvable:$true] %s6947
          %6953 = dma.vmem_to_hbm [thread:$0]  %s6948, 4096, %s6946, %s6934, 128, 128, 8
        $region48: #{tpu_custom_call.1} parent=39 // pred_fallthru
          _
      $region40: #{tpu_custom_call.1} parent=5 // pred_fallthru
        _
      %p6954 = scmp.le.s32.totalorder 2, %s15
      // Predicated region
      $region49: #{tpu_custom_call.1} parent=5 // pred_check
        %p6955 = pneg %p6954
      $region50: #{tpu_custom_call.1} parent=5 // pred_check_branch
        %6957 = sbr.rel (%p6955) target = $region52
      $region51: #{tpu_custom_call.1} parent=5 // pred_region
        %s6958 = ssub.s32 %s15, 2
        // Predicated region
        $region53: #{tpu_custom_call.1} parent=51 // pred_check
          %p6959 = pneg %p154
        $region54: #{tpu_custom_call.1} parent=51 // pred_check_branch
          %6961 = sbr.rel (%p6959) target = $region56
        $region55: #{tpu_custom_call.1} parent=51 // pred_region
          %s6962 = sand.u32 %s139, 1
          %s6963 = scalar_lea.sflag [#allocation7], %s6962
          %s6964 = sand.u32 %s139, 1
          %s6965 = smul.addr %s6964, 256
          %s6966 = scalar_lea.vmem [#allocation8], %s6965
          %6967 = dma.done %s6963, 4096
        $region56: #{tpu_custom_call.1} parent=51 // pred_fallthru
          _
      $region52: #{tpu_custom_call.1} parent=5 // pred_fallthru
        _
    $region6: #{tpu_custom_call.1} parent=1 // loop_footer
      %s19 = sadd.s32 1, %s15
    $region7: #{tpu_custom_call.1} parent=1 // loop_footer_branch
      %14 = sbr.rel target = $region3
    $region8: #{tpu_custom_call.1} parent=1 // loop_exit
      _
    %6968 = vsyncpa [#allocation6], 1
    %s6969 = scalar_lea.sflag [#allocation6], 1
    %6970 = vsyncpa %s6969, 1
    %6971 = vsyncpa [#allocation7], 1
    %s6972 = scalar_lea.sflag [#allocation7], 1
    %6973 = vsyncpa %s6972, 1

</llo_original>
